<compile_context>
chip_gen: v7x
topology: tpu7x:2x2x1
jax: 0.10.0
libtpu: 0.0.40
codegen_flags: <defaults>
</compile_context>

<pallas_src>
import functools

import jax
import jax.numpy as jnp
from jax.experimental import pallas as pl
from jax.experimental.pallas import tpu as pltpu


_GELU_APPROX = True   # tanh GELU -> EUP slot; set False for exact-erf nn.GELU numerics.


# ---------------------------------------------------------------------------
# in-kernel helpers
# ---------------------------------------------------------------------------
def _gelu(x):
    return jax.nn.gelu(x, approximate=_GELU_APPROX)


def _layernorm(x, w, b, eps=1e-6):
    # nn.LayerNorm(dim, eps=1e-6), biased variance.  One-pass form: the two
    # reductions (E[x], E[x^2]) are independent, unlike mean->center->var.
    mu = jnp.mean(x, axis=-1, keepdims=True)
    ms = jnp.mean(x * x, axis=-1, keepdims=True)
    var = ms - mu * mu
    return (x - mu) * jax.lax.rsqrt(var + eps) * w + b


def _mixer_layer(x, n1w, n1b, t1w, t1b, t2w, t2b, n2w, n2b, c1w, c1b, c2w, c2b,
                 *, samples, seq_len):
    """One MixerBlock on a (samples*seq_len, D) f32 activation tile."""
    bf16 = jnp.bfloat16
    L = seq_len
    D = x.shape[-1]

    # ---- token mixing:  x + mlp_tokens(norm1(x).T).T  (per sample) --------
    n16 = _layernorm(x, n1w, n1b).astype(bf16)
    if samples == 1:
        a = _gelu(jnp.dot(t1w, n16, preferred_element_type=jnp.float32) + t1b)
        tmix = jnp.dot(t2w, a.astype(bf16),
                       preferred_element_type=jnp.float32) + t2b
    else:
        # Batched dot_general (batch = samples): same per-sample MXU matmuls
        # as a loop, but no per-sample slices and no concatenate copies.
        n3 = n16.reshape(samples, L, D)
        w1 = jnp.broadcast_to(t1w, (samples,) + t1w.shape)     # (Bt, tok, L)
        w2 = jnp.broadcast_to(t2w, (samples,) + t2w.shape)     # (Bt, L, tok)
        dn = (((2,), (1,)), ((0,), (0,)))
        a = _gelu(jax.lax.dot_general(w1, n3, dn,
                                      preferred_element_type=jnp.float32) + t1b)
        tmix = jax.lax.dot_general(w2, a.astype(bf16), dn,
                                   preferred_element_type=jnp.float32) + t2b
        tmix = tmix.reshape(samples * L, D)
    x = x + tmix

    # ---- channel mixing:  x + mlp_channels(norm2(x))  (all tokens) --------
    n16 = _layernorm(x, n2w, n2b).astype(bf16)
    h = _gelu(jnp.dot(n16, c1w, preferred_element_type=jnp.float32) + c1b)
    cmix = jnp.dot(h.astype(bf16), c2w, preferred_element_type=jnp.float32) + c2b
    return x + cmix


def _head(x, nfw, nfb, hdw_ref, hdb_ref, hfw, hfb, decoder_depth, out_dtype):
    bf16 = jnp.bfloat16
    x = _layernorm(x, nfw, nfb)
    for d in range(decoder_depth):
        x = _gelu(jnp.dot(x.astype(bf16), hdw_ref[d],
                          preferred_element_type=jnp.float32) + hdb_ref[d])
    y = jnp.dot(x.astype(bf16), hfw, preferred_element_type=jnp.float32) + hfb
    return y.astype(out_dtype)


# ---------------------------------------------------------------------------
# kernels
# ---------------------------------------------------------------------------
def _mixer_kernel_resident(xp_ref, pe_w, pe_b,
                           n1w, n1b, t1w, t1b, t2w, t2b,
                           n2w, n2b, c1w, c1b, c2w, c2b,
                           nfw, nfb, hdw, hdb, hfw, hfb,
                           out_ref, *, depth, decoder_depth, samples, seq_len):
    # PatchEmbed (Conv2d k=p,s=p == per-patch linear) over all Bt samples.
    x = jnp.dot(xp_ref[...], pe_w[...],
                preferred_element_type=jnp.float32) + pe_b[...]

    def layer(d, x):
        return _mixer_layer(x, n1w[d], n1b[d], t1w[d], t1b[d], t2w[d], t2b[d],
                            n2w[d], n2b[d], c1w[d], c1b[d], c2w[d], c2b[d],
                            samples=samples, seq_len=seq_len)

    x = jax.lax.fori_loop(0, depth, layer, x)
    out_ref[...] = _head(x, nfw[...], nfb[...], hdw, hdb, hfw[...], hfb[...],
                         decoder_depth, out_ref.dtype)


def _mixer_kernel_streamed(xp_ref, pe_w, pe_b,
                           n1w, n1b, t1w, t1b, t2w, t2b,
                           n2w, n2b, c1w, c1b, c2w, c2b,
                           nfw, nfb, hdw, hdb, hfw, hfb,
                           out_ref, x_scr, *, depth, decoder_depth, samples,
                           seq_len):
    # depth is the inner ("arbitrary") grid axis; per-layer weights streamed.
    d = pl.program_id(1)

    @pl.when(d == 0)
    def _():
        x_scr[...] = (jnp.dot(xp_ref[...], pe_w[...],
                              preferred_element_type=jnp.float32) + pe_b[...])

    x = _mixer_layer(x_scr[...],
                     n1w[0], n1b[0], t1w[0], t1b[0], t2w[0], t2b[0],
                     n2w[0], n2b[0], c1w[0], c1b[0], c2w[0], c2b[0],
                     samples=samples, seq_len=seq_len)
    x_scr[...] = x

    @pl.when(d == depth - 1)
    def _():
        out_ref[...] = _head(x, nfw[...], nfb[...], hdw, hdb, hfw[...],
                             hfb[...], decoder_depth, out_ref.dtype)


# ---------------------------------------------------------------------------
# wrapper helpers
# ---------------------------------------------------------------------------
PARAM_ORDER = ['pe_w', 'pe_b',
               'n1_w', 'n1_b', 't1_w', 't1_b', 't2_w', 't2_b',
               'n2_w', 'n2_b', 'c1_w', 'c1_b', 'c2_w', 'c2_b',
               'nf_w', 'nf_b', 'hd_w', 'hd_b', 'hf_w', 'hf_b']

MXU_WEIGHTS = ('pe_w', 't1_w', 't2_w', 'c1_w', 'c2_w', 'hd_w', 'hf_w')

# depth-stacked (per MixerBlock) parameters -> streamable along the depth axis
BLOCK_PARAMS = ('n1_w', 'n1_b', 't1_w', 't1_b', 't2_w', 't2_b',
                'n2_w', 'n2_b', 'c1_w', 'c1_b', 'c2_w', 'c2_b')


def _round_up(n, m):
    return ((n + m - 1) // m) * m


def _tpu_hints():
    kind = ""
    try:
        kind = jax.devices()[0].device_kind.lower()
    except Exception:
        pass
    megacore = any(t in kind for t in ("v4", "v5p", "v7"))
    small_mxu = ("v5e" in kind) or ("v5 lite" in kind) or ("v5lite" in kind)
    target_rows = 256 if small_mxu else 512        # MXU M-dim fill target
    vmem_cap = 64 << 20                            # conservative default
    try:
        info = pltpu.get_tpu_info()
        vmem_cap = int(getattr(info, "vmem_capacity_bytes", vmem_cap))
    except Exception:
        pass
    return megacore, target_rows, vmem_cap


def _pick_block_batch(batch, seq_len, *, target_rows, max_rows, prefer_split):
    """Per-step sample count Bt: Bt | batch, Bt*L legal for (8,128) blocks,
    Bt*L within the VMEM row budget, generation-aware grid-extent preference."""
    divs = [d for d in range(1, batch + 1) if batch % d == 0]

    def tier(mult):
        return [d for d in divs if d == batch or (d * seq_len) % mult == 0]

    valid = tier(16) or tier(8) or [batch]
    fit = [d for d in valid if d * seq_len <= max_rows] or [min(valid)]
    if prefer_split:      # megacore: keep grid extent >= 2, ideally even
        cands = ([d for d in fit if batch // d >= 2 and (batch // d) % 2 == 0]
                 or [d for d in fit if batch // d >= 2] or fit)
    else:
        cands = fit
    hit = [d for d in cands if d * seq_len >= target_rows]
    return min(hit) if hit else max(cands)


def _weight_bytes(prm, streamed):
    total = 0
    for k, a in prm.items():
        b = int(a.size) * a.dtype.itemsize
        if streamed and k in BLOCK_PARAMS:
            total += 2 * (b // int(a.shape[0]))    # double-buffered layer slice
        else:
            total += b                             # resident, single buffer
    return total


# ---------------------------------------------------------------------------
# wrapper (patchify / pallas_call / unpatchify)
# ---------------------------------------------------------------------------
def mlp_mixer_forward(x, params, *, img_size, patch_size, out_channels,
                      depth, decoder_depth, weight_streaming=None):
    B, C, H, W = x.shape
    p = patch_size
    h, w = H // p, W // p
    L = h * w
    Cp2 = C * p * p
    D = params['pe_w'].shape[1]
    tok = params['t1_w'].shape[1]
    ch = params['c1_w'].shape[2]
    outdim = out_channels * p * p
    outdim_p = _round_up(outdim, 128)        # lane-dense output writeback
    Cp2p = _round_up(Cp2, 128)               # lane-dense input K

    megacore, target_rows, vmem_cap = _tpu_hints()

    # bf16 MXU weights (f32 accumulation in-kernel); zero-pad K and out lanes.
    prm = dict(params)
    for k in MXU_WEIGHTS:
        prm[k] = prm[k].astype(jnp.bfloat16)
    if Cp2p != Cp2:
        prm['pe_w'] = jnp.pad(prm['pe_w'], ((0, Cp2p - Cp2), (0, 0)))
    if outdim_p != outdim:
        prm['hf_w'] = jnp.pad(prm['hf_w'], ((0, 0), (0, outdim_p - outdim)))
        prm['hf_b'] = jnp.pad(prm['hf_b'], ((0, 0), (0, outdim_p - outdim)))

    # --- path selection: resident weights vs. depth-axis weight streaming ---
    resident_w_bytes = _weight_bytes(prm, streamed=False)
    if weight_streaming is None:
        streamed = resident_w_bytes > int(0.55 * vmem_cap)
    else:
        streamed = bool(weight_streaming)
    w_bytes = _weight_bytes(prm, streamed)

    # --- Bt / grid selection (VMEM-aware row budget) -------------------------
    per_row = (2 * 2 * Cp2p            # xp bf16, double-buffered
               + 2 * 4 * outdim_p      # out f32, double-buffered
               + 4 * (6 * D + ch)      # f32 activations
               + 4 * D                 # scratch / slack
               + (4 * tok * D) // max(L, 1))
    max_rows = (int(0.75 * vmem_cap) - w_bytes) // max(per_row, 1)
    max_rows = max(min(max_rows, 1024), L)
    Bt = _pick_block_batch(B, L, target_rows=target_rows, max_rows=max_rows,
                           prefer_split=megacore)
    nb = B // Bt
    BtL = Bt * L

    # --- patchify (== Conv2d(k=p,s=p) + flatten(2).transpose(1,2)) ----------
    xp = (x.reshape(B, C, h, p, w, p)
           .transpose(0, 2, 4, 1, 3, 5)
           .reshape(B * L, Cp2)).astype(jnp.bfloat16)
    if Cp2p != Cp2:
        xp = jnp.pad(xp, ((0, 0), (0, Cp2p - Cp2)))
    # TODO(synk): try CompilerParams(allow_input_fusion=...) so the patchify
    # reshape/transpose + bf16 cast fuses into the pallas_call operand instead
    # of materializing xp in HBM (one input-sized HBM round-trip saved on v5e).

    param_list = [prm[k] for k in PARAM_ORDER]

    # --- VMEM limit (generation-aware) & cost estimate -----------------------
    io_bytes = BtL * (2 * 2 * Cp2p + 2 * 4 * outdim_p)
    act_bytes = (BtL * 4 * (6 * D + ch) + 4 * Bt * tok * D
                 + (BtL * D * 4 if streamed else 0))
    vmem_need = w_bytes + io_bytes + act_bytes
    vmem_limit = None
    if vmem_need > (16 << 20):
        vmem_limit = int(min(max(vmem_need * 5 // 4, 32 << 20),
                             int(0.85 * vmem_cap)))

    flops = (2 * B * L * Cp2p * D
             + B * depth * (4 * tok * L * D + 4 * L * D * ch)
             + B * decoder_depth * 2 * L * D * D
             + 2 * B * L * D * outdim_p)
    transcendentals = (B * depth * (tok * D + L * ch)
                       + B * decoder_depth * L * D)
    bytes_accessed = (w_bytes * (nb if streamed else 1)
                      + int(xp.size) * 2 + B * L * outdim_p * 4)
    cost = pl.CostEstimate(flops=int(flops),
                           transcendentals=int(transcendentals),
                           bytes_accessed=int(bytes_accessed))

    # --- specs ---------------------------------------------------------------
    ngrid = 2 if streamed else 1

    def _data_spec(block):
        if ngrid == 1:
            return pl.BlockSpec(block, lambda b: (b, 0))
        return pl.BlockSpec(block, lambda b, d: (b, 0))

    def _const_spec(shape, use_buffered):
        nd = len(shape)
        if ngrid == 1:
            idx = lambda b, _nd=nd: (0,) * _nd
        else:
            idx = lambda b, d, _nd=nd: (0,) * _nd
        if use_buffered:
            # constant index map -> block never re-fetched; 1 buffer is enough.
            return pl.BlockSpec(shape, idx, pipeline_mode=pl.Buffered(1))
        return pl.BlockSpec(shape, idx)

    def _layer_spec(shape):
        nd = len(shape)
        blk = (1,) + tuple(shape[1:])
        idx = lambda b, d, _nd=nd: (d,) + (0,) * (_nd - 1)
        return pl.BlockSpec(blk, idx)

    def run(use_buffered):
        in_specs = [_data_spec((BtL, Cp2p))]
        for name, a in zip(PARAM_ORDER, param_list):
            if streamed and name in BLOCK_PARAMS:
                in_specs.append(_layer_spec(a.shape))
            else:
                in_specs.append(_const_spec(a.shape, use_buffered))
        out_spec = _data_spec((BtL, outdim_p))

        if streamed:
            grid = (nb, depth)
            kern = functools.partial(_mixer_kernel_streamed, depth=depth,
                                     decoder_depth=decoder_depth,
                                     samples=Bt, seq_len=L)
            scratch = (pltpu.VMEM((BtL, D), jnp.float32),)
            dims = ("parallel", "arbitrary")
        else:
            grid = (nb,)
            kern = functools.partial(_mixer_kernel_resident, depth=depth,
                                     decoder_depth=decoder_depth,
                                     samples=Bt, seq_len=L)
            scratch = ()
            dims = ("parallel",)

        return pl.pallas_call(
            kern,
            out_shape=jax.ShapeDtypeStruct((B * L, outdim_p), jnp.float32),
            grid_spec=pltpu.PrefetchScalarGridSpec(
                num_scalar_prefetch=0, grid=grid, in_specs=in_specs,
                out_specs=out_spec, scratch_shapes=scratch),
            compiler_params=pltpu.CompilerParams(
                dimension_semantics=dims, vmem_limit_bytes=vmem_limit),
            cost_estimate=cost,
        )(xp, *param_list)

    use_buf = hasattr(pl, "Buffered")
    try:
        y = run(use_buf)
    except Exception:
        if not use_buf:
            raise
        y = run(False)          # fallback: default double-buffered weights

    # strip lane padding, then unpatchify: (B, L, p*p*c) -> (B, c, H, W)
    y = y[:, :outdim].reshape(B, h, w, p, p, out_channels)
    y = jnp.einsum('nhwpqc->nchpwq', y)
    return y.reshape(B, out_channels, h * p, w * p)


# ---------------------------------------------------------------------------
# pure-JAX reference (f32) for correctness checking
# ---------------------------------------------------------------------------
def mlp_mixer_reference(x, params, *, img_size, patch_size, out_channels,
                        depth, decoder_depth):
    B, C, H, W = x.shape
    p = patch_size
    h, w = H // p, W // p
    L = h * w
    xp = (x.reshape(B, C, h, p, w, p).transpose(0, 2, 4, 1, 3, 5)
           .reshape(B, L, C * p * p))
    z = xp @ params['pe_w'] + params['pe_b']

    def ln(t, w_, b_):
        mu = t.mean(-1, keepdims=True)
        var = ((t - mu) ** 2).mean(-1, keepdims=True)
        return (t - mu) / jnp.sqrt(var + 1e-6) * w_ + b_

    for d in range(depth):
        n = ln(z, params['n1_w'][d], params['n1_b'][d])
        a = jnp.einsum('bld,tl->bdt', n, params['t1_w'][d]) + params['t1_b'][d][:, 0]
        tmix = jnp.einsum('bdt,lt->bld', _gelu(a), params['t2_w'][d]) + params['t2_b'][d]
        z = z + tmix
        n = ln(z, params['n2_w'][d], params['n2_b'][d])
        hid = _gelu(n @ params['c1_w'][d] + params['c1_b'][d])
        z = z + hid @ params['c2_w'][d] + params['c2_b'][d]
    z = ln(z, params['nf_w'], params['nf_b'])
    for d in range(decoder_depth):
        z = _gelu(z @ params['hd_w'][d] + params['hd_b'][d])
    y = z @ params['hf_w'] + params['hf_b']
    y = y.reshape(B, h, w, p, p, out_channels)
    y = jnp.einsum('nhwpqc->nchpwq', y)
    return y.reshape(B, out_channels, h * p, w * p)


# ---------------------------------------------------------------------------
# deterministic parameter init (shapes from MlpMixer.__init__), f32 master
# ---------------------------------------------------------------------------
def init_params(key, *, in_chans, embed_dim, patch_size, num_patches,
                depth, decoder_depth, out_channels, mlp_ratio=(0.5, 4.0)):
    tok_dim = int(mlp_ratio[0] * embed_dim)
    ch_dim = int(mlp_ratio[1] * embed_dim)
    D, L, p = embed_dim, num_patches, patch_size
    Cp2 = in_chans * p * p

    keys = iter(jax.random.split(key, 32))

    def tn(shape):  # trunc_normal_(std=0.02)
        return (0.02 * jax.random.truncated_normal(
            next(keys), -2.0, 2.0, shape)).astype(jnp.float32)

    z = lambda s: jnp.zeros(s, jnp.float32)
    o = lambda s: jnp.ones(s, jnp.float32)

    return {
        'pe_w': tn((Cp2, D)), 'pe_b': z((1, D)),
        'n1_w': o((depth, 1, D)), 'n1_b': z((depth, 1, D)),
        't1_w': tn((depth, tok_dim, L)), 't1_b': z((depth, tok_dim, 1)),
        't2_w': tn((depth, L, tok_dim)), 't2_b': z((depth, L, 1)),
        'n2_w': o((depth, 1, D)), 'n2_b': z((depth, 1, D)),
        'c1_w': tn((depth, D, ch_dim)), 'c1_b': z((depth, 1, ch_dim)),
        'c2_w': tn((depth, ch_dim, D)), 'c2_b': z((depth, 1, D)),
        'nf_w': o((1, D)), 'nf_b': z((1, D)),
        'hd_w': tn((decoder_depth, D, D)), 'hd_b': z((decoder_depth, 1, D)),
        'hf_w': tn((D, out_channels * p * p)),
        'hf_b': z((1, out_channels * p * p)),
    }


# ---------------------------------------------------------------------------
if __name__ == "__main__":
    B = 8
    img_size = (16, 16)
    in_channels = 2
    history = 2            # module flattens (B, T, C, H, W) -> (B, T*C, H, W)
    out_channels = 3
    patch_size = 4
    depth = 2
    decoder_depth = 1
    embed_dim = 32

    C = in_channels * history
    h, w = img_size[0] // patch_size, img_size[1] // patch_size
    L = h * w

    key = jax.random.PRNGKey(0)
    kx, kp = jax.random.split(key)
    x = jax.random.normal(kx, (B, C, img_size[0], img_size[1]), jnp.float32)
    params = init_params(kp, in_chans=C, embed_dim=embed_dim,
                         patch_size=patch_size, num_patches=L, depth=depth,
                         decoder_depth=decoder_depth, out_channels=out_channels)

    fwd = functools.partial(mlp_mixer_forward, img_size=img_size,
                            patch_size=patch_size, out_channels=out_channels,
                            depth=depth, decoder_depth=decoder_depth)

    # auto path (resident weights at this size)
    preds = fwd(x, params)
    jax.block_until_ready(preds)
    assert preds.shape == (B, out_channels, img_size[0], img_size[1])
    assert preds.dtype == jnp.float32

    # exercise the weight-streaming path (depth as an "arbitrary" grid axis)
    preds_s = fwd(x, params, weight_streaming=True)
    jax.block_until_ready(preds_s)
    assert jnp.allclose(preds, preds_s, atol=1e-3, rtol=1e-3), \
        "resident / streamed paths disagree"

    # compare against the pure-JAX f32 reference (bf16-MXU tolerance)
    ref = mlp_mixer_reference(x, params, img_size=img_size,
                              patch_size=patch_size, out_channels=out_channels,
                              depth=depth, decoder_depth=decoder_depth)
    err = float(jnp.max(jnp.abs(preds - ref)))
    assert err < 5e-2, f"kernel/reference mismatch: max |err| = {err}"

    print("KERNEL_OK")
</pallas_src>

<mosaic_0001>
module attributes {stable_mosaic.version = 11 : i64} {
  func.func @_mixer_kernel_resident(%arg0: i32, %arg1: memref<128x128xbf16, #tpu.memory_space<vmem>>, %arg2: memref<128x32xbf16, #tpu.memory_space<vmem>>, %arg3: memref<1x32xf32, #tpu.memory_space<vmem>>, %arg4: memref<2x1x32xf32, #tpu.memory_space<vmem>>, %arg5: memref<2x1x32xf32, #tpu.memory_space<vmem>>, %arg6: memref<2x16x16xbf16, #tpu.memory_space<vmem>>, %arg7: memref<2x16x1xf32, #tpu.memory_space<vmem>>, %arg8: memref<2x16x16xbf16, #tpu.memory_space<vmem>>, %arg9: memref<2x16x1xf32, #tpu.memory_space<vmem>>, %arg10: memref<2x1x32xf32, #tpu.memory_space<vmem>>, %arg11: memref<2x1x32xf32, #tpu.memory_space<vmem>>, %arg12: memref<2x32x128xbf16, #tpu.memory_space<vmem>>, %arg13: memref<2x1x128xf32, #tpu.memory_space<vmem>>, %arg14: memref<2x128x32xbf16, #tpu.memory_space<vmem>>, %arg15: memref<2x1x32xf32, #tpu.memory_space<vmem>>, %arg16: memref<1x32xf32, #tpu.memory_space<vmem>>, %arg17: memref<1x32xf32, #tpu.memory_space<vmem>>, %arg18: memref<1x32x32xbf16, #tpu.memory_space<vmem>>, %arg19: memref<1x1x32xf32, #tpu.memory_space<vmem>>, %arg20: memref<32x128xbf16, #tpu.memory_space<vmem>>, %arg21: memref<1x128xf32, #tpu.memory_space<vmem>>, %arg22: memref<128x128xf32, #tpu.memory_space<vmem>>) attributes {dimension_semantics = [#tpu.dimension_semantics<parallel>], iteration_bounds = array<i64: 1>, scalar_prefetch = 0 : i64, scratch_operands = 0 : i64, tpu.core_type = #tpu.core_type<tc>, window_params = [{transform_indices = @transform_0, window_bounds = array<i64: 128, 128>}, {pipeline_mode = #tpu.pipeline_mode<synchronous>, transform_indices = @transform_1, window_bounds = array<i64: 128, 32>}, {pipeline_mode = #tpu.pipeline_mode<synchronous>, transform_indices = @transform_2, window_bounds = array<i64: 1, 32>}, {pipeline_mode = #tpu.pipeline_mode<synchronous>, transform_indices = @transform_3, window_bounds = array<i64: 2, 1, 32>}, {pipeline_mode = #tpu.pipeline_mode<synchronous>, transform_indices = @transform_4, window_bounds = array<i64: 2, 1, 32>}, {pipeline_mode = #tpu.pipeline_mode<synchronous>, transform_indices = @transform_5, window_bounds = array<i64: 2, 16, 16>}, {pipeline_mode = #tpu.pipeline_mode<synchronous>, transform_indices = @transform_6, window_bounds = array<i64: 2, 16, 1>}, {pipeline_mode = #tpu.pipeline_mode<synchronous>, transform_indices = @transform_7, window_bounds = array<i64: 2, 16, 16>}, {pipeline_mode = #tpu.pipeline_mode<synchronous>, transform_indices = @transform_8, window_bounds = array<i64: 2, 16, 1>}, {pipeline_mode = #tpu.pipeline_mode<synchronous>, transform_indices = @transform_9, window_bounds = array<i64: 2, 1, 32>}, {pipeline_mode = #tpu.pipeline_mode<synchronous>, transform_indices = @transform_10, window_bounds = array<i64: 2, 1, 32>}, {pipeline_mode = #tpu.pipeline_mode<synchronous>, transform_indices = @transform_11, window_bounds = array<i64: 2, 32, 128>}, {pipeline_mode = #tpu.pipeline_mode<synchronous>, transform_indices = @transform_12, window_bounds = array<i64: 2, 1, 128>}, {pipeline_mode = #tpu.pipeline_mode<synchronous>, transform_indices = @transform_13, window_bounds = array<i64: 2, 128, 32>}, {pipeline_mode = #tpu.pipeline_mode<synchronous>, transform_indices = @transform_14, window_bounds = array<i64: 2, 1, 32>}, {pipeline_mode = #tpu.pipeline_mode<synchronous>, transform_indices = @transform_15, window_bounds = array<i64: 1, 32>}, {pipeline_mode = #tpu.pipeline_mode<synchronous>, transform_indices = @transform_16, window_bounds = array<i64: 1, 32>}, {pipeline_mode = #tpu.pipeline_mode<synchronous>, transform_indices = @transform_17, window_bounds = array<i64: 1, 32, 32>}, {pipeline_mode = #tpu.pipeline_mode<synchronous>, transform_indices = @transform_18, window_bounds = array<i64: 1, 1, 32>}, {pipeline_mode = #tpu.pipeline_mode<synchronous>, transform_indices = @transform_19, window_bounds = array<i64: 32, 128>}, {pipeline_mode = #tpu.pipeline_mode<synchronous>, transform_indices = @transform_20, window_bounds = array<i64: 1, 128>}, {transform_indices = @transform_21, window_bounds = array<i64: 128, 128>}]} {
    %c0 = arith.constant 0 : index
    %c0_0 = arith.constant 0 : index
    %0 = vector.load %arg1[%c0, %c0_0] : memref<128x128xbf16, #tpu.memory_space<vmem>>, vector<128x128xbf16>
    %c0_1 = arith.constant 0 : index
    %c0_2 = arith.constant 0 : index
    %1 = vector.load %arg2[%c0_1, %c0_2] : memref<128x32xbf16, #tpu.memory_space<vmem>>, vector<128x32xbf16>
    %cst = arith.constant dense<0.000000e+00> : vector<128x32xf32>
    %2 = tpu.matmul %0, %1, %cst {dimension_numbers = #tpu.dot_dimension_numbers<[1], [0], [0], [1], [0, 0, 1, 1], [], []>} : vector<128x128xbf16>, vector<128x32xbf16>, vector<128x32xf32> -> vector<128x32xf32>
    %c0_3 = arith.constant 0 : index
    %c0_4 = arith.constant 0 : index
    %3 = vector.load %arg3[%c0_3, %c0_4] : memref<1x32xf32, #tpu.memory_space<vmem>>, vector<1x32xf32>
    %4 = vector.broadcast %3 : vector<1x32xf32> to vector<128x32xf32>
    %5 = arith.addf %2, %4 : vector<128x32xf32>
    %c0_i32 = arith.constant 0 : i32
    %c2_i32 = arith.constant 2 : i32
    %6 = arith.addi %c0_i32, %c2_i32 : i32
    %c1_i32 = arith.constant 1 : i32
    %7 = scf.for %arg23 = %c0_i32 to %6 step %c1_i32 iter_args(%arg24 = %5) -> (vector<128x32xf32>)  : i32 {
      %60 = arith.index_cast %arg23 : i32 to index
      %c0_33 = arith.constant 0 : index
      %c0_34 = arith.constant 0 : index
      %61 = vector.load %arg4[%60, %c0_33, %c0_34] : memref<2x1x32xf32, #tpu.memory_space<vmem>>, vector<1x1x32xf32>
      %62 = vector.shape_cast %61 : vector<1x1x32xf32> to vector<1x32xf32>
      %63 = arith.index_cast %arg23 : i32 to index
      %c0_35 = arith.constant 0 : index
      %c0_36 = arith.constant 0 : index
      %64 = vector.load %arg5[%63, %c0_35, %c0_36] : memref<2x1x32xf32, #tpu.memory_space<vmem>>, vector<1x1x32xf32>
      %65 = vector.shape_cast %64 : vector<1x1x32xf32> to vector<1x32xf32>
      %66 = arith.index_cast %arg23 : i32 to index
      %c0_37 = arith.constant 0 : index
      %c0_38 = arith.constant 0 : index
      %67 = vector.load %arg6[%66, %c0_37, %c0_38] : memref<2x16x16xbf16, #tpu.memory_space<vmem>>, vector<1x16x16xbf16>
      %68 = vector.shape_cast %67 : vector<1x16x16xbf16> to vector<16x16xbf16>
      %69 = arith.index_cast %arg23 : i32 to index
      %c0_39 = arith.constant 0 : index
      %c0_40 = arith.constant 0 : index
      %70 = vector.load %arg7[%69, %c0_39, %c0_40] : memref<2x16x1xf32, #tpu.memory_space<vmem>>, vector<1x16x1xf32>
      %71 = vector.shape_cast %70 : vector<1x16x1xf32> to vector<16x1xf32>
      %72 = arith.index_cast %arg23 : i32 to index
      %c0_41 = arith.constant 0 : index
      %c0_42 = arith.constant 0 : index
      %73 = vector.load %arg8[%72, %c0_41, %c0_42] : memref<2x16x16xbf16, #tpu.memory_space<vmem>>, vector<1x16x16xbf16>
      %74 = vector.shape_cast %73 : vector<1x16x16xbf16> to vector<16x16xbf16>
      %75 = arith.index_cast %arg23 : i32 to index
      %c0_43 = arith.constant 0 : index
      %c0_44 = arith.constant 0 : index
      %76 = vector.load %arg9[%75, %c0_43, %c0_44] : memref<2x16x1xf32, #tpu.memory_space<vmem>>, vector<1x16x1xf32>
      %77 = vector.shape_cast %76 : vector<1x16x1xf32> to vector<16x1xf32>
      %78 = arith.index_cast %arg23 : i32 to index
      %c0_45 = arith.constant 0 : index
      %c0_46 = arith.constant 0 : index
      %79 = vector.load %arg10[%78, %c0_45, %c0_46] : memref<2x1x32xf32, #tpu.memory_space<vmem>>, vector<1x1x32xf32>
      %80 = vector.shape_cast %79 : vector<1x1x32xf32> to vector<1x32xf32>
      %81 = arith.index_cast %arg23 : i32 to index
      %c0_47 = arith.constant 0 : index
      %c0_48 = arith.constant 0 : index
      %82 = vector.load %arg11[%81, %c0_47, %c0_48] : memref<2x1x32xf32, #tpu.memory_space<vmem>>, vector<1x1x32xf32>
      %83 = vector.shape_cast %82 : vector<1x1x32xf32> to vector<1x32xf32>
      %84 = arith.index_cast %arg23 : i32 to index
      %c0_49 = arith.constant 0 : index
      %c0_50 = arith.constant 0 : index
      %85 = vector.load %arg12[%84, %c0_49, %c0_50] : memref<2x32x128xbf16, #tpu.memory_space<vmem>>, vector<1x32x128xbf16>
      %86 = vector.shape_cast %85 : vector<1x32x128xbf16> to vector<32x128xbf16>
      %87 = arith.index_cast %arg23 : i32 to index
      %c0_51 = arith.constant 0 : index
      %c0_52 = arith.constant 0 : index
      %88 = vector.load %arg13[%87, %c0_51, %c0_52] : memref<2x1x128xf32, #tpu.memory_space<vmem>>, vector<1x1x128xf32>
      %89 = vector.shape_cast %88 : vector<1x1x128xf32> to vector<1x128xf32>
      %90 = arith.index_cast %arg23 : i32 to index
      %c0_53 = arith.constant 0 : index
      %c0_54 = arith.constant 0 : index
      %91 = vector.load %arg14[%90, %c0_53, %c0_54] : memref<2x128x32xbf16, #tpu.memory_space<vmem>>, vector<1x128x32xbf16>
      %92 = vector.shape_cast %91 : vector<1x128x32xbf16> to vector<128x32xbf16>
      %93 = arith.index_cast %arg23 : i32 to index
      %c0_55 = arith.constant 0 : index
      %c0_56 = arith.constant 0 : index
      %94 = vector.load %arg15[%93, %c0_55, %c0_56] : memref<2x1x32xf32, #tpu.memory_space<vmem>>, vector<1x1x32xf32>
      %95 = vector.shape_cast %94 : vector<1x1x32xf32> to vector<1x32xf32>
      %cst_57 = arith.constant dense<0.000000e+00> : vector<128xf32>
      %96 = vector.multi_reduction <add>, %arg24, %cst_57 [1] : vector<128x32xf32> to vector<128xf32>
      %97 = vector.shape_cast %96 : vector<128xf32> to vector<128x1xf32>
      %cst_58 = arith.constant 3.200000e+01 : f32
      %98 = vector.broadcast %cst_58 : f32 to vector<128x1xf32>
      %99 = arith.divf %97, %98 : vector<128x1xf32>
      %100 = arith.mulf %arg24, %arg24 : vector<128x32xf32>
      %cst_59 = arith.constant dense<0.000000e+00> : vector<128xf32>
      %101 = vector.multi_reduction <add>, %100, %cst_59 [1] : vector<128x32xf32> to vector<128xf32>
      %102 = vector.shape_cast %101 : vector<128xf32> to vector<128x1xf32>
      %cst_60 = arith.constant 3.200000e+01 : f32
      %103 = vector.broadcast %cst_60 : f32 to vector<128x1xf32>
      %104 = arith.divf %102, %103 : vector<128x1xf32>
      %105 = arith.mulf %99, %99 : vector<128x1xf32>
      %106 = arith.subf %104, %105 : vector<128x1xf32>
      %107 = vector.broadcast %99 : vector<128x1xf32> to vector<128x32xf32>
      %108 = arith.subf %arg24, %107 : vector<128x32xf32>
      %cst_61 = arith.constant 9.99999997E-7 : f32
      %109 = vector.broadcast %cst_61 : f32 to vector<128x1xf32>
      %110 = arith.addf %106, %109 : vector<128x1xf32>
      %111 = math.rsqrt %110 : vector<128x1xf32>
      %112 = vector.broadcast %111 : vector<128x1xf32> to vector<128x32xf32>
      %113 = arith.mulf %108, %112 : vector<128x32xf32>
      %114 = vector.broadcast %62 : vector<1x32xf32> to vector<128x32xf32>
      %115 = arith.mulf %113, %114 : vector<128x32xf32>
      %116 = vector.broadcast %65 : vector<1x32xf32> to vector<128x32xf32>
      %117 = arith.addf %115, %116 : vector<128x32xf32>
      %118 = arith.truncf %117 : vector<128x32xf32> to vector<128x32xbf16>
      %119 = vector.shape_cast %118 : vector<128x32xbf16> to vector<8x16x32xbf16>
      %120 = vector.shape_cast %68 : vector<16x16xbf16> to vector<1x16x16xbf16>
      %121 = vector.broadcast %120 : vector<1x16x16xbf16> to vector<8x16x16xbf16>
      %122 = vector.shape_cast %74 : vector<16x16xbf16> to vector<1x16x16xbf16>
      %123 = vector.broadcast %122 : vector<1x16x16xbf16> to vector<8x16x16xbf16>
      %cst_62 = arith.constant dense<0.000000e+00> : vector<8x16x32xf32>
      %124 = tpu.matmul %121, %119, %cst_62 {dimension_numbers = #tpu.dot_dimension_numbers<[2], [1], [1], [2], [0, 0, 0, 1, 1, 2], [0], [0]>} : vector<8x16x16xbf16>, vector<8x16x32xbf16>, vector<8x16x32xf32> -> vector<8x16x32xf32>
      %125 = vector.shape_cast %71 : vector<16x1xf32> to vector<1x16x1xf32>
      %126 = vector.broadcast %125 : vector<1x16x1xf32> to vector<8x16x32xf32>
      %127 = arith.addf %124, %126 : vector<8x16x32xf32>
      %128 = arith.mulf %127, %127 : vector<8x16x32xf32>
      %129 = arith.mulf %127, %128 : vector<8x16x32xf32>
      %cst_63 = arith.constant 4.471500e-02 : f32
      %130 = vector.broadcast %cst_63 : f32 to vector<8x16x32xf32>
      %131 = arith.mulf %130, %129 : vector<8x16x32xf32>
      %132 = arith.addf %127, %131 : vector<8x16x32xf32>
      %cst_64 = arith.constant 0.797884583 : f32
      %133 = vector.broadcast %cst_64 : f32 to vector<8x16x32xf32>
      %134 = arith.mulf %133, %132 : vector<8x16x32xf32>
      %135 = math.tanh %134 : vector<8x16x32xf32>
      %cst_65 = arith.constant 1.000000e+00 : f32
      %136 = vector.broadcast %cst_65 : f32 to vector<8x16x32xf32>
      %137 = arith.addf %136, %135 : vector<8x16x32xf32>
      %cst_66 = arith.constant 5.000000e-01 : f32
      %138 = vector.broadcast %cst_66 : f32 to vector<8x16x32xf32>
      %139 = arith.mulf %138, %137 : vector<8x16x32xf32>
      %140 = arith.mulf %127, %139 : vector<8x16x32xf32>
      %141 = arith.truncf %140 : vector<8x16x32xf32> to vector<8x16x32xbf16>
      %cst_67 = arith.constant dense<0.000000e+00> : vector<8x16x32xf32>
      %142 = tpu.matmul %123, %141, %cst_67 {dimension_numbers = #tpu.dot_dimension_numbers<[2], [1], [1], [2], [0, 0, 0, 1, 1, 2], [0], [0]>} : vector<8x16x16xbf16>, vector<8x16x32xbf16>, vector<8x16x32xf32> -> vector<8x16x32xf32>
      %143 = vector.shape_cast %77 : vector<16x1xf32> to vector<1x16x1xf32>
      %144 = vector.broadcast %143 : vector<1x16x1xf32> to vector<8x16x32xf32>
      %145 = arith.addf %142, %144 : vector<8x16x32xf32>
      %146 = vector.shape_cast %145 : vector<8x16x32xf32> to vector<128x32xf32>
      %147 = arith.addf %arg24, %146 : vector<128x32xf32>
      %cst_68 = arith.constant dense<0.000000e+00> : vector<128xf32>
      %148 = vector.multi_reduction <add>, %147, %cst_68 [1] : vector<128x32xf32> to vector<128xf32>
      %149 = vector.shape_cast %148 : vector<128xf32> to vector<128x1xf32>
      %cst_69 = arith.constant 3.200000e+01 : f32
      %150 = vector.broadcast %cst_69 : f32 to vector<128x1xf32>
      %151 = arith.divf %149, %150 : vector<128x1xf32>
      %152 = arith.mulf %147, %147 : vector<128x32xf32>
      %cst_70 = arith.constant dense<0.000000e+00> : vector<128xf32>
      %153 = vector.multi_reduction <add>, %152, %cst_70 [1] : vector<128x32xf32> to vector<128xf32>
      %154 = vector.shape_cast %153 : vector<128xf32> to vector<128x1xf32>
      %cst_71 = arith.constant 3.200000e+01 : f32
      %155 = vector.broadcast %cst_71 : f32 to vector<128x1xf32>
      %156 = arith.divf %154, %155 : vector<128x1xf32>
      %157 = arith.mulf %151, %151 : vector<128x1xf32>
      %158 = arith.subf %156, %157 : vector<128x1xf32>
      %159 = vector.broadcast %151 : vector<128x1xf32> to vector<128x32xf32>
      %160 = arith.subf %147, %159 : vector<128x32xf32>
      %cst_72 = arith.constant 9.99999997E-7 : f32
      %161 = vector.broadcast %cst_72 : f32 to vector<128x1xf32>
      %162 = arith.addf %158, %161 : vector<128x1xf32>
      %163 = math.rsqrt %162 : vector<128x1xf32>
      %164 = vector.broadcast %163 : vector<128x1xf32> to vector<128x32xf32>
      %165 = arith.mulf %160, %164 : vector<128x32xf32>
      %166 = vector.broadcast %80 : vector<1x32xf32> to vector<128x32xf32>
      %167 = arith.mulf %165, %166 : vector<128x32xf32>
      %168 = vector.broadcast %83 : vector<1x32xf32> to vector<128x32xf32>
      %169 = arith.addf %167, %168 : vector<128x32xf32>
      %170 = arith.truncf %169 : vector<128x32xf32> to vector<128x32xbf16>
      %cst_73 = arith.constant dense<0.000000e+00> : vector<128x128xf32>
      %171 = tpu.matmul %170, %86, %cst_73 {dimension_numbers = #tpu.dot_dimension_numbers<[1], [0], [0], [1], [0, 0, 1, 1], [], []>} : vector<128x32xbf16>, vector<32x128xbf16>, vector<128x128xf32> -> vector<128x128xf32>
      %172 = vector.broadcast %89 : vector<1x128xf32> to vector<128x128xf32>
      %173 = arith.addf %171, %172 : vector<128x128xf32>
      %174 = arith.mulf %173, %173 : vector<128x128xf32>
      %175 = arith.mulf %173, %174 : vector<128x128xf32>
      %cst_74 = arith.constant 4.471500e-02 : f32
      %176 = vector.broadcast %cst_74 : f32 to vector<128x128xf32>
      %177 = arith.mulf %176, %175 : vector<128x128xf32>
      %178 = arith.addf %173, %177 : vector<128x128xf32>
      %cst_75 = arith.constant 0.797884583 : f32
      %179 = vector.broadcast %cst_75 : f32 to vector<128x128xf32>
      %180 = arith.mulf %179, %178 : vector<128x128xf32>
      %181 = math.tanh %180 : vector<128x128xf32>
      %cst_76 = arith.constant 1.000000e+00 : f32
      %182 = vector.broadcast %cst_76 : f32 to vector<128x128xf32>
      %183 = arith.addf %182, %181 : vector<128x128xf32>
      %cst_77 = arith.constant 5.000000e-01 : f32
      %184 = vector.broadcast %cst_77 : f32 to vector<128x128xf32>
      %185 = arith.mulf %184, %183 : vector<128x128xf32>
      %186 = arith.mulf %173, %185 : vector<128x128xf32>
      %187 = arith.truncf %186 : vector<128x128xf32> to vector<128x128xbf16>
      %cst_78 = arith.constant dense<0.000000e+00> : vector<128x32xf32>
      %188 = tpu.matmul %187, %92, %cst_78 {dimension_numbers = #tpu.dot_dimension_numbers<[1], [0], [0], [1], [0, 0, 1, 1], [], []>} : vector<128x128xbf16>, vector<128x32xbf16>, vector<128x32xf32> -> vector<128x32xf32>
      %189 = vector.broadcast %95 : vector<1x32xf32> to vector<128x32xf32>
      %190 = arith.addf %188, %189 : vector<128x32xf32>
      %191 = arith.addf %147, %190 : vector<128x32xf32>
      scf.yield %191 : vector<128x32xf32>
    }
    %c2_i32_5 = arith.constant 2 : i32
    %c0_6 = arith.constant 0 : index
    %c0_7 = arith.constant 0 : index
    %8 = vector.load %arg16[%c0_6, %c0_7] : memref<1x32xf32, #tpu.memory_space<vmem>>, vector<1x32xf32>
    %c0_8 = arith.constant 0 : index
    %c0_9 = arith.constant 0 : index
    %9 = vector.load %arg17[%c0_8, %c0_9] : memref<1x32xf32, #tpu.memory_space<vmem>>, vector<1x32xf32>
    %c0_10 = arith.constant 0 : index
    %c0_11 = arith.constant 0 : index
    %10 = vector.load %arg20[%c0_10, %c0_11] : memref<32x128xbf16, #tpu.memory_space<vmem>>, vector<32x128xbf16>
    %c0_12 = arith.constant 0 : index
    %c0_13 = arith.constant 0 : index
    %11 = vector.load %arg21[%c0_12, %c0_13] : memref<1x128xf32, #tpu.memory_space<vmem>>, vector<1x128xf32>
    %cst_14 = arith.constant dense<0.000000e+00> : vector<128xf32>
    %12 = vector.multi_reduction <add>, %7, %cst_14 [1] : vector<128x32xf32> to vector<128xf32>
    %13 = vector.shape_cast %12 : vector<128xf32> to vector<128x1xf32>
    %cst_15 = arith.constant 3.200000e+01 : f32
    %14 = vector.broadcast %cst_15 : f32 to vector<128x1xf32>
    %15 = arith.divf %13, %14 : vector<128x1xf32>
    %16 = arith.mulf %7, %7 : vector<128x32xf32>
    %cst_16 = arith.constant dense<0.000000e+00> : vector<128xf32>
    %17 = vector.multi_reduction <add>, %16, %cst_16 [1] : vector<128x32xf32> to vector<128xf32>
    %18 = vector.shape_cast %17 : vector<128xf32> to vector<128x1xf32>
    %cst_17 = arith.constant 3.200000e+01 : f32
    %19 = vector.broadcast %cst_17 : f32 to vector<128x1xf32>
    %20 = arith.divf %18, %19 : vector<128x1xf32>
    %21 = arith.mulf %15, %15 : vector<128x1xf32>
    %22 = arith.subf %20, %21 : vector<128x1xf32>
    %23 = vector.broadcast %15 : vector<128x1xf32> to vector<128x32xf32>
    %24 = arith.subf %7, %23 : vector<128x32xf32>
    %cst_18 = arith.constant 9.99999997E-7 : f32
    %25 = vector.broadcast %cst_18 : f32 to vector<128x1xf32>
    %26 = arith.addf %22, %25 : vector<128x1xf32>
    %27 = math.rsqrt %26 : vector<128x1xf32>
    %28 = vector.broadcast %27 : vector<128x1xf32> to vector<128x32xf32>
    %29 = arith.mulf %24, %28 : vector<128x32xf32>
    %30 = vector.broadcast %8 : vector<1x32xf32> to vector<128x32xf32>
    %31 = arith.mulf %29, %30 : vector<128x32xf32>
    %32 = vector.broadcast %9 : vector<1x32xf32> to vector<128x32xf32>
    %33 = arith.addf %31, %32 : vector<128x32xf32>
    %34 = arith.truncf %33 : vector<128x32xf32> to vector<128x32xbf16>
    %c0_19 = arith.constant 0 : index
    %c0_20 = arith.constant 0 : index
    %c0_21 = arith.constant 0 : index
    %35 = vector.load %arg18[%c0_19, %c0_20, %c0_21] : memref<1x32x32xbf16, #tpu.memory_space<vmem>>, vector<1x32x32xbf16>
    %36 = vector.shape_cast %35 : vector<1x32x32xbf16> to vector<32x32xbf16>
    %cst_22 = arith.constant dense<0.000000e+00> : vector<128x32xf32>
    %37 = tpu.matmul %34, %36, %cst_22 {dimension_numbers = #tpu.dot_dimension_numbers<[1], [0], [0], [1], [0, 0, 1, 1], [], []>} : vector<128x32xbf16>, vector<32x32xbf16>, vector<128x32xf32> -> vector<128x32xf32>
    %c0_23 = arith.constant 0 : index
    %c0_24 = arith.constant 0 : index
    %c0_25 = arith.constant 0 : index
    %38 = vector.load %arg19[%c0_23, %c0_24, %c0_25] : memref<1x1x32xf32, #tpu.memory_space<vmem>>, vector<1x1x32xf32>
    %39 = vector.shape_cast %38 : vector<1x1x32xf32> to vector<1x32xf32>
    %40 = vector.broadcast %39 : vector<1x32xf32> to vector<128x32xf32>
    %41 = arith.addf %37, %40 : vector<128x32xf32>
    %42 = arith.mulf %41, %41 : vector<128x32xf32>
    %43 = arith.mulf %41, %42 : vector<128x32xf32>
    %cst_26 = arith.constant 4.471500e-02 : f32
    %44 = vector.broadcast %cst_26 : f32 to vector<128x32xf32>
    %45 = arith.mulf %44, %43 : vector<128x32xf32>
    %46 = arith.addf %41, %45 : vector<128x32xf32>
    %cst_27 = arith.constant 0.797884583 : f32
    %47 = vector.broadcast %cst_27 : f32 to vector<128x32xf32>
    %48 = arith.mulf %47, %46 : vector<128x32xf32>
    %49 = math.tanh %48 : vector<128x32xf32>
    %cst_28 = arith.constant 1.000000e+00 : f32
    %50 = vector.broadcast %cst_28 : f32 to vector<128x32xf32>
    %51 = arith.addf %50, %49 : vector<128x32xf32>
    %cst_29 = arith.constant 5.000000e-01 : f32
    %52 = vector.broadcast %cst_29 : f32 to vector<128x32xf32>
    %53 = arith.mulf %52, %51 : vector<128x32xf32>
    %54 = arith.mulf %41, %53 : vector<128x32xf32>
    %55 = arith.truncf %54 : vector<128x32xf32> to vector<128x32xbf16>
    %cst_30 = arith.constant dense<0.000000e+00> : vector<128x128xf32>
    %56 = tpu.matmul %55, %10, %cst_30 {dimension_numbers = #tpu.dot_dimension_numbers<[1], [0], [0], [1], [0, 0, 1, 1], [], []>} : vector<128x32xbf16>, vector<32x128xbf16>, vector<128x128xf32> -> vector<128x128xf32>
    %57 = vector.broadcast %11 : vector<1x128xf32> to vector<128x128xf32>
    %58 = arith.addf %56, %57 : vector<128x128xf32>
    %c0_31 = arith.constant 0 : index
    %c0_32 = arith.constant 0 : index
    %59 = vector.load %arg22[%c0_31, %c0_32] : memref<128x128xf32, #tpu.memory_space<vmem>>, vector<128x128xf32>
    tpu.vector_store %arg22[%c0_31, %c0_32], %58 {strides = array<i32>} : memref<128x128xf32, #tpu.memory_space<vmem>>, vector<128x128xf32>,
    return
  }
  func.func @transform_0(%arg0: i32) -> (i32, i32) {
    %c0_i32 = arith.constant 0 : i32
    %c0_i32_0 = arith.constant 0 : i32
    return %arg0, %c0_i32 : i32, i32
  }
  func.func @transform_1(%arg0: i32) -> (i32, i32) {
    %c0_i32 = arith.constant 0 : i32
    %c0_i32_0 = arith.constant 0 : i32
    %c0_i32_1 = arith.constant 0 : i32
    return %c0_i32, %c0_i32_0 : i32, i32
  }
  func.func @transform_2(%arg0: i32) -> (i32, i32) {
    %c0_i32 = arith.constant 0 : i32
    %c0_i32_0 = arith.constant 0 : i32
    %c0_i32_1 = arith.constant 0 : i32
    return %c0_i32, %c0_i32_0 : i32, i32
  }
  func.func @transform_3(%arg0: i32) -> (i32, i32, i32) {
    %c0_i32 = arith.constant 0 : i32
    %c0_i32_0 = arith.constant 0 : i32
    %c0_i32_1 = arith.constant 0 : i32
    %c0_i32_2 = arith.constant 0 : i32
    return %c0_i32, %c0_i32_0, %c0_i32_1 : i32, i32, i32
  }
  func.func @transform_4(%arg0: i32) -> (i32, i32, i32) {
    %c0_i32 = arith.constant 0 : i32
    %c0_i32_0 = arith.constant 0 : i32
    %c0_i32_1 = arith.constant 0 : i32
    %c0_i32_2 = arith.constant 0 : i32
    return %c0_i32, %c0_i32_0, %c0_i32_1 : i32, i32, i32
  }
  func.func @transform_5(%arg0: i32) -> (i32, i32, i32) {
    %c0_i32 = arith.constant 0 : i32
    %c0_i32_0 = arith.constant 0 : i32
    %c0_i32_1 = arith.constant 0 : i32
    %c0_i32_2 = arith.constant 0 : i32
    return %c0_i32, %c0_i32_0, %c0_i32_1 : i32, i32, i32
  }
  func.func @transform_6(%arg0: i32) -> (i32, i32, i32) {
    %c0_i32 = arith.constant 0 : i32
    %c0_i32_0 = arith.constant 0 : i32
    %c0_i32_1 = arith.constant 0 : i32
    %c0_i32_2 = arith.constant 0 : i32
    return %c0_i32, %c0_i32_0, %c0_i32_1 : i32, i32, i32
  }
  func.func @transform_7(%arg0: i32) -> (i32, i32, i32) {
    %c0_i32 = arith.constant 0 : i32
    %c0_i32_0 = arith.constant 0 : i32
    %c0_i32_1 = arith.constant 0 : i32
    %c0_i32_2 = arith.constant 0 : i32
    return %c0_i32, %c0_i32_0, %c0_i32_1 : i32, i32, i32
  }
  func.func @transform_8(%arg0: i32) -> (i32, i32, i32) {
    %c0_i32 = arith.constant 0 : i32
    %c0_i32_0 = arith.constant 0 : i32
    %c0_i32_1 = arith.constant 0 : i32
    %c0_i32_2 = arith.constant 0 : i32
    return %c0_i32, %c0_i32_0, %c0_i32_1 : i32, i32, i32
  }
  func.func @transform_9(%arg0: i32) -> (i32, i32, i32) {
    %c0_i32 = arith.constant 0 : i32
    %c0_i32_0 = arith.constant 0 : i32
    %c0_i32_1 = arith.constant 0 : i32
    %c0_i32_2 = arith.constant 0 : i32
    return %c0_i32, %c0_i32_0, %c0_i32_1 : i32, i32, i32
  }
  func.func @transform_10(%arg0: i32) -> (i32, i32, i32) {
    %c0_i32 = arith.constant 0 : i32
    %c0_i32_0 = arith.constant 0 : i32
    %c0_i32_1 = arith.constant 0 : i32
    %c0_i32_2 = arith.constant 0 : i32
    return %c0_i32, %c0_i32_0, %c0_i32_1 : i32, i32, i32
  }
  func.func @transform_11(%arg0: i32) -> (i32, i32, i32) {
    %c0_i32 = arith.constant 0 : i32
    %c0_i32_0 = arith.constant 0 : i32
    %c0_i32_1 = arith.constant 0 : i32
    %c0_i32_2 = arith.constant 0 : i32
    return %c0_i32, %c0_i32_0, %c0_i32_1 : i32, i32, i32
  }
  func.func @transform_12(%arg0: i32) -> (i32, i32, i32) {
    %c0_i32 = arith.constant 0 : i32
    %c0_i32_0 = arith.constant 0 : i32
    %c0_i32_1 = arith.constant 0 : i32
    %c0_i32_2 = arith.constant 0 : i32
    return %c0_i32, %c0_i32_0, %c0_i32_1 : i32, i32, i32
  }
  func.func @transform_13(%arg0: i32) -> (i32, i32, i32) {
    %c0_i32 = arith.constant 0 : i32
    %c0_i32_0 = arith.constant 0 : i32
    %c0_i32_1 = arith.constant 0 : i32
    %c0_i32_2 = arith.constant 0 : i32
    return %c0_i32, %c0_i32_0, %c0_i32_1 : i32, i32, i32
  }
  func.func @transform_14(%arg0: i32) -> (i32, i32, i32) {
    %c0_i32 = arith.constant 0 : i32
    %c0_i32_0 = arith.constant 0 : i32
    %c0_i32_1 = arith.constant 0 : i32
    %c0_i32_2 = arith.constant 0 : i32
    return %c0_i32, %c0_i32_0, %c0_i32_1 : i32, i32, i32
  }
  func.func @transform_15(%arg0: i32) -> (i32, i32) {
    %c0_i32 = arith.constant 0 : i32
    %c0_i32_0 = arith.constant 0 : i32
    %c0_i32_1 = arith.constant 0 : i32
    return %c0_i32, %c0_i32_0 : i32, i32
  }
  func.func @transform_16(%arg0: i32) -> (i32, i32) {
    %c0_i32 = arith.constant 0 : i32
    %c0_i32_0 = arith.constant 0 : i32
    %c0_i32_1 = arith.constant 0 : i32
    return %c0_i32, %c0_i32_0 : i32, i32
  }
  func.func @transform_17(%arg0: i32) -> (i32, i32, i32) {
    %c0_i32 = arith.constant 0 : i32
    %c0_i32_0 = arith.constant 0 : i32
    %c0_i32_1 = arith.constant 0 : i32
    %c0_i32_2 = arith.constant 0 : i32
    return %c0_i32, %c0_i32_0, %c0_i32_1 : i32, i32, i32
  }
  func.func @transform_18(%arg0: i32) -> (i32, i32, i32) {
    %c0_i32 = arith.constant 0 : i32
    %c0_i32_0 = arith.constant 0 : i32
    %c0_i32_1 = arith.constant 0 : i32
    %c0_i32_2 = arith.constant 0 : i32
    return %c0_i32, %c0_i32_0, %c0_i32_1 : i32, i32, i32
  }
  func.func @transform_19(%arg0: i32) -> (i32, i32) {
    %c0_i32 = arith.constant 0 : i32
    %c0_i32_0 = arith.constant 0 : i32
    %c0_i32_1 = arith.constant 0 : i32
    return %c0_i32, %c0_i32_0 : i32, i32
  }
  func.func @transform_20(%arg0: i32) -> (i32, i32) {
    %c0_i32 = arith.constant 0 : i32
    %c0_i32_0 = arith.constant 0 : i32
    %c0_i32_1 = arith.constant 0 : i32
    return %c0_i32, %c0_i32_0 : i32, i32
  }
  func.func @transform_21(%arg0: i32) -> (i32, i32) {
    %c0_i32 = arith.constant 0 : i32
    %c0_i32_0 = arith.constant 0 : i32
    return %arg0, %c0_i32 : i32, i32
  }
}

module attributes {stable_mosaic.version = 11 : i64} {
  func.func @_mixer_kernel_resident(%arg0: i32, %arg1: memref<128x128xbf16, #tpu.memory_space<vmem>>, %arg2: memref<128x32xbf16, #tpu.memory_space<vmem>>, %arg3: memref<1x32xf32, #tpu.memory_space<vmem>>, %arg4: memref<2x1x32xf32, #tpu.memory_space<vmem>>, %arg5: memref<2x1x32xf32, #tpu.memory_space<vmem>>, %arg6: memref<2x16x16xbf16, #tpu.memory_space<vmem>>, %arg7: memref<2x16x1xf32, #tpu.memory_space<vmem>>, %arg8: memref<2x16x16xbf16, #tpu.memory_space<vmem>>, %arg9: memref<2x16x1xf32, #tpu.memory_space<vmem>>, %arg10: memref<2x1x32xf32, #tpu.memory_space<vmem>>, %arg11: memref<2x1x32xf32, #tpu.memory_space<vmem>>, %arg12: memref<2x32x128xbf16, #tpu.memory_space<vmem>>, %arg13: memref<2x1x128xf32, #tpu.memory_space<vmem>>, %arg14: memref<2x128x32xbf16, #tpu.memory_space<vmem>>, %arg15: memref<2x1x32xf32, #tpu.memory_space<vmem>>, %arg16: memref<1x32xf32, #tpu.memory_space<vmem>>, %arg17: memref<1x32xf32, #tpu.memory_space<vmem>>, %arg18: memref<1x32x32xbf16, #tpu.memory_space<vmem>>, %arg19: memref<1x1x32xf32, #tpu.memory_space<vmem>>, %arg20: memref<32x128xbf16, #tpu.memory_space<vmem>>, %arg21: memref<1x128xf32, #tpu.memory_space<vmem>>, %arg22: memref<128x128xf32, #tpu.memory_space<vmem>>) attributes {dimension_semantics = [#tpu.dimension_semantics<parallel>], iteration_bounds = array<i64: 1>, scalar_prefetch = 0 : i64, scratch_operands = 0 : i64, tpu.core_type = #tpu.core_type<tc>, window_params = [{transform_indices = @transform_0, window_bounds = array<i64: 128, 128>}, {pipeline_mode = #tpu.pipeline_mode<synchronous>, transform_indices = @transform_1, window_bounds = array<i64: 128, 32>}, {pipeline_mode = #tpu.pipeline_mode<synchronous>, transform_indices = @transform_2, window_bounds = array<i64: 1, 32>}, {pipeline_mode = #tpu.pipeline_mode<synchronous>, transform_indices = @transform_3, window_bounds = array<i64: 2, 1, 32>}, {pipeline_mode = #tpu.pipeline_mode<synchronous>, transform_indices = @transform_4, window_bounds = array<i64: 2, 1, 32>}, {pipeline_mode = #tpu.pipeline_mode<synchronous>, transform_indices = @transform_5, window_bounds = array<i64: 2, 16, 16>}, {pipeline_mode = #tpu.pipeline_mode<synchronous>, transform_indices = @transform_6, window_bounds = array<i64: 2, 16, 1>}, {pipeline_mode = #tpu.pipeline_mode<synchronous>, transform_indices = @transform_7, window_bounds = array<i64: 2, 16, 16>}, {pipeline_mode = #tpu.pipeline_mode<synchronous>, transform_indices = @transform_8, window_bounds = array<i64: 2, 16, 1>}, {pipeline_mode = #tpu.pipeline_mode<synchronous>, transform_indices = @transform_9, window_bounds = array<i64: 2, 1, 32>}, {pipeline_mode = #tpu.pipeline_mode<synchronous>, transform_indices = @transform_10, window_bounds = array<i64: 2, 1, 32>}, {pipeline_mode = #tpu.pipeline_mode<synchronous>, transform_indices = @transform_11, window_bounds = array<i64: 2, 32, 128>}, {pipeline_mode = #tpu.pipeline_mode<synchronous>, transform_indices = @transform_12, window_bounds = array<i64: 2, 1, 128>}, {pipeline_mode = #tpu.pipeline_mode<synchronous>, transform_indices = @transform_13, window_bounds = array<i64: 2, 128, 32>}, {pipeline_mode = #tpu.pipeline_mode<synchronous>, transform_indices = @transform_14, window_bounds = array<i64: 2, 1, 32>}, {pipeline_mode = #tpu.pipeline_mode<synchronous>, transform_indices = @transform_15, window_bounds = array<i64: 1, 32>}, {pipeline_mode = #tpu.pipeline_mode<synchronous>, transform_indices = @transform_16, window_bounds = array<i64: 1, 32>}, {pipeline_mode = #tpu.pipeline_mode<synchronous>, transform_indices = @transform_17, window_bounds = array<i64: 1, 32, 32>}, {pipeline_mode = #tpu.pipeline_mode<synchronous>, transform_indices = @transform_18, window_bounds = array<i64: 1, 1, 32>}, {pipeline_mode = #tpu.pipeline_mode<synchronous>, transform_indices = @transform_19, window_bounds = array<i64: 32, 128>}, {pipeline_mode = #tpu.pipeline_mode<synchronous>, transform_indices = @transform_20, window_bounds = array<i64: 1, 128>}, {transform_indices = @transform_21, window_bounds = array<i64: 128, 128>}]} {
    %c0 = arith.constant 0 : index
    %c0_0 = arith.constant 0 : index
    %0 = vector.load %arg1[%c0, %c0_0] : memref<128x128xbf16, #tpu.memory_space<vmem>>, vector<128x128xbf16>
    %c0_1 = arith.constant 0 : index
    %c0_2 = arith.constant 0 : index
    %1 = vector.load %arg2[%c0_1, %c0_2] : memref<128x32xbf16, #tpu.memory_space<vmem>>, vector<128x32xbf16>
    %cst = arith.constant dense<0.000000e+00> : vector<128x32xf32>
    %2 = tpu.matmul %0, %1, %cst {dimension_numbers = #tpu.dot_dimension_numbers<[1], [0], [0], [1], [0, 0, 1, 1], [], []>} : vector<128x128xbf16>, vector<128x32xbf16>, vector<128x32xf32> -> vector<128x32xf32>
    %c0_3 = arith.constant 0 : index
    %c0_4 = arith.constant 0 : index
    %3 = vector.load %arg3[%c0_3, %c0_4] : memref<1x32xf32, #tpu.memory_space<vmem>>, vector<1x32xf32>
    %4 = vector.broadcast %3 : vector<1x32xf32> to vector<128x32xf32>
    %5 = arith.addf %2, %4 : vector<128x32xf32>
    %c0_i32 = arith.constant 0 : i32
    %c2_i32 = arith.constant 2 : i32
    %6 = arith.addi %c0_i32, %c2_i32 : i32
    %c1_i32 = arith.constant 1 : i32
    %7 = scf.for %arg23 = %c0_i32 to %6 step %c1_i32 iter_args(%arg24 = %5) -> (vector<128x32xf32>)  : i32 {
      %60 = arith.index_cast %arg23 : i32 to index
      %c0_33 = arith.constant 0 : index
      %c0_34 = arith.constant 0 : index
      %61 = vector.load %arg4[%60, %c0_33, %c0_34] : memref<2x1x32xf32, #tpu.memory_space<vmem>>, vector<1x1x32xf32>
      %62 = vector.shape_cast %61 : vector<1x1x32xf32> to vector<1x32xf32>
      %63 = arith.index_cast %arg23 : i32 to index
      %c0_35 = arith.constant 0 : index
      %c0_36 = arith.constant 0 : index
      %64 = vector.load %arg5[%63, %c0_35, %c0_36] : memref<2x1x32xf32, #tpu.memory_space<vmem>>, vector<1x1x32xf32>
      %65 = vector.shape_cast %64 : vector<1x1x32xf32> to vector<1x32xf32>
      %66 = arith.index_cast %arg23 : i32 to index
      %c0_37 = arith.constant 0 : index
      %c0_38 = arith.constant 0 : index
      %67 = vector.load %arg6[%66, %c0_37, %c0_38] : memref<2x16x16xbf16, #tpu.memory_space<vmem>>, vector<1x16x16xbf16>
      %68 = vector.shape_cast %67 : vector<1x16x16xbf16> to vector<16x16xbf16>
      %69 = arith.index_cast %arg23 : i32 to index
      %c0_39 = arith.constant 0 : index
      %c0_40 = arith.constant 0 : index
      %70 = vector.load %arg7[%69, %c0_39, %c0_40] : memref<2x16x1xf32, #tpu.memory_space<vmem>>, vector<1x16x1xf32>
      %71 = vector.shape_cast %70 : vector<1x16x1xf32> to vector<16x1xf32>
      %72 = arith.index_cast %arg23 : i32 to index
      %c0_41 = arith.constant 0 : index
      %c0_42 = arith.constant 0 : index
      %73 = vector.load %arg8[%72, %c0_41, %c0_42] : memref<2x16x16xbf16, #tpu.memory_space<vmem>>, vector<1x16x16xbf16>
      %74 = vector.shape_cast %73 : vector<1x16x16xbf16> to vector<16x16xbf16>
      %75 = arith.index_cast %arg23 : i32 to index
      %c0_43 = arith.constant 0 : index
      %c0_44 = arith.constant 0 : index
      %76 = vector.load %arg9[%75, %c0_43, %c0_44] : memref<2x16x1xf32, #tpu.memory_space<vmem>>, vector<1x16x1xf32>
      %77 = vector.shape_cast %76 : vector<1x16x1xf32> to vector<16x1xf32>
      %78 = arith.index_cast %arg23 : i32 to index
      %c0_45 = arith.constant 0 : index
      %c0_46 = arith.constant 0 : index
      %79 = vector.load %arg10[%78, %c0_45, %c0_46] : memref<2x1x32xf32, #tpu.memory_space<vmem>>, vector<1x1x32xf32>
      %80 = vector.shape_cast %79 : vector<1x1x32xf32> to vector<1x32xf32>
      %81 = arith.index_cast %arg23 : i32 to index
      %c0_47 = arith.constant 0 : index
      %c0_48 = arith.constant 0 : index
      %82 = vector.load %arg11[%81, %c0_47, %c0_48] : memref<2x1x32xf32, #tpu.memory_space<vmem>>, vector<1x1x32xf32>
      %83 = vector.shape_cast %82 : vector<1x1x32xf32> to vector<1x32xf32>
      %84 = arith.index_cast %arg23 : i32 to index
      %c0_49 = arith.constant 0 : index
      %c0_50 = arith.constant 0 : index
      %85 = vector.load %arg12[%84, %c0_49, %c0_50] : memref<2x32x128xbf16, #tpu.memory_space<vmem>>, vector<1x32x128xbf16>
      %86 = vector.shape_cast %85 : vector<1x32x128xbf16> to vector<32x128xbf16>
      %87 = arith.index_cast %arg23 : i32 to index
      %c0_51 = arith.constant 0 : index
      %c0_52 = arith.constant 0 : index
      %88 = vector.load %arg13[%87, %c0_51, %c0_52] : memref<2x1x128xf32, #tpu.memory_space<vmem>>, vector<1x1x128xf32>
      %89 = vector.shape_cast %88 : vector<1x1x128xf32> to vector<1x128xf32>
      %90 = arith.index_cast %arg23 : i32 to index
      %c0_53 = arith.constant 0 : index
      %c0_54 = arith.constant 0 : index
      %91 = vector.load %arg14[%90, %c0_53, %c0_54] : memref<2x128x32xbf16, #tpu.memory_space<vmem>>, vector<1x128x32xbf16>
      %92 = vector.shape_cast %91 : vector<1x128x32xbf16> to vector<128x32xbf16>
      %93 = arith.index_cast %arg23 : i32 to index
      %c0_55 = arith.constant 0 : index
      %c0_56 = arith.constant 0 : index
      %94 = vector.load %arg15[%93, %c0_55, %c0_56] : memref<2x1x32xf32, #tpu.memory_space<vmem>>, vector<1x1x32xf32>
      %95 = vector.shape_cast %94 : vector<1x1x32xf32> to vector<1x32xf32>
      %cst_57 = arith.constant dense<0.000000e+00> : vector<128xf32>
      %96 = vector.multi_reduction <add>, %arg24, %cst_57 [1] : vector<128x32xf32> to vector<128xf32>
      %97 = vector.shape_cast %96 : vector<128xf32> to vector<128x1xf32>
      %cst_58 = arith.constant 3.200000e+01 : f32
      %98 = vector.broadcast %cst_58 : f32 to vector<128x1xf32>
      %99 = arith.divf %97, %98 : vector<128x1xf32>
      %100 = arith.mulf %arg24, %arg24 : vector<128x32xf32>
      %cst_59 = arith.constant dense<0.000000e+00> : vector<128xf32>
      %101 = vector.multi_reduction <add>, %100, %cst_59 [1] : vector<128x32xf32> to vector<128xf32>
      %102 = vector.shape_cast %101 : vector<128xf32> to vector<128x1xf32>
      %cst_60 = arith.constant 3.200000e+01 : f32
      %103 = vector.broadcast %cst_60 : f32 to vector<128x1xf32>
      %104 = arith.divf %102, %103 : vector<128x1xf32>
      %105 = arith.mulf %99, %99 : vector<128x1xf32>
      %106 = arith.subf %104, %105 : vector<128x1xf32>
      %107 = vector.broadcast %99 : vector<128x1xf32> to vector<128x32xf32>
      %108 = arith.subf %arg24, %107 : vector<128x32xf32>
      %cst_61 = arith.constant 9.99999997E-7 : f32
      %109 = vector.broadcast %cst_61 : f32 to vector<128x1xf32>
      %110 = arith.addf %106, %109 : vector<128x1xf32>
      %111 = math.rsqrt %110 : vector<128x1xf32>
      %112 = vector.broadcast %111 : vector<128x1xf32> to vector<128x32xf32>
      %113 = arith.mulf %108, %112 : vector<128x32xf32>
      %114 = vector.broadcast %62 : vector<1x32xf32> to vector<128x32xf32>
      %115 = arith.mulf %113, %114 : vector<128x32xf32>
      %116 = vector.broadcast %65 : vector<1x32xf32> to vector<128x32xf32>
      %117 = arith.addf %115, %116 : vector<128x32xf32>
      %118 = arith.truncf %117 : vector<128x32xf32> to vector<128x32xbf16>
      %119 = vector.shape_cast %118 : vector<128x32xbf16> to vector<8x16x32xbf16>
      %120 = vector.shape_cast %68 : vector<16x16xbf16> to vector<1x16x16xbf16>
      %121 = vector.broadcast %120 : vector<1x16x16xbf16> to vector<8x16x16xbf16>
      %122 = vector.shape_cast %74 : vector<16x16xbf16> to vector<1x16x16xbf16>
      %123 = vector.broadcast %122 : vector<1x16x16xbf16> to vector<8x16x16xbf16>
      %cst_62 = arith.constant dense<0.000000e+00> : vector<8x16x32xf32>
      %124 = tpu.matmul %121, %119, %cst_62 {dimension_numbers = #tpu.dot_dimension_numbers<[2], [1], [1], [2], [0, 0, 0, 1, 1, 2], [0], [0]>} : vector<8x16x16xbf16>, vector<8x16x32xbf16>, vector<8x16x32xf32> -> vector<8x16x32xf32>
      %125 = vector.shape_cast %71 : vector<16x1xf32> to vector<1x16x1xf32>
      %126 = vector.broadcast %125 : vector<1x16x1xf32> to vector<8x16x32xf32>
      %127 = arith.addf %124, %126 : vector<8x16x32xf32>
      %128 = arith.mulf %127, %127 : vector<8x16x32xf32>
      %129 = arith.mulf %127, %128 : vector<8x16x32xf32>
      %cst_63 = arith.constant 4.471500e-02 : f32
      %130 = vector.broadcast %cst_63 : f32 to vector<8x16x32xf32>
      %131 = arith.mulf %130, %129 : vector<8x16x32xf32>
      %132 = arith.addf %127, %131 : vector<8x16x32xf32>
      %cst_64 = arith.constant 0.797884583 : f32
      %133 = vector.broadcast %cst_64 : f32 to vector<8x16x32xf32>
      %134 = arith.mulf %133, %132 : vector<8x16x32xf32>
      %135 = math.tanh %134 : vector<8x16x32xf32>
      %cst_65 = arith.constant 1.000000e+00 : f32
      %136 = vector.broadcast %cst_65 : f32 to vector<8x16x32xf32>
      %137 = arith.addf %136, %135 : vector<8x16x32xf32>
      %cst_66 = arith.constant 5.000000e-01 : f32
      %138 = vector.broadcast %cst_66 : f32 to vector<8x16x32xf32>
      %139 = arith.mulf %138, %137 : vector<8x16x32xf32>
      %140 = arith.mulf %127, %139 : vector<8x16x32xf32>
      %141 = arith.truncf %140 : vector<8x16x32xf32> to vector<8x16x32xbf16>
      %cst_67 = arith.constant dense<0.000000e+00> : vector<8x16x32xf32>
      %142 = tpu.matmul %123, %141, %cst_67 {dimension_numbers = #tpu.dot_dimension_numbers<[2], [1], [1], [2], [0, 0, 0, 1, 1, 2], [0], [0]>} : vector<8x16x16xbf16>, vector<8x16x32xbf16>, vector<8x16x32xf32> -> vector<8x16x32xf32>
      %143 = vector.shape_cast %77 : vector<16x1xf32> to vector<1x16x1xf32>
      %144 = vector.broadcast %143 : vector<1x16x1xf32> to vector<8x16x32xf32>
      %145 = arith.addf %142, %144 : vector<8x16x32xf32>
      %146 = vector.shape_cast %145 : vector<8x16x32xf32> to vector<128x32xf32>
      %147 = arith.addf %arg24, %146 : vector<128x32xf32>
      %cst_68 = arith.constant dense<0.000000e+00> : vector<128xf32>
      %148 = vector.multi_reduction <add>, %147, %cst_68 [1] : vector<128x32xf32> to vector<128xf32>
      %149 = vector.shape_cast %148 : vector<128xf32> to vector<128x1xf32>
      %cst_69 = arith.constant 3.200000e+01 : f32
      %150 = vector.broadcast %cst_69 : f32 to vector<128x1xf32>
      %151 = arith.divf %149, %150 : vector<128x1xf32>
      %152 = arith.mulf %147, %147 : vector<128x32xf32>
      %cst_70 = arith.constant dense<0.000000e+00> : vector<128xf32>
      %153 = vector.multi_reduction <add>, %152, %cst_70 [1] : vector<128x32xf32> to vector<128xf32>
      %154 = vector.shape_cast %153 : vector<128xf32> to vector<128x1xf32>
      %cst_71 = arith.constant 3.200000e+01 : f32
      %155 = vector.broadcast %cst_71 : f32 to vector<128x1xf32>
      %156 = arith.divf %154, %155 : vector<128x1xf32>
      %157 = arith.mulf %151, %151 : vector<128x1xf32>
      %158 = arith.subf %156, %157 : vector<128x1xf32>
      %159 = vector.broadcast %151 : vector<128x1xf32> to vector<128x32xf32>
      %160 = arith.subf %147, %159 : vector<128x32xf32>
      %cst_72 = arith.constant 9.99999997E-7 : f32
      %161 = vector.broadcast %cst_72 : f32 to vector<128x1xf32>
      %162 = arith.addf %158, %161 : vector<128x1xf32>
      %163 = math.rsqrt %162 : vector<128x1xf32>
      %164 = vector.broadcast %163 : vector<128x1xf32> to vector<128x32xf32>
      %165 = arith.mulf %160, %164 : vector<128x32xf32>
      %166 = vector.broadcast %80 : vector<1x32xf32> to vector<128x32xf32>
      %167 = arith.mulf %165, %166 : vector<128x32xf32>
      %168 = vector.broadcast %83 : vector<1x32xf32> to vector<128x32xf32>
      %169 = arith.addf %167, %168 : vector<128x32xf32>
      %170 = arith.truncf %169 : vector<128x32xf32> to vector<128x32xbf16>
      %cst_73 = arith.constant dense<0.000000e+00> : vector<128x128xf32>
      %171 = tpu.matmul %170, %86, %cst_73 {dimension_numbers = #tpu.dot_dimension_numbers<[1], [0], [0], [1], [0, 0, 1, 1], [], []>} : vector<128x32xbf16>, vector<32x128xbf16>, vector<128x128xf32> -> vector<128x128xf32>
      %172 = vector.broadcast %89 : vector<1x128xf32> to vector<128x128xf32>
      %173 = arith.addf %171, %172 : vector<128x128xf32>
      %174 = arith.mulf %173, %173 : vector<128x128xf32>
      %175 = arith.mulf %173, %174 : vector<128x128xf32>
      %cst_74 = arith.constant 4.471500e-02 : f32
      %176 = vector.broadcast %cst_74 : f32 to vector<128x128xf32>
      %177 = arith.mulf %176, %175 : vector<128x128xf32>
      %178 = arith.addf %173, %177 : vector<128x128xf32>
      %cst_75 = arith.constant 0.797884583 : f32
      %179 = vector.broadcast %cst_75 : f32 to vector<128x128xf32>
      %180 = arith.mulf %179, %178 : vector<128x128xf32>
      %181 = math.tanh %180 : vector<128x128xf32>
      %cst_76 = arith.constant 1.000000e+00 : f32
      %182 = vector.broadcast %cst_76 : f32 to vector<128x128xf32>
      %183 = arith.addf %182, %181 : vector<128x128xf32>
      %cst_77 = arith.constant 5.000000e-01 : f32
      %184 = vector.broadcast %cst_77 : f32 to vector<128x128xf32>
      %185 = arith.mulf %184, %183 : vector<128x128xf32>
      %186 = arith.mulf %173, %185 : vector<128x128xf32>
      %187 = arith.truncf %186 : vector<128x128xf32> to vector<128x128xbf16>
      %cst_78 = arith.constant dense<0.000000e+00> : vector<128x32xf32>
      %188 = tpu.matmul %187, %92, %cst_78 {dimension_numbers = #tpu.dot_dimension_numbers<[1], [0], [0], [1], [0, 0, 1, 1], [], []>} : vector<128x128xbf16>, vector<128x32xbf16>, vector<128x32xf32> -> vector<128x32xf32>
      %189 = vector.broadcast %95 : vector<1x32xf32> to vector<128x32xf32>
      %190 = arith.addf %188, %189 : vector<128x32xf32>
      %191 = arith.addf %147, %190 : vector<128x32xf32>
      scf.yield %191 : vector<128x32xf32>
    }
    %c2_i32_5 = arith.constant 2 : i32
    %c0_6 = arith.constant 0 : index
    %c0_7 = arith.constant 0 : index
    %8 = vector.load %arg16[%c0_6, %c0_7] : memref<1x32xf32, #tpu.memory_space<vmem>>, vector<1x32xf32>
    %c0_8 = arith.constant 0 : index
    %c0_9 = arith.constant 0 : index
    %9 = vector.load %arg17[%c0_8, %c0_9] : memref<1x32xf32, #tpu.memory_space<vmem>>, vector<1x32xf32>
    %c0_10 = arith.constant 0 : index
    %c0_11 = arith.constant 0 : index
    %10 = vector.load %arg20[%c0_10, %c0_11] : memref<32x128xbf16, #tpu.memory_space<vmem>>, vector<32x128xbf16>
    %c0_12 = arith.constant 0 : index
    %c0_13 = arith.constant 0 : index
    %11 = vector.load %arg21[%c0_12, %c0_13] : memref<1x128xf32, #tpu.memory_space<vmem>>, vector<1x128xf32>
    %cst_14 = arith.constant dense<0.000000e+00> : vector<128xf32>
    %12 = vector.multi_reduction <add>, %7, %cst_14 [1] : vector<128x32xf32> to vector<128xf32>
    %13 = vector.shape_cast %12 : vector<128xf32> to vector<128x1xf32>
    %cst_15 = arith.constant 3.200000e+01 : f32
    %14 = vector.broadcast %cst_15 : f32 to vector<128x1xf32>
    %15 = arith.divf %13, %14 : vector<128x1xf32>
    %16 = arith.mulf %7, %7 : vector<128x32xf32>
    %cst_16 = arith.constant dense<0.000000e+00> : vector<128xf32>
    %17 = vector.multi_reduction <add>, %16, %cst_16 [1] : vector<128x32xf32> to vector<128xf32>
    %18 = vector.shape_cast %17 : vector<128xf32> to vector<128x1xf32>
    %cst_17 = arith.constant 3.200000e+01 : f32
    %19 = vector.broadcast %cst_17 : f32 to vector<128x1xf32>
    %20 = arith.divf %18, %19 : vector<128x1xf32>
    %21 = arith.mulf %15, %15 : vector<128x1xf32>
    %22 = arith.subf %20, %21 : vector<128x1xf32>
    %23 = vector.broadcast %15 : vector<128x1xf32> to vector<128x32xf32>
    %24 = arith.subf %7, %23 : vector<128x32xf32>
    %cst_18 = arith.constant 9.99999997E-7 : f32
    %25 = vector.broadcast %cst_18 : f32 to vector<128x1xf32>
    %26 = arith.addf %22, %25 : vector<128x1xf32>
    %27 = math.rsqrt %26 : vector<128x1xf32>
    %28 = vector.broadcast %27 : vector<128x1xf32> to vector<128x32xf32>
    %29 = arith.mulf %24, %28 : vector<128x32xf32>
    %30 = vector.broadcast %8 : vector<1x32xf32> to vector<128x32xf32>
    %31 = arith.mulf %29, %30 : vector<128x32xf32>
    %32 = vector.broadcast %9 : vector<1x32xf32> to vector<128x32xf32>
    %33 = arith.addf %31, %32 : vector<128x32xf32>
    %34 = arith.truncf %33 : vector<128x32xf32> to vector<128x32xbf16>
    %c0_19 = arith.constant 0 : index
    %c0_20 = arith.constant 0 : index
    %c0_21 = arith.constant 0 : index
    %35 = vector.load %arg18[%c0_19, %c0_20, %c0_21] : memref<1x32x32xbf16, #tpu.memory_space<vmem>>, vector<1x32x32xbf16>
    %36 = vector.shape_cast %35 : vector<1x32x32xbf16> to vector<32x32xbf16>
    %cst_22 = arith.constant dense<0.000000e+00> : vector<128x32xf32>
    %37 = tpu.matmul %34, %36, %cst_22 {dimension_numbers = #tpu.dot_dimension_numbers<[1], [0], [0], [1], [0, 0, 1, 1], [], []>} : vector<128x32xbf16>, vector<32x32xbf16>, vector<128x32xf32> -> vector<128x32xf32>
    %c0_23 = arith.constant 0 : index
    %c0_24 = arith.constant 0 : index
    %c0_25 = arith.constant 0 : index
    %38 = vector.load %arg19[%c0_23, %c0_24, %c0_25] : memref<1x1x32xf32, #tpu.memory_space<vmem>>, vector<1x1x32xf32>
    %39 = vector.shape_cast %38 : vector<1x1x32xf32> to vector<1x32xf32>
    %40 = vector.broadcast %39 : vector<1x32xf32> to vector<128x32xf32>
    %41 = arith.addf %37, %40 : vector<128x32xf32>
    %42 = arith.mulf %41, %41 : vector<128x32xf32>
    %43 = arith.mulf %41, %42 : vector<128x32xf32>
    %cst_26 = arith.constant 4.471500e-02 : f32
    %44 = vector.broadcast %cst_26 : f32 to vector<128x32xf32>
    %45 = arith.mulf %44, %43 : vector<128x32xf32>
    %46 = arith.addf %41, %45 : vector<128x32xf32>
    %cst_27 = arith.constant 0.797884583 : f32
    %47 = vector.broadcast %cst_27 : f32 to vector<128x32xf32>
    %48 = arith.mulf %47, %46 : vector<128x32xf32>
    %49 = math.tanh %48 : vector<128x32xf32>
    %cst_28 = arith.constant 1.000000e+00 : f32
    %50 = vector.broadcast %cst_28 : f32 to vector<128x32xf32>
    %51 = arith.addf %50, %49 : vector<128x32xf32>
    %cst_29 = arith.constant 5.000000e-01 : f32
    %52 = vector.broadcast %cst_29 : f32 to vector<128x32xf32>
    %53 = arith.mulf %52, %51 : vector<128x32xf32>
    %54 = arith.mulf %41, %53 : vector<128x32xf32>
    %55 = arith.truncf %54 : vector<128x32xf32> to vector<128x32xbf16>
    %cst_30 = arith.constant dense<0.000000e+00> : vector<128x128xf32>
    %56 = tpu.matmul %55, %10, %cst_30 {dimension_numbers = #tpu.dot_dimension_numbers<[1], [0], [0], [1], [0, 0, 1, 1], [], []>} : vector<128x32xbf16>, vector<32x128xbf16>, vector<128x128xf32> -> vector<128x128xf32>
    %57 = vector.broadcast %11 : vector<1x128xf32> to vector<128x128xf32>
    %58 = arith.addf %56, %57 : vector<128x128xf32>
    %c0_31 = arith.constant 0 : index
    %c0_32 = arith.constant 0 : index
    %59 = vector.load %arg22[%c0_31, %c0_32] : memref<128x128xf32, #tpu.memory_space<vmem>>, vector<128x128xf32>
    tpu.vector_store %arg22[%c0_31, %c0_32], %58 {strides = array<i32>} : memref<128x128xf32, #tpu.memory_space<vmem>>, vector<128x128xf32>,
    return
  }
  func.func @transform_0(%arg0: i32) -> (i32, i32) {
    %c0_i32 = arith.constant 0 : i32
    %c0_i32_0 = arith.constant 0 : i32
    return %arg0, %c0_i32 : i32, i32
  }
  func.func @transform_1(%arg0: i32) -> (i32, i32) {
    %c0_i32 = arith.constant 0 : i32
    %c0_i32_0 = arith.constant 0 : i32
    %c0_i32_1 = arith.constant 0 : i32
    return %c0_i32, %c0_i32_0 : i32, i32
  }
  func.func @transform_2(%arg0: i32) -> (i32, i32) {
    %c0_i32 = arith.constant 0 : i32
    %c0_i32_0 = arith.constant 0 : i32
    %c0_i32_1 = arith.constant 0 : i32
    return %c0_i32, %c0_i32_0 : i32, i32
  }
  func.func @transform_3(%arg0: i32) -> (i32, i32, i32) {
    %c0_i32 = arith.constant 0 : i32
    %c0_i32_0 = arith.constant 0 : i32
    %c0_i32_1 = arith.constant 0 : i32
    %c0_i32_2 = arith.constant 0 : i32
    return %c0_i32, %c0_i32_0, %c0_i32_1 : i32, i32, i32
  }
  func.func @transform_4(%arg0: i32) -> (i32, i32, i32) {
    %c0_i32 = arith.constant 0 : i32
    %c0_i32_0 = arith.constant 0 : i32
    %c0_i32_1 = arith.constant 0 : i32
    %c0_i32_2 = arith.constant 0 : i32
    return %c0_i32, %c0_i32_0, %c0_i32_1 : i32, i32, i32
  }
  func.func @transform_5(%arg0: i32) -> (i32, i32, i32) {
    %c0_i32 = arith.constant 0 : i32
    %c0_i32_0 = arith.constant 0 : i32
    %c0_i32_1 = arith.constant 0 : i32
    %c0_i32_2 = arith.constant 0 : i32
    return %c0_i32, %c0_i32_0, %c0_i32_1 : i32, i32, i32
  }
  func.func @transform_6(%arg0: i32) -> (i32, i32, i32) {
    %c0_i32 = arith.constant 0 : i32
    %c0_i32_0 = arith.constant 0 : i32
    %c0_i32_1 = arith.constant 0 : i32
    %c0_i32_2 = arith.constant 0 : i32
    return %c0_i32, %c0_i32_0, %c0_i32_1 : i32, i32, i32
  }
  func.func @transform_7(%arg0: i32) -> (i32, i32, i32) {
    %c0_i32 = arith.constant 0 : i32
    %c0_i32_0 = arith.constant 0 : i32
    %c0_i32_1 = arith.constant 0 : i32
    %c0_i32_2 = arith.constant 0 : i32
    return %c0_i32, %c0_i32_0, %c0_i32_1 : i32, i32, i32
  }
  func.func @transform_8(%arg0: i32) -> (i32, i32, i32) {
    %c0_i32 = arith.constant 0 : i32
    %c0_i32_0 = arith.constant 0 : i32
    %c0_i32_1 = arith.constant 0 : i32
    %c0_i32_2 = arith.constant 0 : i32
    return %c0_i32, %c0_i32_0, %c0_i32_1 : i32, i32, i32
  }
  func.func @transform_9(%arg0: i32) -> (i32, i32, i32) {
    %c0_i32 = arith.constant 0 : i32
    %c0_i32_0 = arith.constant 0 : i32
    %c0_i32_1 = arith.constant 0 : i32
    %c0_i32_2 = arith.constant 0 : i32
    return %c0_i32, %c0_i32_0, %c0_i32_1 : i32, i32, i32
  }
  func.func @transform_10(%arg0: i32) -> (i32, i32, i32) {
    %c0_i32 = arith.constant 0 : i32
    %c0_i32_0 = arith.constant 0 : i32
    %c0_i32_1 = arith.constant 0 : i32
    %c0_i32_2 = arith.constant 0 : i32
    return %c0_i32, %c0_i32_0, %c0_i32_1 : i32, i32, i32
  }
  func.func @transform_11(%arg0: i32) -> (i32, i32, i32) {
    %c0_i32 = arith.constant 0 : i32
    %c0_i32_0 = arith.constant 0 : i32
    %c0_i32_1 = arith.constant 0 : i32
    %c0_i32_2 = arith.constant 0 : i32
    return %c0_i32, %c0_i32_0, %c0_i32_1 : i32, i32, i32
  }
  func.func @transform_12(%arg0: i32) -> (i32, i32, i32) {
    %c0_i32 = arith.constant 0 : i32
    %c0_i32_0 = arith.constant 0 : i32
    %c0_i32_1 = arith.constant 0 : i32
    %c0_i32_2 = arith.constant 0 : i32
    return %c0_i32, %c0_i32_0, %c0_i32_1 : i32, i32, i32
  }
  func.func @transform_13(%arg0: i32) -> (i32, i32, i32) {
    %c0_i32 = arith.constant 0 : i32
    %c0_i32_0 = arith.constant 0 : i32
    %c0_i32_1 = arith.constant 0 : i32
    %c0_i32_2 = arith.constant 0 : i32
    return %c0_i32, %c0_i32_0, %c0_i32_1 : i32, i32, i32
  }
  func.func @transform_14(%arg0: i32) -> (i32, i32, i32) {
    %c0_i32 = arith.constant 0 : i32
    %c0_i32_0 = arith.constant 0 : i32
    %c0_i32_1 = arith.constant 0 : i32
    %c0_i32_2 = arith.constant 0 : i32
    return %c0_i32, %c0_i32_0, %c0_i32_1 : i32, i32, i32
  }
  func.func @transform_15(%arg0: i32) -> (i32, i32) {
    %c0_i32 = arith.constant 0 : i32
    %c0_i32_0 = arith.constant 0 : i32
    %c0_i32_1 = arith.constant 0 : i32
    return %c0_i32, %c0_i32_0 : i32, i32
  }
  func.func @transform_16(%arg0: i32) -> (i32, i32) {
    %c0_i32 = arith.constant 0 : i32
    %c0_i32_0 = arith.constant 0 : i32
    %c0_i32_1 = arith.constant 0 : i32
    return %c0_i32, %c0_i32_0 : i32, i32
  }
  func.func @transform_17(%arg0: i32) -> (i32, i32, i32) {
    %c0_i32 = arith.constant 0 : i32
    %c0_i32_0 = arith.constant 0 : i32
    %c0_i32_1 = arith.constant 0 : i32
    %c0_i32_2 = arith.constant 0 : i32
    return %c0_i32, %c0_i32_0, %c0_i32_1 : i32, i32, i32
  }
  func.func @transform_18(%arg0: i32) -> (i32, i32, i32) {
    %c0_i32 = arith.constant 0 : i32
    %c0_i32_0 = arith.constant 0 : i32
    %c0_i32_1 = arith.constant 0 : i32
    %c0_i32_2 = arith.constant 0 : i32
    return %c0_i32, %c0_i32_0, %c0_i32_1 : i32, i32, i32
  }
  func.func @transform_19(%arg0: i32) -> (i32, i32) {
    %c0_i32 = arith.constant 0 : i32
    %c0_i32_0 = arith.constant 0 : i32
    %c0_i32_1 = arith.constant 0 : i32
    return %c0_i32, %c0_i32_0 : i32, i32
  }
  func.func @transform_20(%arg0: i32) -> (i32, i32) {
    %c0_i32 = arith.constant 0 : i32
    %c0_i32_0 = arith.constant 0 : i32
    %c0_i32_1 = arith.constant 0 : i32
    return %c0_i32, %c0_i32_0 : i32, i32
  }
  func.func @transform_21(%arg0: i32) -> (i32, i32) {
    %c0_i32 = arith.constant 0 : i32
    %c0_i32_0 = arith.constant 0 : i32
    return %arg0, %c0_i32 : i32, i32
  }
}

</mosaic_0001>

<llo_original>
// kernel: tpu_custom_call.1
$region0: #{tpu_custom_call.1}
  #allocation0 [shape = 'u32[]', space=smem, size = 0x4, offset = 0x4, fixed_abs, tag = 'smem constant byte address 0x4 - core index']
  #allocation1 [shape = 'u32[144,128]{1,0:T(1,128)}', space=vmem, size = 0x12000, scoped, tag = 'internal scratch']
  %s0 = inlined_call_operand.vmem [shape: bf16[128,128], index: 0, kind: input, shape index: {}]
  %s1 = inlined_call_operand.vmem [shape: bf16[128,32], index: 1, kind: input, shape index: {}]
  %s2 = inlined_call_operand.vmem [shape: f32[1,32], index: 2, kind: input, shape index: {}]
  %s3 = inlined_call_operand.vmem [shape: f32[2,1,32], index: 3, kind: input, shape index: {}]
  %s4 = inlined_call_operand.vmem [shape: f32[2,1,32], index: 4, kind: input, shape index: {}]
  %s5 = inlined_call_operand.vmem [shape: bf16[2,16,16], index: 5, kind: input, shape index: {}]
  %s6 = inlined_call_operand.vmem [shape: f32[2,16,1], index: 6, kind: input, shape index: {}]
  %s7 = inlined_call_operand.vmem [shape: bf16[2,16,16], index: 7, kind: input, shape index: {}]
  %s8 = inlined_call_operand.vmem [shape: f32[2,16,1], index: 8, kind: input, shape index: {}]
  %s9 = inlined_call_operand.vmem [shape: f32[2,1,32], index: 9, kind: input, shape index: {}]
  %s10 = inlined_call_operand.vmem [shape: f32[2,1,32], index: 10, kind: input, shape index: {}]
  %s11 = inlined_call_operand.vmem [shape: bf16[2,32,128], index: 11, kind: input, shape index: {}]
  %s12 = inlined_call_operand.vmem [shape: f32[2,1,128], index: 12, kind: input, shape index: {}]
  %s13 = inlined_call_operand.vmem [shape: bf16[2,128,32], index: 13, kind: input, shape index: {}]
  %s14 = inlined_call_operand.vmem [shape: f32[2,1,32], index: 14, kind: input, shape index: {}]
  %s15 = inlined_call_operand.vmem [shape: f32[1,32], index: 15, kind: input, shape index: {}]
  %s16 = inlined_call_operand.vmem [shape: f32[1,32], index: 16, kind: input, shape index: {}]
  %s17 = inlined_call_operand.vmem [shape: bf16[1,32,32], index: 17, kind: input, shape index: {}]
  %s18 = inlined_call_operand.vmem [shape: f32[1,1,32], index: 18, kind: input, shape index: {}]
  %s19 = inlined_call_operand.vmem [shape: bf16[32,128], index: 19, kind: input, shape index: {}]
  %s20 = inlined_call_operand.vmem [shape: f32[1,128], index: 20, kind: input, shape index: {}]
  %s21 = inlined_call_operand.hbm [shape: f32[128,128], index: 21, kind: output, shape index: {}]
  %s22 = sld [smem:[#allocation0]]
  $region101: #{tpu_custom_call.1} parent=0
    _
  %s24 = ssub.s32 1, %s22
  %s25 = scalar_select 0, %s24, %s22
  $region1: #{tpu_custom_call.1} parent=0
    #allocation2 [shape = 'u8[65536]{0}', space=vmem, size = 0x10000, scoped, tag = 'output window, operand 0, single buffered']
    #allocation3 [shape = 's32[1]{0}', space=sflag, size = 0x4, scoped, tag = 'scoped memory for tpu_custom_call.1']
    %26 = vsyncpa [#allocation3], 0
    // Predicated region
    $region2: #{tpu_custom_call.1} parent=1 // pred_check
      _
    $region3: #{tpu_custom_call.1} parent=1 // pred_check_branch
      %28 = sbr.rel (0) target = $region5
    $region4: #{tpu_custom_call.1} parent=1 // pred_region
      _
    $region5: #{tpu_custom_call.1} parent=1 // pred_fallthru
      _
    // Predicated region
    $region6: #{tpu_custom_call.1} parent=1 // pred_check
      _
    $region7: #{tpu_custom_call.1} parent=1 // pred_check_branch
      %30 = sbr.rel (0) target = $region9
    $region8: #{tpu_custom_call.1} parent=1 // pred_region
      _
    $region9: #{tpu_custom_call.1} parent=1 // pred_fallthru
      _
    // Predicated region
    $region10: #{tpu_custom_call.1} parent=1 // pred_check
      _
    $region11: #{tpu_custom_call.1} parent=1 // pred_check_branch
      %32 = sbr.rel (0) target = $region13
    $region12: #{tpu_custom_call.1} parent=1 // pred_region
      _
    $region13: #{tpu_custom_call.1} parent=1 // pred_fallthru
      _
    // Predicated region
    $region14: #{tpu_custom_call.1} parent=1 // pred_check
      _
    $region15: #{tpu_custom_call.1} parent=1 // pred_check_branch
      %34 = sbr.rel (0) target = $region17
    $region16: #{tpu_custom_call.1} parent=1 // pred_region
      _
    $region17: #{tpu_custom_call.1} parent=1 // pred_fallthru
      _
    // Predicated region
    $region18: #{tpu_custom_call.1} parent=1 // pred_check
      _
    $region19: #{tpu_custom_call.1} parent=1 // pred_check_branch
      %36 = sbr.rel (0) target = $region21
    $region20: #{tpu_custom_call.1} parent=1 // pred_region
      _
    $region21: #{tpu_custom_call.1} parent=1 // pred_fallthru
      _
    // Predicated region
    $region22: #{tpu_custom_call.1} parent=1 // pred_check
      _
    $region23: #{tpu_custom_call.1} parent=1 // pred_check_branch
      %38 = sbr.rel (0) target = $region25
    $region24: #{tpu_custom_call.1} parent=1 // pred_region
      _
    $region25: #{tpu_custom_call.1} parent=1 // pred_fallthru
      _
    // Predicated region
    $region26: #{tpu_custom_call.1} parent=1 // pred_check
      _
    $region27: #{tpu_custom_call.1} parent=1 // pred_check_branch
      %40 = sbr.rel (0) target = $region29
    $region28: #{tpu_custom_call.1} parent=1 // pred_region
      _
    $region29: #{tpu_custom_call.1} parent=1 // pred_fallthru
      _
    // Predicated region
    $region30: #{tpu_custom_call.1} parent=1 // pred_check
      _
    $region31: #{tpu_custom_call.1} parent=1 // pred_check_branch
      %42 = sbr.rel (0) target = $region33
    $region32: #{tpu_custom_call.1} parent=1 // pred_region
      _
    $region33: #{tpu_custom_call.1} parent=1 // pred_fallthru
      _
    // Predicated region
    $region34: #{tpu_custom_call.1} parent=1 // pred_check
      _
    $region35: #{tpu_custom_call.1} parent=1 // pred_check_branch
      %44 = sbr.rel (0) target = $region37
    $region36: #{tpu_custom_call.1} parent=1 // pred_region
      _
    $region37: #{tpu_custom_call.1} parent=1 // pred_fallthru
      _
    // Predicated region
    $region38: #{tpu_custom_call.1} parent=1 // pred_check
      _
    $region39: #{tpu_custom_call.1} parent=1 // pred_check_branch
      %46 = sbr.rel (0) target = $region41
    $region40: #{tpu_custom_call.1} parent=1 // pred_region
      _
    $region41: #{tpu_custom_call.1} parent=1 // pred_fallthru
      _
    // Predicated region
    $region42: #{tpu_custom_call.1} parent=1 // pred_check
      _
    $region43: #{tpu_custom_call.1} parent=1 // pred_check_branch
      %48 = sbr.rel (0) target = $region45
    $region44: #{tpu_custom_call.1} parent=1 // pred_region
      _
    $region45: #{tpu_custom_call.1} parent=1 // pred_fallthru
      _
    // Predicated region
    $region46: #{tpu_custom_call.1} parent=1 // pred_check
      _
    $region47: #{tpu_custom_call.1} parent=1 // pred_check_branch
      %50 = sbr.rel (0) target = $region49
    $region48: #{tpu_custom_call.1} parent=1 // pred_region
      _
    $region49: #{tpu_custom_call.1} parent=1 // pred_fallthru
      _
    // Predicated region
    $region50: #{tpu_custom_call.1} parent=1 // pred_check
      _
    $region51: #{tpu_custom_call.1} parent=1 // pred_check_branch
      %52 = sbr.rel (0) target = $region53
    $region52: #{tpu_custom_call.1} parent=1 // pred_region
      _
    $region53: #{tpu_custom_call.1} parent=1 // pred_fallthru
      _
    // Predicated region
    $region54: #{tpu_custom_call.1} parent=1 // pred_check
      _
    $region55: #{tpu_custom_call.1} parent=1 // pred_check_branch
      %54 = sbr.rel (0) target = $region57
    $region56: #{tpu_custom_call.1} parent=1 // pred_region
      _
    $region57: #{tpu_custom_call.1} parent=1 // pred_fallthru
      _
    // Predicated region
    $region58: #{tpu_custom_call.1} parent=1 // pred_check
      _
    $region59: #{tpu_custom_call.1} parent=1 // pred_check_branch
      %56 = sbr.rel (0) target = $region61
    $region60: #{tpu_custom_call.1} parent=1 // pred_region
      _
    $region61: #{tpu_custom_call.1} parent=1 // pred_fallthru
      _
    // Predicated region
    $region62: #{tpu_custom_call.1} parent=1 // pred_check
      _
    $region63: #{tpu_custom_call.1} parent=1 // pred_check_branch
      %58 = sbr.rel (0) target = $region65
    $region64: #{tpu_custom_call.1} parent=1 // pred_region
      _
    $region65: #{tpu_custom_call.1} parent=1 // pred_fallthru
      _
    // Predicated region
    $region66: #{tpu_custom_call.1} parent=1 // pred_check
      _
    $region67: #{tpu_custom_call.1} parent=1 // pred_check_branch
      %60 = sbr.rel (0) target = $region69
    $region68: #{tpu_custom_call.1} parent=1 // pred_region
      _
    $region69: #{tpu_custom_call.1} parent=1 // pred_fallthru
      _
    // Predicated region
    $region70: #{tpu_custom_call.1} parent=1 // pred_check
      _
    $region71: #{tpu_custom_call.1} parent=1 // pred_check_branch
      %62 = sbr.rel (0) target = $region73
    $region72: #{tpu_custom_call.1} parent=1 // pred_region
      _
    $region73: #{tpu_custom_call.1} parent=1 // pred_fallthru
      _
    // Predicated region
    $region74: #{tpu_custom_call.1} parent=1 // pred_check
      _
    $region75: #{tpu_custom_call.1} parent=1 // pred_check_branch
      %64 = sbr.rel (0) target = $region77
    $region76: #{tpu_custom_call.1} parent=1 // pred_region
      _
    $region77: #{tpu_custom_call.1} parent=1 // pred_fallthru
      _
    // Predicated region
    $region78: #{tpu_custom_call.1} parent=1 // pred_check
      _
    $region79: #{tpu_custom_call.1} parent=1 // pred_check_branch
      %66 = sbr.rel (0) target = $region81
    $region80: #{tpu_custom_call.1} parent=1 // pred_region
      _
    $region81: #{tpu_custom_call.1} parent=1 // pred_fallthru
      _
    // Predicated region
    $region82: #{tpu_custom_call.1} parent=1 // pred_check
      _
    $region83: #{tpu_custom_call.1} parent=1 // pred_check_branch
      %68 = sbr.rel (0) target = $region85
    $region84: #{tpu_custom_call.1} parent=1 // pred_region
      _
    $region85: #{tpu_custom_call.1} parent=1 // pred_fallthru
      _
    %v70 = vld [vmem:[%s0] sm:$0xf]
    %v71 = vld [vmem:[%s0 + $0x4] sm:$0xf]
    %v72 = vld [vmem:[%s0 + $0x8] sm:$0xf]
    %v73 = vld [vmem:[%s0 + $0xc] sm:$0xf]
    %v74 = vld [vmem:[%s0 + $0x10] sm:$0xf]
    %v75 = vld [vmem:[%s0 + $0x14] sm:$0xf]
    %v76 = vld [vmem:[%s0 + $0x18] sm:$0xf]
    %v77 = vld [vmem:[%s0 + $0x1c] sm:$0xf]
    %v78 = vld [vmem:[%s0 + $0x20] sm:$0xf]
    %v79 = vld [vmem:[%s0 + $0x24] sm:$0xf]
    %v80 = vld [vmem:[%s0 + $0x28] sm:$0xf]
    %v81 = vld [vmem:[%s0 + $0x2c] sm:$0xf]
    %v82 = vld [vmem:[%s0 + $0x30] sm:$0xf]
    %v83 = vld [vmem:[%s0 + $0x34] sm:$0xf]
    %v84 = vld [vmem:[%s0 + $0x38] sm:$0xf]
    %v85 = vld [vmem:[%s0 + $0x3c] sm:$0xf]
    %v86 = vld [vmem:[%s1] sm:$0xf]
    %v87 = vld [vmem:[%s1 + $0x4] sm:$0xf]
    %v88 = vld [vmem:[%s1 + $0x8] sm:$0xf]
    %v89 = vld [vmem:[%s1 + $0xc] sm:$0xf]
    %v90 = vld [vmem:[%s1 + $0x10] sm:$0xf]
    %v91 = vld [vmem:[%s1 + $0x14] sm:$0xf]
    %v92 = vld [vmem:[%s1 + $0x18] sm:$0xf]
    %v93 = vld [vmem:[%s1 + $0x1c] sm:$0xf]
    %v94 = vld [vmem:[%s1 + $0x20] sm:$0xf]
    %v95 = vld [vmem:[%s1 + $0x24] sm:$0xf]
    %v96 = vld [vmem:[%s1 + $0x28] sm:$0xf]
    %v97 = vld [vmem:[%s1 + $0x2c] sm:$0xf]
    %v98 = vld [vmem:[%s1 + $0x30] sm:$0xf]
    %v99 = vld [vmem:[%s1 + $0x34] sm:$0xf]
    %v100 = vld [vmem:[%s1 + $0x38] sm:$0xf]
    %v101 = vld [vmem:[%s1 + $0x3c] sm:$0xf]
    %v102 = vld [vmem:[%s2] sm:$0x1]
    %v104 = vlaneseq
    %v105 = vshrl.u32 %v104, 7
    %v106 = vsub.s32 0, %v105
    %v107 = vrot.slane %v102, %v106
    %v125 = vunpack.c.l.b16 %v70
    %v126 = vunpack.c.l.b16 %v71
    %v127 = vunpack.c.l.b16 %v72
    %v128 = vunpack.c.l.b16 %v73
    %v129 = vunpack.c.l.b16 %v74
    %v130 = vunpack.c.l.b16 %v75
    %v131 = vunpack.c.l.b16 %v76
    %v132 = vunpack.c.l.b16 %v77
    %v133 = vunpack.c.l.b16 %v78
    %v134 = vunpack.c.l.b16 %v79
    %v135 = vunpack.c.l.b16 %v80
    %v136 = vunpack.c.l.b16 %v81
    %v137 = vunpack.c.l.b16 %v82
    %v138 = vunpack.c.l.b16 %v83
    %v139 = vunpack.c.l.b16 %v84
    %v140 = vunpack.c.l.b16 %v85
    %v141 = vpack.c.b16 %v126, %v125
    %v142 = vpack.c.b16 %v128, %v127
    %v143 = vpack.c.b16 %v130, %v129
    %v144 = vpack.c.b16 %v132, %v131
    %v145 = vpack.c.b16 %v134, %v133
    %v146 = vpack.c.b16 %v136, %v135
    %v147 = vpack.c.b16 %v138, %v137
    %v148 = vpack.c.b16 %v140, %v139
    %v173 = vunpack.c.l.b16 %v86
    %v174 = vunpack.c.l.b16 %v87
    %v175 = vunpack.c.l.b16 %v88
    %v176 = vunpack.c.l.b16 %v89
    %v177 = vunpack.c.l.b16 %v90
    %v178 = vunpack.c.l.b16 %v91
    %v179 = vunpack.c.l.b16 %v92
    %v180 = vunpack.c.l.b16 %v93
    %v181 = vunpack.c.l.b16 %v94
    %v182 = vunpack.c.l.b16 %v95
    %v183 = vunpack.c.l.b16 %v96
    %v184 = vunpack.c.l.b16 %v97
    %v185 = vunpack.c.l.b16 %v98
    %v186 = vunpack.c.l.b16 %v99
    %v187 = vunpack.c.l.b16 %v100
    %v188 = vunpack.c.l.b16 %v101
    %v189 = vpack.c.b16 %v174, %v173
    %v190 = vpack.c.b16 %v176, %v175
    %v191 = vpack.c.b16 %v178, %v177
    %v192 = vpack.c.b16 %v180, %v179
    %v193 = vpack.c.b16 %v182, %v181
    %v194 = vpack.c.b16 %v184, %v183
    %v195 = vpack.c.b16 %v186, %v185
    %v196 = vpack.c.b16 %v188, %v187
    %205 = vmatprep.subr.bf16.mxu0 0
    %206 = vmatpush1.bf16.msra.mxu0 %v189
    %207 = vmatprep.subr.bf16.mxu0 0
    %208 = vmatpush1.bf16.msra.mxu0 %v190
    %209 = vmatprep.subr.bf16.mxu0 0
    %210 = vmatpush1.bf16.msra.mxu0 %v191
    %211 = vmatprep.subr.bf16.mxu0 0
    %212 = vmatpush1.bf16.msra.mxu0 %v192
    %213 = vmatprep.subr.bf16.mxu0 0
    %214 = vmatpush1.bf16.msra.mxu0 %v193
    %215 = vmatprep.subr.bf16.mxu0 0
    %216 = vmatpush1.bf16.msra.mxu0 %v194
    %217 = vmatprep.subr.bf16.mxu0 0
    %218 = vmatpush1.bf16.msra.mxu0 %v195
    %219 = vmatprep.subr.bf16.mxu0 0
    %220 = vmatpush1.bf16.msra.mxu0 %v196
    %221 = vmatprep.subr.bf16.mxu0 0
    %222 = vmatpush1.bf16.msra.mxu0 0
    %223 = vmatprep.subr.bf16.mxu0 0
    %224 = vmatpush1.bf16.msra.mxu0 0
    %225 = vmatprep.subr.bf16.mxu0 0
    %226 = vmatpush1.bf16.msra.mxu0 0
    %227 = vmatprep.subr.bf16.mxu0 0
    %228 = vmatpush1.bf16.msra.mxu0 0
    %229 = vmatprep.subr.bf16.mxu0 0
    %230 = vmatpush1.bf16.msra.mxu0 0
    %231 = vmatprep.subr.bf16.mxu0 0
    %232 = vmatpush1.bf16.msra.mxu0 0
    %233 = vmatprep.subr.bf16.mxu0 0
    %234 = vmatpush1.bf16.msra.mxu0 0
    %235 = vmatprep.subr.bf16.mxu0 0
    %236 = vmatpush1.bf16.msra.mxu0 0
    %237 = vmatprep.mubr.bf16.mxu0 0
    %238 = vmatmul.mubr.bf16.gmra.mrb[0].mxu0 %v141
    %v239 = vpop.f32.mrb[0].mxu0
    %v240 = vadd.f32 %v107, %v239
    %v241 = vpop.f32.mrb[0].mxu0
    %v242 = vpop.f32.mrb[0].mxu0
    %v243 = vadd.f32 %v107, %v242
    %v244 = vpop.f32.mrb[0].mxu0
    %245 = vmatprep.mubr.bf16.mxu0 0
    %246 = vmatmul.mubr.bf16.gmra.mrb[0].mxu0 %v142
    %v247 = vpop.f32.mrb[0].mxu0
    %v248 = vadd.f32 %v107, %v247
    %v249 = vpop.f32.mrb[0].mxu0
    %v250 = vpop.f32.mrb[0].mxu0
    %v251 = vadd.f32 %v107, %v250
    %v252 = vpop.f32.mrb[0].mxu0
    %253 = vmatprep.mubr.bf16.mxu0 0
    %254 = vmatmul.mubr.bf16.gmra.mrb[0].mxu0 %v143
    %v255 = vpop.f32.mrb[0].mxu0
    %v256 = vadd.f32 %v107, %v255
    %v257 = vpop.f32.mrb[0].mxu0
    %v258 = vpop.f32.mrb[0].mxu0
    %v259 = vadd.f32 %v107, %v258
    %v260 = vpop.f32.mrb[0].mxu0
    %261 = vmatprep.mubr.bf16.mxu0 0
    %262 = vmatmul.mubr.bf16.gmra.mrb[0].mxu0 %v144
    %v263 = vpop.f32.mrb[0].mxu0
    %v264 = vadd.f32 %v107, %v263
    %v265 = vpop.f32.mrb[0].mxu0
    %v266 = vpop.f32.mrb[0].mxu0
    %v267 = vadd.f32 %v107, %v266
    %v268 = vpop.f32.mrb[0].mxu0
    %269 = vmatprep.mubr.bf16.mxu0 0
    %270 = vmatmul.mubr.bf16.gmra.mrb[0].mxu0 %v145
    %v271 = vpop.f32.mrb[0].mxu0
    %v272 = vadd.f32 %v107, %v271
    %v273 = vpop.f32.mrb[0].mxu0
    %v274 = vpop.f32.mrb[0].mxu0
    %v275 = vadd.f32 %v107, %v274
    %v276 = vpop.f32.mrb[0].mxu0
    %277 = vmatprep.mubr.bf16.mxu0 0
    %278 = vmatmul.mubr.bf16.gmra.mrb[0].mxu0 %v146
    %v279 = vpop.f32.mrb[0].mxu0
    %v280 = vadd.f32 %v107, %v279
    %v281 = vpop.f32.mrb[0].mxu0
    %v282 = vpop.f32.mrb[0].mxu0
    %v283 = vadd.f32 %v107, %v282
    %v284 = vpop.f32.mrb[0].mxu0
    %285 = vmatprep.mubr.bf16.mxu0 0
    %286 = vmatmul.mubr.bf16.gmra.mrb[0].mxu0 %v147
    %v287 = vpop.f32.mrb[0].mxu0
    %v288 = vadd.f32 %v107, %v287
    %v289 = vpop.f32.mrb[0].mxu0
    %v290 = vpop.f32.mrb[0].mxu0
    %v291 = vadd.f32 %v107, %v290
    %v292 = vpop.f32.mrb[0].mxu0
    %293 = vmatprep.mubr.bf16.mxu0 0
    %294 = vmatmul.mubr.bf16.gmra.mrb[0].mxu0 %v148
    %v295 = vpop.f32.mrb[0].mxu0
    %v296 = vadd.f32 %v107, %v295
    %v297 = vpop.f32.mrb[0].mxu0
    %v298 = vpop.f32.mrb[0].mxu0
    %v299 = vadd.f32 %v107, %v298
    %v300 = vpop.f32.mrb[0].mxu0
    %301 = vdwg.mxu0
    loop: start=0, step=1, limit=2
    $region86: #{tpu_custom_call.1} parent=1 // loop_pre_header
      _
    $region87: #{tpu_custom_call.1} parent=1 // loop_header
      %s303 = sphi 0, %s307
      %p304 = scmp.ge.s32.totalorder %s303, 2
      %v308 = vphi %v240, %v2266
      %v309 = vphi %v243, %v2267
      %v310 = vphi %v248, %v2268
      %v311 = vphi %v251, %v2269
      %v312 = vphi %v256, %v2270
      %v313 = vphi %v259, %v2271
      %v314 = vphi %v264, %v2272
      %v315 = vphi %v267, %v2273
      %v316 = vphi %v272, %v2274
      %v317 = vphi %v275, %v2275
      %v318 = vphi %v280, %v2276
      %v319 = vphi %v283, %v2277
      %v320 = vphi %v288, %v2278
      %v321 = vphi %v291, %v2279
      %v322 = vphi %v296, %v2280
      %v323 = vphi %v299, %v2281
    $region88: #{tpu_custom_call.1} parent=1 // loop_header_branch
      %306 = sbr.rel (%p304) target = $region92
    $region89: #{tpu_custom_call.1} parent=1 // loop_body
      %s324 = scalar_lea.vmem %s3, %s303
      %v325 = vld [vmem:[%s324] sm:$0x1]
      %s326 = scalar_lea.vmem %s4, %s303
      %v327 = vld [vmem:[%s326] sm:$0x1]
      %s328 = smul.u32 %s303, 2
      %s329 = smul.addr %s328, 4
      %s330 = scalar_lea.vmem %s5, %s329
      %v331 = vld [vmem:[%s330] sm:$0xf]
      %v332 = vld [vmem:[%s330 + $0x4] sm:$0xf]
      %s333 = smul.u32 %s303, 16
      %s334 = scalar_lea.vmem %s6, %s333
      %v335 = vld [vmem:[%s334] sm:$0xff]
      %v336 = vld [vmem:[%s334 + $0x8] sm:$0xff]
      %s337 = smul.addr %s328, 4
      %s338 = scalar_lea.vmem %s7, %s337
      %v339 = vld [vmem:[%s338] sm:$0xf]
      %v340 = vld [vmem:[%s338 + $0x4] sm:$0xf]
      %s341 = scalar_lea.vmem %s8, %s333
      %v342 = vld [vmem:[%s341] sm:$0xff]
      %v343 = vld [vmem:[%s341 + $0x8] sm:$0xff]
      %s344 = scalar_lea.vmem %s9, %s303
      %v345 = vld [vmem:[%s344] sm:$0x1]
      %s346 = scalar_lea.vmem %s10, %s303
      %v347 = vld [vmem:[%s346] sm:$0x1]
      %s348 = smul.u32 %s303, 4
      %s349 = smul.addr %s348, 4
      %s350 = scalar_lea.vmem %s11, %s349
      %v351 = vld [vmem:[%s350] sm:$0xf]
      %v352 = vld [vmem:[%s350 + $0x4] sm:$0xf]
      %v353 = vld [vmem:[%s350 + $0x8] sm:$0xf]
      %v354 = vld [vmem:[%s350 + $0xc] sm:$0xf]
      %s355 = scalar_lea.vmem %s12, %s303
      %v356 = vld [vmem:[%s355] sm:$0x1]
      %s357 = smul.addr %s333, 4
      %s358 = scalar_lea.vmem %s13, %s357
      %v359 = vld [vmem:[%s358] sm:$0xf]
      %v360 = vld [vmem:[%s358 + $0x4] sm:$0xf]
      %v361 = vld [vmem:[%s358 + $0x8] sm:$0xf]
      %v362 = vld [vmem:[%s358 + $0xc] sm:$0xf]
      %v363 = vld [vmem:[%s358 + $0x10] sm:$0xf]
      %v364 = vld [vmem:[%s358 + $0x14] sm:$0xf]
      %v365 = vld [vmem:[%s358 + $0x18] sm:$0xf]
      %v366 = vld [vmem:[%s358 + $0x1c] sm:$0xf]
      %v367 = vld [vmem:[%s358 + $0x20] sm:$0xf]
      %v368 = vld [vmem:[%s358 + $0x24] sm:$0xf]
      %v369 = vld [vmem:[%s358 + $0x28] sm:$0xf]
      %v370 = vld [vmem:[%s358 + $0x2c] sm:$0xf]
      %v371 = vld [vmem:[%s358 + $0x30] sm:$0xf]
      %v372 = vld [vmem:[%s358 + $0x34] sm:$0xf]
      %v373 = vld [vmem:[%s358 + $0x38] sm:$0xf]
      %v374 = vld [vmem:[%s358 + $0x3c] sm:$0xf]
      %s375 = scalar_lea.vmem %s14, %s303
      %v376 = vld [vmem:[%s375] sm:$0x1]
      %vm377 = vcmask 261120
      %v378 = vsel %vm377, %v308, 0.0
      %379 = vadd.xlane.f32.xlu0 %v378
      %v380 = vpop.xlane.xlu0 %379
      %v381 = vsel %vm377, %v309, 0.0
      %382 = vadd.xlane.f32.xlu0 %v381
      %v383 = vpop.xlane.xlu0 %382
      %v384 = vsel %vm377, %v310, 0.0
      %385 = vadd.xlane.f32.xlu0 %v384
      %v386 = vpop.xlane.xlu0 %385
      %v387 = vsel %vm377, %v311, 0.0
      %388 = vadd.xlane.f32.xlu0 %v387
      %v389 = vpop.xlane.xlu0 %388
      %v390 = vsel %vm377, %v312, 0.0
      %391 = vadd.xlane.f32.xlu0 %v390
      %v392 = vpop.xlane.xlu0 %391
      %v393 = vsel %vm377, %v313, 0.0
      %394 = vadd.xlane.f32.xlu0 %v393
      %v395 = vpop.xlane.xlu0 %394
      %v396 = vsel %vm377, %v314, 0.0
      %397 = vadd.xlane.f32.xlu0 %v396
      %v398 = vpop.xlane.xlu0 %397
      %v399 = vsel %vm377, %v315, 0.0
      %400 = vadd.xlane.f32.xlu0 %v399
      %v401 = vpop.xlane.xlu0 %400
      %v402 = vsel %vm377, %v316, 0.0
      %403 = vadd.xlane.f32.xlu0 %v402
      %v404 = vpop.xlane.xlu0 %403
      %v405 = vsel %vm377, %v317, 0.0
      %406 = vadd.xlane.f32.xlu0 %v405
      %v407 = vpop.xlane.xlu0 %406
      %v408 = vsel %vm377, %v318, 0.0
      %409 = vadd.xlane.f32.xlu0 %v408
      %v410 = vpop.xlane.xlu0 %409
      %v411 = vsel %vm377, %v319, 0.0
      %412 = vadd.xlane.f32.xlu0 %v411
      %v413 = vpop.xlane.xlu0 %412
      %v414 = vsel %vm377, %v320, 0.0
      %415 = vadd.xlane.f32.xlu0 %v414
      %v416 = vpop.xlane.xlu0 %415
      %v417 = vsel %vm377, %v321, 0.0
      %418 = vadd.xlane.f32.xlu0 %v417
      %v419 = vpop.xlane.xlu0 %418
      %v420 = vsel %vm377, %v322, 0.0
      %421 = vadd.xlane.f32.xlu0 %v420
      %v422 = vpop.xlane.xlu0 %421
      %v423 = vsel %vm377, %v323, 0.0
      %424 = vadd.xlane.f32.xlu0 %v423
      %v425 = vpop.xlane.xlu0 %424
      %v426 = vrcp.pop 32.0
      %v427 = vmul.f32 %v380, %v426
      %v428 = vmul.f32 %v383, %v426
      %v429 = vmul.f32 %v386, %v426
      %v430 = vmul.f32 %v389, %v426
      %v431 = vmul.f32 %v392, %v426
      %v432 = vmul.f32 %v395, %v426
      %v433 = vmul.f32 %v398, %v426
      %v434 = vmul.f32 %v401, %v426
      %v435 = vmul.f32 %v404, %v426
      %v436 = vmul.f32 %v407, %v426
      %v437 = vmul.f32 %v410, %v426
      %v438 = vmul.f32 %v413, %v426
      %v439 = vmul.f32 %v416, %v426
      %v440 = vmul.f32 %v419, %v426
      %v441 = vmul.f32 %v422, %v426
      %v442 = vmul.f32 %v425, %v426
      %v443 = vmul.f32 %v308, %v308
      %v444 = vmul.f32 %v309, %v309
      %v445 = vmul.f32 %v310, %v310
      %v446 = vmul.f32 %v311, %v311
      %v447 = vmul.f32 %v312, %v312
      %v448 = vmul.f32 %v313, %v313
      %v449 = vmul.f32 %v314, %v314
      %v450 = vmul.f32 %v315, %v315
      %v451 = vmul.f32 %v316, %v316
      %v452 = vmul.f32 %v317, %v317
      %v453 = vmul.f32 %v318, %v318
      %v454 = vmul.f32 %v319, %v319
      %v455 = vmul.f32 %v320, %v320
      %v456 = vmul.f32 %v321, %v321
      %v457 = vmul.f32 %v322, %v322
      %v458 = vmul.f32 %v323, %v323
      %v459 = vsel %vm377, %v443, 0.0
      %460 = vadd.xlane.f32.xlu0 %v459
      %v461 = vpop.xlane.xlu0 %460
      %v462 = vsel %vm377, %v444, 0.0
      %463 = vadd.xlane.f32.xlu0 %v462
      %v464 = vpop.xlane.xlu0 %463
      %v465 = vsel %vm377, %v445, 0.0
      %466 = vadd.xlane.f32.xlu0 %v465
      %v467 = vpop.xlane.xlu0 %466
      %v468 = vsel %vm377, %v446, 0.0
      %469 = vadd.xlane.f32.xlu0 %v468
      %v470 = vpop.xlane.xlu0 %469
      %v471 = vsel %vm377, %v447, 0.0
      %472 = vadd.xlane.f32.xlu0 %v471
      %v473 = vpop.xlane.xlu0 %472
      %v474 = vsel %vm377, %v448, 0.0
      %475 = vadd.xlane.f32.xlu0 %v474
      %v476 = vpop.xlane.xlu0 %475
      %v477 = vsel %vm377, %v449, 0.0
      %478 = vadd.xlane.f32.xlu0 %v477
      %v479 = vpop.xlane.xlu0 %478
      %v480 = vsel %vm377, %v450, 0.0
      %481 = vadd.xlane.f32.xlu0 %v480
      %v482 = vpop.xlane.xlu0 %481
      %v483 = vsel %vm377, %v451, 0.0
      %484 = vadd.xlane.f32.xlu0 %v483
      %v485 = vpop.xlane.xlu0 %484
      %v486 = vsel %vm377, %v452, 0.0
      %487 = vadd.xlane.f32.xlu0 %v486
      %v488 = vpop.xlane.xlu0 %487
      %v489 = vsel %vm377, %v453, 0.0
      %490 = vadd.xlane.f32.xlu0 %v489
      %v491 = vpop.xlane.xlu0 %490
      %v492 = vsel %vm377, %v454, 0.0
      %493 = vadd.xlane.f32.xlu0 %v492
      %v494 = vpop.xlane.xlu0 %493
      %v495 = vsel %vm377, %v455, 0.0
      %496 = vadd.xlane.f32.xlu0 %v495
      %v497 = vpop.xlane.xlu0 %496
      %v498 = vsel %vm377, %v456, 0.0
      %499 = vadd.xlane.f32.xlu0 %v498
      %v500 = vpop.xlane.xlu0 %499
      %v501 = vsel %vm377, %v457, 0.0
      %502 = vadd.xlane.f32.xlu0 %v501
      %v503 = vpop.xlane.xlu0 %502
      %v504 = vsel %vm377, %v458, 0.0
      %505 = vadd.xlane.f32.xlu0 %v504
      %v506 = vpop.xlane.xlu0 %505
      %v507 = vmul.f32 %v461, %v426
      %v508 = vmul.f32 %v464, %v426
      %v509 = vmul.f32 %v467, %v426
      %v510 = vmul.f32 %v470, %v426
      %v511 = vmul.f32 %v473, %v426
      %v512 = vmul.f32 %v476, %v426
      %v513 = vmul.f32 %v479, %v426
      %v514 = vmul.f32 %v482, %v426
      %v515 = vmul.f32 %v485, %v426
      %v516 = vmul.f32 %v488, %v426
      %v517 = vmul.f32 %v491, %v426
      %v518 = vmul.f32 %v494, %v426
      %v519 = vmul.f32 %v497, %v426
      %v520 = vmul.f32 %v500, %v426
      %v521 = vmul.f32 %v503, %v426
      %v522 = vmul.f32 %v506, %v426
      %v523 = vmul.f32 %v427, %v427
      %v524 = vmul.f32 %v428, %v428
      %v525 = vmul.f32 %v429, %v429
      %v526 = vmul.f32 %v430, %v430
      %v527 = vmul.f32 %v431, %v431
      %v528 = vmul.f32 %v432, %v432
      %v529 = vmul.f32 %v433, %v433
      %v530 = vmul.f32 %v434, %v434
      %v531 = vmul.f32 %v435, %v435
      %v532 = vmul.f32 %v436, %v436
      %v533 = vmul.f32 %v437, %v437
      %v534 = vmul.f32 %v438, %v438
      %v535 = vmul.f32 %v439, %v439
      %v536 = vmul.f32 %v440, %v440
      %v537 = vmul.f32 %v441, %v441
      %v538 = vmul.f32 %v442, %v442
      %v539 = vsub.f32 %v507, %v523
      %v540 = vsub.f32 %v508, %v524
      %v541 = vsub.f32 %v509, %v525
      %v542 = vsub.f32 %v510, %v526
      %v543 = vsub.f32 %v511, %v527
      %v544 = vsub.f32 %v512, %v528
      %v545 = vsub.f32 %v513, %v529
      %v546 = vsub.f32 %v514, %v530
      %v547 = vsub.f32 %v515, %v531
      %v548 = vsub.f32 %v516, %v532
      %v549 = vsub.f32 %v517, %v533
      %v550 = vsub.f32 %v518, %v534
      %v551 = vsub.f32 %v519, %v535
      %v552 = vsub.f32 %v520, %v536
      %v553 = vsub.f32 %v521, %v537
      %v554 = vsub.f32 %v522, %v538
      %v555 = vsub.f32 %v308, %v427
      %v556 = vsub.f32 %v309, %v428
      %v557 = vsub.f32 %v310, %v429
      %v558 = vsub.f32 %v311, %v430
      %v559 = vsub.f32 %v312, %v431
      %v560 = vsub.f32 %v313, %v432
      %v561 = vsub.f32 %v314, %v433
      %v562 = vsub.f32 %v315, %v434
      %v563 = vsub.f32 %v316, %v435
      %v564 = vsub.f32 %v317, %v436
      %v565 = vsub.f32 %v318, %v437
      %v566 = vsub.f32 %v319, %v438
      %v567 = vsub.f32 %v320, %v439
      %v568 = vsub.f32 %v321, %v440
      %v569 = vsub.f32 %v322, %v441
      %v570 = vsub.f32 %v323, %v442
      %v571 = vadd.f32 %v539, 1e-06
      %v572 = vadd.f32 %v540, 1e-06
      %v573 = vadd.f32 %v541, 1e-06
      %v574 = vadd.f32 %v542, 1e-06
      %v575 = vadd.f32 %v543, 1e-06
      %v576 = vadd.f32 %v544, 1e-06
      %v577 = vadd.f32 %v545, 1e-06
      %v578 = vadd.f32 %v546, 1e-06
      %v579 = vadd.f32 %v547, 1e-06
      %v580 = vadd.f32 %v548, 1e-06
      %v581 = vadd.f32 %v549, 1e-06
      %v582 = vadd.f32 %v550, 1e-06
      %v583 = vadd.f32 %v551, 1e-06
      %v584 = vadd.f32 %v552, 1e-06
      %v585 = vadd.f32 %v553, 1e-06
      %v586 = vadd.f32 %v554, 1e-06
      %v587 = vrsqrt.pop %v571
      %v588 = vrsqrt.pop %v572
      %v589 = vrsqrt.pop %v573
      %v590 = vrsqrt.pop %v574
      %v591 = vrsqrt.pop %v575
      %v592 = vrsqrt.pop %v576
      %v593 = vrsqrt.pop %v577
      %v594 = vrsqrt.pop %v578
      %v595 = vrsqrt.pop %v579
      %v596 = vrsqrt.pop %v580
      %v597 = vrsqrt.pop %v581
      %v598 = vrsqrt.pop %v582
      %v599 = vrsqrt.pop %v583
      %v600 = vrsqrt.pop %v584
      %v601 = vrsqrt.pop %v585
      %v602 = vrsqrt.pop %v586
      %v603 = vmul.f32 %v555, %v587
      %v604 = vmul.f32 %v556, %v588
      %v605 = vmul.f32 %v557, %v589
      %v606 = vmul.f32 %v558, %v590
      %v607 = vmul.f32 %v559, %v591
      %v608 = vmul.f32 %v560, %v592
      %v609 = vmul.f32 %v561, %v593
      %v610 = vmul.f32 %v562, %v594
      %v611 = vmul.f32 %v563, %v595
      %v612 = vmul.f32 %v564, %v596
      %v613 = vmul.f32 %v565, %v597
      %v614 = vmul.f32 %v566, %v598
      %v615 = vmul.f32 %v567, %v599
      %v616 = vmul.f32 %v568, %v600
      %v617 = vmul.f32 %v569, %v601
      %v618 = vmul.f32 %v570, %v602
      %v620 = vlaneseq
      %v621 = vshrl.u32 %v620, 7
      %v622 = vsub.s32 0, %v621
      %v623 = vrot.slane %v325, %v622
      %v625 = vmul.f32 %v603, %v623
      %v626 = vmul.f32 %v604, %v623
      %v627 = vmul.f32 %v605, %v623
      %v628 = vmul.f32 %v606, %v623
      %v629 = vmul.f32 %v607, %v623
      %v630 = vmul.f32 %v608, %v623
      %v631 = vmul.f32 %v609, %v623
      %v632 = vmul.f32 %v610, %v623
      %v633 = vmul.f32 %v611, %v623
      %v634 = vmul.f32 %v612, %v623
      %v635 = vmul.f32 %v613, %v623
      %v636 = vmul.f32 %v614, %v623
      %v637 = vmul.f32 %v615, %v623
      %v638 = vmul.f32 %v616, %v623
      %v639 = vmul.f32 %v617, %v623
      %v640 = vmul.f32 %v618, %v623
      %v642 = vlaneseq
      %v643 = vshrl.u32 %v642, 7
      %v644 = vsub.s32 0, %v643
      %v645 = vrot.slane %v327, %v644
      %v647 = vadd.f32 %v625, %v645
      %v648 = vadd.f32 %v626, %v645
      %v649 = vadd.f32 %v627, %v645
      %v650 = vadd.f32 %v628, %v645
      %v651 = vadd.f32 %v629, %v645
      %v652 = vadd.f32 %v630, %v645
      %v653 = vadd.f32 %v631, %v645
      %v654 = vadd.f32 %v632, %v645
      %v655 = vadd.f32 %v633, %v645
      %v656 = vadd.f32 %v634, %v645
      %v657 = vadd.f32 %v635, %v645
      %v658 = vadd.f32 %v636, %v645
      %v659 = vadd.f32 %v637, %v645
      %v660 = vadd.f32 %v638, %v645
      %v661 = vadd.f32 %v639, %v645
      %v662 = vadd.f32 %v640, %v645
      %v663 = vpack.c.bf16 %v648, %v647
      %v664 = vpack.c.bf16 %v650, %v649
      %v665 = vpack.c.bf16 %v652, %v651
      %v666 = vpack.c.bf16 %v654, %v653
      %v667 = vpack.c.bf16 %v656, %v655
      %v668 = vpack.c.bf16 %v658, %v657
      %v669 = vpack.c.bf16 %v660, %v659
      %v670 = vpack.c.bf16 %v662, %v661
      %672 = vset.pattern.permute.xlu0 0
      %673 = vperm.xlu0 %672, %v335
      %v674 = vpop.permute.xlu0 %673
      %677 = vset.pattern.permute.xlu0 0
      %678 = vperm.xlu0 %677, %v336
      %v679 = vpop.permute.xlu0 %678
      %v683 = vunpack.c.l.b16 %v331
      %v684 = vunpack.c.l.b16 %v332
      %v685 = vpack.c.b16 %v684, %v683
      %vm686 = vcmask 130048
      %v688 = vsel %vm686, %v685, 0
      %690 = vmatprep.subr.bf16.mxu0 0
      %691 = vmatpush1.bf16.msra.mxu0 %v663
      %692 = vmatprep.subr.bf16.mxu0 0
      %693 = vmatpush1.bf16.msra.mxu0 0
      %694 = vmatprep.subr.bf16.mxu0 0
      %695 = vmatpush1.bf16.msra.mxu0 0
      %696 = vmatprep.subr.bf16.mxu0 0
      %697 = vmatpush1.bf16.msra.mxu0 0
      %698 = vmatprep.subr.bf16.mxu0 0
      %699 = vmatpush1.bf16.msra.mxu0 0
      %700 = vmatprep.subr.bf16.mxu0 0
      %701 = vmatpush1.bf16.msra.mxu0 0
      %702 = vmatprep.subr.bf16.mxu0 0
      %703 = vmatpush1.bf16.msra.mxu0 0
      %704 = vmatprep.subr.bf16.mxu0 0
      %705 = vmatpush1.bf16.msra.mxu0 0
      %706 = vmatprep.subr.bf16.mxu0 0
      %707 = vmatpush1.bf16.msra.mxu0 0
      %708 = vmatprep.subr.bf16.mxu0 0
      %709 = vmatpush1.bf16.msra.mxu0 0
      %710 = vmatprep.subr.bf16.mxu0 0
      %711 = vmatpush1.bf16.msra.mxu0 0
      %712 = vmatprep.subr.bf16.mxu0 0
      %713 = vmatpush1.bf16.msra.mxu0 0
      %714 = vmatprep.subr.bf16.mxu0 0
      %715 = vmatpush1.bf16.msra.mxu0 0
      %716 = vmatprep.subr.bf16.mxu0 0
      %717 = vmatpush1.bf16.msra.mxu0 0
      %718 = vmatprep.subr.bf16.mxu0 0
      %719 = vmatpush1.bf16.msra.mxu0 0
      %720 = vmatprep.subr.bf16.mxu0 0
      %721 = vmatpush1.bf16.msra.mxu0 0
      %722 = vmatprep.mubr.bf16.mxu0 0
      %723 = vmatmul.mubr.bf16.gmra.mrb[0].mxu0 %v688
      %v724 = vpop.f32.mrb[0].mxu0
      %v725 = vadd.f32 %v674, %v724
      %v726 = vpop.f32.mrb[0].mxu0
      %v727 = vpop.f32.mrb[0].mxu0
      %v728 = vadd.f32 %v679, %v727
      %v729 = vpop.f32.mrb[0].mxu0
      %730 = vdwg.mxu0
      %731 = vmatprep.subr.bf16.mxu0 0
      %732 = vmatpush1.bf16.msra.mxu0 %v664
      %733 = vmatprep.subr.bf16.mxu0 0
      %734 = vmatpush1.bf16.msra.mxu0 0
      %735 = vmatprep.subr.bf16.mxu0 0
      %736 = vmatpush1.bf16.msra.mxu0 0
      %737 = vmatprep.subr.bf16.mxu0 0
      %738 = vmatpush1.bf16.msra.mxu0 0
      %739 = vmatprep.subr.bf16.mxu0 0
      %740 = vmatpush1.bf16.msra.mxu0 0
      %741 = vmatprep.subr.bf16.mxu0 0
      %742 = vmatpush1.bf16.msra.mxu0 0
      %743 = vmatprep.subr.bf16.mxu0 0
      %744 = vmatpush1.bf16.msra.mxu0 0
      %745 = vmatprep.subr.bf16.mxu0 0
      %746 = vmatpush1.bf16.msra.mxu0 0
      %747 = vmatprep.subr.bf16.mxu0 0
      %748 = vmatpush1.bf16.msra.mxu0 0
      %749 = vmatprep.subr.bf16.mxu0 0
      %750 = vmatpush1.bf16.msra.mxu0 0
      %751 = vmatprep.subr.bf16.mxu0 0
      %752 = vmatpush1.bf16.msra.mxu0 0
      %753 = vmatprep.subr.bf16.mxu0 0
      %754 = vmatpush1.bf16.msra.mxu0 0
      %755 = vmatprep.subr.bf16.mxu0 0
      %756 = vmatpush1.bf16.msra.mxu0 0
      %757 = vmatprep.subr.bf16.mxu0 0
      %758 = vmatpush1.bf16.msra.mxu0 0
      %759 = vmatprep.subr.bf16.mxu0 0
      %760 = vmatpush1.bf16.msra.mxu0 0
      %761 = vmatprep.subr.bf16.mxu0 0
      %762 = vmatpush1.bf16.msra.mxu0 0
      %763 = vmatprep.mubr.bf16.mxu0 0
      %764 = vmatmul.mubr.bf16.gmra.mrb[0].mxu0 %v688
      %v765 = vpop.f32.mrb[0].mxu0
      %v766 = vadd.f32 %v674, %v765
      %v767 = vpop.f32.mrb[0].mxu0
      %v768 = vpop.f32.mrb[0].mxu0
      %v769 = vadd.f32 %v679, %v768
      %v770 = vpop.f32.mrb[0].mxu0
      %771 = vdwg.mxu0
      %772 = vmatprep.subr.bf16.mxu0 0
      %773 = vmatpush1.bf16.msra.mxu0 %v665
      %774 = vmatprep.subr.bf16.mxu0 0
      %775 = vmatpush1.bf16.msra.mxu0 0
      %776 = vmatprep.subr.bf16.mxu0 0
      %777 = vmatpush1.bf16.msra.mxu0 0
      %778 = vmatprep.subr.bf16.mxu0 0
      %779 = vmatpush1.bf16.msra.mxu0 0
      %780 = vmatprep.subr.bf16.mxu0 0
      %781 = vmatpush1.bf16.msra.mxu0 0
      %782 = vmatprep.subr.bf16.mxu0 0
      %783 = vmatpush1.bf16.msra.mxu0 0
      %784 = vmatprep.subr.bf16.mxu0 0
      %785 = vmatpush1.bf16.msra.mxu0 0
      %786 = vmatprep.subr.bf16.mxu0 0
      %787 = vmatpush1.bf16.msra.mxu0 0
      %788 = vmatprep.subr.bf16.mxu0 0
      %789 = vmatpush1.bf16.msra.mxu0 0
      %790 = vmatprep.subr.bf16.mxu0 0
      %791 = vmatpush1.bf16.msra.mxu0 0
      %792 = vmatprep.subr.bf16.mxu0 0
      %793 = vmatpush1.bf16.msra.mxu0 0
      %794 = vmatprep.subr.bf16.mxu0 0
      %795 = vmatpush1.bf16.msra.mxu0 0
      %796 = vmatprep.subr.bf16.mxu0 0
      %797 = vmatpush1.bf16.msra.mxu0 0
      %798 = vmatprep.subr.bf16.mxu0 0
      %799 = vmatpush1.bf16.msra.mxu0 0
      %800 = vmatprep.subr.bf16.mxu0 0
      %801 = vmatpush1.bf16.msra.mxu0 0
      %802 = vmatprep.subr.bf16.mxu0 0
      %803 = vmatpush1.bf16.msra.mxu0 0
      %804 = vmatprep.mubr.bf16.mxu0 0
      %805 = vmatmul.mubr.bf16.gmra.mrb[0].mxu0 %v688
      %v806 = vpop.f32.mrb[0].mxu0
      %v807 = vadd.f32 %v674, %v806
      %v808 = vpop.f32.mrb[0].mxu0
      %v809 = vpop.f32.mrb[0].mxu0
      %v810 = vadd.f32 %v679, %v809
      %v811 = vpop.f32.mrb[0].mxu0
      %812 = vdwg.mxu0
      %813 = vmatprep.subr.bf16.mxu0 0
      %814 = vmatpush1.bf16.msra.mxu0 %v666
      %815 = vmatprep.subr.bf16.mxu0 0
      %816 = vmatpush1.bf16.msra.mxu0 0
      %817 = vmatprep.subr.bf16.mxu0 0
      %818 = vmatpush1.bf16.msra.mxu0 0
      %819 = vmatprep.subr.bf16.mxu0 0
      %820 = vmatpush1.bf16.msra.mxu0 0
      %821 = vmatprep.subr.bf16.mxu0 0
      %822 = vmatpush1.bf16.msra.mxu0 0
      %823 = vmatprep.subr.bf16.mxu0 0
      %824 = vmatpush1.bf16.msra.mxu0 0
      %825 = vmatprep.subr.bf16.mxu0 0
      %826 = vmatpush1.bf16.msra.mxu0 0
      %827 = vmatprep.subr.bf16.mxu0 0
      %828 = vmatpush1.bf16.msra.mxu0 0
      %829 = vmatprep.subr.bf16.mxu0 0
      %830 = vmatpush1.bf16.msra.mxu0 0
      %831 = vmatprep.subr.bf16.mxu0 0
      %832 = vmatpush1.bf16.msra.mxu0 0
      %833 = vmatprep.subr.bf16.mxu0 0
      %834 = vmatpush1.bf16.msra.mxu0 0
      %835 = vmatprep.subr.bf16.mxu0 0
      %836 = vmatpush1.bf16.msra.mxu0 0
      %837 = vmatprep.subr.bf16.mxu0 0
      %838 = vmatpush1.bf16.msra.mxu0 0
      %839 = vmatprep.subr.bf16.mxu0 0
      %840 = vmatpush1.bf16.msra.mxu0 0
      %841 = vmatprep.subr.bf16.mxu0 0
      %842 = vmatpush1.bf16.msra.mxu0 0
      %843 = vmatprep.subr.bf16.mxu0 0
      %844 = vmatpush1.bf16.msra.mxu0 0
      %845 = vmatprep.mubr.bf16.mxu0 0
      %846 = vmatmul.mubr.bf16.gmra.mrb[0].mxu0 %v688
      %v847 = vpop.f32.mrb[0].mxu0
      %v848 = vadd.f32 %v674, %v847
      %v849 = vpop.f32.mrb[0].mxu0
      %v850 = vpop.f32.mrb[0].mxu0
      %v851 = vadd.f32 %v679, %v850
      %v852 = vpop.f32.mrb[0].mxu0
      %853 = vdwg.mxu0
      %854 = vmatprep.subr.bf16.mxu0 0
      %855 = vmatpush1.bf16.msra.mxu0 %v667
      %856 = vmatprep.subr.bf16.mxu0 0
      %857 = vmatpush1.bf16.msra.mxu0 0
      %858 = vmatprep.subr.bf16.mxu0 0
      %859 = vmatpush1.bf16.msra.mxu0 0
      %860 = vmatprep.subr.bf16.mxu0 0
      %861 = vmatpush1.bf16.msra.mxu0 0
      %862 = vmatprep.subr.bf16.mxu0 0
      %863 = vmatpush1.bf16.msra.mxu0 0
      %864 = vmatprep.subr.bf16.mxu0 0
      %865 = vmatpush1.bf16.msra.mxu0 0
      %866 = vmatprep.subr.bf16.mxu0 0
      %867 = vmatpush1.bf16.msra.mxu0 0
      %868 = vmatprep.subr.bf16.mxu0 0
      %869 = vmatpush1.bf16.msra.mxu0 0
      %870 = vmatprep.subr.bf16.mxu0 0
      %871 = vmatpush1.bf16.msra.mxu0 0
      %872 = vmatprep.subr.bf16.mxu0 0
      %873 = vmatpush1.bf16.msra.mxu0 0
      %874 = vmatprep.subr.bf16.mxu0 0
      %875 = vmatpush1.bf16.msra.mxu0 0
      %876 = vmatprep.subr.bf16.mxu0 0
      %877 = vmatpush1.bf16.msra.mxu0 0
      %878 = vmatprep.subr.bf16.mxu0 0
      %879 = vmatpush1.bf16.msra.mxu0 0
      %880 = vmatprep.subr.bf16.mxu0 0
      %881 = vmatpush1.bf16.msra.mxu0 0
      %882 = vmatprep.subr.bf16.mxu0 0
      %883 = vmatpush1.bf16.msra.mxu0 0
      %884 = vmatprep.subr.bf16.mxu0 0
      %885 = vmatpush1.bf16.msra.mxu0 0
      %886 = vmatprep.mubr.bf16.mxu0 0
      %887 = vmatmul.mubr.bf16.gmra.mrb[0].mxu0 %v688
      %v888 = vpop.f32.mrb[0].mxu0
      %v889 = vadd.f32 %v674, %v888
      %v890 = vpop.f32.mrb[0].mxu0
      %v891 = vpop.f32.mrb[0].mxu0
      %v892 = vadd.f32 %v679, %v891
      %v893 = vpop.f32.mrb[0].mxu0
      %894 = vdwg.mxu0
      %895 = vmatprep.subr.bf16.mxu0 0
      %896 = vmatpush1.bf16.msra.mxu0 %v668
      %897 = vmatprep.subr.bf16.mxu0 0
      %898 = vmatpush1.bf16.msra.mxu0 0
      %899 = vmatprep.subr.bf16.mxu0 0
      %900 = vmatpush1.bf16.msra.mxu0 0
      %901 = vmatprep.subr.bf16.mxu0 0
      %902 = vmatpush1.bf16.msra.mxu0 0
      %903 = vmatprep.subr.bf16.mxu0 0
      %904 = vmatpush1.bf16.msra.mxu0 0
      %905 = vmatprep.subr.bf16.mxu0 0
      %906 = vmatpush1.bf16.msra.mxu0 0
      %907 = vmatprep.subr.bf16.mxu0 0
      %908 = vmatpush1.bf16.msra.mxu0 0
      %909 = vmatprep.subr.bf16.mxu0 0
      %910 = vmatpush1.bf16.msra.mxu0 0
      %911 = vmatprep.subr.bf16.mxu0 0
      %912 = vmatpush1.bf16.msra.mxu0 0
      %913 = vmatprep.subr.bf16.mxu0 0
      %914 = vmatpush1.bf16.msra.mxu0 0
      %915 = vmatprep.subr.bf16.mxu0 0
      %916 = vmatpush1.bf16.msra.mxu0 0
      %917 = vmatprep.subr.bf16.mxu0 0
      %918 = vmatpush1.bf16.msra.mxu0 0
      %919 = vmatprep.subr.bf16.mxu0 0
      %920 = vmatpush1.bf16.msra.mxu0 0
      %921 = vmatprep.subr.bf16.mxu0 0
      %922 = vmatpush1.bf16.msra.mxu0 0
      %923 = vmatprep.subr.bf16.mxu0 0
      %924 = vmatpush1.bf16.msra.mxu0 0
      %925 = vmatprep.subr.bf16.mxu0 0
      %926 = vmatpush1.bf16.msra.mxu0 0
      %927 = vmatprep.mubr.bf16.mxu0 0
      %928 = vmatmul.mubr.bf16.gmra.mrb[0].mxu0 %v688
      %v929 = vpop.f32.mrb[0].mxu0
      %v930 = vadd.f32 %v674, %v929
      %v931 = vpop.f32.mrb[0].mxu0
      %v932 = vpop.f32.mrb[0].mxu0
      %v933 = vadd.f32 %v679, %v932
      %v934 = vpop.f32.mrb[0].mxu0
      %935 = vdwg.mxu0
      %936 = vmatprep.subr.bf16.mxu0 0
      %937 = vmatpush1.bf16.msra.mxu0 %v669
      %938 = vmatprep.subr.bf16.mxu0 0
      %939 = vmatpush1.bf16.msra.mxu0 0
      %940 = vmatprep.subr.bf16.mxu0 0
      %941 = vmatpush1.bf16.msra.mxu0 0
      %942 = vmatprep.subr.bf16.mxu0 0
      %943 = vmatpush1.bf16.msra.mxu0 0
      %944 = vmatprep.subr.bf16.mxu0 0
      %945 = vmatpush1.bf16.msra.mxu0 0
      %946 = vmatprep.subr.bf16.mxu0 0
      %947 = vmatpush1.bf16.msra.mxu0 0
      %948 = vmatprep.subr.bf16.mxu0 0
      %949 = vmatpush1.bf16.msra.mxu0 0
      %950 = vmatprep.subr.bf16.mxu0 0
      %951 = vmatpush1.bf16.msra.mxu0 0
      %952 = vmatprep.subr.bf16.mxu0 0
      %953 = vmatpush1.bf16.msra.mxu0 0
      %954 = vmatprep.subr.bf16.mxu0 0
      %955 = vmatpush1.bf16.msra.mxu0 0
      %956 = vmatprep.subr.bf16.mxu0 0
      %957 = vmatpush1.bf16.msra.mxu0 0
      %958 = vmatprep.subr.bf16.mxu0 0
      %959 = vmatpush1.bf16.msra.mxu0 0
      %960 = vmatprep.subr.bf16.mxu0 0
      %961 = vmatpush1.bf16.msra.mxu0 0
      %962 = vmatprep.subr.bf16.mxu0 0
      %963 = vmatpush1.bf16.msra.mxu0 0
      %964 = vmatprep.subr.bf16.mxu0 0
      %965 = vmatpush1.bf16.msra.mxu0 0
      %966 = vmatprep.subr.bf16.mxu0 0
      %967 = vmatpush1.bf16.msra.mxu0 0
      %968 = vmatprep.mubr.bf16.mxu0 0
      %969 = vmatmul.mubr.bf16.gmra.mrb[0].mxu0 %v688
      %v970 = vpop.f32.mrb[0].mxu0
      %v971 = vadd.f32 %v674, %v970
      %v972 = vpop.f32.mrb[0].mxu0
      %v973 = vpop.f32.mrb[0].mxu0
      %v974 = vadd.f32 %v679, %v973
      %v975 = vpop.f32.mrb[0].mxu0
      %976 = vdwg.mxu0
      %977 = vmatprep.subr.bf16.mxu0 0
      %978 = vmatpush1.bf16.msra.mxu0 %v670
      %979 = vmatprep.subr.bf16.mxu0 0
      %980 = vmatpush1.bf16.msra.mxu0 0
      %981 = vmatprep.subr.bf16.mxu0 0
      %982 = vmatpush1.bf16.msra.mxu0 0
      %983 = vmatprep.subr.bf16.mxu0 0
      %984 = vmatpush1.bf16.msra.mxu0 0
      %985 = vmatprep.subr.bf16.mxu0 0
      %986 = vmatpush1.bf16.msra.mxu0 0
      %987 = vmatprep.subr.bf16.mxu0 0
      %988 = vmatpush1.bf16.msra.mxu0 0
      %989 = vmatprep.subr.bf16.mxu0 0
      %990 = vmatpush1.bf16.msra.mxu0 0
      %991 = vmatprep.subr.bf16.mxu0 0
      %992 = vmatpush1.bf16.msra.mxu0 0
      %993 = vmatprep.subr.bf16.mxu0 0
      %994 = vmatpush1.bf16.msra.mxu0 0
      %995 = vmatprep.subr.bf16.mxu0 0
      %996 = vmatpush1.bf16.msra.mxu0 0
      %997 = vmatprep.subr.bf16.mxu0 0
      %998 = vmatpush1.bf16.msra.mxu0 0
      %999 = vmatprep.subr.bf16.mxu0 0
      %1000 = vmatpush1.bf16.msra.mxu0 0
      %1001 = vmatprep.subr.bf16.mxu0 0
      %1002 = vmatpush1.bf16.msra.mxu0 0
      %1003 = vmatprep.subr.bf16.mxu0 0
      %1004 = vmatpush1.bf16.msra.mxu0 0
      %1005 = vmatprep.subr.bf16.mxu0 0
      %1006 = vmatpush1.bf16.msra.mxu0 0
      %1007 = vmatprep.subr.bf16.mxu0 0
      %1008 = vmatpush1.bf16.msra.mxu0 0
      %1009 = vmatprep.mubr.bf16.mxu0 0
      %1010 = vmatmul.mubr.bf16.gmra.mrb[0].mxu0 %v688
      %v1011 = vpop.f32.mrb[0].mxu0
      %v1012 = vadd.f32 %v674, %v1011
      %v1013 = vpop.f32.mrb[0].mxu0
      %v1014 = vpop.f32.mrb[0].mxu0
      %v1015 = vadd.f32 %v679, %v1014
      %v1016 = vpop.f32.mrb[0].mxu0
      %1017 = vdwg.mxu0
      %v1018 = vmul.f32 %v725, %v725
      %v1019 = vmul.f32 %v728, %v728
      %v1020 = vmul.f32 %v766, %v766
      %v1021 = vmul.f32 %v769, %v769
      %v1022 = vmul.f32 %v807, %v807
      %v1023 = vmul.f32 %v810, %v810
      %v1024 = vmul.f32 %v848, %v848
      %v1025 = vmul.f32 %v851, %v851
      %v1026 = vmul.f32 %v889, %v889
      %v1027 = vmul.f32 %v892, %v892
      %v1028 = vmul.f32 %v930, %v930
      %v1029 = vmul.f32 %v933, %v933
      %v1030 = vmul.f32 %v971, %v971
      %v1031 = vmul.f32 %v974, %v974
      %v1032 = vmul.f32 %v1012, %v1012
      %v1033 = vmul.f32 %v1015, %v1015
      %v1034 = vmul.f32 %v725, %v1018
      %v1035 = vmul.f32 %v728, %v1019
      %v1036 = vmul.f32 %v766, %v1020
      %v1037 = vmul.f32 %v769, %v1021
      %v1038 = vmul.f32 %v807, %v1022
      %v1039 = vmul.f32 %v810, %v1023
      %v1040 = vmul.f32 %v848, %v1024
      %v1041 = vmul.f32 %v851, %v1025
      %v1042 = vmul.f32 %v889, %v1026
      %v1043 = vmul.f32 %v892, %v1027
      %v1044 = vmul.f32 %v930, %v1028
      %v1045 = vmul.f32 %v933, %v1029
      %v1046 = vmul.f32 %v971, %v1030
      %v1047 = vmul.f32 %v974, %v1031
      %v1048 = vmul.f32 %v1012, %v1032
      %v1049 = vmul.f32 %v1015, %v1033
      %v1050 = vmul.f32 %v1034, 0.044715
      %v1051 = vmul.f32 %v1035, 0.044715
      %v1052 = vmul.f32 %v1036, 0.044715
      %v1053 = vmul.f32 %v1037, 0.044715
      %v1054 = vmul.f32 %v1038, 0.044715
      %v1055 = vmul.f32 %v1039, 0.044715
      %v1056 = vmul.f32 %v1040, 0.044715
      %v1057 = vmul.f32 %v1041, 0.044715
      %v1058 = vmul.f32 %v1042, 0.044715
      %v1059 = vmul.f32 %v1043, 0.044715
      %v1060 = vmul.f32 %v1044, 0.044715
      %v1061 = vmul.f32 %v1045, 0.044715
      %v1062 = vmul.f32 %v1046, 0.044715
      %v1063 = vmul.f32 %v1047, 0.044715
      %v1064 = vmul.f32 %v1048, 0.044715
      %v1065 = vmul.f32 %v1049, 0.044715
      %v1066 = vadd.f32 %v725, %v1050
      %v1067 = vadd.f32 %v728, %v1051
      %v1068 = vadd.f32 %v766, %v1052
      %v1069 = vadd.f32 %v769, %v1053
      %v1070 = vadd.f32 %v807, %v1054
      %v1071 = vadd.f32 %v810, %v1055
      %v1072 = vadd.f32 %v848, %v1056
      %v1073 = vadd.f32 %v851, %v1057
      %v1074 = vadd.f32 %v889, %v1058
      %v1075 = vadd.f32 %v892, %v1059
      %v1076 = vadd.f32 %v930, %v1060
      %v1077 = vadd.f32 %v933, %v1061
      %v1078 = vadd.f32 %v971, %v1062
      %v1079 = vadd.f32 %v974, %v1063
      %v1080 = vadd.f32 %v1012, %v1064
      %v1081 = vadd.f32 %v1015, %v1065
      %v1082 = vmul.f32 %v1066, 0.7978846
      %v1083 = vmul.f32 %v1067, 0.7978846
      %v1084 = vmul.f32 %v1068, 0.7978846
      %v1085 = vmul.f32 %v1069, 0.7978846
      %v1086 = vmul.f32 %v1070, 0.7978846
      %v1087 = vmul.f32 %v1071, 0.7978846
      %v1088 = vmul.f32 %v1072, 0.7978846
      %v1089 = vmul.f32 %v1073, 0.7978846
      %v1090 = vmul.f32 %v1074, 0.7978846
      %v1091 = vmul.f32 %v1075, 0.7978846
      %v1092 = vmul.f32 %v1076, 0.7978846
      %v1093 = vmul.f32 %v1077, 0.7978846
      %v1094 = vmul.f32 %v1078, 0.7978846
      %v1095 = vmul.f32 %v1079, 0.7978846
      %v1096 = vmul.f32 %v1080, 0.7978846
      %v1097 = vmul.f32 %v1081, 0.7978846
      %v1098 = vtanh.pop %v1082
      %v1099 = vtanh.pop %v1083
      %v1100 = vtanh.pop %v1084
      %v1101 = vtanh.pop %v1085
      %v1102 = vtanh.pop %v1086
      %v1103 = vtanh.pop %v1087
      %v1104 = vtanh.pop %v1088
      %v1105 = vtanh.pop %v1089
      %v1106 = vtanh.pop %v1090
      %v1107 = vtanh.pop %v1091
      %v1108 = vtanh.pop %v1092
      %v1109 = vtanh.pop %v1093
      %v1110 = vtanh.pop %v1094
      %v1111 = vtanh.pop %v1095
      %v1112 = vtanh.pop %v1096
      %v1113 = vtanh.pop %v1097
      %v1114 = vadd.f32 %v1098, 1.0
      %v1115 = vadd.f32 %v1099, 1.0
      %v1116 = vadd.f32 %v1100, 1.0
      %v1117 = vadd.f32 %v1101, 1.0
      %v1118 = vadd.f32 %v1102, 1.0
      %v1119 = vadd.f32 %v1103, 1.0
      %v1120 = vadd.f32 %v1104, 1.0
      %v1121 = vadd.f32 %v1105, 1.0
      %v1122 = vadd.f32 %v1106, 1.0
      %v1123 = vadd.f32 %v1107, 1.0
      %v1124 = vadd.f32 %v1108, 1.0
      %v1125 = vadd.f32 %v1109, 1.0
      %v1126 = vadd.f32 %v1110, 1.0
      %v1127 = vadd.f32 %v1111, 1.0
      %v1128 = vadd.f32 %v1112, 1.0
      %v1129 = vadd.f32 %v1113, 1.0
      %v1130 = vmul.f32 %v1114, 0.5
      %v1131 = vmul.f32 %v1115, 0.5
      %v1132 = vmul.f32 %v1116, 0.5
      %v1133 = vmul.f32 %v1117, 0.5
      %v1134 = vmul.f32 %v1118, 0.5
      %v1135 = vmul.f32 %v1119, 0.5
      %v1136 = vmul.f32 %v1120, 0.5
      %v1137 = vmul.f32 %v1121, 0.5
      %v1138 = vmul.f32 %v1122, 0.5
      %v1139 = vmul.f32 %v1123, 0.5
      %v1140 = vmul.f32 %v1124, 0.5
      %v1141 = vmul.f32 %v1125, 0.5
      %v1142 = vmul.f32 %v1126, 0.5
      %v1143 = vmul.f32 %v1127, 0.5
      %v1144 = vmul.f32 %v1128, 0.5
      %v1145 = vmul.f32 %v1129, 0.5
      %v1146 = vmul.f32 %v725, %v1130
      %v1147 = vmul.f32 %v728, %v1131
      %v1148 = vmul.f32 %v766, %v1132
      %v1149 = vmul.f32 %v769, %v1133
      %v1150 = vmul.f32 %v807, %v1134
      %v1151 = vmul.f32 %v810, %v1135
      %v1152 = vmul.f32 %v848, %v1136
      %v1153 = vmul.f32 %v851, %v1137
      %v1154 = vmul.f32 %v889, %v1138
      %v1155 = vmul.f32 %v892, %v1139
      %v1156 = vmul.f32 %v930, %v1140
      %v1157 = vmul.f32 %v933, %v1141
      %v1158 = vmul.f32 %v971, %v1142
      %v1159 = vmul.f32 %v974, %v1143
      %v1160 = vmul.f32 %v1012, %v1144
      %v1161 = vmul.f32 %v1015, %v1145
      %v1162 = vpack.c.bf16 %v1147, %v1146
      %v1163 = vpack.c.bf16 %v1149, %v1148
      %v1164 = vpack.c.bf16 %v1151, %v1150
      %v1165 = vpack.c.bf16 %v1153, %v1152
      %v1166 = vpack.c.bf16 %v1155, %v1154
      %v1167 = vpack.c.bf16 %v1157, %v1156
      %v1168 = vpack.c.bf16 %v1159, %v1158
      %v1169 = vpack.c.bf16 %v1161, %v1160
      %1171 = vset.pattern.permute.xlu0 0
      %1172 = vperm.xlu0 %1171, %v342
      %v1173 = vpop.permute.xlu0 %1172
      %1176 = vset.pattern.permute.xlu0 0
      %1177 = vperm.xlu0 %1176, %v343
      %v1178 = vpop.permute.xlu0 %1177
      %v1182 = vunpack.c.l.b16 %v339
      %v1183 = vunpack.c.l.b16 %v340
      %v1184 = vpack.c.b16 %v1183, %v1182
      %v1186 = vsel %vm686, %v1184, 0
      %1188 = vmatprep.subr.bf16.mxu0 0
      %1189 = vmatpush1.bf16.msra.mxu0 %v1162
      %1190 = vmatprep.subr.bf16.mxu0 0
      %1191 = vmatpush1.bf16.msra.mxu0 0
      %1192 = vmatprep.subr.bf16.mxu0 0
      %1193 = vmatpush1.bf16.msra.mxu0 0
      %1194 = vmatprep.subr.bf16.mxu0 0
      %1195 = vmatpush1.bf16.msra.mxu0 0
      %1196 = vmatprep.subr.bf16.mxu0 0
      %1197 = vmatpush1.bf16.msra.mxu0 0
      %1198 = vmatprep.subr.bf16.mxu0 0
      %1199 = vmatpush1.bf16.msra.mxu0 0
      %1200 = vmatprep.subr.bf16.mxu0 0
      %1201 = vmatpush1.bf16.msra.mxu0 0
      %1202 = vmatprep.subr.bf16.mxu0 0
      %1203 = vmatpush1.bf16.msra.mxu0 0
      %1204 = vmatprep.subr.bf16.mxu0 0
      %1205 = vmatpush1.bf16.msra.mxu0 0
      %1206 = vmatprep.subr.bf16.mxu0 0
      %1207 = vmatpush1.bf16.msra.mxu0 0
      %1208 = vmatprep.subr.bf16.mxu0 0
      %1209 = vmatpush1.bf16.msra.mxu0 0
      %1210 = vmatprep.subr.bf16.mxu0 0
      %1211 = vmatpush1.bf16.msra.mxu0 0
      %1212 = vmatprep.subr.bf16.mxu0 0
      %1213 = vmatpush1.bf16.msra.mxu0 0
      %1214 = vmatprep.subr.bf16.mxu0 0
      %1215 = vmatpush1.bf16.msra.mxu0 0
      %1216 = vmatprep.subr.bf16.mxu0 0
      %1217 = vmatpush1.bf16.msra.mxu0 0
      %1218 = vmatprep.subr.bf16.mxu0 0
      %1219 = vmatpush1.bf16.msra.mxu0 0
      %1220 = vmatprep.mubr.bf16.mxu0 0
      %1221 = vmatmul.mubr.bf16.gmra.mrb[0].mxu0 %v1186
      %v1222 = vpop.f32.mrb[0].mxu0
      %v1223 = vadd.f32 %v1173, %v1222
      %v1224 = vpop.f32.mrb[0].mxu0
      %v1225 = vpop.f32.mrb[0].mxu0
      %v1226 = vadd.f32 %v1178, %v1225
      %v1227 = vpop.f32.mrb[0].mxu0
      %1228 = vdwg.mxu0
      %1229 = vmatprep.subr.bf16.mxu0 0
      %1230 = vmatpush1.bf16.msra.mxu0 %v1163
      %1231 = vmatprep.subr.bf16.mxu0 0
      %1232 = vmatpush1.bf16.msra.mxu0 0
      %1233 = vmatprep.subr.bf16.mxu0 0
      %1234 = vmatpush1.bf16.msra.mxu0 0
      %1235 = vmatprep.subr.bf16.mxu0 0
      %1236 = vmatpush1.bf16.msra.mxu0 0
      %1237 = vmatprep.subr.bf16.mxu0 0
      %1238 = vmatpush1.bf16.msra.mxu0 0
      %1239 = vmatprep.subr.bf16.mxu0 0
      %1240 = vmatpush1.bf16.msra.mxu0 0
      %1241 = vmatprep.subr.bf16.mxu0 0
      %1242 = vmatpush1.bf16.msra.mxu0 0
      %1243 = vmatprep.subr.bf16.mxu0 0
      %1244 = vmatpush1.bf16.msra.mxu0 0
      %1245 = vmatprep.subr.bf16.mxu0 0
      %1246 = vmatpush1.bf16.msra.mxu0 0
      %1247 = vmatprep.subr.bf16.mxu0 0
      %1248 = vmatpush1.bf16.msra.mxu0 0
      %1249 = vmatprep.subr.bf16.mxu0 0
      %1250 = vmatpush1.bf16.msra.mxu0 0
      %1251 = vmatprep.subr.bf16.mxu0 0
      %1252 = vmatpush1.bf16.msra.mxu0 0
      %1253 = vmatprep.subr.bf16.mxu0 0
      %1254 = vmatpush1.bf16.msra.mxu0 0
      %1255 = vmatprep.subr.bf16.mxu0 0
      %1256 = vmatpush1.bf16.msra.mxu0 0
      %1257 = vmatprep.subr.bf16.mxu0 0
      %1258 = vmatpush1.bf16.msra.mxu0 0
      %1259 = vmatprep.subr.bf16.mxu0 0
      %1260 = vmatpush1.bf16.msra.mxu0 0
      %1261 = vmatprep.mubr.bf16.mxu0 0
      %1262 = vmatmul.mubr.bf16.gmra.mrb[0].mxu0 %v1186
      %v1263 = vpop.f32.mrb[0].mxu0
      %v1264 = vadd.f32 %v1173, %v1263
      %v1265 = vpop.f32.mrb[0].mxu0
      %v1266 = vpop.f32.mrb[0].mxu0
      %v1267 = vadd.f32 %v1178, %v1266
      %v1268 = vpop.f32.mrb[0].mxu0
      %1269 = vdwg.mxu0
      %1270 = vmatprep.subr.bf16.mxu0 0
      %1271 = vmatpush1.bf16.msra.mxu0 %v1164
      %1272 = vmatprep.subr.bf16.mxu0 0
      %1273 = vmatpush1.bf16.msra.mxu0 0
      %1274 = vmatprep.subr.bf16.mxu0 0
      %1275 = vmatpush1.bf16.msra.mxu0 0
      %1276 = vmatprep.subr.bf16.mxu0 0
      %1277 = vmatpush1.bf16.msra.mxu0 0
      %1278 = vmatprep.subr.bf16.mxu0 0
      %1279 = vmatpush1.bf16.msra.mxu0 0
      %1280 = vmatprep.subr.bf16.mxu0 0
      %1281 = vmatpush1.bf16.msra.mxu0 0
      %1282 = vmatprep.subr.bf16.mxu0 0
      %1283 = vmatpush1.bf16.msra.mxu0 0
      %1284 = vmatprep.subr.bf16.mxu0 0
      %1285 = vmatpush1.bf16.msra.mxu0 0
      %1286 = vmatprep.subr.bf16.mxu0 0
      %1287 = vmatpush1.bf16.msra.mxu0 0
      %1288 = vmatprep.subr.bf16.mxu0 0
      %1289 = vmatpush1.bf16.msra.mxu0 0
      %1290 = vmatprep.subr.bf16.mxu0 0
      %1291 = vmatpush1.bf16.msra.mxu0 0
      %1292 = vmatprep.subr.bf16.mxu0 0
      %1293 = vmatpush1.bf16.msra.mxu0 0
      %1294 = vmatprep.subr.bf16.mxu0 0
      %1295 = vmatpush1.bf16.msra.mxu0 0
      %1296 = vmatprep.subr.bf16.mxu0 0
      %1297 = vmatpush1.bf16.msra.mxu0 0
      %1298 = vmatprep.subr.bf16.mxu0 0
      %1299 = vmatpush1.bf16.msra.mxu0 0
      %1300 = vmatprep.subr.bf16.mxu0 0
      %1301 = vmatpush1.bf16.msra.mxu0 0
      %1302 = vmatprep.mubr.bf16.mxu0 0
      %1303 = vmatmul.mubr.bf16.gmra.mrb[0].mxu0 %v1186
      %v1304 = vpop.f32.mrb[0].mxu0
      %v1305 = vadd.f32 %v1173, %v1304
      %v1306 = vpop.f32.mrb[0].mxu0
      %v1307 = vpop.f32.mrb[0].mxu0
      %v1308 = vadd.f32 %v1178, %v1307
      %v1309 = vpop.f32.mrb[0].mxu0
      %1310 = vdwg.mxu0
      %1311 = vmatprep.subr.bf16.mxu0 0
      %1312 = vmatpush1.bf16.msra.mxu0 %v1165
      %1313 = vmatprep.subr.bf16.mxu0 0
      %1314 = vmatpush1.bf16.msra.mxu0 0
      %1315 = vmatprep.subr.bf16.mxu0 0
      %1316 = vmatpush1.bf16.msra.mxu0 0
      %1317 = vmatprep.subr.bf16.mxu0 0
      %1318 = vmatpush1.bf16.msra.mxu0 0
      %1319 = vmatprep.subr.bf16.mxu0 0
      %1320 = vmatpush1.bf16.msra.mxu0 0
      %1321 = vmatprep.subr.bf16.mxu0 0
      %1322 = vmatpush1.bf16.msra.mxu0 0
      %1323 = vmatprep.subr.bf16.mxu0 0
      %1324 = vmatpush1.bf16.msra.mxu0 0
      %1325 = vmatprep.subr.bf16.mxu0 0
      %1326 = vmatpush1.bf16.msra.mxu0 0
      %1327 = vmatprep.subr.bf16.mxu0 0
      %1328 = vmatpush1.bf16.msra.mxu0 0
      %1329 = vmatprep.subr.bf16.mxu0 0
      %1330 = vmatpush1.bf16.msra.mxu0 0
      %1331 = vmatprep.subr.bf16.mxu0 0
      %1332 = vmatpush1.bf16.msra.mxu0 0
      %1333 = vmatprep.subr.bf16.mxu0 0
      %1334 = vmatpush1.bf16.msra.mxu0 0
      %1335 = vmatprep.subr.bf16.mxu0 0
      %1336 = vmatpush1.bf16.msra.mxu0 0
      %1337 = vmatprep.subr.bf16.mxu0 0
      %1338 = vmatpush1.bf16.msra.mxu0 0
      %1339 = vmatprep.subr.bf16.mxu0 0
      %1340 = vmatpush1.bf16.msra.mxu0 0
      %1341 = vmatprep.subr.bf16.mxu0 0
      %1342 = vmatpush1.bf16.msra.mxu0 0
      %1343 = vmatprep.mubr.bf16.mxu0 0
      %1344 = vmatmul.mubr.bf16.gmra.mrb[0].mxu0 %v1186
      %v1345 = vpop.f32.mrb[0].mxu0
      %v1346 = vadd.f32 %v1173, %v1345
      %v1347 = vpop.f32.mrb[0].mxu0
      %v1348 = vpop.f32.mrb[0].mxu0
      %v1349 = vadd.f32 %v1178, %v1348
      %v1350 = vpop.f32.mrb[0].mxu0
      %1351 = vdwg.mxu0
      %1352 = vmatprep.subr.bf16.mxu0 0
      %1353 = vmatpush1.bf16.msra.mxu0 %v1166
      %1354 = vmatprep.subr.bf16.mxu0 0
      %1355 = vmatpush1.bf16.msra.mxu0 0
      %1356 = vmatprep.subr.bf16.mxu0 0
      %1357 = vmatpush1.bf16.msra.mxu0 0
      %1358 = vmatprep.subr.bf16.mxu0 0
      %1359 = vmatpush1.bf16.msra.mxu0 0
      %1360 = vmatprep.subr.bf16.mxu0 0
      %1361 = vmatpush1.bf16.msra.mxu0 0
      %1362 = vmatprep.subr.bf16.mxu0 0
      %1363 = vmatpush1.bf16.msra.mxu0 0
      %1364 = vmatprep.subr.bf16.mxu0 0
      %1365 = vmatpush1.bf16.msra.mxu0 0
      %1366 = vmatprep.subr.bf16.mxu0 0
      %1367 = vmatpush1.bf16.msra.mxu0 0
      %1368 = vmatprep.subr.bf16.mxu0 0
      %1369 = vmatpush1.bf16.msra.mxu0 0
      %1370 = vmatprep.subr.bf16.mxu0 0
      %1371 = vmatpush1.bf16.msra.mxu0 0
      %1372 = vmatprep.subr.bf16.mxu0 0
      %1373 = vmatpush1.bf16.msra.mxu0 0
      %1374 = vmatprep.subr.bf16.mxu0 0
      %1375 = vmatpush1.bf16.msra.mxu0 0
      %1376 = vmatprep.subr.bf16.mxu0 0
      %1377 = vmatpush1.bf16.msra.mxu0 0
      %1378 = vmatprep.subr.bf16.mxu0 0
      %1379 = vmatpush1.bf16.msra.mxu0 0
      %1380 = vmatprep.subr.bf16.mxu0 0
      %1381 = vmatpush1.bf16.msra.mxu0 0
      %1382 = vmatprep.subr.bf16.mxu0 0
      %1383 = vmatpush1.bf16.msra.mxu0 0
      %1384 = vmatprep.mubr.bf16.mxu0 0
      %1385 = vmatmul.mubr.bf16.gmra.mrb[0].mxu0 %v1186
      %v1386 = vpop.f32.mrb[0].mxu0
      %v1387 = vadd.f32 %v1173, %v1386
      %v1388 = vpop.f32.mrb[0].mxu0
      %v1389 = vpop.f32.mrb[0].mxu0
      %v1390 = vadd.f32 %v1178, %v1389
      %v1391 = vpop.f32.mrb[0].mxu0
      %1392 = vdwg.mxu0
      %1393 = vmatprep.subr.bf16.mxu0 0
      %1394 = vmatpush1.bf16.msra.mxu0 %v1167
      %1395 = vmatprep.subr.bf16.mxu0 0
      %1396 = vmatpush1.bf16.msra.mxu0 0
      %1397 = vmatprep.subr.bf16.mxu0 0
      %1398 = vmatpush1.bf16.msra.mxu0 0
      %1399 = vmatprep.subr.bf16.mxu0 0
      %1400 = vmatpush1.bf16.msra.mxu0 0
      %1401 = vmatprep.subr.bf16.mxu0 0
      %1402 = vmatpush1.bf16.msra.mxu0 0
      %1403 = vmatprep.subr.bf16.mxu0 0
      %1404 = vmatpush1.bf16.msra.mxu0 0
      %1405 = vmatprep.subr.bf16.mxu0 0
      %1406 = vmatpush1.bf16.msra.mxu0 0
      %1407 = vmatprep.subr.bf16.mxu0 0
      %1408 = vmatpush1.bf16.msra.mxu0 0
      %1409 = vmatprep.subr.bf16.mxu0 0
      %1410 = vmatpush1.bf16.msra.mxu0 0
      %1411 = vmatprep.subr.bf16.mxu0 0
      %1412 = vmatpush1.bf16.msra.mxu0 0
      %1413 = vmatprep.subr.bf16.mxu0 0
      %1414 = vmatpush1.bf16.msra.mxu0 0
      %1415 = vmatprep.subr.bf16.mxu0 0
      %1416 = vmatpush1.bf16.msra.mxu0 0
      %1417 = vmatprep.subr.bf16.mxu0 0
      %1418 = vmatpush1.bf16.msra.mxu0 0
      %1419 = vmatprep.subr.bf16.mxu0 0
      %1420 = vmatpush1.bf16.msra.mxu0 0
      %1421 = vmatprep.subr.bf16.mxu0 0
      %1422 = vmatpush1.bf16.msra.mxu0 0
      %1423 = vmatprep.subr.bf16.mxu0 0
      %1424 = vmatpush1.bf16.msra.mxu0 0
      %1425 = vmatprep.mubr.bf16.mxu0 0
      %1426 = vmatmul.mubr.bf16.gmra.mrb[0].mxu0 %v1186
      %v1427 = vpop.f32.mrb[0].mxu0
      %v1428 = vadd.f32 %v1173, %v1427
      %v1429 = vpop.f32.mrb[0].mxu0
      %v1430 = vpop.f32.mrb[0].mxu0
      %v1431 = vadd.f32 %v1178, %v1430
      %v1432 = vpop.f32.mrb[0].mxu0
      %1433 = vdwg.mxu0
      %1434 = vmatprep.subr.bf16.mxu0 0
      %1435 = vmatpush1.bf16.msra.mxu0 %v1168
      %1436 = vmatprep.subr.bf16.mxu0 0
      %1437 = vmatpush1.bf16.msra.mxu0 0
      %1438 = vmatprep.subr.bf16.mxu0 0
      %1439 = vmatpush1.bf16.msra.mxu0 0
      %1440 = vmatprep.subr.bf16.mxu0 0
      %1441 = vmatpush1.bf16.msra.mxu0 0
      %1442 = vmatprep.subr.bf16.mxu0 0
      %1443 = vmatpush1.bf16.msra.mxu0 0
      %1444 = vmatprep.subr.bf16.mxu0 0
      %1445 = vmatpush1.bf16.msra.mxu0 0
      %1446 = vmatprep.subr.bf16.mxu0 0
      %1447 = vmatpush1.bf16.msra.mxu0 0
      %1448 = vmatprep.subr.bf16.mxu0 0
      %1449 = vmatpush1.bf16.msra.mxu0 0
      %1450 = vmatprep.subr.bf16.mxu0 0
      %1451 = vmatpush1.bf16.msra.mxu0 0
      %1452 = vmatprep.subr.bf16.mxu0 0
      %1453 = vmatpush1.bf16.msra.mxu0 0
      %1454 = vmatprep.subr.bf16.mxu0 0
      %1455 = vmatpush1.bf16.msra.mxu0 0
      %1456 = vmatprep.subr.bf16.mxu0 0
      %1457 = vmatpush1.bf16.msra.mxu0 0
      %1458 = vmatprep.subr.bf16.mxu0 0
      %1459 = vmatpush1.bf16.msra.mxu0 0
      %1460 = vmatprep.subr.bf16.mxu0 0
      %1461 = vmatpush1.bf16.msra.mxu0 0
      %1462 = vmatprep.subr.bf16.mxu0 0
      %1463 = vmatpush1.bf16.msra.mxu0 0
      %1464 = vmatprep.subr.bf16.mxu0 0
      %1465 = vmatpush1.bf16.msra.mxu0 0
      %1466 = vmatprep.mubr.bf16.mxu0 0
      %1467 = vmatmul.mubr.bf16.gmra.mrb[0].mxu0 %v1186
      %v1468 = vpop.f32.mrb[0].mxu0
      %v1469 = vadd.f32 %v1173, %v1468
      %v1470 = vpop.f32.mrb[0].mxu0
      %v1471 = vpop.f32.mrb[0].mxu0
      %v1472 = vadd.f32 %v1178, %v1471
      %v1473 = vpop.f32.mrb[0].mxu0
      %1474 = vdwg.mxu0
      %1475 = vmatprep.subr.bf16.mxu0 0
      %1476 = vmatpush1.bf16.msra.mxu0 %v1169
      %1477 = vmatprep.subr.bf16.mxu0 0
      %1478 = vmatpush1.bf16.msra.mxu0 0
      %1479 = vmatprep.subr.bf16.mxu0 0
      %1480 = vmatpush1.bf16.msra.mxu0 0
      %1481 = vmatprep.subr.bf16.mxu0 0
      %1482 = vmatpush1.bf16.msra.mxu0 0
      %1483 = vmatprep.subr.bf16.mxu0 0
      %1484 = vmatpush1.bf16.msra.mxu0 0
      %1485 = vmatprep.subr.bf16.mxu0 0
      %1486 = vmatpush1.bf16.msra.mxu0 0
      %1487 = vmatprep.subr.bf16.mxu0 0
      %1488 = vmatpush1.bf16.msra.mxu0 0
      %1489 = vmatprep.subr.bf16.mxu0 0
      %1490 = vmatpush1.bf16.msra.mxu0 0
      %1491 = vmatprep.subr.bf16.mxu0 0
      %1492 = vmatpush1.bf16.msra.mxu0 0
      %1493 = vmatprep.subr.bf16.mxu0 0
      %1494 = vmatpush1.bf16.msra.mxu0 0
      %1495 = vmatprep.subr.bf16.mxu0 0
      %1496 = vmatpush1.bf16.msra.mxu0 0
      %1497 = vmatprep.subr.bf16.mxu0 0
      %1498 = vmatpush1.bf16.msra.mxu0 0
      %1499 = vmatprep.subr.bf16.mxu0 0
      %1500 = vmatpush1.bf16.msra.mxu0 0
      %1501 = vmatprep.subr.bf16.mxu0 0
      %1502 = vmatpush1.bf16.msra.mxu0 0
      %1503 = vmatprep.subr.bf16.mxu0 0
      %1504 = vmatpush1.bf16.msra.mxu0 0
      %1505 = vmatprep.subr.bf16.mxu0 0
      %1506 = vmatpush1.bf16.msra.mxu0 0
      %1507 = vmatprep.mubr.bf16.mxu0 0
      %1508 = vmatmul.mubr.bf16.gmra.mrb[0].mxu0 %v1186
      %v1509 = vpop.f32.mrb[0].mxu0
      %v1510 = vadd.f32 %v1173, %v1509
      %v1511 = vpop.f32.mrb[0].mxu0
      %v1512 = vpop.f32.mrb[0].mxu0
      %v1513 = vadd.f32 %v1178, %v1512
      %v1514 = vpop.f32.mrb[0].mxu0
      %1515 = vdwg.mxu0
      %v1516 = vadd.f32 %v308, %v1223
      %v1517 = vadd.f32 %v309, %v1226
      %v1518 = vadd.f32 %v310, %v1264
      %v1519 = vadd.f32 %v311, %v1267
      %v1520 = vadd.f32 %v312, %v1305
      %v1521 = vadd.f32 %v313, %v1308
      %v1522 = vadd.f32 %v314, %v1346
      %v1523 = vadd.f32 %v315, %v1349
      %v1524 = vadd.f32 %v316, %v1387
      %v1525 = vadd.f32 %v317, %v1390
      %v1526 = vadd.f32 %v318, %v1428
      %v1527 = vadd.f32 %v319, %v1431
      %v1528 = vadd.f32 %v320, %v1469
      %v1529 = vadd.f32 %v321, %v1472
      %v1530 = vadd.f32 %v322, %v1510
      %v1531 = vadd.f32 %v323, %v1513
      %v1532 = vsel %vm377, %v1516, 0.0
      %1533 = vadd.xlane.f32.xlu0 %v1532
      %v1534 = vpop.xlane.xlu0 %1533
      %v1535 = vsel %vm377, %v1517, 0.0
      %1536 = vadd.xlane.f32.xlu0 %v1535
      %v1537 = vpop.xlane.xlu0 %1536
      %v1538 = vsel %vm377, %v1518, 0.0
      %1539 = vadd.xlane.f32.xlu0 %v1538
      %v1540 = vpop.xlane.xlu0 %1539
      %v1541 = vsel %vm377, %v1519, 0.0
      %1542 = vadd.xlane.f32.xlu0 %v1541
      %v1543 = vpop.xlane.xlu0 %1542
      %v1544 = vsel %vm377, %v1520, 0.0
      %1545 = vadd.xlane.f32.xlu0 %v1544
      %v1546 = vpop.xlane.xlu0 %1545
      %v1547 = vsel %vm377, %v1521, 0.0
      %1548 = vadd.xlane.f32.xlu0 %v1547
      %v1549 = vpop.xlane.xlu0 %1548
      %v1550 = vsel %vm377, %v1522, 0.0
      %1551 = vadd.xlane.f32.xlu0 %v1550
      %v1552 = vpop.xlane.xlu0 %1551
      %v1553 = vsel %vm377, %v1523, 0.0
      %1554 = vadd.xlane.f32.xlu0 %v1553
      %v1555 = vpop.xlane.xlu0 %1554
      %v1556 = vsel %vm377, %v1524, 0.0
      %1557 = vadd.xlane.f32.xlu0 %v1556
      %v1558 = vpop.xlane.xlu0 %1557
      %v1559 = vsel %vm377, %v1525, 0.0
      %1560 = vadd.xlane.f32.xlu0 %v1559
      %v1561 = vpop.xlane.xlu0 %1560
      %v1562 = vsel %vm377, %v1526, 0.0
      %1563 = vadd.xlane.f32.xlu0 %v1562
      %v1564 = vpop.xlane.xlu0 %1563
      %v1565 = vsel %vm377, %v1527, 0.0
      %1566 = vadd.xlane.f32.xlu0 %v1565
      %v1567 = vpop.xlane.xlu0 %1566
      %v1568 = vsel %vm377, %v1528, 0.0
      %1569 = vadd.xlane.f32.xlu0 %v1568
      %v1570 = vpop.xlane.xlu0 %1569
      %v1571 = vsel %vm377, %v1529, 0.0
      %1572 = vadd.xlane.f32.xlu0 %v1571
      %v1573 = vpop.xlane.xlu0 %1572
      %v1574 = vsel %vm377, %v1530, 0.0
      %1575 = vadd.xlane.f32.xlu0 %v1574
      %v1576 = vpop.xlane.xlu0 %1575
      %v1577 = vsel %vm377, %v1531, 0.0
      %1578 = vadd.xlane.f32.xlu0 %v1577
      %v1579 = vpop.xlane.xlu0 %1578
      %v1580 = vmul.f32 %v1534, %v426
      %v1581 = vmul.f32 %v1537, %v426
      %v1582 = vmul.f32 %v1540, %v426
      %v1583 = vmul.f32 %v1543, %v426
      %v1584 = vmul.f32 %v1546, %v426
      %v1585 = vmul.f32 %v1549, %v426
      %v1586 = vmul.f32 %v1552, %v426
      %v1587 = vmul.f32 %v1555, %v426
      %v1588 = vmul.f32 %v1558, %v426
      %v1589 = vmul.f32 %v1561, %v426
      %v1590 = vmul.f32 %v1564, %v426
      %v1591 = vmul.f32 %v1567, %v426
      %v1592 = vmul.f32 %v1570, %v426
      %v1593 = vmul.f32 %v1573, %v426
      %v1594 = vmul.f32 %v1576, %v426
      %v1595 = vmul.f32 %v1579, %v426
      %v1596 = vmul.f32 %v1516, %v1516
      %v1597 = vmul.f32 %v1517, %v1517
      %v1598 = vmul.f32 %v1518, %v1518
      %v1599 = vmul.f32 %v1519, %v1519
      %v1600 = vmul.f32 %v1520, %v1520
      %v1601 = vmul.f32 %v1521, %v1521
      %v1602 = vmul.f32 %v1522, %v1522
      %v1603 = vmul.f32 %v1523, %v1523
      %v1604 = vmul.f32 %v1524, %v1524
      %v1605 = vmul.f32 %v1525, %v1525
      %v1606 = vmul.f32 %v1526, %v1526
      %v1607 = vmul.f32 %v1527, %v1527
      %v1608 = vmul.f32 %v1528, %v1528
      %v1609 = vmul.f32 %v1529, %v1529
      %v1610 = vmul.f32 %v1530, %v1530
      %v1611 = vmul.f32 %v1531, %v1531
      %v1612 = vsel %vm377, %v1596, 0.0
      %1613 = vadd.xlane.f32.xlu0 %v1612
      %v1614 = vpop.xlane.xlu0 %1613
      %v1615 = vsel %vm377, %v1597, 0.0
      %1616 = vadd.xlane.f32.xlu0 %v1615
      %v1617 = vpop.xlane.xlu0 %1616
      %v1618 = vsel %vm377, %v1598, 0.0
      %1619 = vadd.xlane.f32.xlu0 %v1618
      %v1620 = vpop.xlane.xlu0 %1619
      %v1621 = vsel %vm377, %v1599, 0.0
      %1622 = vadd.xlane.f32.xlu0 %v1621
      %v1623 = vpop.xlane.xlu0 %1622
      %v1624 = vsel %vm377, %v1600, 0.0
      %1625 = vadd.xlane.f32.xlu0 %v1624
      %v1626 = vpop.xlane.xlu0 %1625
      %v1627 = vsel %vm377, %v1601, 0.0
      %1628 = vadd.xlane.f32.xlu0 %v1627
      %v1629 = vpop.xlane.xlu0 %1628
      %v1630 = vsel %vm377, %v1602, 0.0
      %1631 = vadd.xlane.f32.xlu0 %v1630
      %v1632 = vpop.xlane.xlu0 %1631
      %v1633 = vsel %vm377, %v1603, 0.0
      %1634 = vadd.xlane.f32.xlu0 %v1633
      %v1635 = vpop.xlane.xlu0 %1634
      %v1636 = vsel %vm377, %v1604, 0.0
      %1637 = vadd.xlane.f32.xlu0 %v1636
      %v1638 = vpop.xlane.xlu0 %1637
      %v1639 = vsel %vm377, %v1605, 0.0
      %1640 = vadd.xlane.f32.xlu0 %v1639
      %v1641 = vpop.xlane.xlu0 %1640
      %v1642 = vsel %vm377, %v1606, 0.0
      %1643 = vadd.xlane.f32.xlu0 %v1642
      %v1644 = vpop.xlane.xlu0 %1643
      %v1645 = vsel %vm377, %v1607, 0.0
      %1646 = vadd.xlane.f32.xlu0 %v1645
      %v1647 = vpop.xlane.xlu0 %1646
      %v1648 = vsel %vm377, %v1608, 0.0
      %1649 = vadd.xlane.f32.xlu0 %v1648
      %v1650 = vpop.xlane.xlu0 %1649
      %v1651 = vsel %vm377, %v1609, 0.0
      %1652 = vadd.xlane.f32.xlu0 %v1651
      %v1653 = vpop.xlane.xlu0 %1652
      %v1654 = vsel %vm377, %v1610, 0.0
      %1655 = vadd.xlane.f32.xlu0 %v1654
      %v1656 = vpop.xlane.xlu0 %1655
      %v1657 = vsel %vm377, %v1611, 0.0
      %1658 = vadd.xlane.f32.xlu0 %v1657
      %v1659 = vpop.xlane.xlu0 %1658
      %v1660 = vmul.f32 %v1614, %v426
      %v1661 = vmul.f32 %v1617, %v426
      %v1662 = vmul.f32 %v1620, %v426
      %v1663 = vmul.f32 %v1623, %v426
      %v1664 = vmul.f32 %v1626, %v426
      %v1665 = vmul.f32 %v1629, %v426
      %v1666 = vmul.f32 %v1632, %v426
      %v1667 = vmul.f32 %v1635, %v426
      %v1668 = vmul.f32 %v1638, %v426
      %v1669 = vmul.f32 %v1641, %v426
      %v1670 = vmul.f32 %v1644, %v426
      %v1671 = vmul.f32 %v1647, %v426
      %v1672 = vmul.f32 %v1650, %v426
      %v1673 = vmul.f32 %v1653, %v426
      %v1674 = vmul.f32 %v1656, %v426
      %v1675 = vmul.f32 %v1659, %v426
      %v1676 = vmul.f32 %v1580, %v1580
      %v1677 = vmul.f32 %v1581, %v1581
      %v1678 = vmul.f32 %v1582, %v1582
      %v1679 = vmul.f32 %v1583, %v1583
      %v1680 = vmul.f32 %v1584, %v1584
      %v1681 = vmul.f32 %v1585, %v1585
      %v1682 = vmul.f32 %v1586, %v1586
      %v1683 = vmul.f32 %v1587, %v1587
      %v1684 = vmul.f32 %v1588, %v1588
      %v1685 = vmul.f32 %v1589, %v1589
      %v1686 = vmul.f32 %v1590, %v1590
      %v1687 = vmul.f32 %v1591, %v1591
      %v1688 = vmul.f32 %v1592, %v1592
      %v1689 = vmul.f32 %v1593, %v1593
      %v1690 = vmul.f32 %v1594, %v1594
      %v1691 = vmul.f32 %v1595, %v1595
      %v1692 = vsub.f32 %v1660, %v1676
      %v1693 = vsub.f32 %v1661, %v1677
      %v1694 = vsub.f32 %v1662, %v1678
      %v1695 = vsub.f32 %v1663, %v1679
      %v1696 = vsub.f32 %v1664, %v1680
      %v1697 = vsub.f32 %v1665, %v1681
      %v1698 = vsub.f32 %v1666, %v1682
      %v1699 = vsub.f32 %v1667, %v1683
      %v1700 = vsub.f32 %v1668, %v1684
      %v1701 = vsub.f32 %v1669, %v1685
      %v1702 = vsub.f32 %v1670, %v1686
      %v1703 = vsub.f32 %v1671, %v1687
      %v1704 = vsub.f32 %v1672, %v1688
      %v1705 = vsub.f32 %v1673, %v1689
      %v1706 = vsub.f32 %v1674, %v1690
      %v1707 = vsub.f32 %v1675, %v1691
      %v1708 = vsub.f32 %v1516, %v1580
      %v1709 = vsub.f32 %v1517, %v1581
      %v1710 = vsub.f32 %v1518, %v1582
      %v1711 = vsub.f32 %v1519, %v1583
      %v1712 = vsub.f32 %v1520, %v1584
      %v1713 = vsub.f32 %v1521, %v1585
      %v1714 = vsub.f32 %v1522, %v1586
      %v1715 = vsub.f32 %v1523, %v1587
      %v1716 = vsub.f32 %v1524, %v1588
      %v1717 = vsub.f32 %v1525, %v1589
      %v1718 = vsub.f32 %v1526, %v1590
      %v1719 = vsub.f32 %v1527, %v1591
      %v1720 = vsub.f32 %v1528, %v1592
      %v1721 = vsub.f32 %v1529, %v1593
      %v1722 = vsub.f32 %v1530, %v1594
      %v1723 = vsub.f32 %v1531, %v1595
      %v1724 = vadd.f32 %v1692, 1e-06
      %v1725 = vadd.f32 %v1693, 1e-06
      %v1726 = vadd.f32 %v1694, 1e-06
      %v1727 = vadd.f32 %v1695, 1e-06
      %v1728 = vadd.f32 %v1696, 1e-06
      %v1729 = vadd.f32 %v1697, 1e-06
      %v1730 = vadd.f32 %v1698, 1e-06
      %v1731 = vadd.f32 %v1699, 1e-06
      %v1732 = vadd.f32 %v1700, 1e-06
      %v1733 = vadd.f32 %v1701, 1e-06
      %v1734 = vadd.f32 %v1702, 1e-06
      %v1735 = vadd.f32 %v1703, 1e-06
      %v1736 = vadd.f32 %v1704, 1e-06
      %v1737 = vadd.f32 %v1705, 1e-06
      %v1738 = vadd.f32 %v1706, 1e-06
      %v1739 = vadd.f32 %v1707, 1e-06
      %v1740 = vrsqrt.pop %v1724
      %v1741 = vrsqrt.pop %v1725
      %v1742 = vrsqrt.pop %v1726
      %v1743 = vrsqrt.pop %v1727
      %v1744 = vrsqrt.pop %v1728
      %v1745 = vrsqrt.pop %v1729
      %v1746 = vrsqrt.pop %v1730
      %v1747 = vrsqrt.pop %v1731
      %v1748 = vrsqrt.pop %v1732
      %v1749 = vrsqrt.pop %v1733
      %v1750 = vrsqrt.pop %v1734
      %v1751 = vrsqrt.pop %v1735
      %v1752 = vrsqrt.pop %v1736
      %v1753 = vrsqrt.pop %v1737
      %v1754 = vrsqrt.pop %v1738
      %v1755 = vrsqrt.pop %v1739
      %v1756 = vmul.f32 %v1708, %v1740
      %v1757 = vmul.f32 %v1709, %v1741
      %v1758 = vmul.f32 %v1710, %v1742
      %v1759 = vmul.f32 %v1711, %v1743
      %v1760 = vmul.f32 %v1712, %v1744
      %v1761 = vmul.f32 %v1713, %v1745
      %v1762 = vmul.f32 %v1714, %v1746
      %v1763 = vmul.f32 %v1715, %v1747
      %v1764 = vmul.f32 %v1716, %v1748
      %v1765 = vmul.f32 %v1717, %v1749
      %v1766 = vmul.f32 %v1718, %v1750
      %v1767 = vmul.f32 %v1719, %v1751
      %v1768 = vmul.f32 %v1720, %v1752
      %v1769 = vmul.f32 %v1721, %v1753
      %v1770 = vmul.f32 %v1722, %v1754
      %v1771 = vmul.f32 %v1723, %v1755
      %v1773 = vlaneseq
      %v1774 = vshrl.u32 %v1773, 7
      %v1775 = vsub.s32 0, %v1774
      %v1776 = vrot.slane %v345, %v1775
      %v1778 = vmul.f32 %v1756, %v1776
      %v1779 = vmul.f32 %v1757, %v1776
      %v1780 = vmul.f32 %v1758, %v1776
      %v1781 = vmul.f32 %v1759, %v1776
      %v1782 = vmul.f32 %v1760, %v1776
      %v1783 = vmul.f32 %v1761, %v1776
      %v1784 = vmul.f32 %v1762, %v1776
      %v1785 = vmul.f32 %v1763, %v1776
      %v1786 = vmul.f32 %v1764, %v1776
      %v1787 = vmul.f32 %v1765, %v1776
      %v1788 = vmul.f32 %v1766, %v1776
      %v1789 = vmul.f32 %v1767, %v1776
      %v1790 = vmul.f32 %v1768, %v1776
      %v1791 = vmul.f32 %v1769, %v1776
      %v1792 = vmul.f32 %v1770, %v1776
      %v1793 = vmul.f32 %v1771, %v1776
      %v1795 = vlaneseq
      %v1796 = vshrl.u32 %v1795, 7
      %v1797 = vsub.s32 0, %v1796
      %v1798 = vrot.slane %v347, %v1797
      %v1800 = vadd.f32 %v1778, %v1798
      %v1801 = vadd.f32 %v1779, %v1798
      %v1802 = vadd.f32 %v1780, %v1798
      %v1803 = vadd.f32 %v1781, %v1798
      %v1804 = vadd.f32 %v1782, %v1798
      %v1805 = vadd.f32 %v1783, %v1798
      %v1806 = vadd.f32 %v1784, %v1798
      %v1807 = vadd.f32 %v1785, %v1798
      %v1808 = vadd.f32 %v1786, %v1798
      %v1809 = vadd.f32 %v1787, %v1798
      %v1810 = vadd.f32 %v1788, %v1798
      %v1811 = vadd.f32 %v1789, %v1798
      %v1812 = vadd.f32 %v1790, %v1798
      %v1813 = vadd.f32 %v1791, %v1798
      %v1814 = vadd.f32 %v1792, %v1798
      %v1815 = vadd.f32 %v1793, %v1798
      %v1816 = vpack.c.bf16 %v1801, %v1800
      %v1817 = vpack.c.bf16 %v1803, %v1802
      %v1818 = vpack.c.bf16 %v1805, %v1804
      %v1819 = vpack.c.bf16 %v1807, %v1806
      %v1820 = vpack.c.bf16 %v1809, %v1808
      %v1821 = vpack.c.bf16 %v1811, %v1810
      %v1822 = vpack.c.bf16 %v1813, %v1812
      %v1823 = vpack.c.bf16 %v1815, %v1814
      %v1825 = vlaneseq
      %v1826 = vshrl.u32 %v1825, 7
      %v1827 = vsub.s32 0, %v1826
      %v1828 = vrot.slane %v356, %v1827
      %v1834 = vunpack.c.l.b16 %v351
      %v1835 = vunpack.c.l.b16 %v352
      %v1836 = vunpack.c.l.b16 %v353
      %v1837 = vunpack.c.l.b16 %v354
      %v1838 = vpack.c.b16 %v1835, %v1834
      %v1839 = vpack.c.b16 %v1837, %v1836
      %v1843 = vsel %vm377, %v1816, 0
      %v1846 = vsel %vm377, %v1817, 0
      %v1849 = vsel %vm377, %v1818, 0
      %v1852 = vsel %vm377, %v1819, 0
      %v1855 = vsel %vm377, %v1820, 0
      %v1858 = vsel %vm377, %v1821, 0
      %v1861 = vsel %vm377, %v1822, 0
      %v1864 = vsel %vm377, %v1823, 0
      %1866 = vmatprep.subr.bf16.mxu0 0
      %1867 = vmatpush1.bf16.msra.mxu0 %v1838
      %1868 = vmatprep.subr.bf16.mxu0 0
      %1869 = vmatpush1.bf16.msra.mxu0 %v1839
      %1870 = vmatprep.subr.bf16.mxu0 0
      %1871 = vmatpush1.bf16.msra.mxu0 0
      %1872 = vmatprep.subr.bf16.mxu0 0
      %1873 = vmatpush1.bf16.msra.mxu0 0
      %1874 = vmatprep.subr.bf16.mxu0 0
      %1875 = vmatpush1.bf16.msra.mxu0 0
      %1876 = vmatprep.subr.bf16.mxu0 0
      %1877 = vmatpush1.bf16.msra.mxu0 0
      %1878 = vmatprep.subr.bf16.mxu0 0
      %1879 = vmatpush1.bf16.msra.mxu0 0
      %1880 = vmatprep.subr.bf16.mxu0 0
      %1881 = vmatpush1.bf16.msra.mxu0 0
      %1882 = vmatprep.subr.bf16.mxu0 0
      %1883 = vmatpush1.bf16.msra.mxu0 0
      %1884 = vmatprep.subr.bf16.mxu0 0
      %1885 = vmatpush1.bf16.msra.mxu0 0
      %1886 = vmatprep.subr.bf16.mxu0 0
      %1887 = vmatpush1.bf16.msra.mxu0 0
      %1888 = vmatprep.subr.bf16.mxu0 0
      %1889 = vmatpush1.bf16.msra.mxu0 0
      %1890 = vmatprep.subr.bf16.mxu0 0
      %1891 = vmatpush1.bf16.msra.mxu0 0
      %1892 = vmatprep.subr.bf16.mxu0 0
      %1893 = vmatpush1.bf16.msra.mxu0 0
      %1894 = vmatprep.subr.bf16.mxu0 0
      %1895 = vmatpush1.bf16.msra.mxu0 0
      %1896 = vmatprep.subr.bf16.mxu0 0
      %1897 = vmatpush1.bf16.msra.mxu0 0
      %1898 = vmatprep.mubr.bf16.mxu0 0
      %1899 = vmatmul.mubr.bf16.gmra.mrb[0].mxu0 %v1843
      %v1900 = vpop.f32.mrb[0].mxu0
      %v1901 = vadd.f32 %v1828, %v1900
      %v1902 = vpop.f32.mrb[0].mxu0
      %v1903 = vpop.f32.mrb[0].mxu0
      %v1904 = vadd.f32 %v1828, %v1903
      %v1905 = vpop.f32.mrb[0].mxu0
      %1906 = vmatprep.mubr.bf16.mxu0 0
      %1907 = vmatmul.mubr.bf16.gmra.mrb[0].mxu0 %v1846
      %v1908 = vpop.f32.mrb[0].mxu0
      %v1909 = vadd.f32 %v1828, %v1908
      %v1910 = vpop.f32.mrb[0].mxu0
      %v1911 = vpop.f32.mrb[0].mxu0
      %v1912 = vadd.f32 %v1828, %v1911
      %v1913 = vpop.f32.mrb[0].mxu0
      %1914 = vmatprep.mubr.bf16.mxu0 0
      %1915 = vmatmul.mubr.bf16.gmra.mrb[0].mxu0 %v1849
      %v1916 = vpop.f32.mrb[0].mxu0
      %v1917 = vadd.f32 %v1828, %v1916
      %v1918 = vpop.f32.mrb[0].mxu0
      %v1919 = vpop.f32.mrb[0].mxu0
      %v1920 = vadd.f32 %v1828, %v1919
      %v1921 = vpop.f32.mrb[0].mxu0
      %1922 = vmatprep.mubr.bf16.mxu0 0
      %1923 = vmatmul.mubr.bf16.gmra.mrb[0].mxu0 %v1852
      %v1924 = vpop.f32.mrb[0].mxu0
      %v1925 = vadd.f32 %v1828, %v1924
      %v1926 = vpop.f32.mrb[0].mxu0
      %v1927 = vpop.f32.mrb[0].mxu0
      %v1928 = vadd.f32 %v1828, %v1927
      %v1929 = vpop.f32.mrb[0].mxu0
      %1930 = vmatprep.mubr.bf16.mxu0 0
      %1931 = vmatmul.mubr.bf16.gmra.mrb[0].mxu0 %v1855
      %v1932 = vpop.f32.mrb[0].mxu0
      %v1933 = vadd.f32 %v1828, %v1932
      %v1934 = vpop.f32.mrb[0].mxu0
      %v1935 = vpop.f32.mrb[0].mxu0
      %v1936 = vadd.f32 %v1828, %v1935
      %v1937 = vpop.f32.mrb[0].mxu0
      %1938 = vmatprep.mubr.bf16.mxu0 0
      %1939 = vmatmul.mubr.bf16.gmra.mrb[0].mxu0 %v1858
      %v1940 = vpop.f32.mrb[0].mxu0
      %v1941 = vadd.f32 %v1828, %v1940
      %v1942 = vpop.f32.mrb[0].mxu0
      %v1943 = vpop.f32.mrb[0].mxu0
      %v1944 = vadd.f32 %v1828, %v1943
      %v1945 = vpop.f32.mrb[0].mxu0
      %1946 = vmatprep.mubr.bf16.mxu0 0
      %1947 = vmatmul.mubr.bf16.gmra.mrb[0].mxu0 %v1861
      %v1948 = vpop.f32.mrb[0].mxu0
      %v1949 = vadd.f32 %v1828, %v1948
      %v1950 = vpop.f32.mrb[0].mxu0
      %v1951 = vpop.f32.mrb[0].mxu0
      %v1952 = vadd.f32 %v1828, %v1951
      %v1953 = vpop.f32.mrb[0].mxu0
      %1954 = vmatprep.mubr.bf16.mxu0 0
      %1955 = vmatmul.mubr.bf16.gmra.mrb[0].mxu0 %v1864
      %v1956 = vpop.f32.mrb[0].mxu0
      %v1957 = vadd.f32 %v1828, %v1956
      %v1958 = vpop.f32.mrb[0].mxu0
      %v1959 = vpop.f32.mrb[0].mxu0
      %v1960 = vadd.f32 %v1828, %v1959
      %v1961 = vpop.f32.mrb[0].mxu0
      %1962 = vdwg.mxu0
      %v1963 = vmul.f32 %v1901, %v1901
      %v1964 = vmul.f32 %v1904, %v1904
      %v1965 = vmul.f32 %v1909, %v1909
      %v1966 = vmul.f32 %v1912, %v1912
      %v1967 = vmul.f32 %v1917, %v1917
      %v1968 = vmul.f32 %v1920, %v1920
      %v1969 = vmul.f32 %v1925, %v1925
      %v1970 = vmul.f32 %v1928, %v1928
      %v1971 = vmul.f32 %v1933, %v1933
      %v1972 = vmul.f32 %v1936, %v1936
      %v1973 = vmul.f32 %v1941, %v1941
      %v1974 = vmul.f32 %v1944, %v1944
      %v1975 = vmul.f32 %v1949, %v1949
      %v1976 = vmul.f32 %v1952, %v1952
      %v1977 = vmul.f32 %v1957, %v1957
      %v1978 = vmul.f32 %v1960, %v1960
      %v1979 = vmul.f32 %v1901, %v1963
      %v1980 = vmul.f32 %v1904, %v1964
      %v1981 = vmul.f32 %v1909, %v1965
      %v1982 = vmul.f32 %v1912, %v1966
      %v1983 = vmul.f32 %v1917, %v1967
      %v1984 = vmul.f32 %v1920, %v1968
      %v1985 = vmul.f32 %v1925, %v1969
      %v1986 = vmul.f32 %v1928, %v1970
      %v1987 = vmul.f32 %v1933, %v1971
      %v1988 = vmul.f32 %v1936, %v1972
      %v1989 = vmul.f32 %v1941, %v1973
      %v1990 = vmul.f32 %v1944, %v1974
      %v1991 = vmul.f32 %v1949, %v1975
      %v1992 = vmul.f32 %v1952, %v1976
      %v1993 = vmul.f32 %v1957, %v1977
      %v1994 = vmul.f32 %v1960, %v1978
      %v1995 = vmul.f32 %v1979, 0.044715
      %v1996 = vmul.f32 %v1980, 0.044715
      %v1997 = vmul.f32 %v1981, 0.044715
      %v1998 = vmul.f32 %v1982, 0.044715
      %v1999 = vmul.f32 %v1983, 0.044715
      %v2000 = vmul.f32 %v1984, 0.044715
      %v2001 = vmul.f32 %v1985, 0.044715
      %v2002 = vmul.f32 %v1986, 0.044715
      %v2003 = vmul.f32 %v1987, 0.044715
      %v2004 = vmul.f32 %v1988, 0.044715
      %v2005 = vmul.f32 %v1989, 0.044715
      %v2006 = vmul.f32 %v1990, 0.044715
      %v2007 = vmul.f32 %v1991, 0.044715
      %v2008 = vmul.f32 %v1992, 0.044715
      %v2009 = vmul.f32 %v1993, 0.044715
      %v2010 = vmul.f32 %v1994, 0.044715
      %v2011 = vadd.f32 %v1901, %v1995
      %v2012 = vadd.f32 %v1904, %v1996
      %v2013 = vadd.f32 %v1909, %v1997
      %v2014 = vadd.f32 %v1912, %v1998
      %v2015 = vadd.f32 %v1917, %v1999
      %v2016 = vadd.f32 %v1920, %v2000
      %v2017 = vadd.f32 %v1925, %v2001
      %v2018 = vadd.f32 %v1928, %v2002
      %v2019 = vadd.f32 %v1933, %v2003
      %v2020 = vadd.f32 %v1936, %v2004
      %v2021 = vadd.f32 %v1941, %v2005
      %v2022 = vadd.f32 %v1944, %v2006
      %v2023 = vadd.f32 %v1949, %v2007
      %v2024 = vadd.f32 %v1952, %v2008
      %v2025 = vadd.f32 %v1957, %v2009
      %v2026 = vadd.f32 %v1960, %v2010
      %v2027 = vmul.f32 %v2011, 0.7978846
      %v2028 = vmul.f32 %v2012, 0.7978846
      %v2029 = vmul.f32 %v2013, 0.7978846
      %v2030 = vmul.f32 %v2014, 0.7978846
      %v2031 = vmul.f32 %v2015, 0.7978846
      %v2032 = vmul.f32 %v2016, 0.7978846
      %v2033 = vmul.f32 %v2017, 0.7978846
      %v2034 = vmul.f32 %v2018, 0.7978846
      %v2035 = vmul.f32 %v2019, 0.7978846
      %v2036 = vmul.f32 %v2020, 0.7978846
      %v2037 = vmul.f32 %v2021, 0.7978846
      %v2038 = vmul.f32 %v2022, 0.7978846
      %v2039 = vmul.f32 %v2023, 0.7978846
      %v2040 = vmul.f32 %v2024, 0.7978846
      %v2041 = vmul.f32 %v2025, 0.7978846
      %v2042 = vmul.f32 %v2026, 0.7978846
      %v2043 = vtanh.pop %v2027
      %v2044 = vtanh.pop %v2028
      %v2045 = vtanh.pop %v2029
      %v2046 = vtanh.pop %v2030
      %v2047 = vtanh.pop %v2031
      %v2048 = vtanh.pop %v2032
      %v2049 = vtanh.pop %v2033
      %v2050 = vtanh.pop %v2034
      %v2051 = vtanh.pop %v2035
      %v2052 = vtanh.pop %v2036
      %v2053 = vtanh.pop %v2037
      %v2054 = vtanh.pop %v2038
      %v2055 = vtanh.pop %v2039
      %v2056 = vtanh.pop %v2040
      %v2057 = vtanh.pop %v2041
      %v2058 = vtanh.pop %v2042
      %v2059 = vadd.f32 %v2043, 1.0
      %v2060 = vadd.f32 %v2044, 1.0
      %v2061 = vadd.f32 %v2045, 1.0
      %v2062 = vadd.f32 %v2046, 1.0
      %v2063 = vadd.f32 %v2047, 1.0
      %v2064 = vadd.f32 %v2048, 1.0
      %v2065 = vadd.f32 %v2049, 1.0
      %v2066 = vadd.f32 %v2050, 1.0
      %v2067 = vadd.f32 %v2051, 1.0
      %v2068 = vadd.f32 %v2052, 1.0
      %v2069 = vadd.f32 %v2053, 1.0
      %v2070 = vadd.f32 %v2054, 1.0
      %v2071 = vadd.f32 %v2055, 1.0
      %v2072 = vadd.f32 %v2056, 1.0
      %v2073 = vadd.f32 %v2057, 1.0
      %v2074 = vadd.f32 %v2058, 1.0
      %v2075 = vmul.f32 %v2059, 0.5
      %v2076 = vmul.f32 %v2060, 0.5
      %v2077 = vmul.f32 %v2061, 0.5
      %v2078 = vmul.f32 %v2062, 0.5
      %v2079 = vmul.f32 %v2063, 0.5
      %v2080 = vmul.f32 %v2064, 0.5
      %v2081 = vmul.f32 %v2065, 0.5
      %v2082 = vmul.f32 %v2066, 0.5
      %v2083 = vmul.f32 %v2067, 0.5
      %v2084 = vmul.f32 %v2068, 0.5
      %v2085 = vmul.f32 %v2069, 0.5
      %v2086 = vmul.f32 %v2070, 0.5
      %v2087 = vmul.f32 %v2071, 0.5
      %v2088 = vmul.f32 %v2072, 0.5
      %v2089 = vmul.f32 %v2073, 0.5
      %v2090 = vmul.f32 %v2074, 0.5
      %v2091 = vmul.f32 %v1901, %v2075
      %v2092 = vmul.f32 %v1904, %v2076
      %v2093 = vmul.f32 %v1909, %v2077
      %v2094 = vmul.f32 %v1912, %v2078
      %v2095 = vmul.f32 %v1917, %v2079
      %v2096 = vmul.f32 %v1920, %v2080
      %v2097 = vmul.f32 %v1925, %v2081
      %v2098 = vmul.f32 %v1928, %v2082
      %v2099 = vmul.f32 %v1933, %v2083
      %v2100 = vmul.f32 %v1936, %v2084
      %v2101 = vmul.f32 %v1941, %v2085
      %v2102 = vmul.f32 %v1944, %v2086
      %v2103 = vmul.f32 %v1949, %v2087
      %v2104 = vmul.f32 %v1952, %v2088
      %v2105 = vmul.f32 %v1957, %v2089
      %v2106 = vmul.f32 %v1960, %v2090
      %v2107 = vpack.c.bf16 %v2092, %v2091
      %v2108 = vpack.c.bf16 %v2094, %v2093
      %v2109 = vpack.c.bf16 %v2096, %v2095
      %v2110 = vpack.c.bf16 %v2098, %v2097
      %v2111 = vpack.c.bf16 %v2100, %v2099
      %v2112 = vpack.c.bf16 %v2102, %v2101
      %v2113 = vpack.c.bf16 %v2104, %v2103
      %v2114 = vpack.c.bf16 %v2106, %v2105
      %v2116 = vlaneseq
      %v2117 = vshrl.u32 %v2116, 7
      %v2118 = vsub.s32 0, %v2117
      %v2119 = vrot.slane %v376, %v2118
      %v2137 = vunpack.c.l.b16 %v359
      %v2138 = vunpack.c.l.b16 %v360
      %v2139 = vunpack.c.l.b16 %v361
      %v2140 = vunpack.c.l.b16 %v362
      %v2141 = vunpack.c.l.b16 %v363
      %v2142 = vunpack.c.l.b16 %v364
      %v2143 = vunpack.c.l.b16 %v365
      %v2144 = vunpack.c.l.b16 %v366
      %v2145 = vunpack.c.l.b16 %v367
      %v2146 = vunpack.c.l.b16 %v368
      %v2147 = vunpack.c.l.b16 %v369
      %v2148 = vunpack.c.l.b16 %v370
      %v2149 = vunpack.c.l.b16 %v371
      %v2150 = vunpack.c.l.b16 %v372
      %v2151 = vunpack.c.l.b16 %v373
      %v2152 = vunpack.c.l.b16 %v374
      %v2153 = vpack.c.b16 %v2138, %v2137
      %v2154 = vpack.c.b16 %v2140, %v2139
      %v2155 = vpack.c.b16 %v2142, %v2141
      %v2156 = vpack.c.b16 %v2144, %v2143
      %v2157 = vpack.c.b16 %v2146, %v2145
      %v2158 = vpack.c.b16 %v2148, %v2147
      %v2159 = vpack.c.b16 %v2150, %v2149
      %v2160 = vpack.c.b16 %v2152, %v2151
      %2169 = vmatprep.subr.bf16.mxu0 0
      %2170 = vmatpush1.bf16.msra.mxu0 %v2153
      %2171 = vmatprep.subr.bf16.mxu0 0
      %2172 = vmatpush1.bf16.msra.mxu0 %v2154
      %2173 = vmatprep.subr.bf16.mxu0 0
      %2174 = vmatpush1.bf16.msra.mxu0 %v2155
      %2175 = vmatprep.subr.bf16.mxu0 0
      %2176 = vmatpush1.bf16.msra.mxu0 %v2156
      %2177 = vmatprep.subr.bf16.mxu0 0
      %2178 = vmatpush1.bf16.msra.mxu0 %v2157
      %2179 = vmatprep.subr.bf16.mxu0 0
      %2180 = vmatpush1.bf16.msra.mxu0 %v2158
      %2181 = vmatprep.subr.bf16.mxu0 0
      %2182 = vmatpush1.bf16.msra.mxu0 %v2159
      %2183 = vmatprep.subr.bf16.mxu0 0
      %2184 = vmatpush1.bf16.msra.mxu0 %v2160
      %2185 = vmatprep.subr.bf16.mxu0 0
      %2186 = vmatpush1.bf16.msra.mxu0 0
      %2187 = vmatprep.subr.bf16.mxu0 0
      %2188 = vmatpush1.bf16.msra.mxu0 0
      %2189 = vmatprep.subr.bf16.mxu0 0
      %2190 = vmatpush1.bf16.msra.mxu0 0
      %2191 = vmatprep.subr.bf16.mxu0 0
      %2192 = vmatpush1.bf16.msra.mxu0 0
      %2193 = vmatprep.subr.bf16.mxu0 0
      %2194 = vmatpush1.bf16.msra.mxu0 0
      %2195 = vmatprep.subr.bf16.mxu0 0
      %2196 = vmatpush1.bf16.msra.mxu0 0
      %2197 = vmatprep.subr.bf16.mxu0 0
      %2198 = vmatpush1.bf16.msra.mxu0 0
      %2199 = vmatprep.subr.bf16.mxu0 0
      %2200 = vmatpush1.bf16.msra.mxu0 0
      %2201 = vmatprep.mubr.bf16.mxu0 0
      %2202 = vmatmul.mubr.bf16.gmra.mrb[0].mxu0 %v2107
      %v2203 = vpop.f32.mrb[0].mxu0
      %v2204 = vadd.f32 %v2119, %v2203
      %v2205 = vpop.f32.mrb[0].mxu0
      %v2206 = vpop.f32.mrb[0].mxu0
      %v2207 = vadd.f32 %v2119, %v2206
      %v2208 = vpop.f32.mrb[0].mxu0
      %2209 = vmatprep.mubr.bf16.mxu0 0
      %2210 = vmatmul.mubr.bf16.gmra.mrb[0].mxu0 %v2108
      %v2211 = vpop.f32.mrb[0].mxu0
      %v2212 = vadd.f32 %v2119, %v2211
      %v2213 = vpop.f32.mrb[0].mxu0
      %v2214 = vpop.f32.mrb[0].mxu0
      %v2215 = vadd.f32 %v2119, %v2214
      %v2216 = vpop.f32.mrb[0].mxu0
      %2217 = vmatprep.mubr.bf16.mxu0 0
      %2218 = vmatmul.mubr.bf16.gmra.mrb[0].mxu0 %v2109
      %v2219 = vpop.f32.mrb[0].mxu0
      %v2220 = vadd.f32 %v2119, %v2219
      %v2221 = vpop.f32.mrb[0].mxu0
      %v2222 = vpop.f32.mrb[0].mxu0
      %v2223 = vadd.f32 %v2119, %v2222
      %v2224 = vpop.f32.mrb[0].mxu0
      %2225 = vmatprep.mubr.bf16.mxu0 0
      %2226 = vmatmul.mubr.bf16.gmra.mrb[0].mxu0 %v2110
      %v2227 = vpop.f32.mrb[0].mxu0
      %v2228 = vadd.f32 %v2119, %v2227
      %v2229 = vpop.f32.mrb[0].mxu0
      %v2230 = vpop.f32.mrb[0].mxu0
      %v2231 = vadd.f32 %v2119, %v2230
      %v2232 = vpop.f32.mrb[0].mxu0
      %2233 = vmatprep.mubr.bf16.mxu0 0
      %2234 = vmatmul.mubr.bf16.gmra.mrb[0].mxu0 %v2111
      %v2235 = vpop.f32.mrb[0].mxu0
      %v2236 = vadd.f32 %v2119, %v2235
      %v2237 = vpop.f32.mrb[0].mxu0
      %v2238 = vpop.f32.mrb[0].mxu0
      %v2239 = vadd.f32 %v2119, %v2238
      %v2240 = vpop.f32.mrb[0].mxu0
      %2241 = vmatprep.mubr.bf16.mxu0 0
      %2242 = vmatmul.mubr.bf16.gmra.mrb[0].mxu0 %v2112
      %v2243 = vpop.f32.mrb[0].mxu0
      %v2244 = vadd.f32 %v2119, %v2243
      %v2245 = vpop.f32.mrb[0].mxu0
      %v2246 = vpop.f32.mrb[0].mxu0
      %v2247 = vadd.f32 %v2119, %v2246
      %v2248 = vpop.f32.mrb[0].mxu0
      %2249 = vmatprep.mubr.bf16.mxu0 0
      %2250 = vmatmul.mubr.bf16.gmra.mrb[0].mxu0 %v2113
      %v2251 = vpop.f32.mrb[0].mxu0
      %v2252 = vadd.f32 %v2119, %v2251
      %v2253 = vpop.f32.mrb[0].mxu0
      %v2254 = vpop.f32.mrb[0].mxu0
      %v2255 = vadd.f32 %v2119, %v2254
      %v2256 = vpop.f32.mrb[0].mxu0
      %2257 = vmatprep.mubr.bf16.mxu0 0
      %2258 = vmatmul.mubr.bf16.gmra.mrb[0].mxu0 %v2114
      %v2259 = vpop.f32.mrb[0].mxu0
      %v2260 = vadd.f32 %v2119, %v2259
      %v2261 = vpop.f32.mrb[0].mxu0
      %v2262 = vpop.f32.mrb[0].mxu0
      %v2263 = vadd.f32 %v2119, %v2262
      %v2264 = vpop.f32.mrb[0].mxu0
      %2265 = vdwg.mxu0
      %v2266 = vadd.f32 %v1516, %v2204
      %v2267 = vadd.f32 %v1517, %v2207
      %v2268 = vadd.f32 %v1518, %v2212
      %v2269 = vadd.f32 %v1519, %v2215
      %v2270 = vadd.f32 %v1520, %v2220
      %v2271 = vadd.f32 %v1521, %v2223
      %v2272 = vadd.f32 %v1522, %v2228
      %v2273 = vadd.f32 %v1523, %v2231
      %v2274 = vadd.f32 %v1524, %v2236
      %v2275 = vadd.f32 %v1525, %v2239
      %v2276 = vadd.f32 %v1526, %v2244
      %v2277 = vadd.f32 %v1527, %v2247
      %v2278 = vadd.f32 %v1528, %v2252
      %v2279 = vadd.f32 %v1529, %v2255
      %v2280 = vadd.f32 %v1530, %v2260
      %v2281 = vadd.f32 %v1531, %v2263
    $region90: #{tpu_custom_call.1} parent=1 // loop_footer
      %s307 = sadd.s32 1, %s303
    $region91: #{tpu_custom_call.1} parent=1 // loop_footer_branch
      %302 = sbr.rel target = $region87
    $region92: #{tpu_custom_call.1} parent=1 // loop_exit
      _
    %v2282 = vld [vmem:[%s15] sm:$0x1]
    %v2283 = vld [vmem:[%s16] sm:$0x1]
    %v2284 = vld [vmem:[%s19] sm:$0xf]
    %v2285 = vld [vmem:[%s19 + $0x4] sm:$0xf]
    %v2286 = vld [vmem:[%s19 + $0x8] sm:$0xf]
    %v2287 = vld [vmem:[%s19 + $0xc] sm:$0xf]
    %v2288 = vld [vmem:[%s20] sm:$0x1]
    %vm2289 = vcmask 261120
    %v2290 = vsel %vm2289, %v308, 0.0
    %2291 = vadd.xlane.f32.xlu0 %v2290
    %v2292 = vpop.xlane.xlu0 %2291
    %v2293 = vsel %vm2289, %v309, 0.0
    %2294 = vadd.xlane.f32.xlu0 %v2293
    %v2295 = vpop.xlane.xlu0 %2294
    %v2296 = vsel %vm2289, %v310, 0.0
    %2297 = vadd.xlane.f32.xlu0 %v2296
    %v2298 = vpop.xlane.xlu0 %2297
    %v2299 = vsel %vm2289, %v311, 0.0
    %2300 = vadd.xlane.f32.xlu0 %v2299
    %v2301 = vpop.xlane.xlu0 %2300
    %v2302 = vsel %vm2289, %v312, 0.0
    %2303 = vadd.xlane.f32.xlu0 %v2302
    %v2304 = vpop.xlane.xlu0 %2303
    %v2305 = vsel %vm2289, %v313, 0.0
    %2306 = vadd.xlane.f32.xlu0 %v2305
    %v2307 = vpop.xlane.xlu0 %2306
    %v2308 = vsel %vm2289, %v314, 0.0
    %2309 = vadd.xlane.f32.xlu0 %v2308
    %v2310 = vpop.xlane.xlu0 %2309
    %v2311 = vsel %vm2289, %v315, 0.0
    %2312 = vadd.xlane.f32.xlu0 %v2311
    %v2313 = vpop.xlane.xlu0 %2312
    %v2314 = vsel %vm2289, %v316, 0.0
    %2315 = vadd.xlane.f32.xlu0 %v2314
    %v2316 = vpop.xlane.xlu0 %2315
    %v2317 = vsel %vm2289, %v317, 0.0
    %2318 = vadd.xlane.f32.xlu0 %v2317
    %v2319 = vpop.xlane.xlu0 %2318
    %v2320 = vsel %vm2289, %v318, 0.0
    %2321 = vadd.xlane.f32.xlu0 %v2320
    %v2322 = vpop.xlane.xlu0 %2321
    %v2323 = vsel %vm2289, %v319, 0.0
    %2324 = vadd.xlane.f32.xlu0 %v2323
    %v2325 = vpop.xlane.xlu0 %2324
    %v2326 = vsel %vm2289, %v320, 0.0
    %2327 = vadd.xlane.f32.xlu0 %v2326
    %v2328 = vpop.xlane.xlu0 %2327
    %v2329 = vsel %vm2289, %v321, 0.0
    %2330 = vadd.xlane.f32.xlu0 %v2329
    %v2331 = vpop.xlane.xlu0 %2330
    %v2332 = vsel %vm2289, %v322, 0.0
    %2333 = vadd.xlane.f32.xlu0 %v2332
    %v2334 = vpop.xlane.xlu0 %2333
    %v2335 = vsel %vm2289, %v323, 0.0
    %2336 = vadd.xlane.f32.xlu0 %v2335
    %v2337 = vpop.xlane.xlu0 %2336
    %v2338 = vrcp.pop 32.0
    %v2339 = vmul.f32 %v2292, %v2338
    %v2340 = vmul.f32 %v2295, %v2338
    %v2341 = vmul.f32 %v2298, %v2338
    %v2342 = vmul.f32 %v2301, %v2338
    %v2343 = vmul.f32 %v2304, %v2338
    %v2344 = vmul.f32 %v2307, %v2338
    %v2345 = vmul.f32 %v2310, %v2338
    %v2346 = vmul.f32 %v2313, %v2338
    %v2347 = vmul.f32 %v2316, %v2338
    %v2348 = vmul.f32 %v2319, %v2338
    %v2349 = vmul.f32 %v2322, %v2338
    %v2350 = vmul.f32 %v2325, %v2338
    %v2351 = vmul.f32 %v2328, %v2338
    %v2352 = vmul.f32 %v2331, %v2338
    %v2353 = vmul.f32 %v2334, %v2338
    %v2354 = vmul.f32 %v2337, %v2338
    %v2355 = vmul.f32 %v308, %v308
    %v2356 = vmul.f32 %v309, %v309
    %v2357 = vmul.f32 %v310, %v310
    %v2358 = vmul.f32 %v311, %v311
    %v2359 = vmul.f32 %v312, %v312
    %v2360 = vmul.f32 %v313, %v313
    %v2361 = vmul.f32 %v314, %v314
    %v2362 = vmul.f32 %v315, %v315
    %v2363 = vmul.f32 %v316, %v316
    %v2364 = vmul.f32 %v317, %v317
    %v2365 = vmul.f32 %v318, %v318
    %v2366 = vmul.f32 %v319, %v319
    %v2367 = vmul.f32 %v320, %v320
    %v2368 = vmul.f32 %v321, %v321
    %v2369 = vmul.f32 %v322, %v322
    %v2370 = vmul.f32 %v323, %v323
    %v2371 = vsel %vm2289, %v2355, 0.0
    %2372 = vadd.xlane.f32.xlu0 %v2371
    %v2373 = vpop.xlane.xlu0 %2372
    %v2374 = vsel %vm2289, %v2356, 0.0
    %2375 = vadd.xlane.f32.xlu0 %v2374
    %v2376 = vpop.xlane.xlu0 %2375
    %v2377 = vsel %vm2289, %v2357, 0.0
    %2378 = vadd.xlane.f32.xlu0 %v2377
    %v2379 = vpop.xlane.xlu0 %2378
    %v2380 = vsel %vm2289, %v2358, 0.0
    %2381 = vadd.xlane.f32.xlu0 %v2380
    %v2382 = vpop.xlane.xlu0 %2381
    %v2383 = vsel %vm2289, %v2359, 0.0
    %2384 = vadd.xlane.f32.xlu0 %v2383
    %v2385 = vpop.xlane.xlu0 %2384
    %v2386 = vsel %vm2289, %v2360, 0.0
    %2387 = vadd.xlane.f32.xlu0 %v2386
    %v2388 = vpop.xlane.xlu0 %2387
    %v2389 = vsel %vm2289, %v2361, 0.0
    %2390 = vadd.xlane.f32.xlu0 %v2389
    %v2391 = vpop.xlane.xlu0 %2390
    %v2392 = vsel %vm2289, %v2362, 0.0
    %2393 = vadd.xlane.f32.xlu0 %v2392
    %v2394 = vpop.xlane.xlu0 %2393
    %v2395 = vsel %vm2289, %v2363, 0.0
    %2396 = vadd.xlane.f32.xlu0 %v2395
    %v2397 = vpop.xlane.xlu0 %2396
    %v2398 = vsel %vm2289, %v2364, 0.0
    %2399 = vadd.xlane.f32.xlu0 %v2398
    %v2400 = vpop.xlane.xlu0 %2399
    %v2401 = vsel %vm2289, %v2365, 0.0
    %2402 = vadd.xlane.f32.xlu0 %v2401
    %v2403 = vpop.xlane.xlu0 %2402
    %v2404 = vsel %vm2289, %v2366, 0.0
    %2405 = vadd.xlane.f32.xlu0 %v2404
    %v2406 = vpop.xlane.xlu0 %2405
    %v2407 = vsel %vm2289, %v2367, 0.0
    %2408 = vadd.xlane.f32.xlu0 %v2407
    %v2409 = vpop.xlane.xlu0 %2408
    %v2410 = vsel %vm2289, %v2368, 0.0
    %2411 = vadd.xlane.f32.xlu0 %v2410
    %v2412 = vpop.xlane.xlu0 %2411
    %v2413 = vsel %vm2289, %v2369, 0.0
    %2414 = vadd.xlane.f32.xlu0 %v2413
    %v2415 = vpop.xlane.xlu0 %2414
    %v2416 = vsel %vm2289, %v2370, 0.0
    %2417 = vadd.xlane.f32.xlu0 %v2416
    %v2418 = vpop.xlane.xlu0 %2417
    %v2419 = vmul.f32 %v2373, %v2338
    %v2420 = vmul.f32 %v2376, %v2338
    %v2421 = vmul.f32 %v2379, %v2338
    %v2422 = vmul.f32 %v2382, %v2338
    %v2423 = vmul.f32 %v2385, %v2338
    %v2424 = vmul.f32 %v2388, %v2338
    %v2425 = vmul.f32 %v2391, %v2338
    %v2426 = vmul.f32 %v2394, %v2338
    %v2427 = vmul.f32 %v2397, %v2338
    %v2428 = vmul.f32 %v2400, %v2338
    %v2429 = vmul.f32 %v2403, %v2338
    %v2430 = vmul.f32 %v2406, %v2338
    %v2431 = vmul.f32 %v2409, %v2338
    %v2432 = vmul.f32 %v2412, %v2338
    %v2433 = vmul.f32 %v2415, %v2338
    %v2434 = vmul.f32 %v2418, %v2338
    %v2435 = vmul.f32 %v2339, %v2339
    %v2436 = vmul.f32 %v2340, %v2340
    %v2437 = vmul.f32 %v2341, %v2341
    %v2438 = vmul.f32 %v2342, %v2342
    %v2439 = vmul.f32 %v2343, %v2343
    %v2440 = vmul.f32 %v2344, %v2344
    %v2441 = vmul.f32 %v2345, %v2345
    %v2442 = vmul.f32 %v2346, %v2346
    %v2443 = vmul.f32 %v2347, %v2347
    %v2444 = vmul.f32 %v2348, %v2348
    %v2445 = vmul.f32 %v2349, %v2349
    %v2446 = vmul.f32 %v2350, %v2350
    %v2447 = vmul.f32 %v2351, %v2351
    %v2448 = vmul.f32 %v2352, %v2352
    %v2449 = vmul.f32 %v2353, %v2353
    %v2450 = vmul.f32 %v2354, %v2354
    %v2451 = vsub.f32 %v2419, %v2435
    %v2452 = vsub.f32 %v2420, %v2436
    %v2453 = vsub.f32 %v2421, %v2437
    %v2454 = vsub.f32 %v2422, %v2438
    %v2455 = vsub.f32 %v2423, %v2439
    %v2456 = vsub.f32 %v2424, %v2440
    %v2457 = vsub.f32 %v2425, %v2441
    %v2458 = vsub.f32 %v2426, %v2442
    %v2459 = vsub.f32 %v2427, %v2443
    %v2460 = vsub.f32 %v2428, %v2444
    %v2461 = vsub.f32 %v2429, %v2445
    %v2462 = vsub.f32 %v2430, %v2446
    %v2463 = vsub.f32 %v2431, %v2447
    %v2464 = vsub.f32 %v2432, %v2448
    %v2465 = vsub.f32 %v2433, %v2449
    %v2466 = vsub.f32 %v2434, %v2450
    %v2467 = vsub.f32 %v308, %v2339
    %v2468 = vsub.f32 %v309, %v2340
    %v2469 = vsub.f32 %v310, %v2341
    %v2470 = vsub.f32 %v311, %v2342
    %v2471 = vsub.f32 %v312, %v2343
    %v2472 = vsub.f32 %v313, %v2344
    %v2473 = vsub.f32 %v314, %v2345
    %v2474 = vsub.f32 %v315, %v2346
    %v2475 = vsub.f32 %v316, %v2347
    %v2476 = vsub.f32 %v317, %v2348
    %v2477 = vsub.f32 %v318, %v2349
    %v2478 = vsub.f32 %v319, %v2350
    %v2479 = vsub.f32 %v320, %v2351
    %v2480 = vsub.f32 %v321, %v2352
    %v2481 = vsub.f32 %v322, %v2353
    %v2482 = vsub.f32 %v323, %v2354
    %v2483 = vadd.f32 %v2451, 1e-06
    %v2484 = vadd.f32 %v2452, 1e-06
    %v2485 = vadd.f32 %v2453, 1e-06
    %v2486 = vadd.f32 %v2454, 1e-06
    %v2487 = vadd.f32 %v2455, 1e-06
    %v2488 = vadd.f32 %v2456, 1e-06
    %v2489 = vadd.f32 %v2457, 1e-06
    %v2490 = vadd.f32 %v2458, 1e-06
    %v2491 = vadd.f32 %v2459, 1e-06
    %v2492 = vadd.f32 %v2460, 1e-06
    %v2493 = vadd.f32 %v2461, 1e-06
    %v2494 = vadd.f32 %v2462, 1e-06
    %v2495 = vadd.f32 %v2463, 1e-06
    %v2496 = vadd.f32 %v2464, 1e-06
    %v2497 = vadd.f32 %v2465, 1e-06
    %v2498 = vadd.f32 %v2466, 1e-06
    %v2499 = vrsqrt.pop %v2483
    %v2500 = vrsqrt.pop %v2484
    %v2501 = vrsqrt.pop %v2485
    %v2502 = vrsqrt.pop %v2486
    %v2503 = vrsqrt.pop %v2487
    %v2504 = vrsqrt.pop %v2488
    %v2505 = vrsqrt.pop %v2489
    %v2506 = vrsqrt.pop %v2490
    %v2507 = vrsqrt.pop %v2491
    %v2508 = vrsqrt.pop %v2492
    %v2509 = vrsqrt.pop %v2493
    %v2510 = vrsqrt.pop %v2494
    %v2511 = vrsqrt.pop %v2495
    %v2512 = vrsqrt.pop %v2496
    %v2513 = vrsqrt.pop %v2497
    %v2514 = vrsqrt.pop %v2498
    %v2515 = vmul.f32 %v2467, %v2499
    %v2516 = vmul.f32 %v2468, %v2500
    %v2517 = vmul.f32 %v2469, %v2501
    %v2518 = vmul.f32 %v2470, %v2502
    %v2519 = vmul.f32 %v2471, %v2503
    %v2520 = vmul.f32 %v2472, %v2504
    %v2521 = vmul.f32 %v2473, %v2505
    %v2522 = vmul.f32 %v2474, %v2506
    %v2523 = vmul.f32 %v2475, %v2507
    %v2524 = vmul.f32 %v2476, %v2508
    %v2525 = vmul.f32 %v2477, %v2509
    %v2526 = vmul.f32 %v2478, %v2510
    %v2527 = vmul.f32 %v2479, %v2511
    %v2528 = vmul.f32 %v2480, %v2512
    %v2529 = vmul.f32 %v2481, %v2513
    %v2530 = vmul.f32 %v2482, %v2514
    %v2532 = vlaneseq
    %v2533 = vshrl.u32 %v2532, 7
    %v2534 = vsub.s32 0, %v2533
    %v2535 = vrot.slane %v2282, %v2534
    %v2537 = vmul.f32 %v2515, %v2535
    %v2538 = vmul.f32 %v2516, %v2535
    %v2539 = vmul.f32 %v2517, %v2535
    %v2540 = vmul.f32 %v2518, %v2535
    %v2541 = vmul.f32 %v2519, %v2535
    %v2542 = vmul.f32 %v2520, %v2535
    %v2543 = vmul.f32 %v2521, %v2535
    %v2544 = vmul.f32 %v2522, %v2535
    %v2545 = vmul.f32 %v2523, %v2535
    %v2546 = vmul.f32 %v2524, %v2535
    %v2547 = vmul.f32 %v2525, %v2535
    %v2548 = vmul.f32 %v2526, %v2535
    %v2549 = vmul.f32 %v2527, %v2535
    %v2550 = vmul.f32 %v2528, %v2535
    %v2551 = vmul.f32 %v2529, %v2535
    %v2552 = vmul.f32 %v2530, %v2535
    %v2554 = vlaneseq
    %v2555 = vshrl.u32 %v2554, 7
    %v2556 = vsub.s32 0, %v2555
    %v2557 = vrot.slane %v2283, %v2556
    %v2559 = vadd.f32 %v2537, %v2557
    %v2560 = vadd.f32 %v2538, %v2557
    %v2561 = vadd.f32 %v2539, %v2557
    %v2562 = vadd.f32 %v2540, %v2557
    %v2563 = vadd.f32 %v2541, %v2557
    %v2564 = vadd.f32 %v2542, %v2557
    %v2565 = vadd.f32 %v2543, %v2557
    %v2566 = vadd.f32 %v2544, %v2557
    %v2567 = vadd.f32 %v2545, %v2557
    %v2568 = vadd.f32 %v2546, %v2557
    %v2569 = vadd.f32 %v2547, %v2557
    %v2570 = vadd.f32 %v2548, %v2557
    %v2571 = vadd.f32 %v2549, %v2557
    %v2572 = vadd.f32 %v2550, %v2557
    %v2573 = vadd.f32 %v2551, %v2557
    %v2574 = vadd.f32 %v2552, %v2557
    %v2575 = vpack.c.bf16 %v2560, %v2559
    %v2576 = vpack.c.bf16 %v2562, %v2561
    %v2577 = vpack.c.bf16 %v2564, %v2563
    %v2578 = vpack.c.bf16 %v2566, %v2565
    %v2579 = vpack.c.bf16 %v2568, %v2567
    %v2580 = vpack.c.bf16 %v2570, %v2569
    %v2581 = vpack.c.bf16 %v2572, %v2571
    %v2582 = vpack.c.bf16 %v2574, %v2573
    %v2583 = vld [vmem:[%s17] sm:$0xf]
    %v2584 = vld [vmem:[%s17 + $0x4] sm:$0xf]
    %v2585 = vld [vmem:[%s17 + $0x8] sm:$0xf]
    %v2586 = vld [vmem:[%s17 + $0xc] sm:$0xf]
    %v2587 = vld [vmem:[%s18] sm:$0x1]
    %v2589 = vlaneseq
    %v2590 = vshrl.u32 %v2589, 7
    %v2591 = vsub.s32 0, %v2590
    %v2592 = vrot.slane %v2587, %v2591
    %v2598 = vunpack.c.l.b16 %v2583
    %v2599 = vunpack.c.l.b16 %v2584
    %v2600 = vunpack.c.l.b16 %v2585
    %v2601 = vunpack.c.l.b16 %v2586
    %v2602 = vpack.c.b16 %v2599, %v2598
    %v2603 = vpack.c.b16 %v2601, %v2600
    %v2607 = vsel %vm2289, %v2575, 0
    %v2610 = vsel %vm2289, %v2576, 0
    %v2613 = vsel %vm2289, %v2577, 0
    %v2616 = vsel %vm2289, %v2578, 0
    %v2619 = vsel %vm2289, %v2579, 0
    %v2622 = vsel %vm2289, %v2580, 0
    %v2625 = vsel %vm2289, %v2581, 0
    %v2628 = vsel %vm2289, %v2582, 0
    %2630 = vmatprep.subr.bf16.mxu0 0
    %2631 = vmatpush1.bf16.msra.mxu0 %v2602
    %2632 = vmatprep.subr.bf16.mxu0 0
    %2633 = vmatpush1.bf16.msra.mxu0 %v2603
    %2634 = vmatprep.subr.bf16.mxu0 0
    %2635 = vmatpush1.bf16.msra.mxu0 0
    %2636 = vmatprep.subr.bf16.mxu0 0
    %2637 = vmatpush1.bf16.msra.mxu0 0
    %2638 = vmatprep.subr.bf16.mxu0 0
    %2639 = vmatpush1.bf16.msra.mxu0 0
    %2640 = vmatprep.subr.bf16.mxu0 0
    %2641 = vmatpush1.bf16.msra.mxu0 0
    %2642 = vmatprep.subr.bf16.mxu0 0
    %2643 = vmatpush1.bf16.msra.mxu0 0
    %2644 = vmatprep.subr.bf16.mxu0 0
    %2645 = vmatpush1.bf16.msra.mxu0 0
    %2646 = vmatprep.subr.bf16.mxu0 0
    %2647 = vmatpush1.bf16.msra.mxu0 0
    %2648 = vmatprep.subr.bf16.mxu0 0
    %2649 = vmatpush1.bf16.msra.mxu0 0
    %2650 = vmatprep.subr.bf16.mxu0 0
    %2651 = vmatpush1.bf16.msra.mxu0 0
    %2652 = vmatprep.subr.bf16.mxu0 0
    %2653 = vmatpush1.bf16.msra.mxu0 0
    %2654 = vmatprep.subr.bf16.mxu0 0
    %2655 = vmatpush1.bf16.msra.mxu0 0
    %2656 = vmatprep.subr.bf16.mxu0 0
    %2657 = vmatpush1.bf16.msra.mxu0 0
    %2658 = vmatprep.subr.bf16.mxu0 0
    %2659 = vmatpush1.bf16.msra.mxu0 0
    %2660 = vmatprep.subr.bf16.mxu0 0
    %2661 = vmatpush1.bf16.msra.mxu0 0
    %2662 = vmatprep.mubr.bf16.mxu0 0
    %2663 = vmatmul.mubr.bf16.gmra.mrb[0].mxu0 %v2607
    %v2664 = vpop.f32.mrb[0].mxu0
    %v2665 = vadd.f32 %v2592, %v2664
    %v2666 = vpop.f32.mrb[0].mxu0
    %v2667 = vpop.f32.mrb[0].mxu0
    %v2668 = vadd.f32 %v2592, %v2667
    %v2669 = vpop.f32.mrb[0].mxu0
    %2670 = vmatprep.mubr.bf16.mxu0 0
    %2671 = vmatmul.mubr.bf16.gmra.mrb[0].mxu0 %v2610
    %v2672 = vpop.f32.mrb[0].mxu0
    %v2673 = vadd.f32 %v2592, %v2672
    %v2674 = vpop.f32.mrb[0].mxu0
    %v2675 = vpop.f32.mrb[0].mxu0
    %v2676 = vadd.f32 %v2592, %v2675
    %v2677 = vpop.f32.mrb[0].mxu0
    %2678 = vmatprep.mubr.bf16.mxu0 0
    %2679 = vmatmul.mubr.bf16.gmra.mrb[0].mxu0 %v2613
    %v2680 = vpop.f32.mrb[0].mxu0
    %v2681 = vadd.f32 %v2592, %v2680
    %v2682 = vpop.f32.mrb[0].mxu0
    %v2683 = vpop.f32.mrb[0].mxu0
    %v2684 = vadd.f32 %v2592, %v2683
    %v2685 = vpop.f32.mrb[0].mxu0
    %2686 = vmatprep.mubr.bf16.mxu0 0
    %2687 = vmatmul.mubr.bf16.gmra.mrb[0].mxu0 %v2616
    %v2688 = vpop.f32.mrb[0].mxu0
    %v2689 = vadd.f32 %v2592, %v2688
    %v2690 = vpop.f32.mrb[0].mxu0
    %v2691 = vpop.f32.mrb[0].mxu0
    %v2692 = vadd.f32 %v2592, %v2691
    %v2693 = vpop.f32.mrb[0].mxu0
    %2694 = vmatprep.mubr.bf16.mxu0 0
    %2695 = vmatmul.mubr.bf16.gmra.mrb[0].mxu0 %v2619
    %v2696 = vpop.f32.mrb[0].mxu0
    %v2697 = vadd.f32 %v2592, %v2696
    %v2698 = vpop.f32.mrb[0].mxu0
    %v2699 = vpop.f32.mrb[0].mxu0
    %v2700 = vadd.f32 %v2592, %v2699
    %v2701 = vpop.f32.mrb[0].mxu0
    %2702 = vmatprep.mubr.bf16.mxu0 0
    %2703 = vmatmul.mubr.bf16.gmra.mrb[0].mxu0 %v2622
    %v2704 = vpop.f32.mrb[0].mxu0
    %v2705 = vadd.f32 %v2592, %v2704
    %v2706 = vpop.f32.mrb[0].mxu0
    %v2707 = vpop.f32.mrb[0].mxu0
    %v2708 = vadd.f32 %v2592, %v2707
    %v2709 = vpop.f32.mrb[0].mxu0
    %2710 = vmatprep.mubr.bf16.mxu0 0
    %2711 = vmatmul.mubr.bf16.gmra.mrb[0].mxu0 %v2625
    %v2712 = vpop.f32.mrb[0].mxu0
    %v2713 = vadd.f32 %v2592, %v2712
    %v2714 = vpop.f32.mrb[0].mxu0
    %v2715 = vpop.f32.mrb[0].mxu0
    %v2716 = vadd.f32 %v2592, %v2715
    %v2717 = vpop.f32.mrb[0].mxu0
    %2718 = vmatprep.mubr.bf16.mxu0 0
    %2719 = vmatmul.mubr.bf16.gmra.mrb[0].mxu0 %v2628
    %v2720 = vpop.f32.mrb[0].mxu0
    %v2721 = vadd.f32 %v2592, %v2720
    %v2722 = vpop.f32.mrb[0].mxu0
    %v2723 = vpop.f32.mrb[0].mxu0
    %v2724 = vadd.f32 %v2592, %v2723
    %v2725 = vpop.f32.mrb[0].mxu0
    %2726 = vdwg.mxu0
    %v2727 = vmul.f32 %v2665, %v2665
    %v2728 = vmul.f32 %v2668, %v2668
    %v2729 = vmul.f32 %v2673, %v2673
    %v2730 = vmul.f32 %v2676, %v2676
    %v2731 = vmul.f32 %v2681, %v2681
    %v2732 = vmul.f32 %v2684, %v2684
    %v2733 = vmul.f32 %v2689, %v2689
    %v2734 = vmul.f32 %v2692, %v2692
    %v2735 = vmul.f32 %v2697, %v2697
    %v2736 = vmul.f32 %v2700, %v2700
    %v2737 = vmul.f32 %v2705, %v2705
    %v2738 = vmul.f32 %v2708, %v2708
    %v2739 = vmul.f32 %v2713, %v2713
    %v2740 = vmul.f32 %v2716, %v2716
    %v2741 = vmul.f32 %v2721, %v2721
    %v2742 = vmul.f32 %v2724, %v2724
    %v2743 = vmul.f32 %v2665, %v2727
    %v2744 = vmul.f32 %v2668, %v2728
    %v2745 = vmul.f32 %v2673, %v2729
    %v2746 = vmul.f32 %v2676, %v2730
    %v2747 = vmul.f32 %v2681, %v2731
    %v2748 = vmul.f32 %v2684, %v2732
    %v2749 = vmul.f32 %v2689, %v2733
    %v2750 = vmul.f32 %v2692, %v2734
    %v2751 = vmul.f32 %v2697, %v2735
    %v2752 = vmul.f32 %v2700, %v2736
    %v2753 = vmul.f32 %v2705, %v2737
    %v2754 = vmul.f32 %v2708, %v2738
    %v2755 = vmul.f32 %v2713, %v2739
    %v2756 = vmul.f32 %v2716, %v2740
    %v2757 = vmul.f32 %v2721, %v2741
    %v2758 = vmul.f32 %v2724, %v2742
    %v2759 = vmul.f32 %v2743, 0.044715
    %v2760 = vmul.f32 %v2744, 0.044715
    %v2761 = vmul.f32 %v2745, 0.044715
    %v2762 = vmul.f32 %v2746, 0.044715
    %v2763 = vmul.f32 %v2747, 0.044715
    %v2764 = vmul.f32 %v2748, 0.044715
    %v2765 = vmul.f32 %v2749, 0.044715
    %v2766 = vmul.f32 %v2750, 0.044715
    %v2767 = vmul.f32 %v2751, 0.044715
    %v2768 = vmul.f32 %v2752, 0.044715
    %v2769 = vmul.f32 %v2753, 0.044715
    %v2770 = vmul.f32 %v2754, 0.044715
    %v2771 = vmul.f32 %v2755, 0.044715
    %v2772 = vmul.f32 %v2756, 0.044715
    %v2773 = vmul.f32 %v2757, 0.044715
    %v2774 = vmul.f32 %v2758, 0.044715
    %v2775 = vadd.f32 %v2665, %v2759
    %v2776 = vadd.f32 %v2668, %v2760
    %v2777 = vadd.f32 %v2673, %v2761
    %v2778 = vadd.f32 %v2676, %v2762
    %v2779 = vadd.f32 %v2681, %v2763
    %v2780 = vadd.f32 %v2684, %v2764
    %v2781 = vadd.f32 %v2689, %v2765
    %v2782 = vadd.f32 %v2692, %v2766
    %v2783 = vadd.f32 %v2697, %v2767
    %v2784 = vadd.f32 %v2700, %v2768
    %v2785 = vadd.f32 %v2705, %v2769
    %v2786 = vadd.f32 %v2708, %v2770
    %v2787 = vadd.f32 %v2713, %v2771
    %v2788 = vadd.f32 %v2716, %v2772
    %v2789 = vadd.f32 %v2721, %v2773
    %v2790 = vadd.f32 %v2724, %v2774
    %v2791 = vmul.f32 %v2775, 0.7978846
    %v2792 = vmul.f32 %v2776, 0.7978846
    %v2793 = vmul.f32 %v2777, 0.7978846
    %v2794 = vmul.f32 %v2778, 0.7978846
    %v2795 = vmul.f32 %v2779, 0.7978846
    %v2796 = vmul.f32 %v2780, 0.7978846
    %v2797 = vmul.f32 %v2781, 0.7978846
    %v2798 = vmul.f32 %v2782, 0.7978846
    %v2799 = vmul.f32 %v2783, 0.7978846
    %v2800 = vmul.f32 %v2784, 0.7978846
    %v2801 = vmul.f32 %v2785, 0.7978846
    %v2802 = vmul.f32 %v2786, 0.7978846
    %v2803 = vmul.f32 %v2787, 0.7978846
    %v2804 = vmul.f32 %v2788, 0.7978846
    %v2805 = vmul.f32 %v2789, 0.7978846
    %v2806 = vmul.f32 %v2790, 0.7978846
    %v2807 = vtanh.pop %v2791
    %v2808 = vtanh.pop %v2792
    %v2809 = vtanh.pop %v2793
    %v2810 = vtanh.pop %v2794
    %v2811 = vtanh.pop %v2795
    %v2812 = vtanh.pop %v2796
    %v2813 = vtanh.pop %v2797
    %v2814 = vtanh.pop %v2798
    %v2815 = vtanh.pop %v2799
    %v2816 = vtanh.pop %v2800
    %v2817 = vtanh.pop %v2801
    %v2818 = vtanh.pop %v2802
    %v2819 = vtanh.pop %v2803
    %v2820 = vtanh.pop %v2804
    %v2821 = vtanh.pop %v2805
    %v2822 = vtanh.pop %v2806
    %v2823 = vadd.f32 %v2807, 1.0
    %v2824 = vadd.f32 %v2808, 1.0
    %v2825 = vadd.f32 %v2809, 1.0
    %v2826 = vadd.f32 %v2810, 1.0
    %v2827 = vadd.f32 %v2811, 1.0
    %v2828 = vadd.f32 %v2812, 1.0
    %v2829 = vadd.f32 %v2813, 1.0
    %v2830 = vadd.f32 %v2814, 1.0
    %v2831 = vadd.f32 %v2815, 1.0
    %v2832 = vadd.f32 %v2816, 1.0
    %v2833 = vadd.f32 %v2817, 1.0
    %v2834 = vadd.f32 %v2818, 1.0
    %v2835 = vadd.f32 %v2819, 1.0
    %v2836 = vadd.f32 %v2820, 1.0
    %v2837 = vadd.f32 %v2821, 1.0
    %v2838 = vadd.f32 %v2822, 1.0
    %v2839 = vmul.f32 %v2823, 0.5
    %v2840 = vmul.f32 %v2824, 0.5
    %v2841 = vmul.f32 %v2825, 0.5
    %v2842 = vmul.f32 %v2826, 0.5
    %v2843 = vmul.f32 %v2827, 0.5
    %v2844 = vmul.f32 %v2828, 0.5
    %v2845 = vmul.f32 %v2829, 0.5
    %v2846 = vmul.f32 %v2830, 0.5
    %v2847 = vmul.f32 %v2831, 0.5
    %v2848 = vmul.f32 %v2832, 0.5
    %v2849 = vmul.f32 %v2833, 0.5
    %v2850 = vmul.f32 %v2834, 0.5
    %v2851 = vmul.f32 %v2835, 0.5
    %v2852 = vmul.f32 %v2836, 0.5
    %v2853 = vmul.f32 %v2837, 0.5
    %v2854 = vmul.f32 %v2838, 0.5
    %v2855 = vmul.f32 %v2665, %v2839
    %v2856 = vmul.f32 %v2668, %v2840
    %v2857 = vmul.f32 %v2673, %v2841
    %v2858 = vmul.f32 %v2676, %v2842
    %v2859 = vmul.f32 %v2681, %v2843
    %v2860 = vmul.f32 %v2684, %v2844
    %v2861 = vmul.f32 %v2689, %v2845
    %v2862 = vmul.f32 %v2692, %v2846
    %v2863 = vmul.f32 %v2697, %v2847
    %v2864 = vmul.f32 %v2700, %v2848
    %v2865 = vmul.f32 %v2705, %v2849
    %v2866 = vmul.f32 %v2708, %v2850
    %v2867 = vmul.f32 %v2713, %v2851
    %v2868 = vmul.f32 %v2716, %v2852
    %v2869 = vmul.f32 %v2721, %v2853
    %v2870 = vmul.f32 %v2724, %v2854
    %v2871 = vpack.c.bf16 %v2856, %v2855
    %v2872 = vpack.c.bf16 %v2858, %v2857
    %v2873 = vpack.c.bf16 %v2860, %v2859
    %v2874 = vpack.c.bf16 %v2862, %v2861
    %v2875 = vpack.c.bf16 %v2864, %v2863
    %v2876 = vpack.c.bf16 %v2866, %v2865
    %v2877 = vpack.c.bf16 %v2868, %v2867
    %v2878 = vpack.c.bf16 %v2870, %v2869
    %v2880 = vlaneseq
    %v2881 = vshrl.u32 %v2880, 7
    %v2882 = vsub.s32 0, %v2881
    %v2883 = vrot.slane %v2288, %v2882
    %v2889 = vunpack.c.l.b16 %v2284
    %v2890 = vunpack.c.l.b16 %v2285
    %v2891 = vunpack.c.l.b16 %v2286
    %v2892 = vunpack.c.l.b16 %v2287
    %v2893 = vpack.c.b16 %v2890, %v2889
    %v2894 = vpack.c.b16 %v2892, %v2891
    %v2898 = vsel %vm2289, %v2871, 0
    %v2901 = vsel %vm2289, %v2872, 0
    %v2904 = vsel %vm2289, %v2873, 0
    %v2907 = vsel %vm2289, %v2874, 0
    %v2910 = vsel %vm2289, %v2875, 0
    %v2913 = vsel %vm2289, %v2876, 0
    %v2916 = vsel %vm2289, %v2877, 0
    %v2919 = vsel %vm2289, %v2878, 0
    %2921 = vmatprep.subr.bf16.mxu0 0
    %2922 = vmatpush1.bf16.msra.mxu0 %v2893
    %2923 = vmatprep.subr.bf16.mxu0 0
    %2924 = vmatpush1.bf16.msra.mxu0 %v2894
    %2925 = vmatprep.subr.bf16.mxu0 0
    %2926 = vmatpush1.bf16.msra.mxu0 0
    %2927 = vmatprep.subr.bf16.mxu0 0
    %2928 = vmatpush1.bf16.msra.mxu0 0
    %2929 = vmatprep.subr.bf16.mxu0 0
    %2930 = vmatpush1.bf16.msra.mxu0 0
    %2931 = vmatprep.subr.bf16.mxu0 0
    %2932 = vmatpush1.bf16.msra.mxu0 0
    %2933 = vmatprep.subr.bf16.mxu0 0
    %2934 = vmatpush1.bf16.msra.mxu0 0
    %2935 = vmatprep.subr.bf16.mxu0 0
    %2936 = vmatpush1.bf16.msra.mxu0 0
    %2937 = vmatprep.subr.bf16.mxu0 0
    %2938 = vmatpush1.bf16.msra.mxu0 0
    %2939 = vmatprep.subr.bf16.mxu0 0
    %2940 = vmatpush1.bf16.msra.mxu0 0
    %2941 = vmatprep.subr.bf16.mxu0 0
    %2942 = vmatpush1.bf16.msra.mxu0 0
    %2943 = vmatprep.subr.bf16.mxu0 0
    %2944 = vmatpush1.bf16.msra.mxu0 0
    %2945 = vmatprep.subr.bf16.mxu0 0
    %2946 = vmatpush1.bf16.msra.mxu0 0
    %2947 = vmatprep.subr.bf16.mxu0 0
    %2948 = vmatpush1.bf16.msra.mxu0 0
    %2949 = vmatprep.subr.bf16.mxu0 0
    %2950 = vmatpush1.bf16.msra.mxu0 0
    %2951 = vmatprep.subr.bf16.mxu0 0
    %2952 = vmatpush1.bf16.msra.mxu0 0
    %2953 = vmatprep.mubr.bf16.mxu0 0
    %2954 = vmatmul.mubr.bf16.gmra.mrb[0].mxu0 %v2898
    %v2955 = vpop.f32.mrb[0].mxu0
    %v2956 = vadd.f32 %v2883, %v2955
    %v2957 = vpop.f32.mrb[0].mxu0
    %v2958 = vpop.f32.mrb[0].mxu0
    %v2959 = vadd.f32 %v2883, %v2958
    %v2960 = vpop.f32.mrb[0].mxu0
    %2961 = vmatprep.mubr.bf16.mxu0 0
    %2962 = vmatmul.mubr.bf16.gmra.mrb[0].mxu0 %v2901
    %v2963 = vpop.f32.mrb[0].mxu0
    %v2964 = vadd.f32 %v2883, %v2963
    %v2965 = vpop.f32.mrb[0].mxu0
    %v2966 = vpop.f32.mrb[0].mxu0
    %v2967 = vadd.f32 %v2883, %v2966
    %v2968 = vpop.f32.mrb[0].mxu0
    %2969 = vmatprep.mubr.bf16.mxu0 0
    %2970 = vmatmul.mubr.bf16.gmra.mrb[0].mxu0 %v2904
    %v2971 = vpop.f32.mrb[0].mxu0
    %v2972 = vadd.f32 %v2883, %v2971
    %v2973 = vpop.f32.mrb[0].mxu0
    %v2974 = vpop.f32.mrb[0].mxu0
    %v2975 = vadd.f32 %v2883, %v2974
    %v2976 = vpop.f32.mrb[0].mxu0
    %2977 = vmatprep.mubr.bf16.mxu0 0
    %2978 = vmatmul.mubr.bf16.gmra.mrb[0].mxu0 %v2907
    %v2979 = vpop.f32.mrb[0].mxu0
    %v2980 = vadd.f32 %v2883, %v2979
    %v2981 = vpop.f32.mrb[0].mxu0
    %v2982 = vpop.f32.mrb[0].mxu0
    %v2983 = vadd.f32 %v2883, %v2982
    %v2984 = vpop.f32.mrb[0].mxu0
    %2985 = vmatprep.mubr.bf16.mxu0 0
    %2986 = vmatmul.mubr.bf16.gmra.mrb[0].mxu0 %v2910
    %v2987 = vpop.f32.mrb[0].mxu0
    %v2988 = vadd.f32 %v2883, %v2987
    %v2989 = vpop.f32.mrb[0].mxu0
    %v2990 = vpop.f32.mrb[0].mxu0
    %v2991 = vadd.f32 %v2883, %v2990
    %v2992 = vpop.f32.mrb[0].mxu0
    %2993 = vmatprep.mubr.bf16.mxu0 0
    %2994 = vmatmul.mubr.bf16.gmra.mrb[0].mxu0 %v2913
    %v2995 = vpop.f32.mrb[0].mxu0
    %v2996 = vadd.f32 %v2883, %v2995
    %v2997 = vpop.f32.mrb[0].mxu0
    %v2998 = vpop.f32.mrb[0].mxu0
    %v2999 = vadd.f32 %v2883, %v2998
    %v3000 = vpop.f32.mrb[0].mxu0
    %3001 = vmatprep.mubr.bf16.mxu0 0
    %3002 = vmatmul.mubr.bf16.gmra.mrb[0].mxu0 %v2916
    %v3003 = vpop.f32.mrb[0].mxu0
    %v3004 = vadd.f32 %v2883, %v3003
    %v3005 = vpop.f32.mrb[0].mxu0
    %v3006 = vpop.f32.mrb[0].mxu0
    %v3007 = vadd.f32 %v2883, %v3006
    %v3008 = vpop.f32.mrb[0].mxu0
    %3009 = vmatprep.mubr.bf16.mxu0 0
    %3010 = vmatmul.mubr.bf16.gmra.mrb[0].mxu0 %v2919
    %v3011 = vpop.f32.mrb[0].mxu0
    %v3012 = vadd.f32 %v2883, %v3011
    %v3013 = vpop.f32.mrb[0].mxu0
    %v3014 = vpop.f32.mrb[0].mxu0
    %v3015 = vadd.f32 %v2883, %v3014
    %v3016 = vpop.f32.mrb[0].mxu0
    %3017 = vdwg.mxu0
    %3018 = vst [vmem:[#allocation2] sm:$0xff] %v2956
    %3019 = vst [vmem:[#allocation2 + $0x8] sm:$0xff] %v2959
    %3020 = vst [vmem:[#allocation2 + $0x10] sm:$0xff] %v2964
    %3021 = vst [vmem:[#allocation2 + $0x18] sm:$0xff] %v2967
    %3022 = vst [vmem:[#allocation2 + $0x20] sm:$0xff] %v2972
    %3023 = vst [vmem:[#allocation2 + $0x28] sm:$0xff] %v2975
    %3024 = vst [vmem:[#allocation2 + $0x30] sm:$0xff] %v2980
    %3025 = vst [vmem:[#allocation2 + $0x38] sm:$0xff] %v2983
    %3026 = vst [vmem:[#allocation2 + $0x40] sm:$0xff] %v2988
    %3027 = vst [vmem:[#allocation2 + $0x48] sm:$0xff] %v2991
    %3028 = vst [vmem:[#allocation2 + $0x50] sm:$0xff] %v2996
    %3029 = vst [vmem:[#allocation2 + $0x58] sm:$0xff] %v2999
    %3030 = vst [vmem:[#allocation2 + $0x60] sm:$0xff] %v3004
    %3031 = vst [vmem:[#allocation2 + $0x68] sm:$0xff] %v3007
    %3032 = vst [vmem:[#allocation2 + $0x70] sm:$0xff] %v3012
    %3033 = vst [vmem:[#allocation2 + $0x78] sm:$0xff] %v3015
    // Predicated region
    $region93: #{tpu_custom_call.1} parent=1 // pred_check
      _
    $region94: #{tpu_custom_call.1} parent=1 // pred_check_branch
      %3035 = sbr.rel (0) target = $region96
    $region95: #{tpu_custom_call.1} parent=1 // pred_region
      %s3037 = ssub.s32 2048, 2048
      %3038 = vsyncadd [#allocation3], %s3037
      %s3039 = sshll.u32 [#allocation2], 4
      %s3040 = int_to_ptr.vmem [resolvable:$true] %s3039
      %3045 = dma.vmem_to_hbm [thread:$0]  %s3040, 2048, %s21, [#allocation3], 128, 128, 8
    $region96: #{tpu_custom_call.1} parent=1 // pred_fallthru
      _
    // Predicated region
    $region97: #{tpu_custom_call.1} parent=1 // pred_check
      _
    $region98: #{tpu_custom_call.1} parent=1 // pred_check_branch
      %3047 = sbr.rel (0) target = $region100
    $region99: #{tpu_custom_call.1} parent=1 // pred_region
      %3048 = dma.done [#allocation3], 2048
    $region100: #{tpu_custom_call.1} parent=1 // pred_fallthru
      _
    %3049 = vsyncpa [#allocation3], 1

// kernel: tpu_custom_call.1
$region0: #{tpu_custom_call.1}
  #allocation0 [shape = 'u32[]', space=smem, size = 0x4, offset = 0x4, fixed_abs, tag = 'smem constant byte address 0x4 - core index']
  #allocation1 [shape = 'u32[144,128]{1,0:T(1,128)}', space=vmem, size = 0x12000, scoped, tag = 'internal scratch']
  %s0 = inlined_call_operand.vmem [shape: bf16[128,128], index: 0, kind: input, shape index: {}]
  %s1 = inlined_call_operand.vmem [shape: bf16[128,32], index: 1, kind: input, shape index: {}]
  %s2 = inlined_call_operand.vmem [shape: f32[1,32], index: 2, kind: input, shape index: {}]
  %s3 = inlined_call_operand.vmem [shape: f32[2,1,32], index: 3, kind: input, shape index: {}]
  %s4 = inlined_call_operand.vmem [shape: f32[2,1,32], index: 4, kind: input, shape index: {}]
  %s5 = inlined_call_operand.vmem [shape: bf16[2,16,16], index: 5, kind: input, shape index: {}]
  %s6 = inlined_call_operand.vmem [shape: f32[2,16,1], index: 6, kind: input, shape index: {}]
  %s7 = inlined_call_operand.vmem [shape: bf16[2,16,16], index: 7, kind: input, shape index: {}]
  %s8 = inlined_call_operand.vmem [shape: f32[2,16,1], index: 8, kind: input, shape index: {}]
  %s9 = inlined_call_operand.vmem [shape: f32[2,1,32], index: 9, kind: input, shape index: {}]
  %s10 = inlined_call_operand.vmem [shape: f32[2,1,32], index: 10, kind: input, shape index: {}]
  %s11 = inlined_call_operand.vmem [shape: bf16[2,32,128], index: 11, kind: input, shape index: {}]
  %s12 = inlined_call_operand.vmem [shape: f32[2,1,128], index: 12, kind: input, shape index: {}]
  %s13 = inlined_call_operand.vmem [shape: bf16[2,128,32], index: 13, kind: input, shape index: {}]
  %s14 = inlined_call_operand.vmem [shape: f32[2,1,32], index: 14, kind: input, shape index: {}]
  %s15 = inlined_call_operand.vmem [shape: f32[1,32], index: 15, kind: input, shape index: {}]
  %s16 = inlined_call_operand.vmem [shape: f32[1,32], index: 16, kind: input, shape index: {}]
  %s17 = inlined_call_operand.vmem [shape: bf16[1,32,32], index: 17, kind: input, shape index: {}]
  %s18 = inlined_call_operand.vmem [shape: f32[1,1,32], index: 18, kind: input, shape index: {}]
  %s19 = inlined_call_operand.vmem [shape: bf16[32,128], index: 19, kind: input, shape index: {}]
  %s20 = inlined_call_operand.vmem [shape: f32[1,128], index: 20, kind: input, shape index: {}]
  %s21 = inlined_call_operand.hbm [shape: f32[128,128], index: 21, kind: output, shape index: {}]
  %s22 = sld [smem:[#allocation0]]
  $region101: #{tpu_custom_call.1} parent=0
    _
  %s24 = ssub.s32 1, %s22
  %s25 = scalar_select 0, %s24, %s22
  $region1: #{tpu_custom_call.1} parent=0
    #allocation2 [shape = 'u8[65536]{0}', space=vmem, size = 0x10000, scoped, tag = 'output window, operand 0, single buffered']
    #allocation3 [shape = 's32[1]{0}', space=sflag, size = 0x4, scoped, tag = 'scoped memory for tpu_custom_call.1']
    %26 = vsyncpa [#allocation3], 0
    // Predicated region
    $region2: #{tpu_custom_call.1} parent=1 // pred_check
      _
    $region3: #{tpu_custom_call.1} parent=1 // pred_check_branch
      %28 = sbr.rel (0) target = $region5
    $region4: #{tpu_custom_call.1} parent=1 // pred_region
      _
    $region5: #{tpu_custom_call.1} parent=1 // pred_fallthru
      _
    // Predicated region
    $region6: #{tpu_custom_call.1} parent=1 // pred_check
      _
    $region7: #{tpu_custom_call.1} parent=1 // pred_check_branch
      %30 = sbr.rel (0) target = $region9
    $region8: #{tpu_custom_call.1} parent=1 // pred_region
      _
    $region9: #{tpu_custom_call.1} parent=1 // pred_fallthru
      _
    // Predicated region
    $region10: #{tpu_custom_call.1} parent=1 // pred_check
      _
    $region11: #{tpu_custom_call.1} parent=1 // pred_check_branch
      %32 = sbr.rel (0) target = $region13
    $region12: #{tpu_custom_call.1} parent=1 // pred_region
      _
    $region13: #{tpu_custom_call.1} parent=1 // pred_fallthru
      _
    // Predicated region
    $region14: #{tpu_custom_call.1} parent=1 // pred_check
      _
    $region15: #{tpu_custom_call.1} parent=1 // pred_check_branch
      %34 = sbr.rel (0) target = $region17
    $region16: #{tpu_custom_call.1} parent=1 // pred_region
      _
    $region17: #{tpu_custom_call.1} parent=1 // pred_fallthru
      _
    // Predicated region
    $region18: #{tpu_custom_call.1} parent=1 // pred_check
      _
    $region19: #{tpu_custom_call.1} parent=1 // pred_check_branch
      %36 = sbr.rel (0) target = $region21
    $region20: #{tpu_custom_call.1} parent=1 // pred_region
      _
    $region21: #{tpu_custom_call.1} parent=1 // pred_fallthru
      _
    // Predicated region
    $region22: #{tpu_custom_call.1} parent=1 // pred_check
      _
    $region23: #{tpu_custom_call.1} parent=1 // pred_check_branch
      %38 = sbr.rel (0) target = $region25
    $region24: #{tpu_custom_call.1} parent=1 // pred_region
      _
    $region25: #{tpu_custom_call.1} parent=1 // pred_fallthru
      _
    // Predicated region
    $region26: #{tpu_custom_call.1} parent=1 // pred_check
      _
    $region27: #{tpu_custom_call.1} parent=1 // pred_check_branch
      %40 = sbr.rel (0) target = $region29
    $region28: #{tpu_custom_call.1} parent=1 // pred_region
      _
    $region29: #{tpu_custom_call.1} parent=1 // pred_fallthru
      _
    // Predicated region
    $region30: #{tpu_custom_call.1} parent=1 // pred_check
      _
    $region31: #{tpu_custom_call.1} parent=1 // pred_check_branch
      %42 = sbr.rel (0) target = $region33
    $region32: #{tpu_custom_call.1} parent=1 // pred_region
      _
    $region33: #{tpu_custom_call.1} parent=1 // pred_fallthru
      _
    // Predicated region
    $region34: #{tpu_custom_call.1} parent=1 // pred_check
      _
    $region35: #{tpu_custom_call.1} parent=1 // pred_check_branch
      %44 = sbr.rel (0) target = $region37
    $region36: #{tpu_custom_call.1} parent=1 // pred_region
      _
    $region37: #{tpu_custom_call.1} parent=1 // pred_fallthru
      _
    // Predicated region
    $region38: #{tpu_custom_call.1} parent=1 // pred_check
      _
    $region39: #{tpu_custom_call.1} parent=1 // pred_check_branch
      %46 = sbr.rel (0) target = $region41
    $region40: #{tpu_custom_call.1} parent=1 // pred_region
      _
    $region41: #{tpu_custom_call.1} parent=1 // pred_fallthru
      _
    // Predicated region
    $region42: #{tpu_custom_call.1} parent=1 // pred_check
      _
    $region43: #{tpu_custom_call.1} parent=1 // pred_check_branch
      %48 = sbr.rel (0) target = $region45
    $region44: #{tpu_custom_call.1} parent=1 // pred_region
      _
    $region45: #{tpu_custom_call.1} parent=1 // pred_fallthru
      _
    // Predicated region
    $region46: #{tpu_custom_call.1} parent=1 // pred_check
      _
    $region47: #{tpu_custom_call.1} parent=1 // pred_check_branch
      %50 = sbr.rel (0) target = $region49
    $region48: #{tpu_custom_call.1} parent=1 // pred_region
      _
    $region49: #{tpu_custom_call.1} parent=1 // pred_fallthru
      _
    // Predicated region
    $region50: #{tpu_custom_call.1} parent=1 // pred_check
      _
    $region51: #{tpu_custom_call.1} parent=1 // pred_check_branch
      %52 = sbr.rel (0) target = $region53
    $region52: #{tpu_custom_call.1} parent=1 // pred_region
      _
    $region53: #{tpu_custom_call.1} parent=1 // pred_fallthru
      _
    // Predicated region
    $region54: #{tpu_custom_call.1} parent=1 // pred_check
      _
    $region55: #{tpu_custom_call.1} parent=1 // pred_check_branch
      %54 = sbr.rel (0) target = $region57
    $region56: #{tpu_custom_call.1} parent=1 // pred_region
      _
    $region57: #{tpu_custom_call.1} parent=1 // pred_fallthru
      _
    // Predicated region
    $region58: #{tpu_custom_call.1} parent=1 // pred_check
      _
    $region59: #{tpu_custom_call.1} parent=1 // pred_check_branch
      %56 = sbr.rel (0) target = $region61
    $region60: #{tpu_custom_call.1} parent=1 // pred_region
      _
    $region61: #{tpu_custom_call.1} parent=1 // pred_fallthru
      _
    // Predicated region
    $region62: #{tpu_custom_call.1} parent=1 // pred_check
      _
    $region63: #{tpu_custom_call.1} parent=1 // pred_check_branch
      %58 = sbr.rel (0) target = $region65
    $region64: #{tpu_custom_call.1} parent=1 // pred_region
      _
    $region65: #{tpu_custom_call.1} parent=1 // pred_fallthru
      _
    // Predicated region
    $region66: #{tpu_custom_call.1} parent=1 // pred_check
      _
    $region67: #{tpu_custom_call.1} parent=1 // pred_check_branch
      %60 = sbr.rel (0) target = $region69
    $region68: #{tpu_custom_call.1} parent=1 // pred_region
      _
    $region69: #{tpu_custom_call.1} parent=1 // pred_fallthru
      _
    // Predicated region
    $region70: #{tpu_custom_call.1} parent=1 // pred_check
      _
    $region71: #{tpu_custom_call.1} parent=1 // pred_check_branch
      %62 = sbr.rel (0) target = $region73
    $region72: #{tpu_custom_call.1} parent=1 // pred_region
      _
    $region73: #{tpu_custom_call.1} parent=1 // pred_fallthru
      _
    // Predicated region
    $region74: #{tpu_custom_call.1} parent=1 // pred_check
      _
    $region75: #{tpu_custom_call.1} parent=1 // pred_check_branch
      %64 = sbr.rel (0) target = $region77
    $region76: #{tpu_custom_call.1} parent=1 // pred_region
      _
    $region77: #{tpu_custom_call.1} parent=1 // pred_fallthru
      _
    // Predicated region
    $region78: #{tpu_custom_call.1} parent=1 // pred_check
      _
    $region79: #{tpu_custom_call.1} parent=1 // pred_check_branch
      %66 = sbr.rel (0) target = $region81
    $region80: #{tpu_custom_call.1} parent=1 // pred_region
      _
    $region81: #{tpu_custom_call.1} parent=1 // pred_fallthru
      _
    // Predicated region
    $region82: #{tpu_custom_call.1} parent=1 // pred_check
      _
    $region83: #{tpu_custom_call.1} parent=1 // pred_check_branch
      %68 = sbr.rel (0) target = $region85
    $region84: #{tpu_custom_call.1} parent=1 // pred_region
      _
    $region85: #{tpu_custom_call.1} parent=1 // pred_fallthru
      _
    %v70 = vld [vmem:[%s0] sm:$0xf]
    %v71 = vld [vmem:[%s0 + $0x4] sm:$0xf]
    %v72 = vld [vmem:[%s0 + $0x8] sm:$0xf]
    %v73 = vld [vmem:[%s0 + $0xc] sm:$0xf]
    %v74 = vld [vmem:[%s0 + $0x10] sm:$0xf]
    %v75 = vld [vmem:[%s0 + $0x14] sm:$0xf]
    %v76 = vld [vmem:[%s0 + $0x18] sm:$0xf]
    %v77 = vld [vmem:[%s0 + $0x1c] sm:$0xf]
    %v78 = vld [vmem:[%s0 + $0x20] sm:$0xf]
    %v79 = vld [vmem:[%s0 + $0x24] sm:$0xf]
    %v80 = vld [vmem:[%s0 + $0x28] sm:$0xf]
    %v81 = vld [vmem:[%s0 + $0x2c] sm:$0xf]
    %v82 = vld [vmem:[%s0 + $0x30] sm:$0xf]
    %v83 = vld [vmem:[%s0 + $0x34] sm:$0xf]
    %v84 = vld [vmem:[%s0 + $0x38] sm:$0xf]
    %v85 = vld [vmem:[%s0 + $0x3c] sm:$0xf]
    %v86 = vld [vmem:[%s1] sm:$0xf]
    %v87 = vld [vmem:[%s1 + $0x4] sm:$0xf]
    %v88 = vld [vmem:[%s1 + $0x8] sm:$0xf]
    %v89 = vld [vmem:[%s1 + $0xc] sm:$0xf]
    %v90 = vld [vmem:[%s1 + $0x10] sm:$0xf]
    %v91 = vld [vmem:[%s1 + $0x14] sm:$0xf]
    %v92 = vld [vmem:[%s1 + $0x18] sm:$0xf]
    %v93 = vld [vmem:[%s1 + $0x1c] sm:$0xf]
    %v94 = vld [vmem:[%s1 + $0x20] sm:$0xf]
    %v95 = vld [vmem:[%s1 + $0x24] sm:$0xf]
    %v96 = vld [vmem:[%s1 + $0x28] sm:$0xf]
    %v97 = vld [vmem:[%s1 + $0x2c] sm:$0xf]
    %v98 = vld [vmem:[%s1 + $0x30] sm:$0xf]
    %v99 = vld [vmem:[%s1 + $0x34] sm:$0xf]
    %v100 = vld [vmem:[%s1 + $0x38] sm:$0xf]
    %v101 = vld [vmem:[%s1 + $0x3c] sm:$0xf]
    %v102 = vld [vmem:[%s2] sm:$0x1]
    %v104 = vlaneseq
    %v105 = vshrl.u32 %v104, 7
    %v106 = vsub.s32 0, %v105
    %v107 = vrot.slane %v102, %v106
    %v125 = vunpack.c.l.b16 %v70
    %v126 = vunpack.c.l.b16 %v71
    %v127 = vunpack.c.l.b16 %v72
    %v128 = vunpack.c.l.b16 %v73
    %v129 = vunpack.c.l.b16 %v74
    %v130 = vunpack.c.l.b16 %v75
    %v131 = vunpack.c.l.b16 %v76
    %v132 = vunpack.c.l.b16 %v77
    %v133 = vunpack.c.l.b16 %v78
    %v134 = vunpack.c.l.b16 %v79
    %v135 = vunpack.c.l.b16 %v80
    %v136 = vunpack.c.l.b16 %v81
    %v137 = vunpack.c.l.b16 %v82
    %v138 = vunpack.c.l.b16 %v83
    %v139 = vunpack.c.l.b16 %v84
    %v140 = vunpack.c.l.b16 %v85
    %v141 = vpack.c.b16 %v126, %v125
    %v142 = vpack.c.b16 %v128, %v127
    %v143 = vpack.c.b16 %v130, %v129
    %v144 = vpack.c.b16 %v132, %v131
    %v145 = vpack.c.b16 %v134, %v133
    %v146 = vpack.c.b16 %v136, %v135
    %v147 = vpack.c.b16 %v138, %v137
    %v148 = vpack.c.b16 %v140, %v139
    %v173 = vunpack.c.l.b16 %v86
    %v174 = vunpack.c.l.b16 %v87
    %v175 = vunpack.c.l.b16 %v88
    %v176 = vunpack.c.l.b16 %v89
    %v177 = vunpack.c.l.b16 %v90
    %v178 = vunpack.c.l.b16 %v91
    %v179 = vunpack.c.l.b16 %v92
    %v180 = vunpack.c.l.b16 %v93
    %v181 = vunpack.c.l.b16 %v94
    %v182 = vunpack.c.l.b16 %v95
    %v183 = vunpack.c.l.b16 %v96
    %v184 = vunpack.c.l.b16 %v97
    %v185 = vunpack.c.l.b16 %v98
    %v186 = vunpack.c.l.b16 %v99
    %v187 = vunpack.c.l.b16 %v100
    %v188 = vunpack.c.l.b16 %v101
    %v189 = vpack.c.b16 %v174, %v173
    %v190 = vpack.c.b16 %v176, %v175
    %v191 = vpack.c.b16 %v178, %v177
    %v192 = vpack.c.b16 %v180, %v179
    %v193 = vpack.c.b16 %v182, %v181
    %v194 = vpack.c.b16 %v184, %v183
    %v195 = vpack.c.b16 %v186, %v185
    %v196 = vpack.c.b16 %v188, %v187
    %205 = vmatprep.subr.bf16.mxu0 0
    %206 = vmatpush1.bf16.msra.mxu0 %v189
    %207 = vmatprep.subr.bf16.mxu0 0
    %208 = vmatpush1.bf16.msra.mxu0 %v190
    %209 = vmatprep.subr.bf16.mxu0 0
    %210 = vmatpush1.bf16.msra.mxu0 %v191
    %211 = vmatprep.subr.bf16.mxu0 0
    %212 = vmatpush1.bf16.msra.mxu0 %v192
    %213 = vmatprep.subr.bf16.mxu0 0
    %214 = vmatpush1.bf16.msra.mxu0 %v193
    %215 = vmatprep.subr.bf16.mxu0 0
    %216 = vmatpush1.bf16.msra.mxu0 %v194
    %217 = vmatprep.subr.bf16.mxu0 0
    %218 = vmatpush1.bf16.msra.mxu0 %v195
    %219 = vmatprep.subr.bf16.mxu0 0
    %220 = vmatpush1.bf16.msra.mxu0 %v196
    %221 = vmatprep.subr.bf16.mxu0 0
    %222 = vmatpush1.bf16.msra.mxu0 0
    %223 = vmatprep.subr.bf16.mxu0 0
    %224 = vmatpush1.bf16.msra.mxu0 0
    %225 = vmatprep.subr.bf16.mxu0 0
    %226 = vmatpush1.bf16.msra.mxu0 0
    %227 = vmatprep.subr.bf16.mxu0 0
    %228 = vmatpush1.bf16.msra.mxu0 0
    %229 = vmatprep.subr.bf16.mxu0 0
    %230 = vmatpush1.bf16.msra.mxu0 0
    %231 = vmatprep.subr.bf16.mxu0 0
    %232 = vmatpush1.bf16.msra.mxu0 0
    %233 = vmatprep.subr.bf16.mxu0 0
    %234 = vmatpush1.bf16.msra.mxu0 0
    %235 = vmatprep.subr.bf16.mxu0 0
    %236 = vmatpush1.bf16.msra.mxu0 0
    %237 = vmatprep.mubr.bf16.mxu0 0
    %238 = vmatmul.mubr.bf16.gmra.mrb[0].mxu0 %v141
    %v239 = vpop.f32.mrb[0].mxu0
    %v240 = vadd.f32 %v107, %v239
    %v241 = vpop.f32.mrb[0].mxu0
    %v242 = vpop.f32.mrb[0].mxu0
    %v243 = vadd.f32 %v107, %v242
    %v244 = vpop.f32.mrb[0].mxu0
    %245 = vmatprep.mubr.bf16.mxu0 0
    %246 = vmatmul.mubr.bf16.gmra.mrb[0].mxu0 %v142
    %v247 = vpop.f32.mrb[0].mxu0
    %v248 = vadd.f32 %v107, %v247
    %v249 = vpop.f32.mrb[0].mxu0
    %v250 = vpop.f32.mrb[0].mxu0
    %v251 = vadd.f32 %v107, %v250
    %v252 = vpop.f32.mrb[0].mxu0
    %253 = vmatprep.mubr.bf16.mxu0 0
    %254 = vmatmul.mubr.bf16.gmra.mrb[0].mxu0 %v143
    %v255 = vpop.f32.mrb[0].mxu0
    %v256 = vadd.f32 %v107, %v255
    %v257 = vpop.f32.mrb[0].mxu0
    %v258 = vpop.f32.mrb[0].mxu0
    %v259 = vadd.f32 %v107, %v258
    %v260 = vpop.f32.mrb[0].mxu0
    %261 = vmatprep.mubr.bf16.mxu0 0
    %262 = vmatmul.mubr.bf16.gmra.mrb[0].mxu0 %v144
    %v263 = vpop.f32.mrb[0].mxu0
    %v264 = vadd.f32 %v107, %v263
    %v265 = vpop.f32.mrb[0].mxu0
    %v266 = vpop.f32.mrb[0].mxu0
    %v267 = vadd.f32 %v107, %v266
    %v268 = vpop.f32.mrb[0].mxu0
    %269 = vmatprep.mubr.bf16.mxu0 0
    %270 = vmatmul.mubr.bf16.gmra.mrb[0].mxu0 %v145
    %v271 = vpop.f32.mrb[0].mxu0
    %v272 = vadd.f32 %v107, %v271
    %v273 = vpop.f32.mrb[0].mxu0
    %v274 = vpop.f32.mrb[0].mxu0
    %v275 = vadd.f32 %v107, %v274
    %v276 = vpop.f32.mrb[0].mxu0
    %277 = vmatprep.mubr.bf16.mxu0 0
    %278 = vmatmul.mubr.bf16.gmra.mrb[0].mxu0 %v146
    %v279 = vpop.f32.mrb[0].mxu0
    %v280 = vadd.f32 %v107, %v279
    %v281 = vpop.f32.mrb[0].mxu0
    %v282 = vpop.f32.mrb[0].mxu0
    %v283 = vadd.f32 %v107, %v282
    %v284 = vpop.f32.mrb[0].mxu0
    %285 = vmatprep.mubr.bf16.mxu0 0
    %286 = vmatmul.mubr.bf16.gmra.mrb[0].mxu0 %v147
    %v287 = vpop.f32.mrb[0].mxu0
    %v288 = vadd.f32 %v107, %v287
    %v289 = vpop.f32.mrb[0].mxu0
    %v290 = vpop.f32.mrb[0].mxu0
    %v291 = vadd.f32 %v107, %v290
    %v292 = vpop.f32.mrb[0].mxu0
    %293 = vmatprep.mubr.bf16.mxu0 0
    %294 = vmatmul.mubr.bf16.gmra.mrb[0].mxu0 %v148
    %v295 = vpop.f32.mrb[0].mxu0
    %v296 = vadd.f32 %v107, %v295
    %v297 = vpop.f32.mrb[0].mxu0
    %v298 = vpop.f32.mrb[0].mxu0
    %v299 = vadd.f32 %v107, %v298
    %v300 = vpop.f32.mrb[0].mxu0
    %301 = vdwg.mxu0
    loop: start=0, step=1, limit=2
    $region86: #{tpu_custom_call.1} parent=1 // loop_pre_header
      _
    $region87: #{tpu_custom_call.1} parent=1 // loop_header
      %s303 = sphi 0, %s307
      %p304 = scmp.ge.s32.totalorder %s303, 2
      %v308 = vphi %v240, %v2266
      %v309 = vphi %v243, %v2267
      %v310 = vphi %v248, %v2268
      %v311 = vphi %v251, %v2269
      %v312 = vphi %v256, %v2270
      %v313 = vphi %v259, %v2271
      %v314 = vphi %v264, %v2272
      %v315 = vphi %v267, %v2273
      %v316 = vphi %v272, %v2274
      %v317 = vphi %v275, %v2275
      %v318 = vphi %v280, %v2276
      %v319 = vphi %v283, %v2277
      %v320 = vphi %v288, %v2278
      %v321 = vphi %v291, %v2279
      %v322 = vphi %v296, %v2280
      %v323 = vphi %v299, %v2281
    $region88: #{tpu_custom_call.1} parent=1 // loop_header_branch
      %306 = sbr.rel (%p304) target = $region92
    $region89: #{tpu_custom_call.1} parent=1 // loop_body
      %s324 = scalar_lea.vmem %s3, %s303
      %v325 = vld [vmem:[%s324] sm:$0x1]
      %s326 = scalar_lea.vmem %s4, %s303
      %v327 = vld [vmem:[%s326] sm:$0x1]
      %s328 = smul.u32 %s303, 2
      %s329 = smul.addr %s328, 4
      %s330 = scalar_lea.vmem %s5, %s329
      %v331 = vld [vmem:[%s330] sm:$0xf]
      %v332 = vld [vmem:[%s330 + $0x4] sm:$0xf]
      %s333 = smul.u32 %s303, 16
      %s334 = scalar_lea.vmem %s6, %s333
      %v335 = vld [vmem:[%s334] sm:$0xff]
      %v336 = vld [vmem:[%s334 + $0x8] sm:$0xff]
      %s337 = smul.addr %s328, 4
      %s338 = scalar_lea.vmem %s7, %s337
      %v339 = vld [vmem:[%s338] sm:$0xf]
      %v340 = vld [vmem:[%s338 + $0x4] sm:$0xf]
      %s341 = scalar_lea.vmem %s8, %s333
      %v342 = vld [vmem:[%s341] sm:$0xff]
      %v343 = vld [vmem:[%s341 + $0x8] sm:$0xff]
      %s344 = scalar_lea.vmem %s9, %s303
      %v345 = vld [vmem:[%s344] sm:$0x1]
      %s346 = scalar_lea.vmem %s10, %s303
      %v347 = vld [vmem:[%s346] sm:$0x1]
      %s348 = smul.u32 %s303, 4
      %s349 = smul.addr %s348, 4
      %s350 = scalar_lea.vmem %s11, %s349
      %v351 = vld [vmem:[%s350] sm:$0xf]
      %v352 = vld [vmem:[%s350 + $0x4] sm:$0xf]
      %v353 = vld [vmem:[%s350 + $0x8] sm:$0xf]
      %v354 = vld [vmem:[%s350 + $0xc] sm:$0xf]
      %s355 = scalar_lea.vmem %s12, %s303
      %v356 = vld [vmem:[%s355] sm:$0x1]
      %s357 = smul.addr %s333, 4
      %s358 = scalar_lea.vmem %s13, %s357
      %v359 = vld [vmem:[%s358] sm:$0xf]
      %v360 = vld [vmem:[%s358 + $0x4] sm:$0xf]
      %v361 = vld [vmem:[%s358 + $0x8] sm:$0xf]
      %v362 = vld [vmem:[%s358 + $0xc] sm:$0xf]
      %v363 = vld [vmem:[%s358 + $0x10] sm:$0xf]
      %v364 = vld [vmem:[%s358 + $0x14] sm:$0xf]
      %v365 = vld [vmem:[%s358 + $0x18] sm:$0xf]
      %v366 = vld [vmem:[%s358 + $0x1c] sm:$0xf]
      %v367 = vld [vmem:[%s358 + $0x20] sm:$0xf]
      %v368 = vld [vmem:[%s358 + $0x24] sm:$0xf]
      %v369 = vld [vmem:[%s358 + $0x28] sm:$0xf]
      %v370 = vld [vmem:[%s358 + $0x2c] sm:$0xf]
      %v371 = vld [vmem:[%s358 + $0x30] sm:$0xf]
      %v372 = vld [vmem:[%s358 + $0x34] sm:$0xf]
      %v373 = vld [vmem:[%s358 + $0x38] sm:$0xf]
      %v374 = vld [vmem:[%s358 + $0x3c] sm:$0xf]
      %s375 = scalar_lea.vmem %s14, %s303
      %v376 = vld [vmem:[%s375] sm:$0x1]
      %vm377 = vcmask 261120
      %v378 = vsel %vm377, %v308, 0.0
      %379 = vadd.xlane.f32.xlu0 %v378
      %v380 = vpop.xlane.xlu0 %379
      %v381 = vsel %vm377, %v309, 0.0
      %382 = vadd.xlane.f32.xlu0 %v381
      %v383 = vpop.xlane.xlu0 %382
      %v384 = vsel %vm377, %v310, 0.0
      %385 = vadd.xlane.f32.xlu0 %v384
      %v386 = vpop.xlane.xlu0 %385
      %v387 = vsel %vm377, %v311, 0.0
      %388 = vadd.xlane.f32.xlu0 %v387
      %v389 = vpop.xlane.xlu0 %388
      %v390 = vsel %vm377, %v312, 0.0
      %391 = vadd.xlane.f32.xlu0 %v390
      %v392 = vpop.xlane.xlu0 %391
      %v393 = vsel %vm377, %v313, 0.0
      %394 = vadd.xlane.f32.xlu0 %v393
      %v395 = vpop.xlane.xlu0 %394
      %v396 = vsel %vm377, %v314, 0.0
      %397 = vadd.xlane.f32.xlu0 %v396
      %v398 = vpop.xlane.xlu0 %397
      %v399 = vsel %vm377, %v315, 0.0
      %400 = vadd.xlane.f32.xlu0 %v399
      %v401 = vpop.xlane.xlu0 %400
      %v402 = vsel %vm377, %v316, 0.0
      %403 = vadd.xlane.f32.xlu0 %v402
      %v404 = vpop.xlane.xlu0 %403
      %v405 = vsel %vm377, %v317, 0.0
      %406 = vadd.xlane.f32.xlu0 %v405
      %v407 = vpop.xlane.xlu0 %406
      %v408 = vsel %vm377, %v318, 0.0
      %409 = vadd.xlane.f32.xlu0 %v408
      %v410 = vpop.xlane.xlu0 %409
      %v411 = vsel %vm377, %v319, 0.0
      %412 = vadd.xlane.f32.xlu0 %v411
      %v413 = vpop.xlane.xlu0 %412
      %v414 = vsel %vm377, %v320, 0.0
      %415 = vadd.xlane.f32.xlu0 %v414
      %v416 = vpop.xlane.xlu0 %415
      %v417 = vsel %vm377, %v321, 0.0
      %418 = vadd.xlane.f32.xlu0 %v417
      %v419 = vpop.xlane.xlu0 %418
      %v420 = vsel %vm377, %v322, 0.0
      %421 = vadd.xlane.f32.xlu0 %v420
      %v422 = vpop.xlane.xlu0 %421
      %v423 = vsel %vm377, %v323, 0.0
      %424 = vadd.xlane.f32.xlu0 %v423
      %v425 = vpop.xlane.xlu0 %424
      %v426 = vrcp.pop 32.0
      %v427 = vmul.f32 %v380, %v426
      %v428 = vmul.f32 %v383, %v426
      %v429 = vmul.f32 %v386, %v426
      %v430 = vmul.f32 %v389, %v426
      %v431 = vmul.f32 %v392, %v426
      %v432 = vmul.f32 %v395, %v426
      %v433 = vmul.f32 %v398, %v426
      %v434 = vmul.f32 %v401, %v426
      %v435 = vmul.f32 %v404, %v426
      %v436 = vmul.f32 %v407, %v426
      %v437 = vmul.f32 %v410, %v426
      %v438 = vmul.f32 %v413, %v426
      %v439 = vmul.f32 %v416, %v426
      %v440 = vmul.f32 %v419, %v426
      %v441 = vmul.f32 %v422, %v426
      %v442 = vmul.f32 %v425, %v426
      %v443 = vmul.f32 %v308, %v308
      %v444 = vmul.f32 %v309, %v309
      %v445 = vmul.f32 %v310, %v310
      %v446 = vmul.f32 %v311, %v311
      %v447 = vmul.f32 %v312, %v312
      %v448 = vmul.f32 %v313, %v313
      %v449 = vmul.f32 %v314, %v314
      %v450 = vmul.f32 %v315, %v315
      %v451 = vmul.f32 %v316, %v316
      %v452 = vmul.f32 %v317, %v317
      %v453 = vmul.f32 %v318, %v318
      %v454 = vmul.f32 %v319, %v319
      %v455 = vmul.f32 %v320, %v320
      %v456 = vmul.f32 %v321, %v321
      %v457 = vmul.f32 %v322, %v322
      %v458 = vmul.f32 %v323, %v323
      %v459 = vsel %vm377, %v443, 0.0
      %460 = vadd.xlane.f32.xlu0 %v459
      %v461 = vpop.xlane.xlu0 %460
      %v462 = vsel %vm377, %v444, 0.0
      %463 = vadd.xlane.f32.xlu0 %v462
      %v464 = vpop.xlane.xlu0 %463
      %v465 = vsel %vm377, %v445, 0.0
      %466 = vadd.xlane.f32.xlu0 %v465
      %v467 = vpop.xlane.xlu0 %466
      %v468 = vsel %vm377, %v446, 0.0
      %469 = vadd.xlane.f32.xlu0 %v468
      %v470 = vpop.xlane.xlu0 %469
      %v471 = vsel %vm377, %v447, 0.0
      %472 = vadd.xlane.f32.xlu0 %v471
      %v473 = vpop.xlane.xlu0 %472
      %v474 = vsel %vm377, %v448, 0.0
      %475 = vadd.xlane.f32.xlu0 %v474
      %v476 = vpop.xlane.xlu0 %475
      %v477 = vsel %vm377, %v449, 0.0
      %478 = vadd.xlane.f32.xlu0 %v477
      %v479 = vpop.xlane.xlu0 %478
      %v480 = vsel %vm377, %v450, 0.0
      %481 = vadd.xlane.f32.xlu0 %v480
      %v482 = vpop.xlane.xlu0 %481
      %v483 = vsel %vm377, %v451, 0.0
      %484 = vadd.xlane.f32.xlu0 %v483
      %v485 = vpop.xlane.xlu0 %484
      %v486 = vsel %vm377, %v452, 0.0
      %487 = vadd.xlane.f32.xlu0 %v486
      %v488 = vpop.xlane.xlu0 %487
      %v489 = vsel %vm377, %v453, 0.0
      %490 = vadd.xlane.f32.xlu0 %v489
      %v491 = vpop.xlane.xlu0 %490
      %v492 = vsel %vm377, %v454, 0.0
      %493 = vadd.xlane.f32.xlu0 %v492
      %v494 = vpop.xlane.xlu0 %493
      %v495 = vsel %vm377, %v455, 0.0
      %496 = vadd.xlane.f32.xlu0 %v495
      %v497 = vpop.xlane.xlu0 %496
      %v498 = vsel %vm377, %v456, 0.0
      %499 = vadd.xlane.f32.xlu0 %v498
      %v500 = vpop.xlane.xlu0 %499
      %v501 = vsel %vm377, %v457, 0.0
      %502 = vadd.xlane.f32.xlu0 %v501
      %v503 = vpop.xlane.xlu0 %502
      %v504 = vsel %vm377, %v458, 0.0
      %505 = vadd.xlane.f32.xlu0 %v504
      %v506 = vpop.xlane.xlu0 %505
      %v507 = vmul.f32 %v461, %v426
      %v508 = vmul.f32 %v464, %v426
      %v509 = vmul.f32 %v467, %v426
      %v510 = vmul.f32 %v470, %v426
      %v511 = vmul.f32 %v473, %v426
      %v512 = vmul.f32 %v476, %v426
      %v513 = vmul.f32 %v479, %v426
      %v514 = vmul.f32 %v482, %v426
      %v515 = vmul.f32 %v485, %v426
      %v516 = vmul.f32 %v488, %v426
      %v517 = vmul.f32 %v491, %v426
      %v518 = vmul.f32 %v494, %v426
      %v519 = vmul.f32 %v497, %v426
      %v520 = vmul.f32 %v500, %v426
      %v521 = vmul.f32 %v503, %v426
      %v522 = vmul.f32 %v506, %v426
      %v523 = vmul.f32 %v427, %v427
      %v524 = vmul.f32 %v428, %v428
      %v525 = vmul.f32 %v429, %v429
      %v526 = vmul.f32 %v430, %v430
      %v527 = vmul.f32 %v431, %v431
      %v528 = vmul.f32 %v432, %v432
      %v529 = vmul.f32 %v433, %v433
      %v530 = vmul.f32 %v434, %v434
      %v531 = vmul.f32 %v435, %v435
      %v532 = vmul.f32 %v436, %v436
      %v533 = vmul.f32 %v437, %v437
      %v534 = vmul.f32 %v438, %v438
      %v535 = vmul.f32 %v439, %v439
      %v536 = vmul.f32 %v440, %v440
      %v537 = vmul.f32 %v441, %v441
      %v538 = vmul.f32 %v442, %v442
      %v539 = vsub.f32 %v507, %v523
      %v540 = vsub.f32 %v508, %v524
      %v541 = vsub.f32 %v509, %v525
      %v542 = vsub.f32 %v510, %v526
      %v543 = vsub.f32 %v511, %v527
      %v544 = vsub.f32 %v512, %v528
      %v545 = vsub.f32 %v513, %v529
      %v546 = vsub.f32 %v514, %v530
      %v547 = vsub.f32 %v515, %v531
      %v548 = vsub.f32 %v516, %v532
      %v549 = vsub.f32 %v517, %v533
      %v550 = vsub.f32 %v518, %v534
      %v551 = vsub.f32 %v519, %v535
      %v552 = vsub.f32 %v520, %v536
      %v553 = vsub.f32 %v521, %v537
      %v554 = vsub.f32 %v522, %v538
      %v555 = vsub.f32 %v308, %v427
      %v556 = vsub.f32 %v309, %v428
      %v557 = vsub.f32 %v310, %v429
      %v558 = vsub.f32 %v311, %v430
      %v559 = vsub.f32 %v312, %v431
      %v560 = vsub.f32 %v313, %v432
      %v561 = vsub.f32 %v314, %v433
      %v562 = vsub.f32 %v315, %v434
      %v563 = vsub.f32 %v316, %v435
      %v564 = vsub.f32 %v317, %v436
      %v565 = vsub.f32 %v318, %v437
      %v566 = vsub.f32 %v319, %v438
      %v567 = vsub.f32 %v320, %v439
      %v568 = vsub.f32 %v321, %v440
      %v569 = vsub.f32 %v322, %v441
      %v570 = vsub.f32 %v323, %v442
      %v571 = vadd.f32 %v539, 1e-06
      %v572 = vadd.f32 %v540, 1e-06
      %v573 = vadd.f32 %v541, 1e-06
      %v574 = vadd.f32 %v542, 1e-06
      %v575 = vadd.f32 %v543, 1e-06
      %v576 = vadd.f32 %v544, 1e-06
      %v577 = vadd.f32 %v545, 1e-06
      %v578 = vadd.f32 %v546, 1e-06
      %v579 = vadd.f32 %v547, 1e-06
      %v580 = vadd.f32 %v548, 1e-06
      %v581 = vadd.f32 %v549, 1e-06
      %v582 = vadd.f32 %v550, 1e-06
      %v583 = vadd.f32 %v551, 1e-06
      %v584 = vadd.f32 %v552, 1e-06
      %v585 = vadd.f32 %v553, 1e-06
      %v586 = vadd.f32 %v554, 1e-06
      %v587 = vrsqrt.pop %v571
      %v588 = vrsqrt.pop %v572
      %v589 = vrsqrt.pop %v573
      %v590 = vrsqrt.pop %v574
      %v591 = vrsqrt.pop %v575
      %v592 = vrsqrt.pop %v576
      %v593 = vrsqrt.pop %v577
      %v594 = vrsqrt.pop %v578
      %v595 = vrsqrt.pop %v579
      %v596 = vrsqrt.pop %v580
      %v597 = vrsqrt.pop %v581
      %v598 = vrsqrt.pop %v582
      %v599 = vrsqrt.pop %v583
      %v600 = vrsqrt.pop %v584
      %v601 = vrsqrt.pop %v585
      %v602 = vrsqrt.pop %v586
      %v603 = vmul.f32 %v555, %v587
      %v604 = vmul.f32 %v556, %v588
      %v605 = vmul.f32 %v557, %v589
      %v606 = vmul.f32 %v558, %v590
      %v607 = vmul.f32 %v559, %v591
      %v608 = vmul.f32 %v560, %v592
      %v609 = vmul.f32 %v561, %v593
      %v610 = vmul.f32 %v562, %v594
      %v611 = vmul.f32 %v563, %v595
      %v612 = vmul.f32 %v564, %v596
      %v613 = vmul.f32 %v565, %v597
      %v614 = vmul.f32 %v566, %v598
      %v615 = vmul.f32 %v567, %v599
      %v616 = vmul.f32 %v568, %v600
      %v617 = vmul.f32 %v569, %v601
      %v618 = vmul.f32 %v570, %v602
      %v620 = vlaneseq
      %v621 = vshrl.u32 %v620, 7
      %v622 = vsub.s32 0, %v621
      %v623 = vrot.slane %v325, %v622
      %v625 = vmul.f32 %v603, %v623
      %v626 = vmul.f32 %v604, %v623
      %v627 = vmul.f32 %v605, %v623
      %v628 = vmul.f32 %v606, %v623
      %v629 = vmul.f32 %v607, %v623
      %v630 = vmul.f32 %v608, %v623
      %v631 = vmul.f32 %v609, %v623
      %v632 = vmul.f32 %v610, %v623
      %v633 = vmul.f32 %v611, %v623
      %v634 = vmul.f32 %v612, %v623
      %v635 = vmul.f32 %v613, %v623
      %v636 = vmul.f32 %v614, %v623
      %v637 = vmul.f32 %v615, %v623
      %v638 = vmul.f32 %v616, %v623
      %v639 = vmul.f32 %v617, %v623
      %v640 = vmul.f32 %v618, %v623
      %v642 = vlaneseq
      %v643 = vshrl.u32 %v642, 7
      %v644 = vsub.s32 0, %v643
      %v645 = vrot.slane %v327, %v644
      %v647 = vadd.f32 %v625, %v645
      %v648 = vadd.f32 %v626, %v645
      %v649 = vadd.f32 %v627, %v645
      %v650 = vadd.f32 %v628, %v645
      %v651 = vadd.f32 %v629, %v645
      %v652 = vadd.f32 %v630, %v645
      %v653 = vadd.f32 %v631, %v645
      %v654 = vadd.f32 %v632, %v645
      %v655 = vadd.f32 %v633, %v645
      %v656 = vadd.f32 %v634, %v645
      %v657 = vadd.f32 %v635, %v645
      %v658 = vadd.f32 %v636, %v645
      %v659 = vadd.f32 %v637, %v645
      %v660 = vadd.f32 %v638, %v645
      %v661 = vadd.f32 %v639, %v645
      %v662 = vadd.f32 %v640, %v645
      %v663 = vpack.c.bf16 %v648, %v647
      %v664 = vpack.c.bf16 %v650, %v649
      %v665 = vpack.c.bf16 %v652, %v651
      %v666 = vpack.c.bf16 %v654, %v653
      %v667 = vpack.c.bf16 %v656, %v655
      %v668 = vpack.c.bf16 %v658, %v657
      %v669 = vpack.c.bf16 %v660, %v659
      %v670 = vpack.c.bf16 %v662, %v661
      %672 = vset.pattern.permute.xlu0 0
      %673 = vperm.xlu0 %672, %v335
      %v674 = vpop.permute.xlu0 %673
      %677 = vset.pattern.permute.xlu0 0
      %678 = vperm.xlu0 %677, %v336
      %v679 = vpop.permute.xlu0 %678
      %v683 = vunpack.c.l.b16 %v331
      %v684 = vunpack.c.l.b16 %v332
      %v685 = vpack.c.b16 %v684, %v683
      %vm686 = vcmask 130048
      %v688 = vsel %vm686, %v685, 0
      %690 = vmatprep.subr.bf16.mxu0 0
      %691 = vmatpush1.bf16.msra.mxu0 %v663
      %692 = vmatprep.subr.bf16.mxu0 0
      %693 = vmatpush1.bf16.msra.mxu0 0
      %694 = vmatprep.subr.bf16.mxu0 0
      %695 = vmatpush1.bf16.msra.mxu0 0
      %696 = vmatprep.subr.bf16.mxu0 0
      %697 = vmatpush1.bf16.msra.mxu0 0
      %698 = vmatprep.subr.bf16.mxu0 0
      %699 = vmatpush1.bf16.msra.mxu0 0
      %700 = vmatprep.subr.bf16.mxu0 0
      %701 = vmatpush1.bf16.msra.mxu0 0
      %702 = vmatprep.subr.bf16.mxu0 0
      %703 = vmatpush1.bf16.msra.mxu0 0
      %704 = vmatprep.subr.bf16.mxu0 0
      %705 = vmatpush1.bf16.msra.mxu0 0
      %706 = vmatprep.subr.bf16.mxu0 0
      %707 = vmatpush1.bf16.msra.mxu0 0
      %708 = vmatprep.subr.bf16.mxu0 0
      %709 = vmatpush1.bf16.msra.mxu0 0
      %710 = vmatprep.subr.bf16.mxu0 0
      %711 = vmatpush1.bf16.msra.mxu0 0
      %712 = vmatprep.subr.bf16.mxu0 0
      %713 = vmatpush1.bf16.msra.mxu0 0
      %714 = vmatprep.subr.bf16.mxu0 0
      %715 = vmatpush1.bf16.msra.mxu0 0
      %716 = vmatprep.subr.bf16.mxu0 0
      %717 = vmatpush1.bf16.msra.mxu0 0
      %718 = vmatprep.subr.bf16.mxu0 0
      %719 = vmatpush1.bf16.msra.mxu0 0
      %720 = vmatprep.subr.bf16.mxu0 0
      %721 = vmatpush1.bf16.msra.mxu0 0
      %722 = vmatprep.mubr.bf16.mxu0 0
      %723 = vmatmul.mubr.bf16.gmra.mrb[0].mxu0 %v688
      %v724 = vpop.f32.mrb[0].mxu0
      %v725 = vadd.f32 %v674, %v724
      %v726 = vpop.f32.mrb[0].mxu0
      %v727 = vpop.f32.mrb[0].mxu0
      %v728 = vadd.f32 %v679, %v727
      %v729 = vpop.f32.mrb[0].mxu0
      %730 = vdwg.mxu0
      %731 = vmatprep.subr.bf16.mxu0 0
      %732 = vmatpush1.bf16.msra.mxu0 %v664
      %733 = vmatprep.subr.bf16.mxu0 0
      %734 = vmatpush1.bf16.msra.mxu0 0
      %735 = vmatprep.subr.bf16.mxu0 0
      %736 = vmatpush1.bf16.msra.mxu0 0
      %737 = vmatprep.subr.bf16.mxu0 0
      %738 = vmatpush1.bf16.msra.mxu0 0
      %739 = vmatprep.subr.bf16.mxu0 0
      %740 = vmatpush1.bf16.msra.mxu0 0
      %741 = vmatprep.subr.bf16.mxu0 0
      %742 = vmatpush1.bf16.msra.mxu0 0
      %743 = vmatprep.subr.bf16.mxu0 0
      %744 = vmatpush1.bf16.msra.mxu0 0
      %745 = vmatprep.subr.bf16.mxu0 0
      %746 = vmatpush1.bf16.msra.mxu0 0
      %747 = vmatprep.subr.bf16.mxu0 0
      %748 = vmatpush1.bf16.msra.mxu0 0
      %749 = vmatprep.subr.bf16.mxu0 0
      %750 = vmatpush1.bf16.msra.mxu0 0
      %751 = vmatprep.subr.bf16.mxu0 0
      %752 = vmatpush1.bf16.msra.mxu0 0
      %753 = vmatprep.subr.bf16.mxu0 0
      %754 = vmatpush1.bf16.msra.mxu0 0
      %755 = vmatprep.subr.bf16.mxu0 0
      %756 = vmatpush1.bf16.msra.mxu0 0
      %757 = vmatprep.subr.bf16.mxu0 0
      %758 = vmatpush1.bf16.msra.mxu0 0
      %759 = vmatprep.subr.bf16.mxu0 0
      %760 = vmatpush1.bf16.msra.mxu0 0
      %761 = vmatprep.subr.bf16.mxu0 0
      %762 = vmatpush1.bf16.msra.mxu0 0
      %763 = vmatprep.mubr.bf16.mxu0 0
      %764 = vmatmul.mubr.bf16.gmra.mrb[0].mxu0 %v688
      %v765 = vpop.f32.mrb[0].mxu0
      %v766 = vadd.f32 %v674, %v765
      %v767 = vpop.f32.mrb[0].mxu0
      %v768 = vpop.f32.mrb[0].mxu0
      %v769 = vadd.f32 %v679, %v768
      %v770 = vpop.f32.mrb[0].mxu0
      %771 = vdwg.mxu0
      %772 = vmatprep.subr.bf16.mxu0 0
      %773 = vmatpush1.bf16.msra.mxu0 %v665
      %774 = vmatprep.subr.bf16.mxu0 0
      %775 = vmatpush1.bf16.msra.mxu0 0
      %776 = vmatprep.subr.bf16.mxu0 0
      %777 = vmatpush1.bf16.msra.mxu0 0
      %778 = vmatprep.subr.bf16.mxu0 0
      %779 = vmatpush1.bf16.msra.mxu0 0
      %780 = vmatprep.subr.bf16.mxu0 0
      %781 = vmatpush1.bf16.msra.mxu0 0
      %782 = vmatprep.subr.bf16.mxu0 0
      %783 = vmatpush1.bf16.msra.mxu0 0
      %784 = vmatprep.subr.bf16.mxu0 0
      %785 = vmatpush1.bf16.msra.mxu0 0
      %786 = vmatprep.subr.bf16.mxu0 0
      %787 = vmatpush1.bf16.msra.mxu0 0
      %788 = vmatprep.subr.bf16.mxu0 0
      %789 = vmatpush1.bf16.msra.mxu0 0
      %790 = vmatprep.subr.bf16.mxu0 0
      %791 = vmatpush1.bf16.msra.mxu0 0
      %792 = vmatprep.subr.bf16.mxu0 0
      %793 = vmatpush1.bf16.msra.mxu0 0
      %794 = vmatprep.subr.bf16.mxu0 0
      %795 = vmatpush1.bf16.msra.mxu0 0
      %796 = vmatprep.subr.bf16.mxu0 0
      %797 = vmatpush1.bf16.msra.mxu0 0
      %798 = vmatprep.subr.bf16.mxu0 0
      %799 = vmatpush1.bf16.msra.mxu0 0
      %800 = vmatprep.subr.bf16.mxu0 0
      %801 = vmatpush1.bf16.msra.mxu0 0
      %802 = vmatprep.subr.bf16.mxu0 0
      %803 = vmatpush1.bf16.msra.mxu0 0
      %804 = vmatprep.mubr.bf16.mxu0 0
      %805 = vmatmul.mubr.bf16.gmra.mrb[0].mxu0 %v688
      %v806 = vpop.f32.mrb[0].mxu0
      %v807 = vadd.f32 %v674, %v806
      %v808 = vpop.f32.mrb[0].mxu0
      %v809 = vpop.f32.mrb[0].mxu0
      %v810 = vadd.f32 %v679, %v809
      %v811 = vpop.f32.mrb[0].mxu0
      %812 = vdwg.mxu0
      %813 = vmatprep.subr.bf16.mxu0 0
      %814 = vmatpush1.bf16.msra.mxu0 %v666
      %815 = vmatprep.subr.bf16.mxu0 0
      %816 = vmatpush1.bf16.msra.mxu0 0
      %817 = vmatprep.subr.bf16.mxu0 0
      %818 = vmatpush1.bf16.msra.mxu0 0
      %819 = vmatprep.subr.bf16.mxu0 0
      %820 = vmatpush1.bf16.msra.mxu0 0
      %821 = vmatprep.subr.bf16.mxu0 0
      %822 = vmatpush1.bf16.msra.mxu0 0
      %823 = vmatprep.subr.bf16.mxu0 0
      %824 = vmatpush1.bf16.msra.mxu0 0
      %825 = vmatprep.subr.bf16.mxu0 0
      %826 = vmatpush1.bf16.msra.mxu0 0
      %827 = vmatprep.subr.bf16.mxu0 0
      %828 = vmatpush1.bf16.msra.mxu0 0
      %829 = vmatprep.subr.bf16.mxu0 0
      %830 = vmatpush1.bf16.msra.mxu0 0
      %831 = vmatprep.subr.bf16.mxu0 0
      %832 = vmatpush1.bf16.msra.mxu0 0
      %833 = vmatprep.subr.bf16.mxu0 0
      %834 = vmatpush1.bf16.msra.mxu0 0
      %835 = vmatprep.subr.bf16.mxu0 0
      %836 = vmatpush1.bf16.msra.mxu0 0
      %837 = vmatprep.subr.bf16.mxu0 0
      %838 = vmatpush1.bf16.msra.mxu0 0
      %839 = vmatprep.subr.bf16.mxu0 0
      %840 = vmatpush1.bf16.msra.mxu0 0
      %841 = vmatprep.subr.bf16.mxu0 0
      %842 = vmatpush1.bf16.msra.mxu0 0
      %843 = vmatprep.subr.bf16.mxu0 0
      %844 = vmatpush1.bf16.msra.mxu0 0
      %845 = vmatprep.mubr.bf16.mxu0 0
      %846 = vmatmul.mubr.bf16.gmra.mrb[0].mxu0 %v688
      %v847 = vpop.f32.mrb[0].mxu0
      %v848 = vadd.f32 %v674, %v847
      %v849 = vpop.f32.mrb[0].mxu0
      %v850 = vpop.f32.mrb[0].mxu0
      %v851 = vadd.f32 %v679, %v850
      %v852 = vpop.f32.mrb[0].mxu0
      %853 = vdwg.mxu0
      %854 = vmatprep.subr.bf16.mxu0 0
      %855 = vmatpush1.bf16.msra.mxu0 %v667
      %856 = vmatprep.subr.bf16.mxu0 0
      %857 = vmatpush1.bf16.msra.mxu0 0
      %858 = vmatprep.subr.bf16.mxu0 0
      %859 = vmatpush1.bf16.msra.mxu0 0
      %860 = vmatprep.subr.bf16.mxu0 0
      %861 = vmatpush1.bf16.msra.mxu0 0
      %862 = vmatprep.subr.bf16.mxu0 0
      %863 = vmatpush1.bf16.msra.mxu0 0
      %864 = vmatprep.subr.bf16.mxu0 0
      %865 = vmatpush1.bf16.msra.mxu0 0
      %866 = vmatprep.subr.bf16.mxu0 0
      %867 = vmatpush1.bf16.msra.mxu0 0
      %868 = vmatprep.subr.bf16.mxu0 0
      %869 = vmatpush1.bf16.msra.mxu0 0
      %870 = vmatprep.subr.bf16.mxu0 0
      %871 = vmatpush1.bf16.msra.mxu0 0
      %872 = vmatprep.subr.bf16.mxu0 0
      %873 = vmatpush1.bf16.msra.mxu0 0
      %874 = vmatprep.subr.bf16.mxu0 0
      %875 = vmatpush1.bf16.msra.mxu0 0
      %876 = vmatprep.subr.bf16.mxu0 0
      %877 = vmatpush1.bf16.msra.mxu0 0
      %878 = vmatprep.subr.bf16.mxu0 0
      %879 = vmatpush1.bf16.msra.mxu0 0
      %880 = vmatprep.subr.bf16.mxu0 0
      %881 = vmatpush1.bf16.msra.mxu0 0
      %882 = vmatprep.subr.bf16.mxu0 0
      %883 = vmatpush1.bf16.msra.mxu0 0
      %884 = vmatprep.subr.bf16.mxu0 0
      %885 = vmatpush1.bf16.msra.mxu0 0
      %886 = vmatprep.mubr.bf16.mxu0 0
      %887 = vmatmul.mubr.bf16.gmra.mrb[0].mxu0 %v688
      %v888 = vpop.f32.mrb[0].mxu0
      %v889 = vadd.f32 %v674, %v888
      %v890 = vpop.f32.mrb[0].mxu0
      %v891 = vpop.f32.mrb[0].mxu0
      %v892 = vadd.f32 %v679, %v891
      %v893 = vpop.f32.mrb[0].mxu0
      %894 = vdwg.mxu0
      %895 = vmatprep.subr.bf16.mxu0 0
      %896 = vmatpush1.bf16.msra.mxu0 %v668
      %897 = vmatprep.subr.bf16.mxu0 0
      %898 = vmatpush1.bf16.msra.mxu0 0
      %899 = vmatprep.subr.bf16.mxu0 0
      %900 = vmatpush1.bf16.msra.mxu0 0
      %901 = vmatprep.subr.bf16.mxu0 0
      %902 = vmatpush1.bf16.msra.mxu0 0
      %903 = vmatprep.subr.bf16.mxu0 0
      %904 = vmatpush1.bf16.msra.mxu0 0
      %905 = vmatprep.subr.bf16.mxu0 0
      %906 = vmatpush1.bf16.msra.mxu0 0
      %907 = vmatprep.subr.bf16.mxu0 0
      %908 = vmatpush1.bf16.msra.mxu0 0
      %909 = vmatprep.subr.bf16.mxu0 0
      %910 = vmatpush1.bf16.msra.mxu0 0
      %911 = vmatprep.subr.bf16.mxu0 0
      %912 = vmatpush1.bf16.msra.mxu0 0
      %913 = vmatprep.subr.bf16.mxu0 0
      %914 = vmatpush1.bf16.msra.mxu0 0
      %915 = vmatprep.subr.bf16.mxu0 0
      %916 = vmatpush1.bf16.msra.mxu0 0
      %917 = vmatprep.subr.bf16.mxu0 0
      %918 = vmatpush1.bf16.msra.mxu0 0
      %919 = vmatprep.subr.bf16.mxu0 0
      %920 = vmatpush1.bf16.msra.mxu0 0
      %921 = vmatprep.subr.bf16.mxu0 0
      %922 = vmatpush1.bf16.msra.mxu0 0
      %923 = vmatprep.subr.bf16.mxu0 0
      %924 = vmatpush1.bf16.msra.mxu0 0
      %925 = vmatprep.subr.bf16.mxu0 0
      %926 = vmatpush1.bf16.msra.mxu0 0
      %927 = vmatprep.mubr.bf16.mxu0 0
      %928 = vmatmul.mubr.bf16.gmra.mrb[0].mxu0 %v688
      %v929 = vpop.f32.mrb[0].mxu0
      %v930 = vadd.f32 %v674, %v929
      %v931 = vpop.f32.mrb[0].mxu0
      %v932 = vpop.f32.mrb[0].mxu0
      %v933 = vadd.f32 %v679, %v932
      %v934 = vpop.f32.mrb[0].mxu0
      %935 = vdwg.mxu0
      %936 = vmatprep.subr.bf16.mxu0 0
      %937 = vmatpush1.bf16.msra.mxu0 %v669
      %938 = vmatprep.subr.bf16.mxu0 0
      %939 = vmatpush1.bf16.msra.mxu0 0
      %940 = vmatprep.subr.bf16.mxu0 0
      %941 = vmatpush1.bf16.msra.mxu0 0
      %942 = vmatprep.subr.bf16.mxu0 0
      %943 = vmatpush1.bf16.msra.mxu0 0
      %944 = vmatprep.subr.bf16.mxu0 0
      %945 = vmatpush1.bf16.msra.mxu0 0
      %946 = vmatprep.subr.bf16.mxu0 0
      %947 = vmatpush1.bf16.msra.mxu0 0
      %948 = vmatprep.subr.bf16.mxu0 0
      %949 = vmatpush1.bf16.msra.mxu0 0
      %950 = vmatprep.subr.bf16.mxu0 0
      %951 = vmatpush1.bf16.msra.mxu0 0
      %952 = vmatprep.subr.bf16.mxu0 0
      %953 = vmatpush1.bf16.msra.mxu0 0
      %954 = vmatprep.subr.bf16.mxu0 0
      %955 = vmatpush1.bf16.msra.mxu0 0
      %956 = vmatprep.subr.bf16.mxu0 0
      %957 = vmatpush1.bf16.msra.mxu0 0
      %958 = vmatprep.subr.bf16.mxu0 0
      %959 = vmatpush1.bf16.msra.mxu0 0
      %960 = vmatprep.subr.bf16.mxu0 0
      %961 = vmatpush1.bf16.msra.mxu0 0
      %962 = vmatprep.subr.bf16.mxu0 0
      %963 = vmatpush1.bf16.msra.mxu0 0
      %964 = vmatprep.subr.bf16.mxu0 0
      %965 = vmatpush1.bf16.msra.mxu0 0
      %966 = vmatprep.subr.bf16.mxu0 0
      %967 = vmatpush1.bf16.msra.mxu0 0
      %968 = vmatprep.mubr.bf16.mxu0 0
      %969 = vmatmul.mubr.bf16.gmra.mrb[0].mxu0 %v688
      %v970 = vpop.f32.mrb[0].mxu0
      %v971 = vadd.f32 %v674, %v970
      %v972 = vpop.f32.mrb[0].mxu0
      %v973 = vpop.f32.mrb[0].mxu0
      %v974 = vadd.f32 %v679, %v973
      %v975 = vpop.f32.mrb[0].mxu0
      %976 = vdwg.mxu0
      %977 = vmatprep.subr.bf16.mxu0 0
      %978 = vmatpush1.bf16.msra.mxu0 %v670
      %979 = vmatprep.subr.bf16.mxu0 0
      %980 = vmatpush1.bf16.msra.mxu0 0
      %981 = vmatprep.subr.bf16.mxu0 0
      %982 = vmatpush1.bf16.msra.mxu0 0
      %983 = vmatprep.subr.bf16.mxu0 0
      %984 = vmatpush1.bf16.msra.mxu0 0
      %985 = vmatprep.subr.bf16.mxu0 0
      %986 = vmatpush1.bf16.msra.mxu0 0
      %987 = vmatprep.subr.bf16.mxu0 0
      %988 = vmatpush1.bf16.msra.mxu0 0
      %989 = vmatprep.subr.bf16.mxu0 0
      %990 = vmatpush1.bf16.msra.mxu0 0
      %991 = vmatprep.subr.bf16.mxu0 0
      %992 = vmatpush1.bf16.msra.mxu0 0
      %993 = vmatprep.subr.bf16.mxu0 0
      %994 = vmatpush1.bf16.msra.mxu0 0
      %995 = vmatprep.subr.bf16.mxu0 0
      %996 = vmatpush1.bf16.msra.mxu0 0
      %997 = vmatprep.subr.bf16.mxu0 0
      %998 = vmatpush1.bf16.msra.mxu0 0
      %999 = vmatprep.subr.bf16.mxu0 0
      %1000 = vmatpush1.bf16.msra.mxu0 0
      %1001 = vmatprep.subr.bf16.mxu0 0
      %1002 = vmatpush1.bf16.msra.mxu0 0
      %1003 = vmatprep.subr.bf16.mxu0 0
      %1004 = vmatpush1.bf16.msra.mxu0 0
      %1005 = vmatprep.subr.bf16.mxu0 0
      %1006 = vmatpush1.bf16.msra.mxu0 0
      %1007 = vmatprep.subr.bf16.mxu0 0
      %1008 = vmatpush1.bf16.msra.mxu0 0
      %1009 = vmatprep.mubr.bf16.mxu0 0
      %1010 = vmatmul.mubr.bf16.gmra.mrb[0].mxu0 %v688
      %v1011 = vpop.f32.mrb[0].mxu0
      %v1012 = vadd.f32 %v674, %v1011
      %v1013 = vpop.f32.mrb[0].mxu0
      %v1014 = vpop.f32.mrb[0].mxu0
      %v1015 = vadd.f32 %v679, %v1014
      %v1016 = vpop.f32.mrb[0].mxu0
      %1017 = vdwg.mxu0
      %v1018 = vmul.f32 %v725, %v725
      %v1019 = vmul.f32 %v728, %v728
      %v1020 = vmul.f32 %v766, %v766
      %v1021 = vmul.f32 %v769, %v769
      %v1022 = vmul.f32 %v807, %v807
      %v1023 = vmul.f32 %v810, %v810
      %v1024 = vmul.f32 %v848, %v848
      %v1025 = vmul.f32 %v851, %v851
      %v1026 = vmul.f32 %v889, %v889
      %v1027 = vmul.f32 %v892, %v892
      %v1028 = vmul.f32 %v930, %v930
      %v1029 = vmul.f32 %v933, %v933
      %v1030 = vmul.f32 %v971, %v971
      %v1031 = vmul.f32 %v974, %v974
      %v1032 = vmul.f32 %v1012, %v1012
      %v1033 = vmul.f32 %v1015, %v1015
      %v1034 = vmul.f32 %v725, %v1018
      %v1035 = vmul.f32 %v728, %v1019
      %v1036 = vmul.f32 %v766, %v1020
      %v1037 = vmul.f32 %v769, %v1021
      %v1038 = vmul.f32 %v807, %v1022
      %v1039 = vmul.f32 %v810, %v1023
      %v1040 = vmul.f32 %v848, %v1024
      %v1041 = vmul.f32 %v851, %v1025
      %v1042 = vmul.f32 %v889, %v1026
      %v1043 = vmul.f32 %v892, %v1027
      %v1044 = vmul.f32 %v930, %v1028
      %v1045 = vmul.f32 %v933, %v1029
      %v1046 = vmul.f32 %v971, %v1030
      %v1047 = vmul.f32 %v974, %v1031
      %v1048 = vmul.f32 %v1012, %v1032
      %v1049 = vmul.f32 %v1015, %v1033
      %v1050 = vmul.f32 %v1034, 0.044715
      %v1051 = vmul.f32 %v1035, 0.044715
      %v1052 = vmul.f32 %v1036, 0.044715
      %v1053 = vmul.f32 %v1037, 0.044715
      %v1054 = vmul.f32 %v1038, 0.044715
      %v1055 = vmul.f32 %v1039, 0.044715
      %v1056 = vmul.f32 %v1040, 0.044715
      %v1057 = vmul.f32 %v1041, 0.044715
      %v1058 = vmul.f32 %v1042, 0.044715
      %v1059 = vmul.f32 %v1043, 0.044715
      %v1060 = vmul.f32 %v1044, 0.044715
      %v1061 = vmul.f32 %v1045, 0.044715
      %v1062 = vmul.f32 %v1046, 0.044715
      %v1063 = vmul.f32 %v1047, 0.044715
      %v1064 = vmul.f32 %v1048, 0.044715
      %v1065 = vmul.f32 %v1049, 0.044715
      %v1066 = vadd.f32 %v725, %v1050
      %v1067 = vadd.f32 %v728, %v1051
      %v1068 = vadd.f32 %v766, %v1052
      %v1069 = vadd.f32 %v769, %v1053
      %v1070 = vadd.f32 %v807, %v1054
      %v1071 = vadd.f32 %v810, %v1055
      %v1072 = vadd.f32 %v848, %v1056
      %v1073 = vadd.f32 %v851, %v1057
      %v1074 = vadd.f32 %v889, %v1058
      %v1075 = vadd.f32 %v892, %v1059
      %v1076 = vadd.f32 %v930, %v1060
      %v1077 = vadd.f32 %v933, %v1061
      %v1078 = vadd.f32 %v971, %v1062
      %v1079 = vadd.f32 %v974, %v1063
      %v1080 = vadd.f32 %v1012, %v1064
      %v1081 = vadd.f32 %v1015, %v1065
      %v1082 = vmul.f32 %v1066, 0.7978846
      %v1083 = vmul.f32 %v1067, 0.7978846
      %v1084 = vmul.f32 %v1068, 0.7978846
      %v1085 = vmul.f32 %v1069, 0.7978846
      %v1086 = vmul.f32 %v1070, 0.7978846
      %v1087 = vmul.f32 %v1071, 0.7978846
      %v1088 = vmul.f32 %v1072, 0.7978846
      %v1089 = vmul.f32 %v1073, 0.7978846
      %v1090 = vmul.f32 %v1074, 0.7978846
      %v1091 = vmul.f32 %v1075, 0.7978846
      %v1092 = vmul.f32 %v1076, 0.7978846
      %v1093 = vmul.f32 %v1077, 0.7978846
      %v1094 = vmul.f32 %v1078, 0.7978846
      %v1095 = vmul.f32 %v1079, 0.7978846
      %v1096 = vmul.f32 %v1080, 0.7978846
      %v1097 = vmul.f32 %v1081, 0.7978846
      %v1098 = vtanh.pop %v1082
      %v1099 = vtanh.pop %v1083
      %v1100 = vtanh.pop %v1084
      %v1101 = vtanh.pop %v1085
      %v1102 = vtanh.pop %v1086
      %v1103 = vtanh.pop %v1087
      %v1104 = vtanh.pop %v1088
      %v1105 = vtanh.pop %v1089
      %v1106 = vtanh.pop %v1090
      %v1107 = vtanh.pop %v1091
      %v1108 = vtanh.pop %v1092
      %v1109 = vtanh.pop %v1093
      %v1110 = vtanh.pop %v1094
      %v1111 = vtanh.pop %v1095
      %v1112 = vtanh.pop %v1096
      %v1113 = vtanh.pop %v1097
      %v1114 = vadd.f32 %v1098, 1.0
      %v1115 = vadd.f32 %v1099, 1.0
      %v1116 = vadd.f32 %v1100, 1.0
      %v1117 = vadd.f32 %v1101, 1.0
      %v1118 = vadd.f32 %v1102, 1.0
      %v1119 = vadd.f32 %v1103, 1.0
      %v1120 = vadd.f32 %v1104, 1.0
      %v1121 = vadd.f32 %v1105, 1.0
      %v1122 = vadd.f32 %v1106, 1.0
      %v1123 = vadd.f32 %v1107, 1.0
      %v1124 = vadd.f32 %v1108, 1.0
      %v1125 = vadd.f32 %v1109, 1.0
      %v1126 = vadd.f32 %v1110, 1.0
      %v1127 = vadd.f32 %v1111, 1.0
      %v1128 = vadd.f32 %v1112, 1.0
      %v1129 = vadd.f32 %v1113, 1.0
      %v1130 = vmul.f32 %v1114, 0.5
      %v1131 = vmul.f32 %v1115, 0.5
      %v1132 = vmul.f32 %v1116, 0.5
      %v1133 = vmul.f32 %v1117, 0.5
      %v1134 = vmul.f32 %v1118, 0.5
      %v1135 = vmul.f32 %v1119, 0.5
      %v1136 = vmul.f32 %v1120, 0.5
      %v1137 = vmul.f32 %v1121, 0.5
      %v1138 = vmul.f32 %v1122, 0.5
      %v1139 = vmul.f32 %v1123, 0.5
      %v1140 = vmul.f32 %v1124, 0.5
      %v1141 = vmul.f32 %v1125, 0.5
      %v1142 = vmul.f32 %v1126, 0.5
      %v1143 = vmul.f32 %v1127, 0.5
      %v1144 = vmul.f32 %v1128, 0.5
      %v1145 = vmul.f32 %v1129, 0.5
      %v1146 = vmul.f32 %v725, %v1130
      %v1147 = vmul.f32 %v728, %v1131
      %v1148 = vmul.f32 %v766, %v1132
      %v1149 = vmul.f32 %v769, %v1133
      %v1150 = vmul.f32 %v807, %v1134
      %v1151 = vmul.f32 %v810, %v1135
      %v1152 = vmul.f32 %v848, %v1136
      %v1153 = vmul.f32 %v851, %v1137
      %v1154 = vmul.f32 %v889, %v1138
      %v1155 = vmul.f32 %v892, %v1139
      %v1156 = vmul.f32 %v930, %v1140
      %v1157 = vmul.f32 %v933, %v1141
      %v1158 = vmul.f32 %v971, %v1142
      %v1159 = vmul.f32 %v974, %v1143
      %v1160 = vmul.f32 %v1012, %v1144
      %v1161 = vmul.f32 %v1015, %v1145
      %v1162 = vpack.c.bf16 %v1147, %v1146
      %v1163 = vpack.c.bf16 %v1149, %v1148
      %v1164 = vpack.c.bf16 %v1151, %v1150
      %v1165 = vpack.c.bf16 %v1153, %v1152
      %v1166 = vpack.c.bf16 %v1155, %v1154
      %v1167 = vpack.c.bf16 %v1157, %v1156
      %v1168 = vpack.c.bf16 %v1159, %v1158
      %v1169 = vpack.c.bf16 %v1161, %v1160
      %1171 = vset.pattern.permute.xlu0 0
      %1172 = vperm.xlu0 %1171, %v342
      %v1173 = vpop.permute.xlu0 %1172
      %1176 = vset.pattern.permute.xlu0 0
      %1177 = vperm.xlu0 %1176, %v343
      %v1178 = vpop.permute.xlu0 %1177
      %v1182 = vunpack.c.l.b16 %v339
      %v1183 = vunpack.c.l.b16 %v340
      %v1184 = vpack.c.b16 %v1183, %v1182
      %v1186 = vsel %vm686, %v1184, 0
      %1188 = vmatprep.subr.bf16.mxu0 0
      %1189 = vmatpush1.bf16.msra.mxu0 %v1162
      %1190 = vmatprep.subr.bf16.mxu0 0
      %1191 = vmatpush1.bf16.msra.mxu0 0
      %1192 = vmatprep.subr.bf16.mxu0 0
      %1193 = vmatpush1.bf16.msra.mxu0 0
      %1194 = vmatprep.subr.bf16.mxu0 0
      %1195 = vmatpush1.bf16.msra.mxu0 0
      %1196 = vmatprep.subr.bf16.mxu0 0
      %1197 = vmatpush1.bf16.msra.mxu0 0
      %1198 = vmatprep.subr.bf16.mxu0 0
      %1199 = vmatpush1.bf16.msra.mxu0 0
      %1200 = vmatprep.subr.bf16.mxu0 0
      %1201 = vmatpush1.bf16.msra.mxu0 0
      %1202 = vmatprep.subr.bf16.mxu0 0
      %1203 = vmatpush1.bf16.msra.mxu0 0
      %1204 = vmatprep.subr.bf16.mxu0 0
      %1205 = vmatpush1.bf16.msra.mxu0 0
      %1206 = vmatprep.subr.bf16.mxu0 0
      %1207 = vmatpush1.bf16.msra.mxu0 0
      %1208 = vmatprep.subr.bf16.mxu0 0
      %1209 = vmatpush1.bf16.msra.mxu0 0
      %1210 = vmatprep.subr.bf16.mxu0 0
      %1211 = vmatpush1.bf16.msra.mxu0 0
      %1212 = vmatprep.subr.bf16.mxu0 0
      %1213 = vmatpush1.bf16.msra.mxu0 0
      %1214 = vmatprep.subr.bf16.mxu0 0
      %1215 = vmatpush1.bf16.msra.mxu0 0
      %1216 = vmatprep.subr.bf16.mxu0 0
      %1217 = vmatpush1.bf16.msra.mxu0 0
      %1218 = vmatprep.subr.bf16.mxu0 0
      %1219 = vmatpush1.bf16.msra.mxu0 0
      %1220 = vmatprep.mubr.bf16.mxu0 0
      %1221 = vmatmul.mubr.bf16.gmra.mrb[0].mxu0 %v1186
      %v1222 = vpop.f32.mrb[0].mxu0
      %v1223 = vadd.f32 %v1173, %v1222
      %v1224 = vpop.f32.mrb[0].mxu0
      %v1225 = vpop.f32.mrb[0].mxu0
      %v1226 = vadd.f32 %v1178, %v1225
      %v1227 = vpop.f32.mrb[0].mxu0
      %1228 = vdwg.mxu0
      %1229 = vmatprep.subr.bf16.mxu0 0
      %1230 = vmatpush1.bf16.msra.mxu0 %v1163
      %1231 = vmatprep.subr.bf16.mxu0 0
      %1232 = vmatpush1.bf16.msra.mxu0 0
      %1233 = vmatprep.subr.bf16.mxu0 0
      %1234 = vmatpush1.bf16.msra.mxu0 0
      %1235 = vmatprep.subr.bf16.mxu0 0
      %1236 = vmatpush1.bf16.msra.mxu0 0
      %1237 = vmatprep.subr.bf16.mxu0 0
      %1238 = vmatpush1.bf16.msra.mxu0 0
      %1239 = vmatprep.subr.bf16.mxu0 0
      %1240 = vmatpush1.bf16.msra.mxu0 0
      %1241 = vmatprep.subr.bf16.mxu0 0
      %1242 = vmatpush1.bf16.msra.mxu0 0
      %1243 = vmatprep.subr.bf16.mxu0 0
      %1244 = vmatpush1.bf16.msra.mxu0 0
      %1245 = vmatprep.subr.bf16.mxu0 0
      %1246 = vmatpush1.bf16.msra.mxu0 0
      %1247 = vmatprep.subr.bf16.mxu0 0
      %1248 = vmatpush1.bf16.msra.mxu0 0
      %1249 = vmatprep.subr.bf16.mxu0 0
      %1250 = vmatpush1.bf16.msra.mxu0 0
      %1251 = vmatprep.subr.bf16.mxu0 0
      %1252 = vmatpush1.bf16.msra.mxu0 0
      %1253 = vmatprep.subr.bf16.mxu0 0
      %1254 = vmatpush1.bf16.msra.mxu0 0
      %1255 = vmatprep.subr.bf16.mxu0 0
      %1256 = vmatpush1.bf16.msra.mxu0 0
      %1257 = vmatprep.subr.bf16.mxu0 0
      %1258 = vmatpush1.bf16.msra.mxu0 0
      %1259 = vmatprep.subr.bf16.mxu0 0
      %1260 = vmatpush1.bf16.msra.mxu0 0
      %1261 = vmatprep.mubr.bf16.mxu0 0
      %1262 = vmatmul.mubr.bf16.gmra.mrb[0].mxu0 %v1186
      %v1263 = vpop.f32.mrb[0].mxu0
      %v1264 = vadd.f32 %v1173, %v1263
      %v1265 = vpop.f32.mrb[0].mxu0
      %v1266 = vpop.f32.mrb[0].mxu0
      %v1267 = vadd.f32 %v1178, %v1266
      %v1268 = vpop.f32.mrb[0].mxu0
      %1269 = vdwg.mxu0
      %1270 = vmatprep.subr.bf16.mxu0 0
      %1271 = vmatpush1.bf16.msra.mxu0 %v1164
      %1272 = vmatprep.subr.bf16.mxu0 0
      %1273 = vmatpush1.bf16.msra.mxu0 0
      %1274 = vmatprep.subr.bf16.mxu0 0
      %1275 = vmatpush1.bf16.msra.mxu0 0
      %1276 = vmatprep.subr.bf16.mxu0 0
      %1277 = vmatpush1.bf16.msra.mxu0 0
      %1278 = vmatprep.subr.bf16.mxu0 0
      %1279 = vmatpush1.bf16.msra.mxu0 0
      %1280 = vmatprep.subr.bf16.mxu0 0
      %1281 = vmatpush1.bf16.msra.mxu0 0
      %1282 = vmatprep.subr.bf16.mxu0 0
      %1283 = vmatpush1.bf16.msra.mxu0 0
      %1284 = vmatprep.subr.bf16.mxu0 0
      %1285 = vmatpush1.bf16.msra.mxu0 0
      %1286 = vmatprep.subr.bf16.mxu0 0
      %1287 = vmatpush1.bf16.msra.mxu0 0
      %1288 = vmatprep.subr.bf16.mxu0 0
      %1289 = vmatpush1.bf16.msra.mxu0 0
      %1290 = vmatprep.subr.bf16.mxu0 0
      %1291 = vmatpush1.bf16.msra.mxu0 0
      %1292 = vmatprep.subr.bf16.mxu0 0
      %1293 = vmatpush1.bf16.msra.mxu0 0
      %1294 = vmatprep.subr.bf16.mxu0 0
      %1295 = vmatpush1.bf16.msra.mxu0 0
      %1296 = vmatprep.subr.bf16.mxu0 0
      %1297 = vmatpush1.bf16.msra.mxu0 0
      %1298 = vmatprep.subr.bf16.mxu0 0
      %1299 = vmatpush1.bf16.msra.mxu0 0
      %1300 = vmatprep.subr.bf16.mxu0 0
      %1301 = vmatpush1.bf16.msra.mxu0 0
      %1302 = vmatprep.mubr.bf16.mxu0 0
      %1303 = vmatmul.mubr.bf16.gmra.mrb[0].mxu0 %v1186
      %v1304 = vpop.f32.mrb[0].mxu0
      %v1305 = vadd.f32 %v1173, %v1304
      %v1306 = vpop.f32.mrb[0].mxu0
      %v1307 = vpop.f32.mrb[0].mxu0
      %v1308 = vadd.f32 %v1178, %v1307
      %v1309 = vpop.f32.mrb[0].mxu0
      %1310 = vdwg.mxu0
      %1311 = vmatprep.subr.bf16.mxu0 0
      %1312 = vmatpush1.bf16.msra.mxu0 %v1165
      %1313 = vmatprep.subr.bf16.mxu0 0
      %1314 = vmatpush1.bf16.msra.mxu0 0
      %1315 = vmatprep.subr.bf16.mxu0 0
      %1316 = vmatpush1.bf16.msra.mxu0 0
      %1317 = vmatprep.subr.bf16.mxu0 0
      %1318 = vmatpush1.bf16.msra.mxu0 0
      %1319 = vmatprep.subr.bf16.mxu0 0
      %1320 = vmatpush1.bf16.msra.mxu0 0
      %1321 = vmatprep.subr.bf16.mxu0 0
      %1322 = vmatpush1.bf16.msra.mxu0 0
      %1323 = vmatprep.subr.bf16.mxu0 0
      %1324 = vmatpush1.bf16.msra.mxu0 0
      %1325 = vmatprep.subr.bf16.mxu0 0
      %1326 = vmatpush1.bf16.msra.mxu0 0
      %1327 = vmatprep.subr.bf16.mxu0 0
      %1328 = vmatpush1.bf16.msra.mxu0 0
      %1329 = vmatprep.subr.bf16.mxu0 0
      %1330 = vmatpush1.bf16.msra.mxu0 0
      %1331 = vmatprep.subr.bf16.mxu0 0
      %1332 = vmatpush1.bf16.msra.mxu0 0
      %1333 = vmatprep.subr.bf16.mxu0 0
      %1334 = vmatpush1.bf16.msra.mxu0 0
      %1335 = vmatprep.subr.bf16.mxu0 0
      %1336 = vmatpush1.bf16.msra.mxu0 0
      %1337 = vmatprep.subr.bf16.mxu0 0
      %1338 = vmatpush1.bf16.msra.mxu0 0
      %1339 = vmatprep.subr.bf16.mxu0 0
      %1340 = vmatpush1.bf16.msra.mxu0 0
      %1341 = vmatprep.subr.bf16.mxu0 0
      %1342 = vmatpush1.bf16.msra.mxu0 0
      %1343 = vmatprep.mubr.bf16.mxu0 0
      %1344 = vmatmul.mubr.bf16.gmra.mrb[0].mxu0 %v1186
      %v1345 = vpop.f32.mrb[0].mxu0
      %v1346 = vadd.f32 %v1173, %v1345
      %v1347 = vpop.f32.mrb[0].mxu0
      %v1348 = vpop.f32.mrb[0].mxu0
      %v1349 = vadd.f32 %v1178, %v1348
      %v1350 = vpop.f32.mrb[0].mxu0
      %1351 = vdwg.mxu0
      %1352 = vmatprep.subr.bf16.mxu0 0
      %1353 = vmatpush1.bf16.msra.mxu0 %v1166
      %1354 = vmatprep.subr.bf16.mxu0 0
      %1355 = vmatpush1.bf16.msra.mxu0 0
      %1356 = vmatprep.subr.bf16.mxu0 0
      %1357 = vmatpush1.bf16.msra.mxu0 0
      %1358 = vmatprep.subr.bf16.mxu0 0
      %1359 = vmatpush1.bf16.msra.mxu0 0
      %1360 = vmatprep.subr.bf16.mxu0 0
      %1361 = vmatpush1.bf16.msra.mxu0 0
      %1362 = vmatprep.subr.bf16.mxu0 0
      %1363 = vmatpush1.bf16.msra.mxu0 0
      %1364 = vmatprep.subr.bf16.mxu0 0
      %1365 = vmatpush1.bf16.msra.mxu0 0
      %1366 = vmatprep.subr.bf16.mxu0 0
      %1367 = vmatpush1.bf16.msra.mxu0 0
      %1368 = vmatprep.subr.bf16.mxu0 0
      %1369 = vmatpush1.bf16.msra.mxu0 0
      %1370 = vmatprep.subr.bf16.mxu0 0
      %1371 = vmatpush1.bf16.msra.mxu0 0
      %1372 = vmatprep.subr.bf16.mxu0 0
      %1373 = vmatpush1.bf16.msra.mxu0 0
      %1374 = vmatprep.subr.bf16.mxu0 0
      %1375 = vmatpush1.bf16.msra.mxu0 0
      %1376 = vmatprep.subr.bf16.mxu0 0
      %1377 = vmatpush1.bf16.msra.mxu0 0
      %1378 = vmatprep.subr.bf16.mxu0 0
      %1379 = vmatpush1.bf16.msra.mxu0 0
      %1380 = vmatprep.subr.bf16.mxu0 0
      %1381 = vmatpush1.bf16.msra.mxu0 0
      %1382 = vmatprep.subr.bf16.mxu0 0
      %1383 = vmatpush1.bf16.msra.mxu0 0
      %1384 = vmatprep.mubr.bf16.mxu0 0
      %1385 = vmatmul.mubr.bf16.gmra.mrb[0].mxu0 %v1186
      %v1386 = vpop.f32.mrb[0].mxu0
      %v1387 = vadd.f32 %v1173, %v1386
      %v1388 = vpop.f32.mrb[0].mxu0
      %v1389 = vpop.f32.mrb[0].mxu0
      %v1390 = vadd.f32 %v1178, %v1389
      %v1391 = vpop.f32.mrb[0].mxu0
      %1392 = vdwg.mxu0
      %1393 = vmatprep.subr.bf16.mxu0 0
      %1394 = vmatpush1.bf16.msra.mxu0 %v1167
      %1395 = vmatprep.subr.bf16.mxu0 0
      %1396 = vmatpush1.bf16.msra.mxu0 0
      %1397 = vmatprep.subr.bf16.mxu0 0
      %1398 = vmatpush1.bf16.msra.mxu0 0
      %1399 = vmatprep.subr.bf16.mxu0 0
      %1400 = vmatpush1.bf16.msra.mxu0 0
      %1401 = vmatprep.subr.bf16.mxu0 0
      %1402 = vmatpush1.bf16.msra.mxu0 0
      %1403 = vmatprep.subr.bf16.mxu0 0
      %1404 = vmatpush1.bf16.msra.mxu0 0
      %1405 = vmatprep.subr.bf16.mxu0 0
      %1406 = vmatpush1.bf16.msra.mxu0 0
      %1407 = vmatprep.subr.bf16.mxu0 0
      %1408 = vmatpush1.bf16.msra.mxu0 0
      %1409 = vmatprep.subr.bf16.mxu0 0
      %1410 = vmatpush1.bf16.msra.mxu0 0
      %1411 = vmatprep.subr.bf16.mxu0 0
      %1412 = vmatpush1.bf16.msra.mxu0 0
      %1413 = vmatprep.subr.bf16.mxu0 0
      %1414 = vmatpush1.bf16.msra.mxu0 0
      %1415 = vmatprep.subr.bf16.mxu0 0
      %1416 = vmatpush1.bf16.msra.mxu0 0
      %1417 = vmatprep.subr.bf16.mxu0 0
      %1418 = vmatpush1.bf16.msra.mxu0 0
      %1419 = vmatprep.subr.bf16.mxu0 0
      %1420 = vmatpush1.bf16.msra.mxu0 0
      %1421 = vmatprep.subr.bf16.mxu0 0
      %1422 = vmatpush1.bf16.msra.mxu0 0
      %1423 = vmatprep.subr.bf16.mxu0 0
      %1424 = vmatpush1.bf16.msra.mxu0 0
      %1425 = vmatprep.mubr.bf16.mxu0 0
      %1426 = vmatmul.mubr.bf16.gmra.mrb[0].mxu0 %v1186
      %v1427 = vpop.f32.mrb[0].mxu0
      %v1428 = vadd.f32 %v1173, %v1427
      %v1429 = vpop.f32.mrb[0].mxu0
      %v1430 = vpop.f32.mrb[0].mxu0
      %v1431 = vadd.f32 %v1178, %v1430
      %v1432 = vpop.f32.mrb[0].mxu0
      %1433 = vdwg.mxu0
      %1434 = vmatprep.subr.bf16.mxu0 0
      %1435 = vmatpush1.bf16.msra.mxu0 %v1168
      %1436 = vmatprep.subr.bf16.mxu0 0
      %1437 = vmatpush1.bf16.msra.mxu0 0
      %1438 = vmatprep.subr.bf16.mxu0 0
      %1439 = vmatpush1.bf16.msra.mxu0 0
      %1440 = vmatprep.subr.bf16.mxu0 0
      %1441 = vmatpush1.bf16.msra.mxu0 0
      %1442 = vmatprep.subr.bf16.mxu0 0
      %1443 = vmatpush1.bf16.msra.mxu0 0
      %1444 = vmatprep.subr.bf16.mxu0 0
      %1445 = vmatpush1.bf16.msra.mxu0 0
      %1446 = vmatprep.subr.bf16.mxu0 0
      %1447 = vmatpush1.bf16.msra.mxu0 0
      %1448 = vmatprep.subr.bf16.mxu0 0
      %1449 = vmatpush1.bf16.msra.mxu0 0
      %1450 = vmatprep.subr.bf16.mxu0 0
      %1451 = vmatpush1.bf16.msra.mxu0 0
      %1452 = vmatprep.subr.bf16.mxu0 0
      %1453 = vmatpush1.bf16.msra.mxu0 0
      %1454 = vmatprep.subr.bf16.mxu0 0
      %1455 = vmatpush1.bf16.msra.mxu0 0
      %1456 = vmatprep.subr.bf16.mxu0 0
      %1457 = vmatpush1.bf16.msra.mxu0 0
      %1458 = vmatprep.subr.bf16.mxu0 0
      %1459 = vmatpush1.bf16.msra.mxu0 0
      %1460 = vmatprep.subr.bf16.mxu0 0
      %1461 = vmatpush1.bf16.msra.mxu0 0
      %1462 = vmatprep.subr.bf16.mxu0 0
      %1463 = vmatpush1.bf16.msra.mxu0 0
      %1464 = vmatprep.subr.bf16.mxu0 0
      %1465 = vmatpush1.bf16.msra.mxu0 0
      %1466 = vmatprep.mubr.bf16.mxu0 0
      %1467 = vmatmul.mubr.bf16.gmra.mrb[0].mxu0 %v1186
      %v1468 = vpop.f32.mrb[0].mxu0
      %v1469 = vadd.f32 %v1173, %v1468
      %v1470 = vpop.f32.mrb[0].mxu0
      %v1471 = vpop.f32.mrb[0].mxu0
      %v1472 = vadd.f32 %v1178, %v1471
      %v1473 = vpop.f32.mrb[0].mxu0
      %1474 = vdwg.mxu0
      %1475 = vmatprep.subr.bf16.mxu0 0
      %1476 = vmatpush1.bf16.msra.mxu0 %v1169
      %1477 = vmatprep.subr.bf16.mxu0 0
      %1478 = vmatpush1.bf16.msra.mxu0 0
      %1479 = vmatprep.subr.bf16.mxu0 0
      %1480 = vmatpush1.bf16.msra.mxu0 0
      %1481 = vmatprep.subr.bf16.mxu0 0
      %1482 = vmatpush1.bf16.msra.mxu0 0
      %1483 = vmatprep.subr.bf16.mxu0 0
      %1484 = vmatpush1.bf16.msra.mxu0 0
      %1485 = vmatprep.subr.bf16.mxu0 0
      %1486 = vmatpush1.bf16.msra.mxu0 0
      %1487 = vmatprep.subr.bf16.mxu0 0
      %1488 = vmatpush1.bf16.msra.mxu0 0
      %1489 = vmatprep.subr.bf16.mxu0 0
      %1490 = vmatpush1.bf16.msra.mxu0 0
      %1491 = vmatprep.subr.bf16.mxu0 0
      %1492 = vmatpush1.bf16.msra.mxu0 0
      %1493 = vmatprep.subr.bf16.mxu0 0
      %1494 = vmatpush1.bf16.msra.mxu0 0
      %1495 = vmatprep.subr.bf16.mxu0 0
      %1496 = vmatpush1.bf16.msra.mxu0 0
      %1497 = vmatprep.subr.bf16.mxu0 0
      %1498 = vmatpush1.bf16.msra.mxu0 0
      %1499 = vmatprep.subr.bf16.mxu0 0
      %1500 = vmatpush1.bf16.msra.mxu0 0
      %1501 = vmatprep.subr.bf16.mxu0 0
      %1502 = vmatpush1.bf16.msra.mxu0 0
      %1503 = vmatprep.subr.bf16.mxu0 0
      %1504 = vmatpush1.bf16.msra.mxu0 0
      %1505 = vmatprep.subr.bf16.mxu0 0
      %1506 = vmatpush1.bf16.msra.mxu0 0
      %1507 = vmatprep.mubr.bf16.mxu0 0
      %1508 = vmatmul.mubr.bf16.gmra.mrb[0].mxu0 %v1186
      %v1509 = vpop.f32.mrb[0].mxu0
      %v1510 = vadd.f32 %v1173, %v1509
      %v1511 = vpop.f32.mrb[0].mxu0
      %v1512 = vpop.f32.mrb[0].mxu0
      %v1513 = vadd.f32 %v1178, %v1512
      %v1514 = vpop.f32.mrb[0].mxu0
      %1515 = vdwg.mxu0
      %v1516 = vadd.f32 %v308, %v1223
      %v1517 = vadd.f32 %v309, %v1226
      %v1518 = vadd.f32 %v310, %v1264
      %v1519 = vadd.f32 %v311, %v1267
      %v1520 = vadd.f32 %v312, %v1305
      %v1521 = vadd.f32 %v313, %v1308
      %v1522 = vadd.f32 %v314, %v1346
      %v1523 = vadd.f32 %v315, %v1349
      %v1524 = vadd.f32 %v316, %v1387
      %v1525 = vadd.f32 %v317, %v1390
      %v1526 = vadd.f32 %v318, %v1428
      %v1527 = vadd.f32 %v319, %v1431
      %v1528 = vadd.f32 %v320, %v1469
      %v1529 = vadd.f32 %v321, %v1472
      %v1530 = vadd.f32 %v322, %v1510
      %v1531 = vadd.f32 %v323, %v1513
      %v1532 = vsel %vm377, %v1516, 0.0
      %1533 = vadd.xlane.f32.xlu0 %v1532
      %v1534 = vpop.xlane.xlu0 %1533
      %v1535 = vsel %vm377, %v1517, 0.0
      %1536 = vadd.xlane.f32.xlu0 %v1535
      %v1537 = vpop.xlane.xlu0 %1536
      %v1538 = vsel %vm377, %v1518, 0.0
      %1539 = vadd.xlane.f32.xlu0 %v1538
      %v1540 = vpop.xlane.xlu0 %1539
      %v1541 = vsel %vm377, %v1519, 0.0
      %1542 = vadd.xlane.f32.xlu0 %v1541
      %v1543 = vpop.xlane.xlu0 %1542
      %v1544 = vsel %vm377, %v1520, 0.0
      %1545 = vadd.xlane.f32.xlu0 %v1544
      %v1546 = vpop.xlane.xlu0 %1545
      %v1547 = vsel %vm377, %v1521, 0.0
      %1548 = vadd.xlane.f32.xlu0 %v1547
      %v1549 = vpop.xlane.xlu0 %1548
      %v1550 = vsel %vm377, %v1522, 0.0
      %1551 = vadd.xlane.f32.xlu0 %v1550
      %v1552 = vpop.xlane.xlu0 %1551
      %v1553 = vsel %vm377, %v1523, 0.0
      %1554 = vadd.xlane.f32.xlu0 %v1553
      %v1555 = vpop.xlane.xlu0 %1554
      %v1556 = vsel %vm377, %v1524, 0.0
      %1557 = vadd.xlane.f32.xlu0 %v1556
      %v1558 = vpop.xlane.xlu0 %1557
      %v1559 = vsel %vm377, %v1525, 0.0
      %1560 = vadd.xlane.f32.xlu0 %v1559
      %v1561 = vpop.xlane.xlu0 %1560
      %v1562 = vsel %vm377, %v1526, 0.0
      %1563 = vadd.xlane.f32.xlu0 %v1562
      %v1564 = vpop.xlane.xlu0 %1563
      %v1565 = vsel %vm377, %v1527, 0.0
      %1566 = vadd.xlane.f32.xlu0 %v1565
      %v1567 = vpop.xlane.xlu0 %1566
      %v1568 = vsel %vm377, %v1528, 0.0
      %1569 = vadd.xlane.f32.xlu0 %v1568
      %v1570 = vpop.xlane.xlu0 %1569
      %v1571 = vsel %vm377, %v1529, 0.0
      %1572 = vadd.xlane.f32.xlu0 %v1571
      %v1573 = vpop.xlane.xlu0 %1572
      %v1574 = vsel %vm377, %v1530, 0.0
      %1575 = vadd.xlane.f32.xlu0 %v1574
      %v1576 = vpop.xlane.xlu0 %1575
      %v1577 = vsel %vm377, %v1531, 0.0
      %1578 = vadd.xlane.f32.xlu0 %v1577
      %v1579 = vpop.xlane.xlu0 %1578
      %v1580 = vmul.f32 %v1534, %v426
      %v1581 = vmul.f32 %v1537, %v426
      %v1582 = vmul.f32 %v1540, %v426
      %v1583 = vmul.f32 %v1543, %v426
      %v1584 = vmul.f32 %v1546, %v426
      %v1585 = vmul.f32 %v1549, %v426
      %v1586 = vmul.f32 %v1552, %v426
      %v1587 = vmul.f32 %v1555, %v426
      %v1588 = vmul.f32 %v1558, %v426
      %v1589 = vmul.f32 %v1561, %v426
      %v1590 = vmul.f32 %v1564, %v426
      %v1591 = vmul.f32 %v1567, %v426
      %v1592 = vmul.f32 %v1570, %v426
      %v1593 = vmul.f32 %v1573, %v426
      %v1594 = vmul.f32 %v1576, %v426
      %v1595 = vmul.f32 %v1579, %v426
      %v1596 = vmul.f32 %v1516, %v1516
      %v1597 = vmul.f32 %v1517, %v1517
      %v1598 = vmul.f32 %v1518, %v1518
      %v1599 = vmul.f32 %v1519, %v1519
      %v1600 = vmul.f32 %v1520, %v1520
      %v1601 = vmul.f32 %v1521, %v1521
      %v1602 = vmul.f32 %v1522, %v1522
      %v1603 = vmul.f32 %v1523, %v1523
      %v1604 = vmul.f32 %v1524, %v1524
      %v1605 = vmul.f32 %v1525, %v1525
      %v1606 = vmul.f32 %v1526, %v1526
      %v1607 = vmul.f32 %v1527, %v1527
      %v1608 = vmul.f32 %v1528, %v1528
      %v1609 = vmul.f32 %v1529, %v1529
      %v1610 = vmul.f32 %v1530, %v1530
      %v1611 = vmul.f32 %v1531, %v1531
      %v1612 = vsel %vm377, %v1596, 0.0
      %1613 = vadd.xlane.f32.xlu0 %v1612
      %v1614 = vpop.xlane.xlu0 %1613
      %v1615 = vsel %vm377, %v1597, 0.0
      %1616 = vadd.xlane.f32.xlu0 %v1615
      %v1617 = vpop.xlane.xlu0 %1616
      %v1618 = vsel %vm377, %v1598, 0.0
      %1619 = vadd.xlane.f32.xlu0 %v1618
      %v1620 = vpop.xlane.xlu0 %1619
      %v1621 = vsel %vm377, %v1599, 0.0
      %1622 = vadd.xlane.f32.xlu0 %v1621
      %v1623 = vpop.xlane.xlu0 %1622
      %v1624 = vsel %vm377, %v1600, 0.0
      %1625 = vadd.xlane.f32.xlu0 %v1624
      %v1626 = vpop.xlane.xlu0 %1625
      %v1627 = vsel %vm377, %v1601, 0.0
      %1628 = vadd.xlane.f32.xlu0 %v1627
      %v1629 = vpop.xlane.xlu0 %1628
      %v1630 = vsel %vm377, %v1602, 0.0
      %1631 = vadd.xlane.f32.xlu0 %v1630
      %v1632 = vpop.xlane.xlu0 %1631
      %v1633 = vsel %vm377, %v1603, 0.0
      %1634 = vadd.xlane.f32.xlu0 %v1633
      %v1635 = vpop.xlane.xlu0 %1634
      %v1636 = vsel %vm377, %v1604, 0.0
      %1637 = vadd.xlane.f32.xlu0 %v1636
      %v1638 = vpop.xlane.xlu0 %1637
      %v1639 = vsel %vm377, %v1605, 0.0
      %1640 = vadd.xlane.f32.xlu0 %v1639
      %v1641 = vpop.xlane.xlu0 %1640
      %v1642 = vsel %vm377, %v1606, 0.0
      %1643 = vadd.xlane.f32.xlu0 %v1642
      %v1644 = vpop.xlane.xlu0 %1643
      %v1645 = vsel %vm377, %v1607, 0.0
      %1646 = vadd.xlane.f32.xlu0 %v1645
      %v1647 = vpop.xlane.xlu0 %1646
      %v1648 = vsel %vm377, %v1608, 0.0
      %1649 = vadd.xlane.f32.xlu0 %v1648
      %v1650 = vpop.xlane.xlu0 %1649
      %v1651 = vsel %vm377, %v1609, 0.0
      %1652 = vadd.xlane.f32.xlu0 %v1651
      %v1653 = vpop.xlane.xlu0 %1652
      %v1654 = vsel %vm377, %v1610, 0.0
      %1655 = vadd.xlane.f32.xlu0 %v1654
      %v1656 = vpop.xlane.xlu0 %1655
      %v1657 = vsel %vm377, %v1611, 0.0
      %1658 = vadd.xlane.f32.xlu0 %v1657
      %v1659 = vpop.xlane.xlu0 %1658
      %v1660 = vmul.f32 %v1614, %v426
      %v1661 = vmul.f32 %v1617, %v426
      %v1662 = vmul.f32 %v1620, %v426
      %v1663 = vmul.f32 %v1623, %v426
      %v1664 = vmul.f32 %v1626, %v426
      %v1665 = vmul.f32 %v1629, %v426
      %v1666 = vmul.f32 %v1632, %v426
      %v1667 = vmul.f32 %v1635, %v426
      %v1668 = vmul.f32 %v1638, %v426
      %v1669 = vmul.f32 %v1641, %v426
      %v1670 = vmul.f32 %v1644, %v426
      %v1671 = vmul.f32 %v1647, %v426
      %v1672 = vmul.f32 %v1650, %v426
      %v1673 = vmul.f32 %v1653, %v426
      %v1674 = vmul.f32 %v1656, %v426
      %v1675 = vmul.f32 %v1659, %v426
      %v1676 = vmul.f32 %v1580, %v1580
      %v1677 = vmul.f32 %v1581, %v1581
      %v1678 = vmul.f32 %v1582, %v1582
      %v1679 = vmul.f32 %v1583, %v1583
      %v1680 = vmul.f32 %v1584, %v1584
      %v1681 = vmul.f32 %v1585, %v1585
      %v1682 = vmul.f32 %v1586, %v1586
      %v1683 = vmul.f32 %v1587, %v1587
      %v1684 = vmul.f32 %v1588, %v1588
      %v1685 = vmul.f32 %v1589, %v1589
      %v1686 = vmul.f32 %v1590, %v1590
      %v1687 = vmul.f32 %v1591, %v1591
      %v1688 = vmul.f32 %v1592, %v1592
      %v1689 = vmul.f32 %v1593, %v1593
      %v1690 = vmul.f32 %v1594, %v1594
      %v1691 = vmul.f32 %v1595, %v1595
      %v1692 = vsub.f32 %v1660, %v1676
      %v1693 = vsub.f32 %v1661, %v1677
      %v1694 = vsub.f32 %v1662, %v1678
      %v1695 = vsub.f32 %v1663, %v1679
      %v1696 = vsub.f32 %v1664, %v1680
      %v1697 = vsub.f32 %v1665, %v1681
      %v1698 = vsub.f32 %v1666, %v1682
      %v1699 = vsub.f32 %v1667, %v1683
      %v1700 = vsub.f32 %v1668, %v1684
      %v1701 = vsub.f32 %v1669, %v1685
      %v1702 = vsub.f32 %v1670, %v1686
      %v1703 = vsub.f32 %v1671, %v1687
      %v1704 = vsub.f32 %v1672, %v1688
      %v1705 = vsub.f32 %v1673, %v1689
      %v1706 = vsub.f32 %v1674, %v1690
      %v1707 = vsub.f32 %v1675, %v1691
      %v1708 = vsub.f32 %v1516, %v1580
      %v1709 = vsub.f32 %v1517, %v1581
      %v1710 = vsub.f32 %v1518, %v1582
      %v1711 = vsub.f32 %v1519, %v1583
      %v1712 = vsub.f32 %v1520, %v1584
      %v1713 = vsub.f32 %v1521, %v1585
      %v1714 = vsub.f32 %v1522, %v1586
      %v1715 = vsub.f32 %v1523, %v1587
      %v1716 = vsub.f32 %v1524, %v1588
      %v1717 = vsub.f32 %v1525, %v1589
      %v1718 = vsub.f32 %v1526, %v1590
      %v1719 = vsub.f32 %v1527, %v1591
      %v1720 = vsub.f32 %v1528, %v1592
      %v1721 = vsub.f32 %v1529, %v1593
      %v1722 = vsub.f32 %v1530, %v1594
      %v1723 = vsub.f32 %v1531, %v1595
      %v1724 = vadd.f32 %v1692, 1e-06
      %v1725 = vadd.f32 %v1693, 1e-06
      %v1726 = vadd.f32 %v1694, 1e-06
      %v1727 = vadd.f32 %v1695, 1e-06
      %v1728 = vadd.f32 %v1696, 1e-06
      %v1729 = vadd.f32 %v1697, 1e-06
      %v1730 = vadd.f32 %v1698, 1e-06
      %v1731 = vadd.f32 %v1699, 1e-06
      %v1732 = vadd.f32 %v1700, 1e-06
      %v1733 = vadd.f32 %v1701, 1e-06
      %v1734 = vadd.f32 %v1702, 1e-06
      %v1735 = vadd.f32 %v1703, 1e-06
      %v1736 = vadd.f32 %v1704, 1e-06
      %v1737 = vadd.f32 %v1705, 1e-06
      %v1738 = vadd.f32 %v1706, 1e-06
      %v1739 = vadd.f32 %v1707, 1e-06
      %v1740 = vrsqrt.pop %v1724
      %v1741 = vrsqrt.pop %v1725
      %v1742 = vrsqrt.pop %v1726
      %v1743 = vrsqrt.pop %v1727
      %v1744 = vrsqrt.pop %v1728
      %v1745 = vrsqrt.pop %v1729
      %v1746 = vrsqrt.pop %v1730
      %v1747 = vrsqrt.pop %v1731
      %v1748 = vrsqrt.pop %v1732
      %v1749 = vrsqrt.pop %v1733
      %v1750 = vrsqrt.pop %v1734
      %v1751 = vrsqrt.pop %v1735
      %v1752 = vrsqrt.pop %v1736
      %v1753 = vrsqrt.pop %v1737
      %v1754 = vrsqrt.pop %v1738
      %v1755 = vrsqrt.pop %v1739
      %v1756 = vmul.f32 %v1708, %v1740
      %v1757 = vmul.f32 %v1709, %v1741
      %v1758 = vmul.f32 %v1710, %v1742
      %v1759 = vmul.f32 %v1711, %v1743
      %v1760 = vmul.f32 %v1712, %v1744
      %v1761 = vmul.f32 %v1713, %v1745
      %v1762 = vmul.f32 %v1714, %v1746
      %v1763 = vmul.f32 %v1715, %v1747
      %v1764 = vmul.f32 %v1716, %v1748
      %v1765 = vmul.f32 %v1717, %v1749
      %v1766 = vmul.f32 %v1718, %v1750
      %v1767 = vmul.f32 %v1719, %v1751
      %v1768 = vmul.f32 %v1720, %v1752
      %v1769 = vmul.f32 %v1721, %v1753
      %v1770 = vmul.f32 %v1722, %v1754
      %v1771 = vmul.f32 %v1723, %v1755
      %v1773 = vlaneseq
      %v1774 = vshrl.u32 %v1773, 7
      %v1775 = vsub.s32 0, %v1774
      %v1776 = vrot.slane %v345, %v1775
      %v1778 = vmul.f32 %v1756, %v1776
      %v1779 = vmul.f32 %v1757, %v1776
      %v1780 = vmul.f32 %v1758, %v1776
      %v1781 = vmul.f32 %v1759, %v1776
      %v1782 = vmul.f32 %v1760, %v1776
      %v1783 = vmul.f32 %v1761, %v1776
      %v1784 = vmul.f32 %v1762, %v1776
      %v1785 = vmul.f32 %v1763, %v1776
      %v1786 = vmul.f32 %v1764, %v1776
      %v1787 = vmul.f32 %v1765, %v1776
      %v1788 = vmul.f32 %v1766, %v1776
      %v1789 = vmul.f32 %v1767, %v1776
      %v1790 = vmul.f32 %v1768, %v1776
      %v1791 = vmul.f32 %v1769, %v1776
      %v1792 = vmul.f32 %v1770, %v1776
      %v1793 = vmul.f32 %v1771, %v1776
      %v1795 = vlaneseq
      %v1796 = vshrl.u32 %v1795, 7
      %v1797 = vsub.s32 0, %v1796
      %v1798 = vrot.slane %v347, %v1797
      %v1800 = vadd.f32 %v1778, %v1798
      %v1801 = vadd.f32 %v1779, %v1798
      %v1802 = vadd.f32 %v1780, %v1798
      %v1803 = vadd.f32 %v1781, %v1798
      %v1804 = vadd.f32 %v1782, %v1798
      %v1805 = vadd.f32 %v1783, %v1798
      %v1806 = vadd.f32 %v1784, %v1798
      %v1807 = vadd.f32 %v1785, %v1798
      %v1808 = vadd.f32 %v1786, %v1798
      %v1809 = vadd.f32 %v1787, %v1798
      %v1810 = vadd.f32 %v1788, %v1798
      %v1811 = vadd.f32 %v1789, %v1798
      %v1812 = vadd.f32 %v1790, %v1798
      %v1813 = vadd.f32 %v1791, %v1798
      %v1814 = vadd.f32 %v1792, %v1798
      %v1815 = vadd.f32 %v1793, %v1798
      %v1816 = vpack.c.bf16 %v1801, %v1800
      %v1817 = vpack.c.bf16 %v1803, %v1802
      %v1818 = vpack.c.bf16 %v1805, %v1804
      %v1819 = vpack.c.bf16 %v1807, %v1806
      %v1820 = vpack.c.bf16 %v1809, %v1808
      %v1821 = vpack.c.bf16 %v1811, %v1810
      %v1822 = vpack.c.bf16 %v1813, %v1812
      %v1823 = vpack.c.bf16 %v1815, %v1814
      %v1825 = vlaneseq
      %v1826 = vshrl.u32 %v1825, 7
      %v1827 = vsub.s32 0, %v1826
      %v1828 = vrot.slane %v356, %v1827
      %v1834 = vunpack.c.l.b16 %v351
      %v1835 = vunpack.c.l.b16 %v352
      %v1836 = vunpack.c.l.b16 %v353
      %v1837 = vunpack.c.l.b16 %v354
      %v1838 = vpack.c.b16 %v1835, %v1834
      %v1839 = vpack.c.b16 %v1837, %v1836
      %v1843 = vsel %vm377, %v1816, 0
      %v1846 = vsel %vm377, %v1817, 0
      %v1849 = vsel %vm377, %v1818, 0
      %v1852 = vsel %vm377, %v1819, 0
      %v1855 = vsel %vm377, %v1820, 0
      %v1858 = vsel %vm377, %v1821, 0
      %v1861 = vsel %vm377, %v1822, 0
      %v1864 = vsel %vm377, %v1823, 0
      %1866 = vmatprep.subr.bf16.mxu0 0
      %1867 = vmatpush1.bf16.msra.mxu0 %v1838
      %1868 = vmatprep.subr.bf16.mxu0 0
      %1869 = vmatpush1.bf16.msra.mxu0 %v1839
      %1870 = vmatprep.subr.bf16.mxu0 0
      %1871 = vmatpush1.bf16.msra.mxu0 0
      %1872 = vmatprep.subr.bf16.mxu0 0
      %1873 = vmatpush1.bf16.msra.mxu0 0
      %1874 = vmatprep.subr.bf16.mxu0 0
      %1875 = vmatpush1.bf16.msra.mxu0 0
      %1876 = vmatprep.subr.bf16.mxu0 0
      %1877 = vmatpush1.bf16.msra.mxu0 0
      %1878 = vmatprep.subr.bf16.mxu0 0
      %1879 = vmatpush1.bf16.msra.mxu0 0
      %1880 = vmatprep.subr.bf16.mxu0 0
      %1881 = vmatpush1.bf16.msra.mxu0 0
      %1882 = vmatprep.subr.bf16.mxu0 0
      %1883 = vmatpush1.bf16.msra.mxu0 0
      %1884 = vmatprep.subr.bf16.mxu0 0
      %1885 = vmatpush1.bf16.msra.mxu0 0
      %1886 = vmatprep.subr.bf16.mxu0 0
      %1887 = vmatpush1.bf16.msra.mxu0 0
      %1888 = vmatprep.subr.bf16.mxu0 0
      %1889 = vmatpush1.bf16.msra.mxu0 0
      %1890 = vmatprep.subr.bf16.mxu0 0
      %1891 = vmatpush1.bf16.msra.mxu0 0
      %1892 = vmatprep.subr.bf16.mxu0 0
      %1893 = vmatpush1.bf16.msra.mxu0 0
      %1894 = vmatprep.subr.bf16.mxu0 0
      %1895 = vmatpush1.bf16.msra.mxu0 0
      %1896 = vmatprep.subr.bf16.mxu0 0
      %1897 = vmatpush1.bf16.msra.mxu0 0
      %1898 = vmatprep.mubr.bf16.mxu0 0
      %1899 = vmatmul.mubr.bf16.gmra.mrb[0].mxu0 %v1843
      %v1900 = vpop.f32.mrb[0].mxu0
      %v1901 = vadd.f32 %v1828, %v1900
      %v1902 = vpop.f32.mrb[0].mxu0
      %v1903 = vpop.f32.mrb[0].mxu0
      %v1904 = vadd.f32 %v1828, %v1903
      %v1905 = vpop.f32.mrb[0].mxu0
      %1906 = vmatprep.mubr.bf16.mxu0 0
      %1907 = vmatmul.mubr.bf16.gmra.mrb[0].mxu0 %v1846
      %v1908 = vpop.f32.mrb[0].mxu0
      %v1909 = vadd.f32 %v1828, %v1908
      %v1910 = vpop.f32.mrb[0].mxu0
      %v1911 = vpop.f32.mrb[0].mxu0
      %v1912 = vadd.f32 %v1828, %v1911
      %v1913 = vpop.f32.mrb[0].mxu0
      %1914 = vmatprep.mubr.bf16.mxu0 0
      %1915 = vmatmul.mubr.bf16.gmra.mrb[0].mxu0 %v1849
      %v1916 = vpop.f32.mrb[0].mxu0
      %v1917 = vadd.f32 %v1828, %v1916
      %v1918 = vpop.f32.mrb[0].mxu0
      %v1919 = vpop.f32.mrb[0].mxu0
      %v1920 = vadd.f32 %v1828, %v1919
      %v1921 = vpop.f32.mrb[0].mxu0
      %1922 = vmatprep.mubr.bf16.mxu0 0
      %1923 = vmatmul.mubr.bf16.gmra.mrb[0].mxu0 %v1852
      %v1924 = vpop.f32.mrb[0].mxu0
      %v1925 = vadd.f32 %v1828, %v1924
      %v1926 = vpop.f32.mrb[0].mxu0
      %v1927 = vpop.f32.mrb[0].mxu0
      %v1928 = vadd.f32 %v1828, %v1927
      %v1929 = vpop.f32.mrb[0].mxu0
      %1930 = vmatprep.mubr.bf16.mxu0 0
      %1931 = vmatmul.mubr.bf16.gmra.mrb[0].mxu0 %v1855
      %v1932 = vpop.f32.mrb[0].mxu0
      %v1933 = vadd.f32 %v1828, %v1932
      %v1934 = vpop.f32.mrb[0].mxu0
      %v1935 = vpop.f32.mrb[0].mxu0
      %v1936 = vadd.f32 %v1828, %v1935
      %v1937 = vpop.f32.mrb[0].mxu0
      %1938 = vmatprep.mubr.bf16.mxu0 0
      %1939 = vmatmul.mubr.bf16.gmra.mrb[0].mxu0 %v1858
      %v1940 = vpop.f32.mrb[0].mxu0
      %v1941 = vadd.f32 %v1828, %v1940
      %v1942 = vpop.f32.mrb[0].mxu0
      %v1943 = vpop.f32.mrb[0].mxu0
      %v1944 = vadd.f32 %v1828, %v1943
      %v1945 = vpop.f32.mrb[0].mxu0
      %1946 = vmatprep.mubr.bf16.mxu0 0
      %1947 = vmatmul.mubr.bf16.gmra.mrb[0].mxu0 %v1861
      %v1948 = vpop.f32.mrb[0].mxu0
      %v1949 = vadd.f32 %v1828, %v1948
      %v1950 = vpop.f32.mrb[0].mxu0
      %v1951 = vpop.f32.mrb[0].mxu0
      %v1952 = vadd.f32 %v1828, %v1951
      %v1953 = vpop.f32.mrb[0].mxu0
      %1954 = vmatprep.mubr.bf16.mxu0 0
      %1955 = vmatmul.mubr.bf16.gmra.mrb[0].mxu0 %v1864
      %v1956 = vpop.f32.mrb[0].mxu0
      %v1957 = vadd.f32 %v1828, %v1956
      %v1958 = vpop.f32.mrb[0].mxu0
      %v1959 = vpop.f32.mrb[0].mxu0
      %v1960 = vadd.f32 %v1828, %v1959
      %v1961 = vpop.f32.mrb[0].mxu0
      %1962 = vdwg.mxu0
      %v1963 = vmul.f32 %v1901, %v1901
      %v1964 = vmul.f32 %v1904, %v1904
      %v1965 = vmul.f32 %v1909, %v1909
      %v1966 = vmul.f32 %v1912, %v1912
      %v1967 = vmul.f32 %v1917, %v1917
      %v1968 = vmul.f32 %v1920, %v1920
      %v1969 = vmul.f32 %v1925, %v1925
      %v1970 = vmul.f32 %v1928, %v1928
      %v1971 = vmul.f32 %v1933, %v1933
      %v1972 = vmul.f32 %v1936, %v1936
      %v1973 = vmul.f32 %v1941, %v1941
      %v1974 = vmul.f32 %v1944, %v1944
      %v1975 = vmul.f32 %v1949, %v1949
      %v1976 = vmul.f32 %v1952, %v1952
      %v1977 = vmul.f32 %v1957, %v1957
      %v1978 = vmul.f32 %v1960, %v1960
      %v1979 = vmul.f32 %v1901, %v1963
      %v1980 = vmul.f32 %v1904, %v1964
      %v1981 = vmul.f32 %v1909, %v1965
      %v1982 = vmul.f32 %v1912, %v1966
      %v1983 = vmul.f32 %v1917, %v1967
      %v1984 = vmul.f32 %v1920, %v1968
      %v1985 = vmul.f32 %v1925, %v1969
      %v1986 = vmul.f32 %v1928, %v1970
      %v1987 = vmul.f32 %v1933, %v1971
      %v1988 = vmul.f32 %v1936, %v1972
      %v1989 = vmul.f32 %v1941, %v1973
      %v1990 = vmul.f32 %v1944, %v1974
      %v1991 = vmul.f32 %v1949, %v1975
      %v1992 = vmul.f32 %v1952, %v1976
      %v1993 = vmul.f32 %v1957, %v1977
      %v1994 = vmul.f32 %v1960, %v1978
      %v1995 = vmul.f32 %v1979, 0.044715
      %v1996 = vmul.f32 %v1980, 0.044715
      %v1997 = vmul.f32 %v1981, 0.044715
      %v1998 = vmul.f32 %v1982, 0.044715
      %v1999 = vmul.f32 %v1983, 0.044715
      %v2000 = vmul.f32 %v1984, 0.044715
      %v2001 = vmul.f32 %v1985, 0.044715
      %v2002 = vmul.f32 %v1986, 0.044715
      %v2003 = vmul.f32 %v1987, 0.044715
      %v2004 = vmul.f32 %v1988, 0.044715
      %v2005 = vmul.f32 %v1989, 0.044715
      %v2006 = vmul.f32 %v1990, 0.044715
      %v2007 = vmul.f32 %v1991, 0.044715
      %v2008 = vmul.f32 %v1992, 0.044715
      %v2009 = vmul.f32 %v1993, 0.044715
      %v2010 = vmul.f32 %v1994, 0.044715
      %v2011 = vadd.f32 %v1901, %v1995
      %v2012 = vadd.f32 %v1904, %v1996
      %v2013 = vadd.f32 %v1909, %v1997
      %v2014 = vadd.f32 %v1912, %v1998
      %v2015 = vadd.f32 %v1917, %v1999
      %v2016 = vadd.f32 %v1920, %v2000
      %v2017 = vadd.f32 %v1925, %v2001
      %v2018 = vadd.f32 %v1928, %v2002
      %v2019 = vadd.f32 %v1933, %v2003
      %v2020 = vadd.f32 %v1936, %v2004
      %v2021 = vadd.f32 %v1941, %v2005
      %v2022 = vadd.f32 %v1944, %v2006
      %v2023 = vadd.f32 %v1949, %v2007
      %v2024 = vadd.f32 %v1952, %v2008
      %v2025 = vadd.f32 %v1957, %v2009
      %v2026 = vadd.f32 %v1960, %v2010
      %v2027 = vmul.f32 %v2011, 0.7978846
      %v2028 = vmul.f32 %v2012, 0.7978846
      %v2029 = vmul.f32 %v2013, 0.7978846
      %v2030 = vmul.f32 %v2014, 0.7978846
      %v2031 = vmul.f32 %v2015, 0.7978846
      %v2032 = vmul.f32 %v2016, 0.7978846
      %v2033 = vmul.f32 %v2017, 0.7978846
      %v2034 = vmul.f32 %v2018, 0.7978846
      %v2035 = vmul.f32 %v2019, 0.7978846
      %v2036 = vmul.f32 %v2020, 0.7978846
      %v2037 = vmul.f32 %v2021, 0.7978846
      %v2038 = vmul.f32 %v2022, 0.7978846
      %v2039 = vmul.f32 %v2023, 0.7978846
      %v2040 = vmul.f32 %v2024, 0.7978846
      %v2041 = vmul.f32 %v2025, 0.7978846
      %v2042 = vmul.f32 %v2026, 0.7978846
      %v2043 = vtanh.pop %v2027
      %v2044 = vtanh.pop %v2028
      %v2045 = vtanh.pop %v2029
      %v2046 = vtanh.pop %v2030
      %v2047 = vtanh.pop %v2031
      %v2048 = vtanh.pop %v2032
      %v2049 = vtanh.pop %v2033
      %v2050 = vtanh.pop %v2034
      %v2051 = vtanh.pop %v2035
      %v2052 = vtanh.pop %v2036
      %v2053 = vtanh.pop %v2037
      %v2054 = vtanh.pop %v2038
      %v2055 = vtanh.pop %v2039
      %v2056 = vtanh.pop %v2040
      %v2057 = vtanh.pop %v2041
      %v2058 = vtanh.pop %v2042
      %v2059 = vadd.f32 %v2043, 1.0
      %v2060 = vadd.f32 %v2044, 1.0
      %v2061 = vadd.f32 %v2045, 1.0
      %v2062 = vadd.f32 %v2046, 1.0
      %v2063 = vadd.f32 %v2047, 1.0
      %v2064 = vadd.f32 %v2048, 1.0
      %v2065 = vadd.f32 %v2049, 1.0
      %v2066 = vadd.f32 %v2050, 1.0
      %v2067 = vadd.f32 %v2051, 1.0
      %v2068 = vadd.f32 %v2052, 1.0
      %v2069 = vadd.f32 %v2053, 1.0
      %v2070 = vadd.f32 %v2054, 1.0
      %v2071 = vadd.f32 %v2055, 1.0
      %v2072 = vadd.f32 %v2056, 1.0
      %v2073 = vadd.f32 %v2057, 1.0
      %v2074 = vadd.f32 %v2058, 1.0
      %v2075 = vmul.f32 %v2059, 0.5
      %v2076 = vmul.f32 %v2060, 0.5
      %v2077 = vmul.f32 %v2061, 0.5
      %v2078 = vmul.f32 %v2062, 0.5
      %v2079 = vmul.f32 %v2063, 0.5
      %v2080 = vmul.f32 %v2064, 0.5
      %v2081 = vmul.f32 %v2065, 0.5
      %v2082 = vmul.f32 %v2066, 0.5
      %v2083 = vmul.f32 %v2067, 0.5
      %v2084 = vmul.f32 %v2068, 0.5
      %v2085 = vmul.f32 %v2069, 0.5
      %v2086 = vmul.f32 %v2070, 0.5
      %v2087 = vmul.f32 %v2071, 0.5
      %v2088 = vmul.f32 %v2072, 0.5
      %v2089 = vmul.f32 %v2073, 0.5
      %v2090 = vmul.f32 %v2074, 0.5
      %v2091 = vmul.f32 %v1901, %v2075
      %v2092 = vmul.f32 %v1904, %v2076
      %v2093 = vmul.f32 %v1909, %v2077
      %v2094 = vmul.f32 %v1912, %v2078
      %v2095 = vmul.f32 %v1917, %v2079
      %v2096 = vmul.f32 %v1920, %v2080
      %v2097 = vmul.f32 %v1925, %v2081
      %v2098 = vmul.f32 %v1928, %v2082
      %v2099 = vmul.f32 %v1933, %v2083
      %v2100 = vmul.f32 %v1936, %v2084
      %v2101 = vmul.f32 %v1941, %v2085
      %v2102 = vmul.f32 %v1944, %v2086
      %v2103 = vmul.f32 %v1949, %v2087
      %v2104 = vmul.f32 %v1952, %v2088
      %v2105 = vmul.f32 %v1957, %v2089
      %v2106 = vmul.f32 %v1960, %v2090
      %v2107 = vpack.c.bf16 %v2092, %v2091
      %v2108 = vpack.c.bf16 %v2094, %v2093
      %v2109 = vpack.c.bf16 %v2096, %v2095
      %v2110 = vpack.c.bf16 %v2098, %v2097
      %v2111 = vpack.c.bf16 %v2100, %v2099
      %v2112 = vpack.c.bf16 %v2102, %v2101
      %v2113 = vpack.c.bf16 %v2104, %v2103
      %v2114 = vpack.c.bf16 %v2106, %v2105
      %v2116 = vlaneseq
      %v2117 = vshrl.u32 %v2116, 7
      %v2118 = vsub.s32 0, %v2117
      %v2119 = vrot.slane %v376, %v2118
      %v2137 = vunpack.c.l.b16 %v359
      %v2138 = vunpack.c.l.b16 %v360
      %v2139 = vunpack.c.l.b16 %v361
      %v2140 = vunpack.c.l.b16 %v362
      %v2141 = vunpack.c.l.b16 %v363
      %v2142 = vunpack.c.l.b16 %v364
      %v2143 = vunpack.c.l.b16 %v365
      %v2144 = vunpack.c.l.b16 %v366
      %v2145 = vunpack.c.l.b16 %v367
      %v2146 = vunpack.c.l.b16 %v368
      %v2147 = vunpack.c.l.b16 %v369
      %v2148 = vunpack.c.l.b16 %v370
      %v2149 = vunpack.c.l.b16 %v371
      %v2150 = vunpack.c.l.b16 %v372
      %v2151 = vunpack.c.l.b16 %v373
      %v2152 = vunpack.c.l.b16 %v374
      %v2153 = vpack.c.b16 %v2138, %v2137
      %v2154 = vpack.c.b16 %v2140, %v2139
      %v2155 = vpack.c.b16 %v2142, %v2141
      %v2156 = vpack.c.b16 %v2144, %v2143
      %v2157 = vpack.c.b16 %v2146, %v2145
      %v2158 = vpack.c.b16 %v2148, %v2147
      %v2159 = vpack.c.b16 %v2150, %v2149
      %v2160 = vpack.c.b16 %v2152, %v2151
      %2169 = vmatprep.subr.bf16.mxu0 0
      %2170 = vmatpush1.bf16.msra.mxu0 %v2153
      %2171 = vmatprep.subr.bf16.mxu0 0
      %2172 = vmatpush1.bf16.msra.mxu0 %v2154
      %2173 = vmatprep.subr.bf16.mxu0 0
      %2174 = vmatpush1.bf16.msra.mxu0 %v2155
      %2175 = vmatprep.subr.bf16.mxu0 0
      %2176 = vmatpush1.bf16.msra.mxu0 %v2156
      %2177 = vmatprep.subr.bf16.mxu0 0
      %2178 = vmatpush1.bf16.msra.mxu0 %v2157
      %2179 = vmatprep.subr.bf16.mxu0 0
      %2180 = vmatpush1.bf16.msra.mxu0 %v2158
      %2181 = vmatprep.subr.bf16.mxu0 0
      %2182 = vmatpush1.bf16.msra.mxu0 %v2159
      %2183 = vmatprep.subr.bf16.mxu0 0
      %2184 = vmatpush1.bf16.msra.mxu0 %v2160
      %2185 = vmatprep.subr.bf16.mxu0 0
      %2186 = vmatpush1.bf16.msra.mxu0 0
      %2187 = vmatprep.subr.bf16.mxu0 0
      %2188 = vmatpush1.bf16.msra.mxu0 0
      %2189 = vmatprep.subr.bf16.mxu0 0
      %2190 = vmatpush1.bf16.msra.mxu0 0
      %2191 = vmatprep.subr.bf16.mxu0 0
      %2192 = vmatpush1.bf16.msra.mxu0 0
      %2193 = vmatprep.subr.bf16.mxu0 0
      %2194 = vmatpush1.bf16.msra.mxu0 0
      %2195 = vmatprep.subr.bf16.mxu0 0
      %2196 = vmatpush1.bf16.msra.mxu0 0
      %2197 = vmatprep.subr.bf16.mxu0 0
      %2198 = vmatpush1.bf16.msra.mxu0 0
      %2199 = vmatprep.subr.bf16.mxu0 0
      %2200 = vmatpush1.bf16.msra.mxu0 0
      %2201 = vmatprep.mubr.bf16.mxu0 0
      %2202 = vmatmul.mubr.bf16.gmra.mrb[0].mxu0 %v2107
      %v2203 = vpop.f32.mrb[0].mxu0
      %v2204 = vadd.f32 %v2119, %v2203
      %v2205 = vpop.f32.mrb[0].mxu0
      %v2206 = vpop.f32.mrb[0].mxu0
      %v2207 = vadd.f32 %v2119, %v2206
      %v2208 = vpop.f32.mrb[0].mxu0
      %2209 = vmatprep.mubr.bf16.mxu0 0
      %2210 = vmatmul.mubr.bf16.gmra.mrb[0].mxu0 %v2108
      %v2211 = vpop.f32.mrb[0].mxu0
      %v2212 = vadd.f32 %v2119, %v2211
      %v2213 = vpop.f32.mrb[0].mxu0
      %v2214 = vpop.f32.mrb[0].mxu0
      %v2215 = vadd.f32 %v2119, %v2214
      %v2216 = vpop.f32.mrb[0].mxu0
      %2217 = vmatprep.mubr.bf16.mxu0 0
      %2218 = vmatmul.mubr.bf16.gmra.mrb[0].mxu0 %v2109
      %v2219 = vpop.f32.mrb[0].mxu0
      %v2220 = vadd.f32 %v2119, %v2219
      %v2221 = vpop.f32.mrb[0].mxu0
      %v2222 = vpop.f32.mrb[0].mxu0
      %v2223 = vadd.f32 %v2119, %v2222
      %v2224 = vpop.f32.mrb[0].mxu0
      %2225 = vmatprep.mubr.bf16.mxu0 0
      %2226 = vmatmul.mubr.bf16.gmra.mrb[0].mxu0 %v2110
      %v2227 = vpop.f32.mrb[0].mxu0
      %v2228 = vadd.f32 %v2119, %v2227
      %v2229 = vpop.f32.mrb[0].mxu0
      %v2230 = vpop.f32.mrb[0].mxu0
      %v2231 = vadd.f32 %v2119, %v2230
      %v2232 = vpop.f32.mrb[0].mxu0
      %2233 = vmatprep.mubr.bf16.mxu0 0
      %2234 = vmatmul.mubr.bf16.gmra.mrb[0].mxu0 %v2111
      %v2235 = vpop.f32.mrb[0].mxu0
      %v2236 = vadd.f32 %v2119, %v2235
      %v2237 = vpop.f32.mrb[0].mxu0
      %v2238 = vpop.f32.mrb[0].mxu0
      %v2239 = vadd.f32 %v2119, %v2238
      %v2240 = vpop.f32.mrb[0].mxu0
      %2241 = vmatprep.mubr.bf16.mxu0 0
      %2242 = vmatmul.mubr.bf16.gmra.mrb[0].mxu0 %v2112
      %v2243 = vpop.f32.mrb[0].mxu0
      %v2244 = vadd.f32 %v2119, %v2243
      %v2245 = vpop.f32.mrb[0].mxu0
      %v2246 = vpop.f32.mrb[0].mxu0
      %v2247 = vadd.f32 %v2119, %v2246
      %v2248 = vpop.f32.mrb[0].mxu0
      %2249 = vmatprep.mubr.bf16.mxu0 0
      %2250 = vmatmul.mubr.bf16.gmra.mrb[0].mxu0 %v2113
      %v2251 = vpop.f32.mrb[0].mxu0
      %v2252 = vadd.f32 %v2119, %v2251
      %v2253 = vpop.f32.mrb[0].mxu0
      %v2254 = vpop.f32.mrb[0].mxu0
      %v2255 = vadd.f32 %v2119, %v2254
      %v2256 = vpop.f32.mrb[0].mxu0
      %2257 = vmatprep.mubr.bf16.mxu0 0
      %2258 = vmatmul.mubr.bf16.gmra.mrb[0].mxu0 %v2114
      %v2259 = vpop.f32.mrb[0].mxu0
      %v2260 = vadd.f32 %v2119, %v2259
      %v2261 = vpop.f32.mrb[0].mxu0
      %v2262 = vpop.f32.mrb[0].mxu0
      %v2263 = vadd.f32 %v2119, %v2262
      %v2264 = vpop.f32.mrb[0].mxu0
      %2265 = vdwg.mxu0
      %v2266 = vadd.f32 %v1516, %v2204
      %v2267 = vadd.f32 %v1517, %v2207
      %v2268 = vadd.f32 %v1518, %v2212
      %v2269 = vadd.f32 %v1519, %v2215
      %v2270 = vadd.f32 %v1520, %v2220
      %v2271 = vadd.f32 %v1521, %v2223
      %v2272 = vadd.f32 %v1522, %v2228
      %v2273 = vadd.f32 %v1523, %v2231
      %v2274 = vadd.f32 %v1524, %v2236
      %v2275 = vadd.f32 %v1525, %v2239
      %v2276 = vadd.f32 %v1526, %v2244
      %v2277 = vadd.f32 %v1527, %v2247
      %v2278 = vadd.f32 %v1528, %v2252
      %v2279 = vadd.f32 %v1529, %v2255
      %v2280 = vadd.f32 %v1530, %v2260
      %v2281 = vadd.f32 %v1531, %v2263
    $region90: #{tpu_custom_call.1} parent=1 // loop_footer
      %s307 = sadd.s32 1, %s303
    $region91: #{tpu_custom_call.1} parent=1 // loop_footer_branch
      %302 = sbr.rel target = $region87
    $region92: #{tpu_custom_call.1} parent=1 // loop_exit
      _
    %v2282 = vld [vmem:[%s15] sm:$0x1]
    %v2283 = vld [vmem:[%s16] sm:$0x1]
    %v2284 = vld [vmem:[%s19] sm:$0xf]
    %v2285 = vld [vmem:[%s19 + $0x4] sm:$0xf]
    %v2286 = vld [vmem:[%s19 + $0x8] sm:$0xf]
    %v2287 = vld [vmem:[%s19 + $0xc] sm:$0xf]
    %v2288 = vld [vmem:[%s20] sm:$0x1]
    %vm2289 = vcmask 261120
    %v2290 = vsel %vm2289, %v308, 0.0
    %2291 = vadd.xlane.f32.xlu0 %v2290
    %v2292 = vpop.xlane.xlu0 %2291
    %v2293 = vsel %vm2289, %v309, 0.0
    %2294 = vadd.xlane.f32.xlu0 %v2293
    %v2295 = vpop.xlane.xlu0 %2294
    %v2296 = vsel %vm2289, %v310, 0.0
    %2297 = vadd.xlane.f32.xlu0 %v2296
    %v2298 = vpop.xlane.xlu0 %2297
    %v2299 = vsel %vm2289, %v311, 0.0
    %2300 = vadd.xlane.f32.xlu0 %v2299
    %v2301 = vpop.xlane.xlu0 %2300
    %v2302 = vsel %vm2289, %v312, 0.0
    %2303 = vadd.xlane.f32.xlu0 %v2302
    %v2304 = vpop.xlane.xlu0 %2303
    %v2305 = vsel %vm2289, %v313, 0.0
    %2306 = vadd.xlane.f32.xlu0 %v2305
    %v2307 = vpop.xlane.xlu0 %2306
    %v2308 = vsel %vm2289, %v314, 0.0
    %2309 = vadd.xlane.f32.xlu0 %v2308
    %v2310 = vpop.xlane.xlu0 %2309
    %v2311 = vsel %vm2289, %v315, 0.0
    %2312 = vadd.xlane.f32.xlu0 %v2311
    %v2313 = vpop.xlane.xlu0 %2312
    %v2314 = vsel %vm2289, %v316, 0.0
    %2315 = vadd.xlane.f32.xlu0 %v2314
    %v2316 = vpop.xlane.xlu0 %2315
    %v2317 = vsel %vm2289, %v317, 0.0
    %2318 = vadd.xlane.f32.xlu0 %v2317
    %v2319 = vpop.xlane.xlu0 %2318
    %v2320 = vsel %vm2289, %v318, 0.0
    %2321 = vadd.xlane.f32.xlu0 %v2320
    %v2322 = vpop.xlane.xlu0 %2321
    %v2323 = vsel %vm2289, %v319, 0.0
    %2324 = vadd.xlane.f32.xlu0 %v2323
    %v2325 = vpop.xlane.xlu0 %2324
    %v2326 = vsel %vm2289, %v320, 0.0
    %2327 = vadd.xlane.f32.xlu0 %v2326
    %v2328 = vpop.xlane.xlu0 %2327
    %v2329 = vsel %vm2289, %v321, 0.0
    %2330 = vadd.xlane.f32.xlu0 %v2329
    %v2331 = vpop.xlane.xlu0 %2330
    %v2332 = vsel %vm2289, %v322, 0.0
    %2333 = vadd.xlane.f32.xlu0 %v2332
    %v2334 = vpop.xlane.xlu0 %2333
    %v2335 = vsel %vm2289, %v323, 0.0
    %2336 = vadd.xlane.f32.xlu0 %v2335
    %v2337 = vpop.xlane.xlu0 %2336
    %v2338 = vrcp.pop 32.0
    %v2339 = vmul.f32 %v2292, %v2338
    %v2340 = vmul.f32 %v2295, %v2338
    %v2341 = vmul.f32 %v2298, %v2338
    %v2342 = vmul.f32 %v2301, %v2338
    %v2343 = vmul.f32 %v2304, %v2338
    %v2344 = vmul.f32 %v2307, %v2338
    %v2345 = vmul.f32 %v2310, %v2338
    %v2346 = vmul.f32 %v2313, %v2338
    %v2347 = vmul.f32 %v2316, %v2338
    %v2348 = vmul.f32 %v2319, %v2338
    %v2349 = vmul.f32 %v2322, %v2338
    %v2350 = vmul.f32 %v2325, %v2338
    %v2351 = vmul.f32 %v2328, %v2338
    %v2352 = vmul.f32 %v2331, %v2338
    %v2353 = vmul.f32 %v2334, %v2338
    %v2354 = vmul.f32 %v2337, %v2338
    %v2355 = vmul.f32 %v308, %v308
    %v2356 = vmul.f32 %v309, %v309
    %v2357 = vmul.f32 %v310, %v310
    %v2358 = vmul.f32 %v311, %v311
    %v2359 = vmul.f32 %v312, %v312
    %v2360 = vmul.f32 %v313, %v313
    %v2361 = vmul.f32 %v314, %v314
    %v2362 = vmul.f32 %v315, %v315
    %v2363 = vmul.f32 %v316, %v316
    %v2364 = vmul.f32 %v317, %v317
    %v2365 = vmul.f32 %v318, %v318
    %v2366 = vmul.f32 %v319, %v319
    %v2367 = vmul.f32 %v320, %v320
    %v2368 = vmul.f32 %v321, %v321
    %v2369 = vmul.f32 %v322, %v322
    %v2370 = vmul.f32 %v323, %v323
    %v2371 = vsel %vm2289, %v2355, 0.0
    %2372 = vadd.xlane.f32.xlu0 %v2371
    %v2373 = vpop.xlane.xlu0 %2372
    %v2374 = vsel %vm2289, %v2356, 0.0
    %2375 = vadd.xlane.f32.xlu0 %v2374
    %v2376 = vpop.xlane.xlu0 %2375
    %v2377 = vsel %vm2289, %v2357, 0.0
    %2378 = vadd.xlane.f32.xlu0 %v2377
    %v2379 = vpop.xlane.xlu0 %2378
    %v2380 = vsel %vm2289, %v2358, 0.0
    %2381 = vadd.xlane.f32.xlu0 %v2380
    %v2382 = vpop.xlane.xlu0 %2381
    %v2383 = vsel %vm2289, %v2359, 0.0
    %2384 = vadd.xlane.f32.xlu0 %v2383
    %v2385 = vpop.xlane.xlu0 %2384
    %v2386 = vsel %vm2289, %v2360, 0.0
    %2387 = vadd.xlane.f32.xlu0 %v2386
    %v2388 = vpop.xlane.xlu0 %2387
    %v2389 = vsel %vm2289, %v2361, 0.0
    %2390 = vadd.xlane.f32.xlu0 %v2389
    %v2391 = vpop.xlane.xlu0 %2390
    %v2392 = vsel %vm2289, %v2362, 0.0
    %2393 = vadd.xlane.f32.xlu0 %v2392
    %v2394 = vpop.xlane.xlu0 %2393
    %v2395 = vsel %vm2289, %v2363, 0.0
    %2396 = vadd.xlane.f32.xlu0 %v2395
    %v2397 = vpop.xlane.xlu0 %2396
    %v2398 = vsel %vm2289, %v2364, 0.0
    %2399 = vadd.xlane.f32.xlu0 %v2398
    %v2400 = vpop.xlane.xlu0 %2399
    %v2401 = vsel %vm2289, %v2365, 0.0
    %2402 = vadd.xlane.f32.xlu0 %v2401
    %v2403 = vpop.xlane.xlu0 %2402
    %v2404 = vsel %vm2289, %v2366, 0.0
    %2405 = vadd.xlane.f32.xlu0 %v2404
    %v2406 = vpop.xlane.xlu0 %2405
    %v2407 = vsel %vm2289, %v2367, 0.0
    %2408 = vadd.xlane.f32.xlu0 %v2407
    %v2409 = vpop.xlane.xlu0 %2408
    %v2410 = vsel %vm2289, %v2368, 0.0
    %2411 = vadd.xlane.f32.xlu0 %v2410
    %v2412 = vpop.xlane.xlu0 %2411
    %v2413 = vsel %vm2289, %v2369, 0.0
    %2414 = vadd.xlane.f32.xlu0 %v2413
    %v2415 = vpop.xlane.xlu0 %2414
    %v2416 = vsel %vm2289, %v2370, 0.0
    %2417 = vadd.xlane.f32.xlu0 %v2416
    %v2418 = vpop.xlane.xlu0 %2417
    %v2419 = vmul.f32 %v2373, %v2338
    %v2420 = vmul.f32 %v2376, %v2338
    %v2421 = vmul.f32 %v2379, %v2338
    %v2422 = vmul.f32 %v2382, %v2338
    %v2423 = vmul.f32 %v2385, %v2338
    %v2424 = vmul.f32 %v2388, %v2338
    %v2425 = vmul.f32 %v2391, %v2338
    %v2426 = vmul.f32 %v2394, %v2338
    %v2427 = vmul.f32 %v2397, %v2338
    %v2428 = vmul.f32 %v2400, %v2338
    %v2429 = vmul.f32 %v2403, %v2338
    %v2430 = vmul.f32 %v2406, %v2338
    %v2431 = vmul.f32 %v2409, %v2338
    %v2432 = vmul.f32 %v2412, %v2338
    %v2433 = vmul.f32 %v2415, %v2338
    %v2434 = vmul.f32 %v2418, %v2338
    %v2435 = vmul.f32 %v2339, %v2339
    %v2436 = vmul.f32 %v2340, %v2340
    %v2437 = vmul.f32 %v2341, %v2341
    %v2438 = vmul.f32 %v2342, %v2342
    %v2439 = vmul.f32 %v2343, %v2343
    %v2440 = vmul.f32 %v2344, %v2344
    %v2441 = vmul.f32 %v2345, %v2345
    %v2442 = vmul.f32 %v2346, %v2346
    %v2443 = vmul.f32 %v2347, %v2347
    %v2444 = vmul.f32 %v2348, %v2348
    %v2445 = vmul.f32 %v2349, %v2349
    %v2446 = vmul.f32 %v2350, %v2350
    %v2447 = vmul.f32 %v2351, %v2351
    %v2448 = vmul.f32 %v2352, %v2352
    %v2449 = vmul.f32 %v2353, %v2353
    %v2450 = vmul.f32 %v2354, %v2354
    %v2451 = vsub.f32 %v2419, %v2435
    %v2452 = vsub.f32 %v2420, %v2436
    %v2453 = vsub.f32 %v2421, %v2437
    %v2454 = vsub.f32 %v2422, %v2438
    %v2455 = vsub.f32 %v2423, %v2439
    %v2456 = vsub.f32 %v2424, %v2440
    %v2457 = vsub.f32 %v2425, %v2441
    %v2458 = vsub.f32 %v2426, %v2442
    %v2459 = vsub.f32 %v2427, %v2443
    %v2460 = vsub.f32 %v2428, %v2444
    %v2461 = vsub.f32 %v2429, %v2445
    %v2462 = vsub.f32 %v2430, %v2446
    %v2463 = vsub.f32 %v2431, %v2447
    %v2464 = vsub.f32 %v2432, %v2448
    %v2465 = vsub.f32 %v2433, %v2449
    %v2466 = vsub.f32 %v2434, %v2450
    %v2467 = vsub.f32 %v308, %v2339
    %v2468 = vsub.f32 %v309, %v2340
    %v2469 = vsub.f32 %v310, %v2341
    %v2470 = vsub.f32 %v311, %v2342
    %v2471 = vsub.f32 %v312, %v2343
    %v2472 = vsub.f32 %v313, %v2344
    %v2473 = vsub.f32 %v314, %v2345
    %v2474 = vsub.f32 %v315, %v2346
    %v2475 = vsub.f32 %v316, %v2347
    %v2476 = vsub.f32 %v317, %v2348
    %v2477 = vsub.f32 %v318, %v2349
    %v2478 = vsub.f32 %v319, %v2350
    %v2479 = vsub.f32 %v320, %v2351
    %v2480 = vsub.f32 %v321, %v2352
    %v2481 = vsub.f32 %v322, %v2353
    %v2482 = vsub.f32 %v323, %v2354
    %v2483 = vadd.f32 %v2451, 1e-06
    %v2484 = vadd.f32 %v2452, 1e-06
    %v2485 = vadd.f32 %v2453, 1e-06
    %v2486 = vadd.f32 %v2454, 1e-06
    %v2487 = vadd.f32 %v2455, 1e-06
    %v2488 = vadd.f32 %v2456, 1e-06
    %v2489 = vadd.f32 %v2457, 1e-06
    %v2490 = vadd.f32 %v2458, 1e-06
    %v2491 = vadd.f32 %v2459, 1e-06
    %v2492 = vadd.f32 %v2460, 1e-06
    %v2493 = vadd.f32 %v2461, 1e-06
    %v2494 = vadd.f32 %v2462, 1e-06
    %v2495 = vadd.f32 %v2463, 1e-06
    %v2496 = vadd.f32 %v2464, 1e-06
    %v2497 = vadd.f32 %v2465, 1e-06
    %v2498 = vadd.f32 %v2466, 1e-06
    %v2499 = vrsqrt.pop %v2483
    %v2500 = vrsqrt.pop %v2484
    %v2501 = vrsqrt.pop %v2485
    %v2502 = vrsqrt.pop %v2486
    %v2503 = vrsqrt.pop %v2487
    %v2504 = vrsqrt.pop %v2488
    %v2505 = vrsqrt.pop %v2489
    %v2506 = vrsqrt.pop %v2490
    %v2507 = vrsqrt.pop %v2491
    %v2508 = vrsqrt.pop %v2492
    %v2509 = vrsqrt.pop %v2493
    %v2510 = vrsqrt.pop %v2494
    %v2511 = vrsqrt.pop %v2495
    %v2512 = vrsqrt.pop %v2496
    %v2513 = vrsqrt.pop %v2497
    %v2514 = vrsqrt.pop %v2498
    %v2515 = vmul.f32 %v2467, %v2499
    %v2516 = vmul.f32 %v2468, %v2500
    %v2517 = vmul.f32 %v2469, %v2501
    %v2518 = vmul.f32 %v2470, %v2502
    %v2519 = vmul.f32 %v2471, %v2503
    %v2520 = vmul.f32 %v2472, %v2504
    %v2521 = vmul.f32 %v2473, %v2505
    %v2522 = vmul.f32 %v2474, %v2506
    %v2523 = vmul.f32 %v2475, %v2507
    %v2524 = vmul.f32 %v2476, %v2508
    %v2525 = vmul.f32 %v2477, %v2509
    %v2526 = vmul.f32 %v2478, %v2510
    %v2527 = vmul.f32 %v2479, %v2511
    %v2528 = vmul.f32 %v2480, %v2512
    %v2529 = vmul.f32 %v2481, %v2513
    %v2530 = vmul.f32 %v2482, %v2514
    %v2532 = vlaneseq
    %v2533 = vshrl.u32 %v2532, 7
    %v2534 = vsub.s32 0, %v2533
    %v2535 = vrot.slane %v2282, %v2534
    %v2537 = vmul.f32 %v2515, %v2535
    %v2538 = vmul.f32 %v2516, %v2535
    %v2539 = vmul.f32 %v2517, %v2535
    %v2540 = vmul.f32 %v2518, %v2535
    %v2541 = vmul.f32 %v2519, %v2535
    %v2542 = vmul.f32 %v2520, %v2535
    %v2543 = vmul.f32 %v2521, %v2535
    %v2544 = vmul.f32 %v2522, %v2535
    %v2545 = vmul.f32 %v2523, %v2535
    %v2546 = vmul.f32 %v2524, %v2535
    %v2547 = vmul.f32 %v2525, %v2535
    %v2548 = vmul.f32 %v2526, %v2535
    %v2549 = vmul.f32 %v2527, %v2535
    %v2550 = vmul.f32 %v2528, %v2535
    %v2551 = vmul.f32 %v2529, %v2535
    %v2552 = vmul.f32 %v2530, %v2535
    %v2554 = vlaneseq
    %v2555 = vshrl.u32 %v2554, 7
    %v2556 = vsub.s32 0, %v2555
    %v2557 = vrot.slane %v2283, %v2556
    %v2559 = vadd.f32 %v2537, %v2557
    %v2560 = vadd.f32 %v2538, %v2557
    %v2561 = vadd.f32 %v2539, %v2557
    %v2562 = vadd.f32 %v2540, %v2557
    %v2563 = vadd.f32 %v2541, %v2557
    %v2564 = vadd.f32 %v2542, %v2557
    %v2565 = vadd.f32 %v2543, %v2557
    %v2566 = vadd.f32 %v2544, %v2557
    %v2567 = vadd.f32 %v2545, %v2557
    %v2568 = vadd.f32 %v2546, %v2557
    %v2569 = vadd.f32 %v2547, %v2557
    %v2570 = vadd.f32 %v2548, %v2557
    %v2571 = vadd.f32 %v2549, %v2557
    %v2572 = vadd.f32 %v2550, %v2557
    %v2573 = vadd.f32 %v2551, %v2557
    %v2574 = vadd.f32 %v2552, %v2557
    %v2575 = vpack.c.bf16 %v2560, %v2559
    %v2576 = vpack.c.bf16 %v2562, %v2561
    %v2577 = vpack.c.bf16 %v2564, %v2563
    %v2578 = vpack.c.bf16 %v2566, %v2565
    %v2579 = vpack.c.bf16 %v2568, %v2567
    %v2580 = vpack.c.bf16 %v2570, %v2569
    %v2581 = vpack.c.bf16 %v2572, %v2571
    %v2582 = vpack.c.bf16 %v2574, %v2573
    %v2583 = vld [vmem:[%s17] sm:$0xf]
    %v2584 = vld [vmem:[%s17 + $0x4] sm:$0xf]
    %v2585 = vld [vmem:[%s17 + $0x8] sm:$0xf]
    %v2586 = vld [vmem:[%s17 + $0xc] sm:$0xf]
    %v2587 = vld [vmem:[%s18] sm:$0x1]
    %v2589 = vlaneseq
    %v2590 = vshrl.u32 %v2589, 7
    %v2591 = vsub.s32 0, %v2590
    %v2592 = vrot.slane %v2587, %v2591
    %v2598 = vunpack.c.l.b16 %v2583
    %v2599 = vunpack.c.l.b16 %v2584
    %v2600 = vunpack.c.l.b16 %v2585
    %v2601 = vunpack.c.l.b16 %v2586
    %v2602 = vpack.c.b16 %v2599, %v2598
    %v2603 = vpack.c.b16 %v2601, %v2600
    %v2607 = vsel %vm2289, %v2575, 0
    %v2610 = vsel %vm2289, %v2576, 0
    %v2613 = vsel %vm2289, %v2577, 0
    %v2616 = vsel %vm2289, %v2578, 0
    %v2619 = vsel %vm2289, %v2579, 0
    %v2622 = vsel %vm2289, %v2580, 0
    %v2625 = vsel %vm2289, %v2581, 0
    %v2628 = vsel %vm2289, %v2582, 0
    %2630 = vmatprep.subr.bf16.mxu0 0
    %2631 = vmatpush1.bf16.msra.mxu0 %v2602
    %2632 = vmatprep.subr.bf16.mxu0 0
    %2633 = vmatpush1.bf16.msra.mxu0 %v2603
    %2634 = vmatprep.subr.bf16.mxu0 0
    %2635 = vmatpush1.bf16.msra.mxu0 0
    %2636 = vmatprep.subr.bf16.mxu0 0
    %2637 = vmatpush1.bf16.msra.mxu0 0
    %2638 = vmatprep.subr.bf16.mxu0 0
    %2639 = vmatpush1.bf16.msra.mxu0 0
    %2640 = vmatprep.subr.bf16.mxu0 0
    %2641 = vmatpush1.bf16.msra.mxu0 0
    %2642 = vmatprep.subr.bf16.mxu0 0
    %2643 = vmatpush1.bf16.msra.mxu0 0
    %2644 = vmatprep.subr.bf16.mxu0 0
    %2645 = vmatpush1.bf16.msra.mxu0 0
    %2646 = vmatprep.subr.bf16.mxu0 0
    %2647 = vmatpush1.bf16.msra.mxu0 0
    %2648 = vmatprep.subr.bf16.mxu0 0
    %2649 = vmatpush1.bf16.msra.mxu0 0
    %2650 = vmatprep.subr.bf16.mxu0 0
    %2651 = vmatpush1.bf16.msra.mxu0 0
    %2652 = vmatprep.subr.bf16.mxu0 0
    %2653 = vmatpush1.bf16.msra.mxu0 0
    %2654 = vmatprep.subr.bf16.mxu0 0
    %2655 = vmatpush1.bf16.msra.mxu0 0
    %2656 = vmatprep.subr.bf16.mxu0 0
    %2657 = vmatpush1.bf16.msra.mxu0 0
    %2658 = vmatprep.subr.bf16.mxu0 0
    %2659 = vmatpush1.bf16.msra.mxu0 0
    %2660 = vmatprep.subr.bf16.mxu0 0
    %2661 = vmatpush1.bf16.msra.mxu0 0
    %2662 = vmatprep.mubr.bf16.mxu0 0
    %2663 = vmatmul.mubr.bf16.gmra.mrb[0].mxu0 %v2607
    %v2664 = vpop.f32.mrb[0].mxu0
    %v2665 = vadd.f32 %v2592, %v2664
    %v2666 = vpop.f32.mrb[0].mxu0
    %v2667 = vpop.f32.mrb[0].mxu0
    %v2668 = vadd.f32 %v2592, %v2667
    %v2669 = vpop.f32.mrb[0].mxu0
    %2670 = vmatprep.mubr.bf16.mxu0 0
    %2671 = vmatmul.mubr.bf16.gmra.mrb[0].mxu0 %v2610
    %v2672 = vpop.f32.mrb[0].mxu0
    %v2673 = vadd.f32 %v2592, %v2672
    %v2674 = vpop.f32.mrb[0].mxu0
    %v2675 = vpop.f32.mrb[0].mxu0
    %v2676 = vadd.f32 %v2592, %v2675
    %v2677 = vpop.f32.mrb[0].mxu0
    %2678 = vmatprep.mubr.bf16.mxu0 0
    %2679 = vmatmul.mubr.bf16.gmra.mrb[0].mxu0 %v2613
    %v2680 = vpop.f32.mrb[0].mxu0
    %v2681 = vadd.f32 %v2592, %v2680
    %v2682 = vpop.f32.mrb[0].mxu0
    %v2683 = vpop.f32.mrb[0].mxu0
    %v2684 = vadd.f32 %v2592, %v2683
    %v2685 = vpop.f32.mrb[0].mxu0
    %2686 = vmatprep.mubr.bf16.mxu0 0
    %2687 = vmatmul.mubr.bf16.gmra.mrb[0].mxu0 %v2616
    %v2688 = vpop.f32.mrb[0].mxu0
    %v2689 = vadd.f32 %v2592, %v2688
    %v2690 = vpop.f32.mrb[0].mxu0
    %v2691 = vpop.f32.mrb[0].mxu0
    %v2692 = vadd.f32 %v2592, %v2691
    %v2693 = vpop.f32.mrb[0].mxu0
    %2694 = vmatprep.mubr.bf16.mxu0 0
    %2695 = vmatmul.mubr.bf16.gmra.mrb[0].mxu0 %v2619
    %v2696 = vpop.f32.mrb[0].mxu0
    %v2697 = vadd.f32 %v2592, %v2696
    %v2698 = vpop.f32.mrb[0].mxu0
    %v2699 = vpop.f32.mrb[0].mxu0
    %v2700 = vadd.f32 %v2592, %v2699
    %v2701 = vpop.f32.mrb[0].mxu0
    %2702 = vmatprep.mubr.bf16.mxu0 0
    %2703 = vmatmul.mubr.bf16.gmra.mrb[0].mxu0 %v2622
    %v2704 = vpop.f32.mrb[0].mxu0
    %v2705 = vadd.f32 %v2592, %v2704
    %v2706 = vpop.f32.mrb[0].mxu0
    %v2707 = vpop.f32.mrb[0].mxu0
    %v2708 = vadd.f32 %v2592, %v2707
    %v2709 = vpop.f32.mrb[0].mxu0
    %2710 = vmatprep.mubr.bf16.mxu0 0
    %2711 = vmatmul.mubr.bf16.gmra.mrb[0].mxu0 %v2625
    %v2712 = vpop.f32.mrb[0].mxu0
    %v2713 = vadd.f32 %v2592, %v2712
    %v2714 = vpop.f32.mrb[0].mxu0
    %v2715 = vpop.f32.mrb[0].mxu0
    %v2716 = vadd.f32 %v2592, %v2715
    %v2717 = vpop.f32.mrb[0].mxu0
    %2718 = vmatprep.mubr.bf16.mxu0 0
    %2719 = vmatmul.mubr.bf16.gmra.mrb[0].mxu0 %v2628
    %v2720 = vpop.f32.mrb[0].mxu0
    %v2721 = vadd.f32 %v2592, %v2720
    %v2722 = vpop.f32.mrb[0].mxu0
    %v2723 = vpop.f32.mrb[0].mxu0
    %v2724 = vadd.f32 %v2592, %v2723
    %v2725 = vpop.f32.mrb[0].mxu0
    %2726 = vdwg.mxu0
    %v2727 = vmul.f32 %v2665, %v2665
    %v2728 = vmul.f32 %v2668, %v2668
    %v2729 = vmul.f32 %v2673, %v2673
    %v2730 = vmul.f32 %v2676, %v2676
    %v2731 = vmul.f32 %v2681, %v2681
    %v2732 = vmul.f32 %v2684, %v2684
    %v2733 = vmul.f32 %v2689, %v2689
    %v2734 = vmul.f32 %v2692, %v2692
    %v2735 = vmul.f32 %v2697, %v2697
    %v2736 = vmul.f32 %v2700, %v2700
    %v2737 = vmul.f32 %v2705, %v2705
    %v2738 = vmul.f32 %v2708, %v2708
    %v2739 = vmul.f32 %v2713, %v2713
    %v2740 = vmul.f32 %v2716, %v2716
    %v2741 = vmul.f32 %v2721, %v2721
    %v2742 = vmul.f32 %v2724, %v2724
    %v2743 = vmul.f32 %v2665, %v2727
    %v2744 = vmul.f32 %v2668, %v2728
    %v2745 = vmul.f32 %v2673, %v2729
    %v2746 = vmul.f32 %v2676, %v2730
    %v2747 = vmul.f32 %v2681, %v2731
    %v2748 = vmul.f32 %v2684, %v2732
    %v2749 = vmul.f32 %v2689, %v2733
    %v2750 = vmul.f32 %v2692, %v2734
    %v2751 = vmul.f32 %v2697, %v2735
    %v2752 = vmul.f32 %v2700, %v2736
    %v2753 = vmul.f32 %v2705, %v2737
    %v2754 = vmul.f32 %v2708, %v2738
    %v2755 = vmul.f32 %v2713, %v2739
    %v2756 = vmul.f32 %v2716, %v2740
    %v2757 = vmul.f32 %v2721, %v2741
    %v2758 = vmul.f32 %v2724, %v2742
    %v2759 = vmul.f32 %v2743, 0.044715
    %v2760 = vmul.f32 %v2744, 0.044715
    %v2761 = vmul.f32 %v2745, 0.044715
    %v2762 = vmul.f32 %v2746, 0.044715
    %v2763 = vmul.f32 %v2747, 0.044715
    %v2764 = vmul.f32 %v2748, 0.044715
    %v2765 = vmul.f32 %v2749, 0.044715
    %v2766 = vmul.f32 %v2750, 0.044715
    %v2767 = vmul.f32 %v2751, 0.044715
    %v2768 = vmul.f32 %v2752, 0.044715
    %v2769 = vmul.f32 %v2753, 0.044715
    %v2770 = vmul.f32 %v2754, 0.044715
    %v2771 = vmul.f32 %v2755, 0.044715
    %v2772 = vmul.f32 %v2756, 0.044715
    %v2773 = vmul.f32 %v2757, 0.044715
    %v2774 = vmul.f32 %v2758, 0.044715
    %v2775 = vadd.f32 %v2665, %v2759
    %v2776 = vadd.f32 %v2668, %v2760
    %v2777 = vadd.f32 %v2673, %v2761
    %v2778 = vadd.f32 %v2676, %v2762
    %v2779 = vadd.f32 %v2681, %v2763
    %v2780 = vadd.f32 %v2684, %v2764
    %v2781 = vadd.f32 %v2689, %v2765
    %v2782 = vadd.f32 %v2692, %v2766
    %v2783 = vadd.f32 %v2697, %v2767
    %v2784 = vadd.f32 %v2700, %v2768
    %v2785 = vadd.f32 %v2705, %v2769
    %v2786 = vadd.f32 %v2708, %v2770
    %v2787 = vadd.f32 %v2713, %v2771
    %v2788 = vadd.f32 %v2716, %v2772
    %v2789 = vadd.f32 %v2721, %v2773
    %v2790 = vadd.f32 %v2724, %v2774
    %v2791 = vmul.f32 %v2775, 0.7978846
    %v2792 = vmul.f32 %v2776, 0.7978846
    %v2793 = vmul.f32 %v2777, 0.7978846
    %v2794 = vmul.f32 %v2778, 0.7978846
    %v2795 = vmul.f32 %v2779, 0.7978846
    %v2796 = vmul.f32 %v2780, 0.7978846
    %v2797 = vmul.f32 %v2781, 0.7978846
    %v2798 = vmul.f32 %v2782, 0.7978846
    %v2799 = vmul.f32 %v2783, 0.7978846
    %v2800 = vmul.f32 %v2784, 0.7978846
    %v2801 = vmul.f32 %v2785, 0.7978846
    %v2802 = vmul.f32 %v2786, 0.7978846
    %v2803 = vmul.f32 %v2787, 0.7978846
    %v2804 = vmul.f32 %v2788, 0.7978846
    %v2805 = vmul.f32 %v2789, 0.7978846
    %v2806 = vmul.f32 %v2790, 0.7978846
    %v2807 = vtanh.pop %v2791
    %v2808 = vtanh.pop %v2792
    %v2809 = vtanh.pop %v2793
    %v2810 = vtanh.pop %v2794
    %v2811 = vtanh.pop %v2795
    %v2812 = vtanh.pop %v2796
    %v2813 = vtanh.pop %v2797
    %v2814 = vtanh.pop %v2798
    %v2815 = vtanh.pop %v2799
    %v2816 = vtanh.pop %v2800
    %v2817 = vtanh.pop %v2801
    %v2818 = vtanh.pop %v2802
    %v2819 = vtanh.pop %v2803
    %v2820 = vtanh.pop %v2804
    %v2821 = vtanh.pop %v2805
    %v2822 = vtanh.pop %v2806
    %v2823 = vadd.f32 %v2807, 1.0
    %v2824 = vadd.f32 %v2808, 1.0
    %v2825 = vadd.f32 %v2809, 1.0
    %v2826 = vadd.f32 %v2810, 1.0
    %v2827 = vadd.f32 %v2811, 1.0
    %v2828 = vadd.f32 %v2812, 1.0
    %v2829 = vadd.f32 %v2813, 1.0
    %v2830 = vadd.f32 %v2814, 1.0
    %v2831 = vadd.f32 %v2815, 1.0
    %v2832 = vadd.f32 %v2816, 1.0
    %v2833 = vadd.f32 %v2817, 1.0
    %v2834 = vadd.f32 %v2818, 1.0
    %v2835 = vadd.f32 %v2819, 1.0
    %v2836 = vadd.f32 %v2820, 1.0
    %v2837 = vadd.f32 %v2821, 1.0
    %v2838 = vadd.f32 %v2822, 1.0
    %v2839 = vmul.f32 %v2823, 0.5
    %v2840 = vmul.f32 %v2824, 0.5
    %v2841 = vmul.f32 %v2825, 0.5
    %v2842 = vmul.f32 %v2826, 0.5
    %v2843 = vmul.f32 %v2827, 0.5
    %v2844 = vmul.f32 %v2828, 0.5
    %v2845 = vmul.f32 %v2829, 0.5
    %v2846 = vmul.f32 %v2830, 0.5
    %v2847 = vmul.f32 %v2831, 0.5
    %v2848 = vmul.f32 %v2832, 0.5
    %v2849 = vmul.f32 %v2833, 0.5
    %v2850 = vmul.f32 %v2834, 0.5
    %v2851 = vmul.f32 %v2835, 0.5
    %v2852 = vmul.f32 %v2836, 0.5
    %v2853 = vmul.f32 %v2837, 0.5
    %v2854 = vmul.f32 %v2838, 0.5
    %v2855 = vmul.f32 %v2665, %v2839
    %v2856 = vmul.f32 %v2668, %v2840
    %v2857 = vmul.f32 %v2673, %v2841
    %v2858 = vmul.f32 %v2676, %v2842
    %v2859 = vmul.f32 %v2681, %v2843
    %v2860 = vmul.f32 %v2684, %v2844
    %v2861 = vmul.f32 %v2689, %v2845
    %v2862 = vmul.f32 %v2692, %v2846
    %v2863 = vmul.f32 %v2697, %v2847
    %v2864 = vmul.f32 %v2700, %v2848
    %v2865 = vmul.f32 %v2705, %v2849
    %v2866 = vmul.f32 %v2708, %v2850
    %v2867 = vmul.f32 %v2713, %v2851
    %v2868 = vmul.f32 %v2716, %v2852
    %v2869 = vmul.f32 %v2721, %v2853
    %v2870 = vmul.f32 %v2724, %v2854
    %v2871 = vpack.c.bf16 %v2856, %v2855
    %v2872 = vpack.c.bf16 %v2858, %v2857
    %v2873 = vpack.c.bf16 %v2860, %v2859
    %v2874 = vpack.c.bf16 %v2862, %v2861
    %v2875 = vpack.c.bf16 %v2864, %v2863
    %v2876 = vpack.c.bf16 %v2866, %v2865
    %v2877 = vpack.c.bf16 %v2868, %v2867
    %v2878 = vpack.c.bf16 %v2870, %v2869
    %v2880 = vlaneseq
    %v2881 = vshrl.u32 %v2880, 7
    %v2882 = vsub.s32 0, %v2881
    %v2883 = vrot.slane %v2288, %v2882
    %v2889 = vunpack.c.l.b16 %v2284
    %v2890 = vunpack.c.l.b16 %v2285
    %v2891 = vunpack.c.l.b16 %v2286
    %v2892 = vunpack.c.l.b16 %v2287
    %v2893 = vpack.c.b16 %v2890, %v2889
    %v2894 = vpack.c.b16 %v2892, %v2891
    %v2898 = vsel %vm2289, %v2871, 0
    %v2901 = vsel %vm2289, %v2872, 0
    %v2904 = vsel %vm2289, %v2873, 0
    %v2907 = vsel %vm2289, %v2874, 0
    %v2910 = vsel %vm2289, %v2875, 0
    %v2913 = vsel %vm2289, %v2876, 0
    %v2916 = vsel %vm2289, %v2877, 0
    %v2919 = vsel %vm2289, %v2878, 0
    %2921 = vmatprep.subr.bf16.mxu0 0
    %2922 = vmatpush1.bf16.msra.mxu0 %v2893
    %2923 = vmatprep.subr.bf16.mxu0 0
    %2924 = vmatpush1.bf16.msra.mxu0 %v2894
    %2925 = vmatprep.subr.bf16.mxu0 0
    %2926 = vmatpush1.bf16.msra.mxu0 0
    %2927 = vmatprep.subr.bf16.mxu0 0
    %2928 = vmatpush1.bf16.msra.mxu0 0
    %2929 = vmatprep.subr.bf16.mxu0 0
    %2930 = vmatpush1.bf16.msra.mxu0 0
    %2931 = vmatprep.subr.bf16.mxu0 0
    %2932 = vmatpush1.bf16.msra.mxu0 0
    %2933 = vmatprep.subr.bf16.mxu0 0
    %2934 = vmatpush1.bf16.msra.mxu0 0
    %2935 = vmatprep.subr.bf16.mxu0 0
    %2936 = vmatpush1.bf16.msra.mxu0 0
    %2937 = vmatprep.subr.bf16.mxu0 0
    %2938 = vmatpush1.bf16.msra.mxu0 0
    %2939 = vmatprep.subr.bf16.mxu0 0
    %2940 = vmatpush1.bf16.msra.mxu0 0
    %2941 = vmatprep.subr.bf16.mxu0 0
    %2942 = vmatpush1.bf16.msra.mxu0 0
    %2943 = vmatprep.subr.bf16.mxu0 0
    %2944 = vmatpush1.bf16.msra.mxu0 0
    %2945 = vmatprep.subr.bf16.mxu0 0
    %2946 = vmatpush1.bf16.msra.mxu0 0
    %2947 = vmatprep.subr.bf16.mxu0 0
    %2948 = vmatpush1.bf16.msra.mxu0 0
    %2949 = vmatprep.subr.bf16.mxu0 0
    %2950 = vmatpush1.bf16.msra.mxu0 0
    %2951 = vmatprep.subr.bf16.mxu0 0
    %2952 = vmatpush1.bf16.msra.mxu0 0
    %2953 = vmatprep.mubr.bf16.mxu0 0
    %2954 = vmatmul.mubr.bf16.gmra.mrb[0].mxu0 %v2898
    %v2955 = vpop.f32.mrb[0].mxu0
    %v2956 = vadd.f32 %v2883, %v2955
    %v2957 = vpop.f32.mrb[0].mxu0
    %v2958 = vpop.f32.mrb[0].mxu0
    %v2959 = vadd.f32 %v2883, %v2958
    %v2960 = vpop.f32.mrb[0].mxu0
    %2961 = vmatprep.mubr.bf16.mxu0 0
    %2962 = vmatmul.mubr.bf16.gmra.mrb[0].mxu0 %v2901
    %v2963 = vpop.f32.mrb[0].mxu0
    %v2964 = vadd.f32 %v2883, %v2963
    %v2965 = vpop.f32.mrb[0].mxu0
    %v2966 = vpop.f32.mrb[0].mxu0
    %v2967 = vadd.f32 %v2883, %v2966
    %v2968 = vpop.f32.mrb[0].mxu0
    %2969 = vmatprep.mubr.bf16.mxu0 0
    %2970 = vmatmul.mubr.bf16.gmra.mrb[0].mxu0 %v2904
    %v2971 = vpop.f32.mrb[0].mxu0
    %v2972 = vadd.f32 %v2883, %v2971
    %v2973 = vpop.f32.mrb[0].mxu0
    %v2974 = vpop.f32.mrb[0].mxu0
    %v2975 = vadd.f32 %v2883, %v2974
    %v2976 = vpop.f32.mrb[0].mxu0
    %2977 = vmatprep.mubr.bf16.mxu0 0
    %2978 = vmatmul.mubr.bf16.gmra.mrb[0].mxu0 %v2907
    %v2979 = vpop.f32.mrb[0].mxu0
    %v2980 = vadd.f32 %v2883, %v2979
    %v2981 = vpop.f32.mrb[0].mxu0
    %v2982 = vpop.f32.mrb[0].mxu0
    %v2983 = vadd.f32 %v2883, %v2982
    %v2984 = vpop.f32.mrb[0].mxu0
    %2985 = vmatprep.mubr.bf16.mxu0 0
    %2986 = vmatmul.mubr.bf16.gmra.mrb[0].mxu0 %v2910
    %v2987 = vpop.f32.mrb[0].mxu0
    %v2988 = vadd.f32 %v2883, %v2987
    %v2989 = vpop.f32.mrb[0].mxu0
    %v2990 = vpop.f32.mrb[0].mxu0
    %v2991 = vadd.f32 %v2883, %v2990
    %v2992 = vpop.f32.mrb[0].mxu0
    %2993 = vmatprep.mubr.bf16.mxu0 0
    %2994 = vmatmul.mubr.bf16.gmra.mrb[0].mxu0 %v2913
    %v2995 = vpop.f32.mrb[0].mxu0
    %v2996 = vadd.f32 %v2883, %v2995
    %v2997 = vpop.f32.mrb[0].mxu0
    %v2998 = vpop.f32.mrb[0].mxu0
    %v2999 = vadd.f32 %v2883, %v2998
    %v3000 = vpop.f32.mrb[0].mxu0
    %3001 = vmatprep.mubr.bf16.mxu0 0
    %3002 = vmatmul.mubr.bf16.gmra.mrb[0].mxu0 %v2916
    %v3003 = vpop.f32.mrb[0].mxu0
    %v3004 = vadd.f32 %v2883, %v3003
    %v3005 = vpop.f32.mrb[0].mxu0
    %v3006 = vpop.f32.mrb[0].mxu0
    %v3007 = vadd.f32 %v2883, %v3006
    %v3008 = vpop.f32.mrb[0].mxu0
    %3009 = vmatprep.mubr.bf16.mxu0 0
    %3010 = vmatmul.mubr.bf16.gmra.mrb[0].mxu0 %v2919
    %v3011 = vpop.f32.mrb[0].mxu0
    %v3012 = vadd.f32 %v2883, %v3011
    %v3013 = vpop.f32.mrb[0].mxu0
    %v3014 = vpop.f32.mrb[0].mxu0
    %v3015 = vadd.f32 %v2883, %v3014
    %v3016 = vpop.f32.mrb[0].mxu0
    %3017 = vdwg.mxu0
    %3018 = vst [vmem:[#allocation2] sm:$0xff] %v2956
    %3019 = vst [vmem:[#allocation2 + $0x8] sm:$0xff] %v2959
    %3020 = vst [vmem:[#allocation2 + $0x10] sm:$0xff] %v2964
    %3021 = vst [vmem:[#allocation2 + $0x18] sm:$0xff] %v2967
    %3022 = vst [vmem:[#allocation2 + $0x20] sm:$0xff] %v2972
    %3023 = vst [vmem:[#allocation2 + $0x28] sm:$0xff] %v2975
    %3024 = vst [vmem:[#allocation2 + $0x30] sm:$0xff] %v2980
    %3025 = vst [vmem:[#allocation2 + $0x38] sm:$0xff] %v2983
    %3026 = vst [vmem:[#allocation2 + $0x40] sm:$0xff] %v2988
    %3027 = vst [vmem:[#allocation2 + $0x48] sm:$0xff] %v2991
    %3028 = vst [vmem:[#allocation2 + $0x50] sm:$0xff] %v2996
    %3029 = vst [vmem:[#allocation2 + $0x58] sm:$0xff] %v2999
    %3030 = vst [vmem:[#allocation2 + $0x60] sm:$0xff] %v3004
    %3031 = vst [vmem:[#allocation2 + $0x68] sm:$0xff] %v3007
    %3032 = vst [vmem:[#allocation2 + $0x70] sm:$0xff] %v3012
    %3033 = vst [vmem:[#allocation2 + $0x78] sm:$0xff] %v3015
    // Predicated region
    $region93: #{tpu_custom_call.1} parent=1 // pred_check
      _
    $region94: #{tpu_custom_call.1} parent=1 // pred_check_branch
      %3035 = sbr.rel (0) target = $region96
    $region95: #{tpu_custom_call.1} parent=1 // pred_region
      %s3037 = ssub.s32 2048, 2048
      %3038 = vsyncadd [#allocation3], %s3037
      %s3039 = sshll.u32 [#allocation2], 4
      %s3040 = int_to_ptr.vmem [resolvable:$true] %s3039
      %3045 = dma.vmem_to_hbm [thread:$0]  %s3040, 2048, %s21, [#allocation3], 128, 128, 8
    $region96: #{tpu_custom_call.1} parent=1 // pred_fallthru
      _
    // Predicated region
    $region97: #{tpu_custom_call.1} parent=1 // pred_check
      _
    $region98: #{tpu_custom_call.1} parent=1 // pred_check_branch
      %3047 = sbr.rel (0) target = $region100
    $region99: #{tpu_custom_call.1} parent=1 // pred_region
      %3048 = dma.done [#allocation3], 2048
    $region100: #{tpu_custom_call.1} parent=1 // pred_fallthru
      _
    %3049 = vsyncpa [#allocation3], 1

</llo_original>
